<compile_context>
chip_gen: v6e
topology: v6e:2x2x1
jax: 0.10.0
libtpu: 0.0.40
codegen_flags: <defaults>
</compile_context>

<pallas_src>
import jax
import jax.numpy as jnp
from jax.experimental import pallas as pl
from jax.experimental.pallas import tpu as pltpu


# Logical (PyTorch) layer dims and their lane-padded counterparts.
DIMS = (1703, 800, 400, 800, 1703)


def _round_up(n, m):
    return (n + m - 1) // m * m


PADDED = tuple(_round_up(d, 128) for d in DIMS)  # (1792, 896, 512, 896, 1792)


def _sae_kernel(x_ref,
                w1_ref, s1_ref, b1_ref,
                w2_ref, s2_ref, b2_ref,
                w3_ref, s3_ref, b3_ref,
                w4_ref, s4_ref, b4_ref,
                o_ref):
    """Fused 4-layer MLP: sigmoid(L1) -> sigmoid(L2) -> sigmoid(L3) -> L4.

    x_ref: (tm, D0) bf16   wK_ref: (Din, Dout) int8
    sK_ref/bK_ref: (1, Dout) f32 (per-output-channel dequant scale / bias)
    o_ref: (tm, D4) f32
    """
    def layer(h, w_ref, s_ref, b_ref, activate):
        # int8 -> bf16 is exact (|q| <= 127); accumulate in f32 on the MXU,
        # dequantize by scaling the accumulator, then add bias.
        acc = jnp.dot(h, w_ref[...].astype(jnp.bfloat16),
                      preferred_element_type=jnp.float32)
        y = acc * s_ref[...] + b_ref[...]
        if activate:
            y = jax.nn.sigmoid(y).astype(jnp.bfloat16)
        return y

    h = x_ref[...]                                   # bf16
    h = layer(h, w1_ref, s1_ref, b1_ref, True)
    h = layer(h, w2_ref, s2_ref, b2_ref, True)
    h = layer(h, w3_ref, s3_ref, b3_ref, True)
    y = layer(h, w4_ref, s4_ref, b4_ref, False)      # f32
    o_ref[...] = y.astype(o_ref.dtype)


@jax.jit
def sae_forward(params, x):
    """Forward pass. params hold pre-padded int8 weights + f32 scales/biases."""
    (w1, s1, b1), (w2, s2, b2), (w3, s3, b3), (w4, s4, b4) = params
    D0, D1 = w1.shape
    D2 = w2.shape[1]
    D3 = w3.shape[1]
    D4 = w4.shape[1]

    M, K = x.shape
    assert K == DIMS[0]

    if M <= 256:
        tm = _round_up(M, 8)
        Mp = tm
    else:
        # tm=256 is budgeted against v7x's 64 MiB VMEM; v5e/v6e (128 MiB)
        # could raise this to 512, but we keep one safe config here.
        tm = 256
        Mp = _round_up(M, tm)

    # Only the (small) activation is padded per call; weights were padded once.
    xp = jnp.pad(x.astype(jnp.bfloat16), ((0, Mp - M), (0, D0 - K)))

    grid = (Mp // tm,)

    flops = 2 * Mp * sum(PADDED[i] * PADDED[i + 1] for i in range(4))
    transcendentals = Mp * (PADDED[1] + PADDED[2] + PADDED[3])
    weight_bytes = sum(int(w.size) for w in (w1, w2, w3, w4))          # int8
    sb_bytes = 4 * sum(int(a.size) for a in (s1, b1, s2, b2, s3, b3, s4, b4))
    act_bytes = 2 * Mp * D0 + 4 * Mp * D4
    cost = pl.CostEstimate(flops=flops, transcendentals=transcendentals,
                           bytes_accessed=weight_bytes + sb_bytes + act_bytes)

    const = lambda i: (0, 0)

    def resident(shape):
        # Constant-index blocks: loaded once, never re-DMA'd -> single buffer.
        return pl.BlockSpec(shape, const, pipeline_mode=pl.Buffered(1))

    out = pl.pallas_call(
        _sae_kernel,
        out_shape=jax.ShapeDtypeStruct((Mp, D4), jnp.float32),
        grid_spec=pltpu.PrefetchScalarGridSpec(
            num_scalar_prefetch=0,
            grid=grid,
            in_specs=[
                pl.BlockSpec((tm, D0), lambda i: (i, 0)),     # x tile (bf16)
                resident((D0, D1)), resident((1, D1)), resident((1, D1)),
                resident((D1, D2)), resident((1, D2)), resident((1, D2)),
                resident((D2, D3)), resident((1, D3)), resident((1, D3)),
                resident((D3, D4)), resident((1, D4)), resident((1, D4)),
            ],
            out_specs=pl.BlockSpec((tm, D4), lambda i: (i, 0)),
        ),
        compiler_params=pltpu.CompilerParams(
            dimension_semantics=("parallel",),
            vmem_limit_bytes=40 * 1024 * 1024,
        ),
        cost_estimate=cost,
    )(xp, w1, s1, b1, w2, s2, b2, w3, s3, b3, w4, s4, b4)

    return out[:M, :DIMS[4]]


def _init_linear_padded(key, in_f, out_f, in_p, out_p):
    """PyTorch-style nn.Linear init, pre-transposed to (in, out), quantized to
    int8 with per-output-channel f32 scales and zero-padded once at init.
    (If params are ever reloaded/updated, the padding must be re-zeroed.)"""
    k_w, k_b = jax.random.split(key)
    bound = 1.0 / (in_f ** 0.5)
    w = jax.random.uniform(k_w, (in_f, out_f), jnp.float32,
                           minval=-bound, maxval=bound)
    b = jax.random.uniform(k_b, (out_f,), jnp.float32,
                           minval=-bound, maxval=bound)

    max_abs = jnp.max(jnp.abs(w), axis=0)
    scale = jnp.where(max_abs > 0, max_abs / 127.0, 1.0)
    w_q = jnp.round(w / scale[None, :]).astype(jnp.int8)

    wp = jnp.zeros((in_p, out_p), jnp.int8).at[:in_f, :out_f].set(w_q)
    sp = jnp.zeros((1, out_p), jnp.float32).at[0, :out_f].set(scale)
    bp = jnp.zeros((1, out_p), jnp.float32).at[0, :out_f].set(b)
    return wp, sp, bp


def init_sae_params(key):
    keys = jax.random.split(key, 4)
    params = []
    for n, k in enumerate(keys):
        params.append(_init_linear_padded(k, DIMS[n], DIMS[n + 1],
                                          PADDED[n], PADDED[n + 1]))
    return params


def sae_forward_ref(params, x):
    """Pure-JAX reference computing the same dequantized math (unpadded)."""
    def layer(h, w_q, s, b, in_f, out_f, activate):
        acc = jnp.dot(h, w_q[:in_f, :out_f].astype(jnp.bfloat16),
                      preferred_element_type=jnp.float32)
        y = acc * s[0, :out_f] + b[0, :out_f]
        if activate:
            y = jax.nn.sigmoid(y).astype(jnp.bfloat16)
        return y

    h = x.astype(jnp.bfloat16)
    h = layer(h, *params[0], 1703, 800, True)
    h = layer(h, *params[1], 800, 400, True)
    h = layer(h, *params[2], 400, 800, True)
    return layer(h, *params[3], 800, 1703, False)


if __name__ == "__main__":
    key = jax.random.PRNGKey(0)
    k_params, k_x = jax.random.split(key)

    params = init_sae_params(k_params)
    x = jax.random.normal(k_x, (2, 1703), jnp.float32)

    y = jax.block_until_ready(sae_forward(params, x))
    y_ref = jax.block_until_ready(sae_forward_ref(params, x))

    assert y.shape == (2, 1703)
    max_err = float(jnp.max(jnp.abs(y - y_ref)))
    assert jnp.allclose(y, y_ref, atol=1e-3, rtol=1e-3), max_err

    print("KERNEL_OK")
</pallas_src>

<mosaic_0001>
module attributes {stable_mosaic.version = 11 : i64} {
  func.func @_sae_kernel(%arg0: i32, %arg1: memref<8x1792xbf16, #tpu.memory_space<vmem>>, %arg2: memref<1792x896xi8, #tpu.memory_space<vmem>>, %arg3: memref<1x896xf32, #tpu.memory_space<vmem>>, %arg4: memref<1x896xf32, #tpu.memory_space<vmem>>, %arg5: memref<896x512xi8, #tpu.memory_space<vmem>>, %arg6: memref<1x512xf32, #tpu.memory_space<vmem>>, %arg7: memref<1x512xf32, #tpu.memory_space<vmem>>, %arg8: memref<512x896xi8, #tpu.memory_space<vmem>>, %arg9: memref<1x896xf32, #tpu.memory_space<vmem>>, %arg10: memref<1x896xf32, #tpu.memory_space<vmem>>, %arg11: memref<896x1792xi8, #tpu.memory_space<vmem>>, %arg12: memref<1x1792xf32, #tpu.memory_space<vmem>>, %arg13: memref<1x1792xf32, #tpu.memory_space<vmem>>, %arg14: memref<8x1792xf32, #tpu.memory_space<vmem>>) attributes {dimension_semantics = [#tpu.dimension_semantics<parallel>], iteration_bounds = array<i64: 1>, scalar_prefetch = 0 : i64, scratch_operands = 0 : i64, tpu.core_type = #tpu.core_type<tc>, window_params = [{transform_indices = @transform_0, window_bounds = array<i64: 8, 1792>}, {pipeline_mode = #tpu.pipeline_mode<synchronous>, transform_indices = @transform_1, window_bounds = array<i64: 1792, 896>}, {pipeline_mode = #tpu.pipeline_mode<synchronous>, transform_indices = @transform_2, window_bounds = array<i64: 1, 896>}, {pipeline_mode = #tpu.pipeline_mode<synchronous>, transform_indices = @transform_3, window_bounds = array<i64: 1, 896>}, {pipeline_mode = #tpu.pipeline_mode<synchronous>, transform_indices = @transform_4, window_bounds = array<i64: 896, 512>}, {pipeline_mode = #tpu.pipeline_mode<synchronous>, transform_indices = @transform_5, window_bounds = array<i64: 1, 512>}, {pipeline_mode = #tpu.pipeline_mode<synchronous>, transform_indices = @transform_6, window_bounds = array<i64: 1, 512>}, {pipeline_mode = #tpu.pipeline_mode<synchronous>, transform_indices = @transform_7, window_bounds = array<i64: 512, 896>}, {pipeline_mode = #tpu.pipeline_mode<synchronous>, transform_indices = @transform_8, window_bounds = array<i64: 1, 896>}, {pipeline_mode = #tpu.pipeline_mode<synchronous>, transform_indices = @transform_9, window_bounds = array<i64: 1, 896>}, {pipeline_mode = #tpu.pipeline_mode<synchronous>, transform_indices = @transform_10, window_bounds = array<i64: 896, 1792>}, {pipeline_mode = #tpu.pipeline_mode<synchronous>, transform_indices = @transform_11, window_bounds = array<i64: 1, 1792>}, {pipeline_mode = #tpu.pipeline_mode<synchronous>, transform_indices = @transform_12, window_bounds = array<i64: 1, 1792>}, {transform_indices = @transform_13, window_bounds = array<i64: 8, 1792>}]} {
    %c0 = arith.constant 0 : index
    %c0_0 = arith.constant 0 : index
    %0 = vector.load %arg1[%c0, %c0_0] : memref<8x1792xbf16, #tpu.memory_space<vmem>>, vector<8x1792xbf16>
    %c0_1 = arith.constant 0 : index
    %c0_2 = arith.constant 0 : index
    %1 = vector.load %arg2[%c0_1, %c0_2] : memref<1792x896xi8, #tpu.memory_space<vmem>>, vector<1792x896xi8>
    %2 = arith.sitofp %1 : vector<1792x896xi8> to vector<1792x896xbf16>
    %cst = arith.constant dense<0.000000e+00> : vector<8x896xf32>
    %3 = tpu.matmul %0, %2, %cst {dimension_numbers = #tpu.dot_dimension_numbers<[1], [0], [0], [1], [0, 0, 1, 1], [], []>} : vector<8x1792xbf16>, vector<1792x896xbf16>, vector<8x896xf32> -> vector<8x896xf32>
    %c0_3 = arith.constant 0 : index
    %c0_4 = arith.constant 0 : index
    %4 = vector.load %arg3[%c0_3, %c0_4] : memref<1x896xf32, #tpu.memory_space<vmem>>, vector<1x896xf32>
    %5 = vector.broadcast %4 : vector<1x896xf32> to vector<8x896xf32>
    %6 = arith.mulf %3, %5 : vector<8x896xf32>
    %c0_5 = arith.constant 0 : index
    %c0_6 = arith.constant 0 : index
    %7 = vector.load %arg4[%c0_5, %c0_6] : memref<1x896xf32, #tpu.memory_space<vmem>>, vector<1x896xf32>
    %8 = vector.broadcast %7 : vector<1x896xf32> to vector<8x896xf32>
    %9 = arith.addf %6, %8 : vector<8x896xf32>
    %10 = arith.negf %9 : vector<8x896xf32>
    %11 = math.exp %10 : vector<8x896xf32>
    %cst_7 = arith.constant 1.000000e+00 : f32
    %12 = vector.broadcast %cst_7 : f32 to vector<8x896xf32>
    %13 = arith.addf %12, %11 : vector<8x896xf32>
    %14 = arith.divf %12, %13 : vector<8x896xf32>
    %15 = arith.truncf %14 : vector<8x896xf32> to vector<8x896xbf16>
    %c0_8 = arith.constant 0 : index
    %c0_9 = arith.constant 0 : index
    %16 = vector.load %arg5[%c0_8, %c0_9] : memref<896x512xi8, #tpu.memory_space<vmem>>, vector<896x512xi8>
    %17 = arith.sitofp %16 : vector<896x512xi8> to vector<896x512xbf16>
    %cst_10 = arith.constant dense<0.000000e+00> : vector<8x512xf32>
    %18 = tpu.matmul %15, %17, %cst_10 {dimension_numbers = #tpu.dot_dimension_numbers<[1], [0], [0], [1], [0, 0, 1, 1], [], []>} : vector<8x896xbf16>, vector<896x512xbf16>, vector<8x512xf32> -> vector<8x512xf32>
    %c0_11 = arith.constant 0 : index
    %c0_12 = arith.constant 0 : index
    %19 = vector.load %arg6[%c0_11, %c0_12] : memref<1x512xf32, #tpu.memory_space<vmem>>, vector<1x512xf32>
    %20 = vector.broadcast %19 : vector<1x512xf32> to vector<8x512xf32>
    %21 = arith.mulf %18, %20 : vector<8x512xf32>
    %c0_13 = arith.constant 0 : index
    %c0_14 = arith.constant 0 : index
    %22 = vector.load %arg7[%c0_13, %c0_14] : memref<1x512xf32, #tpu.memory_space<vmem>>, vector<1x512xf32>
    %23 = vector.broadcast %22 : vector<1x512xf32> to vector<8x512xf32>
    %24 = arith.addf %21, %23 : vector<8x512xf32>
    %25 = arith.negf %24 : vector<8x512xf32>
    %26 = math.exp %25 : vector<8x512xf32>
    %cst_15 = arith.constant 1.000000e+00 : f32
    %27 = vector.broadcast %cst_15 : f32 to vector<8x512xf32>
    %28 = arith.addf %27, %26 : vector<8x512xf32>
    %29 = arith.divf %27, %28 : vector<8x512xf32>
    %30 = arith.truncf %29 : vector<8x512xf32> to vector<8x512xbf16>
    %c0_16 = arith.constant 0 : index
    %c0_17 = arith.constant 0 : index
    %31 = vector.load %arg8[%c0_16, %c0_17] : memref<512x896xi8, #tpu.memory_space<vmem>>, vector<512x896xi8>
    %32 = arith.sitofp %31 : vector<512x896xi8> to vector<512x896xbf16>
    %cst_18 = arith.constant dense<0.000000e+00> : vector<8x896xf32>
    %33 = tpu.matmul %30, %32, %cst_18 {dimension_numbers = #tpu.dot_dimension_numbers<[1], [0], [0], [1], [0, 0, 1, 1], [], []>} : vector<8x512xbf16>, vector<512x896xbf16>, vector<8x896xf32> -> vector<8x896xf32>
    %c0_19 = arith.constant 0 : index
    %c0_20 = arith.constant 0 : index
    %34 = vector.load %arg9[%c0_19, %c0_20] : memref<1x896xf32, #tpu.memory_space<vmem>>, vector<1x896xf32>
    %35 = vector.broadcast %34 : vector<1x896xf32> to vector<8x896xf32>
    %36 = arith.mulf %33, %35 : vector<8x896xf32>
    %c0_21 = arith.constant 0 : index
    %c0_22 = arith.constant 0 : index
    %37 = vector.load %arg10[%c0_21, %c0_22] : memref<1x896xf32, #tpu.memory_space<vmem>>, vector<1x896xf32>
    %38 = vector.broadcast %37 : vector<1x896xf32> to vector<8x896xf32>
    %39 = arith.addf %36, %38 : vector<8x896xf32>
    %40 = arith.negf %39 : vector<8x896xf32>
    %41 = math.exp %40 : vector<8x896xf32>
    %cst_23 = arith.constant 1.000000e+00 : f32
    %42 = vector.broadcast %cst_23 : f32 to vector<8x896xf32>
    %43 = arith.addf %42, %41 : vector<8x896xf32>
    %44 = arith.divf %42, %43 : vector<8x896xf32>
    %45 = arith.truncf %44 : vector<8x896xf32> to vector<8x896xbf16>
    %c0_24 = arith.constant 0 : index
    %c0_25 = arith.constant 0 : index
    %46 = vector.load %arg11[%c0_24, %c0_25] : memref<896x1792xi8, #tpu.memory_space<vmem>>, vector<896x1792xi8>
    %47 = arith.sitofp %46 : vector<896x1792xi8> to vector<896x1792xbf16>
    %cst_26 = arith.constant dense<0.000000e+00> : vector<8x1792xf32>
    %48 = tpu.matmul %45, %47, %cst_26 {dimension_numbers = #tpu.dot_dimension_numbers<[1], [0], [0], [1], [0, 0, 1, 1], [], []>} : vector<8x896xbf16>, vector<896x1792xbf16>, vector<8x1792xf32> -> vector<8x1792xf32>
    %c0_27 = arith.constant 0 : index
    %c0_28 = arith.constant 0 : index
    %49 = vector.load %arg12[%c0_27, %c0_28] : memref<1x1792xf32, #tpu.memory_space<vmem>>, vector<1x1792xf32>
    %50 = vector.broadcast %49 : vector<1x1792xf32> to vector<8x1792xf32>
    %51 = arith.mulf %48, %50 : vector<8x1792xf32>
    %c0_29 = arith.constant 0 : index
    %c0_30 = arith.constant 0 : index
    %52 = vector.load %arg13[%c0_29, %c0_30] : memref<1x1792xf32, #tpu.memory_space<vmem>>, vector<1x1792xf32>
    %53 = vector.broadcast %52 : vector<1x1792xf32> to vector<8x1792xf32>
    %54 = arith.addf %51, %53 : vector<8x1792xf32>
    %c0_31 = arith.constant 0 : index
    %c0_32 = arith.constant 0 : index
    %55 = vector.load %arg14[%c0_31, %c0_32] : memref<8x1792xf32, #tpu.memory_space<vmem>>, vector<8x1792xf32>
    tpu.vector_store %arg14[%c0_31, %c0_32], %54 {strides = array<i32>} : memref<8x1792xf32, #tpu.memory_space<vmem>>, vector<8x1792xf32>,
    return
  }
  func.func @transform_0(%arg0: i32) -> (i32, i32) {
    %c0_i32 = arith.constant 0 : i32
    %c0_i32_0 = arith.constant 0 : i32
    return %arg0, %c0_i32 : i32, i32
  }
  func.func @transform_1(%arg0: i32) -> (i32, i32) {
    %c0_i32 = arith.constant 0 : i32
    %c0_i32_0 = arith.constant 0 : i32
    %c0_i32_1 = arith.constant 0 : i32
    return %c0_i32, %c0_i32_0 : i32, i32
  }
  func.func @transform_2(%arg0: i32) -> (i32, i32) {
    %c0_i32 = arith.constant 0 : i32
    %c0_i32_0 = arith.constant 0 : i32
    %c0_i32_1 = arith.constant 0 : i32
    return %c0_i32, %c0_i32_0 : i32, i32
  }
  func.func @transform_3(%arg0: i32) -> (i32, i32) {
    %c0_i32 = arith.constant 0 : i32
    %c0_i32_0 = arith.constant 0 : i32
    %c0_i32_1 = arith.constant 0 : i32
    return %c0_i32, %c0_i32_0 : i32, i32
  }
  func.func @transform_4(%arg0: i32) -> (i32, i32) {
    %c0_i32 = arith.constant 0 : i32
    %c0_i32_0 = arith.constant 0 : i32
    %c0_i32_1 = arith.constant 0 : i32
    return %c0_i32, %c0_i32_0 : i32, i32
  }
  func.func @transform_5(%arg0: i32) -> (i32, i32) {
    %c0_i32 = arith.constant 0 : i32
    %c0_i32_0 = arith.constant 0 : i32
    %c0_i32_1 = arith.constant 0 : i32
    return %c0_i32, %c0_i32_0 : i32, i32
  }
  func.func @transform_6(%arg0: i32) -> (i32, i32) {
    %c0_i32 = arith.constant 0 : i32
    %c0_i32_0 = arith.constant 0 : i32
    %c0_i32_1 = arith.constant 0 : i32
    return %c0_i32, %c0_i32_0 : i32, i32
  }
  func.func @transform_7(%arg0: i32) -> (i32, i32) {
    %c0_i32 = arith.constant 0 : i32
    %c0_i32_0 = arith.constant 0 : i32
    %c0_i32_1 = arith.constant 0 : i32
    return %c0_i32, %c0_i32_0 : i32, i32
  }
  func.func @transform_8(%arg0: i32) -> (i32, i32) {
    %c0_i32 = arith.constant 0 : i32
    %c0_i32_0 = arith.constant 0 : i32
    %c0_i32_1 = arith.constant 0 : i32
    return %c0_i32, %c0_i32_0 : i32, i32
  }
  func.func @transform_9(%arg0: i32) -> (i32, i32) {
    %c0_i32 = arith.constant 0 : i32
    %c0_i32_0 = arith.constant 0 : i32
    %c0_i32_1 = arith.constant 0 : i32
    return %c0_i32, %c0_i32_0 : i32, i32
  }
  func.func @transform_10(%arg0: i32) -> (i32, i32) {
    %c0_i32 = arith.constant 0 : i32
    %c0_i32_0 = arith.constant 0 : i32
    %c0_i32_1 = arith.constant 0 : i32
    return %c0_i32, %c0_i32_0 : i32, i32
  }
  func.func @transform_11(%arg0: i32) -> (i32, i32) {
    %c0_i32 = arith.constant 0 : i32
    %c0_i32_0 = arith.constant 0 : i32
    %c0_i32_1 = arith.constant 0 : i32
    return %c0_i32, %c0_i32_0 : i32, i32
  }
  func.func @transform_12(%arg0: i32) -> (i32, i32) {
    %c0_i32 = arith.constant 0 : i32
    %c0_i32_0 = arith.constant 0 : i32
    %c0_i32_1 = arith.constant 0 : i32
    return %c0_i32, %c0_i32_0 : i32, i32
  }
  func.func @transform_13(%arg0: i32) -> (i32, i32) {
    %c0_i32 = arith.constant 0 : i32
    %c0_i32_0 = arith.constant 0 : i32
    return %arg0, %c0_i32 : i32, i32
  }
}

</mosaic_0001>

<llo_original>
// kernel: sae_forward.1
$region0: #{sae_forward.1}
  #allocation0 [shape = 'u32[]', space=smem, size = 0x4, offset = 0x4, fixed_abs, tag = 'smem constant byte address 0x4 - core index']
  #allocation1 [shape = 'u32[144,128]{1,0:T(1,128)}', space=vmem, size = 0x12000, scoped, tag = 'internal scratch']
  %s0 = inlined_call_operand.vmem [shape: bf16[8,1792], index: 0, kind: input, shape index: {}]
  %s1 = inlined_call_operand.hbm [shape: s8[1792,896], index: 1, kind: input, shape index: {}]
  %s2 = inlined_call_operand.hbm [shape: f32[1,896], index: 2, kind: input, shape index: {}]
  %s3 = inlined_call_operand.hbm [shape: f32[1,896], index: 3, kind: input, shape index: {}]
  %s4 = inlined_call_operand.hbm [shape: s8[896,512], index: 4, kind: input, shape index: {}]
  %s5 = inlined_call_operand.hbm [shape: f32[1,512], index: 5, kind: input, shape index: {}]
  %s6 = inlined_call_operand.hbm [shape: f32[1,512], index: 6, kind: input, shape index: {}]
  %s7 = inlined_call_operand.hbm [shape: s8[512,896], index: 7, kind: input, shape index: {}]
  %s8 = inlined_call_operand.hbm [shape: f32[1,896], index: 8, kind: input, shape index: {}]
  %s9 = inlined_call_operand.hbm [shape: f32[1,896], index: 9, kind: input, shape index: {}]
  %s10 = inlined_call_operand.hbm [shape: s8[896,1792], index: 10, kind: input, shape index: {}]
  %s11 = inlined_call_operand.hbm [shape: f32[1,1792], index: 11, kind: input, shape index: {}]
  %s12 = inlined_call_operand.hbm [shape: f32[1,1792], index: 12, kind: input, shape index: {}]
  %s13 = inlined_call_operand.vmem [shape: f32[8,1792], index: 13, kind: output, shape index: {}]
  %s14 = sld [smem:[#allocation0]]
  $region110: #{sae_forward.1} parent=0
    _
  %s16 = ssub.s32 1, %s14
  %s17 = scalar_select 0, %s16, %s14
  $region1: #{sae_forward.1} parent=0
    #allocation2 [shape = 'u8[1605632]{0}', space=vmem, size = 0x188000, scoped, tag = 'input window, operand 1, single buffered']
    #allocation3 [shape = 's32[1]{0}', space=sflag, size = 0x4, scoped, tag = 'scoped memory for sae_forward.1']
    #allocation4 [shape = 'u8[3584]{0}', space=vmem, size = 0x1000, scoped, tag = 'input window, operand 2, single buffered']
    #allocation5 [shape = 's32[1]{0}', space=sflag, size = 0x4, scoped, tag = 'scoped memory for sae_forward.1']
    #allocation6 [shape = 'u8[3584]{0}', space=vmem, size = 0x1000, scoped, tag = 'input window, operand 3, single buffered']
    #allocation7 [shape = 'u8[458752]{0}', space=vmem, size = 0x70000, scoped, tag = 'input window, operand 4, single buffered']
    #allocation8 [shape = 's32[1]{0}', space=sflag, size = 0x4, scoped, tag = 'scoped memory for sae_forward.1']
    #allocation9 [shape = 'u8[2048]{0}', space=vmem, size = 0x800, scoped, tag = 'input window, operand 5, single buffered']
    #allocation10 [shape = 'u8[2048]{0}', space=vmem, size = 0x800, scoped, tag = 'input window, operand 6, single buffered']
    #allocation11 [shape = 's32[1]{0}', space=sflag, size = 0x4, scoped, tag = 'scoped memory for sae_forward.1']
    #allocation12 [shape = 'u8[458752]{0}', space=vmem, size = 0x70000, scoped, tag = 'input window, operand 7, single buffered']
    #allocation13 [shape = 'u8[3584]{0}', space=vmem, size = 0x1000, scoped, tag = 'input window, operand 8, single buffered']
    #allocation14 [shape = 's32[1]{0}', space=sflag, size = 0x4, scoped, tag = 'scoped memory for sae_forward.1']
    #allocation15 [shape = 'u8[3584]{0}', space=vmem, size = 0x1000, scoped, tag = 'input window, operand 9, single buffered']
    #allocation16 [shape = 'u8[1605632]{0}', space=vmem, size = 0x188000, scoped, tag = 'input window, operand 10, single buffered']
    #allocation17 [shape = 's32[1]{0}', space=sflag, size = 0x4, scoped, tag = 'scoped memory for sae_forward.1']
    #allocation18 [shape = 'u8[7168]{0}', space=vmem, size = 0x1c00, scoped, tag = 'input window, operand 11, single buffered']
    #allocation19 [shape = 'u8[7168]{0}', space=vmem, size = 0x1c00, scoped, tag = 'input window, operand 12, single buffered']
    #allocation20 [shape = 's32[1]{0}', space=sflag, size = 0x4, scoped, tag = 'scoped memory for sae_forward.1']
    %18 = vsyncpa [#allocation3], 0
    %19 = vsyncpa [#allocation5], 0
    %20 = vsyncpa [#allocation8], 0
    %21 = vsyncpa [#allocation11], 0
    %22 = vsyncpa [#allocation14], 0
    %23 = vsyncpa [#allocation17], 0
    %24 = vsyncpa [#allocation20], 0
    // Predicated region
    $region2: #{sae_forward.1} parent=1 // pred_check
      _
    $region3: #{sae_forward.1} parent=1 // pred_check_branch
      %26 = sbr.rel (0) target = $region5
    $region4: #{sae_forward.1} parent=1 // pred_region
      _
    $region5: #{sae_forward.1} parent=1 // pred_fallthru
      _
    // Predicated region
    $region6: #{sae_forward.1} parent=1 // pred_check
      _
    $region7: #{sae_forward.1} parent=1 // pred_check_branch
      %28 = sbr.rel (0) target = $region9
    $region8: #{sae_forward.1} parent=1 // pred_region
      %s30 = ssub.s32 50176, 50176
      %31 = vsyncadd [#allocation3], %s30
      %s32 = sshll.u32 [#allocation2], 4
      %s33 = int_to_ptr.vmem [resolvable:$true] %s32
      %38 = dma.hbm_to_vmem [thread:$0]  %s1, 50176, %s33, [#allocation3], 896, 896, 56
    $region9: #{sae_forward.1} parent=1 // pred_fallthru
      _
    // Predicated region
    $region10: #{sae_forward.1} parent=1 // pred_check
      _
    $region11: #{sae_forward.1} parent=1 // pred_check_branch
      %40 = sbr.rel (0) target = $region13
    $region12: #{sae_forward.1} parent=1 // pred_region
      %s42 = ssub.s32 112, 112
      %43 = vsyncadd [#allocation5], %s42
      %s45 = sshll.u32 [#allocation4], 4
      %s46 = int_to_ptr.vmem [resolvable:$true] %s45
      %48 = dma.hbm_to_vmem [thread:$0]  %s2, 112, %s46, [#allocation5]
    $region13: #{sae_forward.1} parent=1 // pred_fallthru
      _
    // Predicated region
    $region14: #{sae_forward.1} parent=1 // pred_check
      _
    $region15: #{sae_forward.1} parent=1 // pred_check_branch
      %50 = sbr.rel (0) target = $region17
    $region16: #{sae_forward.1} parent=1 // pred_region
      %s52 = ssub.s32 112, 112
      %53 = vsyncadd [#allocation5], %s52
      %s55 = sshll.u32 [#allocation6], 4
      %s56 = int_to_ptr.vmem [resolvable:$true] %s55
      %58 = dma.hbm_to_vmem [thread:$0]  %s3, 112, %s56, [#allocation5]
    $region17: #{sae_forward.1} parent=1 // pred_fallthru
      _
    // Predicated region
    $region18: #{sae_forward.1} parent=1 // pred_check
      _
    $region19: #{sae_forward.1} parent=1 // pred_check_branch
      %60 = sbr.rel (0) target = $region21
    $region20: #{sae_forward.1} parent=1 // pred_region
      %s62 = ssub.s32 14336, 14336
      %63 = vsyncadd [#allocation8], %s62
      %s64 = sshll.u32 [#allocation7], 4
      %s65 = int_to_ptr.vmem [resolvable:$true] %s64
      %70 = dma.hbm_to_vmem [thread:$0]  %s4, 14336, %s65, [#allocation8], 512, 512, 32
    $region21: #{sae_forward.1} parent=1 // pred_fallthru
      _
    // Predicated region
    $region22: #{sae_forward.1} parent=1 // pred_check
      _
    $region23: #{sae_forward.1} parent=1 // pred_check_branch
      %72 = sbr.rel (0) target = $region25
    $region24: #{sae_forward.1} parent=1 // pred_region
      %s74 = ssub.s32 64, 64
      %75 = vsyncadd [#allocation8], %s74
      %s77 = sshll.u32 [#allocation9], 4
      %s78 = int_to_ptr.vmem [resolvable:$true] %s77
      %80 = dma.hbm_to_vmem [thread:$0]  %s5, 64, %s78, [#allocation8]
    $region25: #{sae_forward.1} parent=1 // pred_fallthru
      _
    // Predicated region
    $region26: #{sae_forward.1} parent=1 // pred_check
      _
    $region27: #{sae_forward.1} parent=1 // pred_check_branch
      %82 = sbr.rel (0) target = $region29
    $region28: #{sae_forward.1} parent=1 // pred_region
      %s84 = ssub.s32 64, 64
      %85 = vsyncadd [#allocation11], %s84
      %s87 = sshll.u32 [#allocation10], 4
      %s88 = int_to_ptr.vmem [resolvable:$true] %s87
      %90 = dma.hbm_to_vmem [thread:$0]  %s6, 64, %s88, [#allocation11]
    $region29: #{sae_forward.1} parent=1 // pred_fallthru
      _
    // Predicated region
    $region30: #{sae_forward.1} parent=1 // pred_check
      _
    $region31: #{sae_forward.1} parent=1 // pred_check_branch
      %92 = sbr.rel (0) target = $region33
    $region32: #{sae_forward.1} parent=1 // pred_region
      %s94 = ssub.s32 14336, 14336
      %95 = vsyncadd [#allocation11], %s94
      %s96 = sshll.u32 [#allocation12], 4
      %s97 = int_to_ptr.vmem [resolvable:$true] %s96
      %102 = dma.hbm_to_vmem [thread:$0]  %s7, 14336, %s97, [#allocation11], 896, 896, 56
    $region33: #{sae_forward.1} parent=1 // pred_fallthru
      _
    // Predicated region
    $region34: #{sae_forward.1} parent=1 // pred_check
      _
    $region35: #{sae_forward.1} parent=1 // pred_check_branch
      %104 = sbr.rel (0) target = $region37
    $region36: #{sae_forward.1} parent=1 // pred_region
      %s106 = ssub.s32 112, 112
      %107 = vsyncadd [#allocation14], %s106
      %s109 = sshll.u32 [#allocation13], 4
      %s110 = int_to_ptr.vmem [resolvable:$true] %s109
      %112 = dma.hbm_to_vmem [thread:$0]  %s8, 112, %s110, [#allocation14]
    $region37: #{sae_forward.1} parent=1 // pred_fallthru
      _
    // Predicated region
    $region38: #{sae_forward.1} parent=1 // pred_check
      _
    $region39: #{sae_forward.1} parent=1 // pred_check_branch
      %114 = sbr.rel (0) target = $region41
    $region40: #{sae_forward.1} parent=1 // pred_region
      %s116 = ssub.s32 112, 112
      %117 = vsyncadd [#allocation14], %s116
      %s119 = sshll.u32 [#allocation15], 4
      %s120 = int_to_ptr.vmem [resolvable:$true] %s119
      %122 = dma.hbm_to_vmem [thread:$0]  %s9, 112, %s120, [#allocation14]
    $region41: #{sae_forward.1} parent=1 // pred_fallthru
      _
    // Predicated region
    $region42: #{sae_forward.1} parent=1 // pred_check
      _
    $region43: #{sae_forward.1} parent=1 // pred_check_branch
      %124 = sbr.rel (0) target = $region45
    $region44: #{sae_forward.1} parent=1 // pred_region
      %s126 = ssub.s32 50176, 50176
      %127 = vsyncadd [#allocation17], %s126
      %s128 = sshll.u32 [#allocation16], 4
      %s129 = int_to_ptr.vmem [resolvable:$true] %s128
      %134 = dma.hbm_to_vmem [thread:$0]  %s10, 50176, %s129, [#allocation17], 1792, 1792, 112
    $region45: #{sae_forward.1} parent=1 // pred_fallthru
      _
    // Predicated region
    $region46: #{sae_forward.1} parent=1 // pred_check
      _
    $region47: #{sae_forward.1} parent=1 // pred_check_branch
      %136 = sbr.rel (0) target = $region49
    $region48: #{sae_forward.1} parent=1 // pred_region
      %s138 = ssub.s32 224, 224
      %139 = vsyncadd [#allocation17], %s138
      %s141 = sshll.u32 [#allocation18], 4
      %s142 = int_to_ptr.vmem [resolvable:$true] %s141
      %144 = dma.hbm_to_vmem [thread:$0]  %s11, 224, %s142, [#allocation17]
    $region49: #{sae_forward.1} parent=1 // pred_fallthru
      _
    // Predicated region
    $region50: #{sae_forward.1} parent=1 // pred_check
      _
    $region51: #{sae_forward.1} parent=1 // pred_check_branch
      %146 = sbr.rel (0) target = $region53
    $region52: #{sae_forward.1} parent=1 // pred_region
      %s148 = ssub.s32 224, 224
      %149 = vsyncadd [#allocation20], %s148
      %s151 = sshll.u32 [#allocation19], 4
      %s152 = int_to_ptr.vmem [resolvable:$true] %s151
      %154 = dma.hbm_to_vmem [thread:$0]  %s12, 224, %s152, [#allocation20]
    $region53: #{sae_forward.1} parent=1 // pred_fallthru
      _
    // Predicated region
    $region54: #{sae_forward.1} parent=1 // pred_check
      _
    $region55: #{sae_forward.1} parent=1 // pred_check_branch
      %156 = sbr.rel (0) target = $region57
    $region56: #{sae_forward.1} parent=1 // pred_region
      %157 = dma.done [#allocation3], 50176
    $region57: #{sae_forward.1} parent=1 // pred_fallthru
      _
    // Predicated region
    $region58: #{sae_forward.1} parent=1 // pred_check
      _
    $region59: #{sae_forward.1} parent=1 // pred_check_branch
      %159 = sbr.rel (0) target = $region61
    $region60: #{sae_forward.1} parent=1 // pred_region
      %160 = dma.done [#allocation5], 112
    $region61: #{sae_forward.1} parent=1 // pred_fallthru
      _
    // Predicated region
    $region62: #{sae_forward.1} parent=1 // pred_check
      _
    $region63: #{sae_forward.1} parent=1 // pred_check_branch
      %162 = sbr.rel (0) target = $region65
    $region64: #{sae_forward.1} parent=1 // pred_region
      %163 = dma.done [#allocation5], 112
    $region65: #{sae_forward.1} parent=1 // pred_fallthru
      _
    // Predicated region
    $region66: #{sae_forward.1} parent=1 // pred_check
      _
    $region67: #{sae_forward.1} parent=1 // pred_check_branch
      %165 = sbr.rel (0) target = $region69
    $region68: #{sae_forward.1} parent=1 // pred_region
      %166 = dma.done [#allocation8], 14336
    $region69: #{sae_forward.1} parent=1 // pred_fallthru
      _
    // Predicated region
    $region70: #{sae_forward.1} parent=1 // pred_check
      _
    $region71: #{sae_forward.1} parent=1 // pred_check_branch
      %168 = sbr.rel (0) target = $region73
    $region72: #{sae_forward.1} parent=1 // pred_region
      %169 = dma.done [#allocation8], 64
    $region73: #{sae_forward.1} parent=1 // pred_fallthru
      _
    // Predicated region
    $region74: #{sae_forward.1} parent=1 // pred_check
      _
    $region75: #{sae_forward.1} parent=1 // pred_check_branch
      %171 = sbr.rel (0) target = $region77
    $region76: #{sae_forward.1} parent=1 // pred_region
      %172 = dma.done [#allocation11], 64
    $region77: #{sae_forward.1} parent=1 // pred_fallthru
      _
    // Predicated region
    $region78: #{sae_forward.1} parent=1 // pred_check
      _
    $region79: #{sae_forward.1} parent=1 // pred_check_branch
      %174 = sbr.rel (0) target = $region81
    $region80: #{sae_forward.1} parent=1 // pred_region
      %175 = dma.done [#allocation11], 14336
    $region81: #{sae_forward.1} parent=1 // pred_fallthru
      _
    // Predicated region
    $region82: #{sae_forward.1} parent=1 // pred_check
      _
    $region83: #{sae_forward.1} parent=1 // pred_check_branch
      %177 = sbr.rel (0) target = $region85
    $region84: #{sae_forward.1} parent=1 // pred_region
      %178 = dma.done [#allocation14], 112
    $region85: #{sae_forward.1} parent=1 // pred_fallthru
      _
    // Predicated region
    $region86: #{sae_forward.1} parent=1 // pred_check
      _
    $region87: #{sae_forward.1} parent=1 // pred_check_branch
      %180 = sbr.rel (0) target = $region89
    $region88: #{sae_forward.1} parent=1 // pred_region
      %181 = dma.done [#allocation14], 112
    $region89: #{sae_forward.1} parent=1 // pred_fallthru
      _
    // Predicated region
    $region90: #{sae_forward.1} parent=1 // pred_check
      _
    $region91: #{sae_forward.1} parent=1 // pred_check_branch
      %183 = sbr.rel (0) target = $region93
    $region92: #{sae_forward.1} parent=1 // pred_region
      %184 = dma.done [#allocation17], 50176
    $region93: #{sae_forward.1} parent=1 // pred_fallthru
      _
    // Predicated region
    $region94: #{sae_forward.1} parent=1 // pred_check
      _
    $region95: #{sae_forward.1} parent=1 // pred_check_branch
      %186 = sbr.rel (0) target = $region97
    $region96: #{sae_forward.1} parent=1 // pred_region
      %187 = dma.done [#allocation17], 224
    $region97: #{sae_forward.1} parent=1 // pred_fallthru
      _
    // Predicated region
    $region98: #{sae_forward.1} parent=1 // pred_check
      _
    $region99: #{sae_forward.1} parent=1 // pred_check_branch
      %189 = sbr.rel (0) target = $region101
    $region100: #{sae_forward.1} parent=1 // pred_region
      %190 = dma.done [#allocation20], 224
    $region101: #{sae_forward.1} parent=1 // pred_fallthru
      _
    %v192 = vld [vmem:[%s0] sm:$0xff]
    %v193 = vld [vmem:[%s0 + $0x8] sm:$0xff]
    %v194 = vld [vmem:[%s0 + $0x10] sm:$0xff]
    %v195 = vld [vmem:[%s0 + $0x18] sm:$0xff]
    %v196 = vld [vmem:[%s0 + $0x20] sm:$0xff]
    %v197 = vld [vmem:[%s0 + $0x28] sm:$0xff]
    %v198 = vld [vmem:[%s0 + $0x30] sm:$0xff]
    %v199 = vld [vmem:[#allocation2] sm:$0xff]
    %v200 = vld [vmem:[#allocation2 + $0x8] sm:$0xff]
    %v201 = vld [vmem:[#allocation2 + $0x10] sm:$0xff]
    %v202 = vld [vmem:[#allocation2 + $0x18] sm:$0xff]
    %v203 = vld [vmem:[#allocation2 + $0x20] sm:$0xff]
    %v204 = vld [vmem:[#allocation2 + $0x28] sm:$0xff]
    %v205 = vld [vmem:[#allocation2 + $0x30] sm:$0xff]
    %v206 = vld [vmem:[#allocation2 + $0x38] sm:$0xff]
    %v207 = vld [vmem:[#allocation2 + $0x40] sm:$0xff]
    %v208 = vld [vmem:[#allocation2 + $0x48] sm:$0xff]
    %v209 = vld [vmem:[#allocation2 + $0x50] sm:$0xff]
    %v210 = vld [vmem:[#allocation2 + $0x58] sm:$0xff]
    %v211 = vld [vmem:[#allocation2 + $0x60] sm:$0xff]
    %v212 = vld [vmem:[#allocation2 + $0x68] sm:$0xff]
    %v213 = vld [vmem:[#allocation2 + $0x70] sm:$0xff]
    %v214 = vld [vmem:[#allocation2 + $0x78] sm:$0xff]
    %v215 = vld [vmem:[#allocation2 + $0x80] sm:$0xff]
    %v216 = vld [vmem:[#allocation2 + $0x88] sm:$0xff]
    %v217 = vld [vmem:[#allocation2 + $0x90] sm:$0xff]
    %v218 = vld [vmem:[#allocation2 + $0x98] sm:$0xff]
    %v219 = vld [vmem:[#allocation2 + $0xa0] sm:$0xff]
    %v220 = vld [vmem:[#allocation2 + $0xa8] sm:$0xff]
    %v221 = vld [vmem:[#allocation2 + $0xb0] sm:$0xff]
    %v222 = vld [vmem:[#allocation2 + $0xb8] sm:$0xff]
    %v223 = vld [vmem:[#allocation2 + $0xc0] sm:$0xff]
    %v224 = vld [vmem:[#allocation2 + $0xc8] sm:$0xff]
    %v225 = vld [vmem:[#allocation2 + $0xd0] sm:$0xff]
    %v226 = vld [vmem:[#allocation2 + $0xd8] sm:$0xff]
    %v227 = vld [vmem:[#allocation2 + $0xe0] sm:$0xff]
    %v228 = vld [vmem:[#allocation2 + $0xe8] sm:$0xff]
    %v229 = vld [vmem:[#allocation2 + $0xf0] sm:$0xff]
    %v230 = vld [vmem:[#allocation2 + $0xf8] sm:$0xff]
    %v231 = vld [vmem:[#allocation2 + $0x100] sm:$0xff]
    %v232 = vld [vmem:[#allocation2 + $0x108] sm:$0xff]
    %v233 = vld [vmem:[#allocation2 + $0x110] sm:$0xff]
    %v234 = vld [vmem:[#allocation2 + $0x118] sm:$0xff]
    %v235 = vld [vmem:[#allocation2 + $0x120] sm:$0xff]
    %v236 = vld [vmem:[#allocation2 + $0x128] sm:$0xff]
    %v237 = vld [vmem:[#allocation2 + $0x130] sm:$0xff]
    %v238 = vld [vmem:[#allocation2 + $0x138] sm:$0xff]
    %v239 = vld [vmem:[#allocation2 + $0x140] sm:$0xff]
    %v240 = vld [vmem:[#allocation2 + $0x148] sm:$0xff]
    %v241 = vld [vmem:[#allocation2 + $0x150] sm:$0xff]
    %v242 = vld [vmem:[#allocation2 + $0x158] sm:$0xff]
    %v243 = vld [vmem:[#allocation2 + $0x160] sm:$0xff]
    %v244 = vld [vmem:[#allocation2 + $0x168] sm:$0xff]
    %v245 = vld [vmem:[#allocation2 + $0x170] sm:$0xff]
    %v246 = vld [vmem:[#allocation2 + $0x178] sm:$0xff]
    %v247 = vld [vmem:[#allocation2 + $0x180] sm:$0xff]
    %v248 = vld [vmem:[#allocation2 + $0x188] sm:$0xff]
    %v249 = vld [vmem:[#allocation2 + $0x190] sm:$0xff]
    %v250 = vld [vmem:[#allocation2 + $0x198] sm:$0xff]
    %v251 = vld [vmem:[#allocation2 + $0x1a0] sm:$0xff]
    %v252 = vld [vmem:[#allocation2 + $0x1a8] sm:$0xff]
    %v253 = vld [vmem:[#allocation2 + $0x1b0] sm:$0xff]
    %v254 = vld [vmem:[#allocation2 + $0x1b8] sm:$0xff]
    %v255 = vld [vmem:[#allocation2 + $0x1c0] sm:$0xff]
    %v256 = vld [vmem:[#allocation2 + $0x1c8] sm:$0xff]
    %v257 = vld [vmem:[#allocation2 + $0x1d0] sm:$0xff]
    %v258 = vld [vmem:[#allocation2 + $0x1d8] sm:$0xff]
    %v259 = vld [vmem:[#allocation2 + $0x1e0] sm:$0xff]
    %v260 = vld [vmem:[#allocation2 + $0x1e8] sm:$0xff]
    %v261 = vld [vmem:[#allocation2 + $0x1f0] sm:$0xff]
    %v262 = vld [vmem:[#allocation2 + $0x1f8] sm:$0xff]
    %v263 = vld [vmem:[#allocation2 + $0x200] sm:$0xff]
    %v264 = vld [vmem:[#allocation2 + $0x208] sm:$0xff]
    %v265 = vld [vmem:[#allocation2 + $0x210] sm:$0xff]
    %v266 = vld [vmem:[#allocation2 + $0x218] sm:$0xff]
    %v267 = vld [vmem:[#allocation2 + $0x220] sm:$0xff]
    %v268 = vld [vmem:[#allocation2 + $0x228] sm:$0xff]
    %v269 = vld [vmem:[#allocation2 + $0x230] sm:$0xff]
    %v270 = vld [vmem:[#allocation2 + $0x238] sm:$0xff]
    %v271 = vld [vmem:[#allocation2 + $0x240] sm:$0xff]
    %v272 = vld [vmem:[#allocation2 + $0x248] sm:$0xff]
    %v273 = vld [vmem:[#allocation2 + $0x250] sm:$0xff]
    %v274 = vld [vmem:[#allocation2 + $0x258] sm:$0xff]
    %v275 = vld [vmem:[#allocation2 + $0x260] sm:$0xff]
    %v276 = vld [vmem:[#allocation2 + $0x268] sm:$0xff]
    %v277 = vld [vmem:[#allocation2 + $0x270] sm:$0xff]
    %v278 = vld [vmem:[#allocation2 + $0x278] sm:$0xff]
    %v279 = vld [vmem:[#allocation2 + $0x280] sm:$0xff]
    %v280 = vld [vmem:[#allocation2 + $0x288] sm:$0xff]
    %v281 = vld [vmem:[#allocation2 + $0x290] sm:$0xff]
    %v282 = vld [vmem:[#allocation2 + $0x298] sm:$0xff]
    %v283 = vld [vmem:[#allocation2 + $0x2a0] sm:$0xff]
    %v284 = vld [vmem:[#allocation2 + $0x2a8] sm:$0xff]
    %v285 = vld [vmem:[#allocation2 + $0x2b0] sm:$0xff]
    %v286 = vld [vmem:[#allocation2 + $0x2b8] sm:$0xff]
    %v287 = vld [vmem:[#allocation2 + $0x2c0] sm:$0xff]
    %v288 = vld [vmem:[#allocation2 + $0x2c8] sm:$0xff]
    %v289 = vld [vmem:[#allocation2 + $0x2d0] sm:$0xff]
    %v290 = vld [vmem:[#allocation2 + $0x2d8] sm:$0xff]
    %v291 = vld [vmem:[#allocation2 + $0x2e0] sm:$0xff]
    %v292 = vld [vmem:[#allocation2 + $0x2e8] sm:$0xff]
    %v293 = vld [vmem:[#allocation2 + $0x2f0] sm:$0xff]
    %v294 = vld [vmem:[#allocation2 + $0x2f8] sm:$0xff]
    %v295 = vld [vmem:[#allocation2 + $0x300] sm:$0xff]
    %v296 = vld [vmem:[#allocation2 + $0x308] sm:$0xff]
    %v297 = vld [vmem:[#allocation2 + $0x310] sm:$0xff]
    %v298 = vld [vmem:[#allocation2 + $0x318] sm:$0xff]
    %v299 = vld [vmem:[#allocation2 + $0x320] sm:$0xff]
    %v300 = vld [vmem:[#allocation2 + $0x328] sm:$0xff]
    %v301 = vld [vmem:[#allocation2 + $0x330] sm:$0xff]
    %v302 = vld [vmem:[#allocation2 + $0x338] sm:$0xff]
    %v303 = vld [vmem:[#allocation2 + $0x340] sm:$0xff]
    %v304 = vld [vmem:[#allocation2 + $0x348] sm:$0xff]
    %v305 = vld [vmem:[#allocation2 + $0x350] sm:$0xff]
    %v306 = vld [vmem:[#allocation2 + $0x358] sm:$0xff]
    %v307 = vld [vmem:[#allocation2 + $0x360] sm:$0xff]
    %v308 = vld [vmem:[#allocation2 + $0x368] sm:$0xff]
    %v309 = vld [vmem:[#allocation2 + $0x370] sm:$0xff]
    %v310 = vld [vmem:[#allocation2 + $0x378] sm:$0xff]
    %v311 = vld [vmem:[#allocation2 + $0x380] sm:$0xff]
    %v312 = vld [vmem:[#allocation2 + $0x388] sm:$0xff]
    %v313 = vld [vmem:[#allocation2 + $0x390] sm:$0xff]
    %v314 = vld [vmem:[#allocation2 + $0x398] sm:$0xff]
    %v315 = vld [vmem:[#allocation2 + $0x3a0] sm:$0xff]
    %v316 = vld [vmem:[#allocation2 + $0x3a8] sm:$0xff]
    %v317 = vld [vmem:[#allocation2 + $0x3b0] sm:$0xff]
    %v318 = vld [vmem:[#allocation2 + $0x3b8] sm:$0xff]
    %v319 = vld [vmem:[#allocation2 + $0x3c0] sm:$0xff]
    %v320 = vld [vmem:[#allocation2 + $0x3c8] sm:$0xff]
    %v321 = vld [vmem:[#allocation2 + $0x3d0] sm:$0xff]
    %v322 = vld [vmem:[#allocation2 + $0x3d8] sm:$0xff]
    %v323 = vld [vmem:[#allocation2 + $0x3e0] sm:$0xff]
    %v324 = vld [vmem:[#allocation2 + $0x3e8] sm:$0xff]
    %v325 = vld [vmem:[#allocation2 + $0x3f0] sm:$0xff]
    %v326 = vld [vmem:[#allocation2 + $0x3f8] sm:$0xff]
    %v327 = vld [vmem:[#allocation2 + $0x400] sm:$0xff]
    %v328 = vld [vmem:[#allocation2 + $0x408] sm:$0xff]
    %v329 = vld [vmem:[#allocation2 + $0x410] sm:$0xff]
    %v330 = vld [vmem:[#allocation2 + $0x418] sm:$0xff]
    %v331 = vld [vmem:[#allocation2 + $0x420] sm:$0xff]
    %v332 = vld [vmem:[#allocation2 + $0x428] sm:$0xff]
    %v333 = vld [vmem:[#allocation2 + $0x430] sm:$0xff]
    %v334 = vld [vmem:[#allocation2 + $0x438] sm:$0xff]
    %v335 = vld [vmem:[#allocation2 + $0x440] sm:$0xff]
    %v336 = vld [vmem:[#allocation2 + $0x448] sm:$0xff]
    %v337 = vld [vmem:[#allocation2 + $0x450] sm:$0xff]
    %v338 = vld [vmem:[#allocation2 + $0x458] sm:$0xff]
    %v339 = vld [vmem:[#allocation2 + $0x460] sm:$0xff]
    %v340 = vld [vmem:[#allocation2 + $0x468] sm:$0xff]
    %v341 = vld [vmem:[#allocation2 + $0x470] sm:$0xff]
    %v342 = vld [vmem:[#allocation2 + $0x478] sm:$0xff]
    %v343 = vld [vmem:[#allocation2 + $0x480] sm:$0xff]
    %v344 = vld [vmem:[#allocation2 + $0x488] sm:$0xff]
    %v345 = vld [vmem:[#allocation2 + $0x490] sm:$0xff]
    %v346 = vld [vmem:[#allocation2 + $0x498] sm:$0xff]
    %v347 = vld [vmem:[#allocation2 + $0x4a0] sm:$0xff]
    %v348 = vld [vmem:[#allocation2 + $0x4a8] sm:$0xff]
    %v349 = vld [vmem:[#allocation2 + $0x4b0] sm:$0xff]
    %v350 = vld [vmem:[#allocation2 + $0x4b8] sm:$0xff]
    %v351 = vld [vmem:[#allocation2 + $0x4c0] sm:$0xff]
    %v352 = vld [vmem:[#allocation2 + $0x4c8] sm:$0xff]
    %v353 = vld [vmem:[#allocation2 + $0x4d0] sm:$0xff]
    %v354 = vld [vmem:[#allocation2 + $0x4d8] sm:$0xff]
    %v355 = vld [vmem:[#allocation2 + $0x4e0] sm:$0xff]
    %v356 = vld [vmem:[#allocation2 + $0x4e8] sm:$0xff]
    %v357 = vld [vmem:[#allocation2 + $0x4f0] sm:$0xff]
    %v358 = vld [vmem:[#allocation2 + $0x4f8] sm:$0xff]
    %v359 = vld [vmem:[#allocation2 + $0x500] sm:$0xff]
    %v360 = vld [vmem:[#allocation2 + $0x508] sm:$0xff]
    %v361 = vld [vmem:[#allocation2 + $0x510] sm:$0xff]
    %v362 = vld [vmem:[#allocation2 + $0x518] sm:$0xff]
    %v363 = vld [vmem:[#allocation2 + $0x520] sm:$0xff]
    %v364 = vld [vmem:[#allocation2 + $0x528] sm:$0xff]
    %v365 = vld [vmem:[#allocation2 + $0x530] sm:$0xff]
    %v366 = vld [vmem:[#allocation2 + $0x538] sm:$0xff]
    %v367 = vld [vmem:[#allocation2 + $0x540] sm:$0xff]
    %v368 = vld [vmem:[#allocation2 + $0x548] sm:$0xff]
    %v369 = vld [vmem:[#allocation2 + $0x550] sm:$0xff]
    %v370 = vld [vmem:[#allocation2 + $0x558] sm:$0xff]
    %v371 = vld [vmem:[#allocation2 + $0x560] sm:$0xff]
    %v372 = vld [vmem:[#allocation2 + $0x568] sm:$0xff]
    %v373 = vld [vmem:[#allocation2 + $0x570] sm:$0xff]
    %v374 = vld [vmem:[#allocation2 + $0x578] sm:$0xff]
    %v375 = vld [vmem:[#allocation2 + $0x580] sm:$0xff]
    %v376 = vld [vmem:[#allocation2 + $0x588] sm:$0xff]
    %v377 = vld [vmem:[#allocation2 + $0x590] sm:$0xff]
    %v378 = vld [vmem:[#allocation2 + $0x598] sm:$0xff]
    %v379 = vld [vmem:[#allocation2 + $0x5a0] sm:$0xff]
    %v380 = vld [vmem:[#allocation2 + $0x5a8] sm:$0xff]
    %v381 = vld [vmem:[#allocation2 + $0x5b0] sm:$0xff]
    %v382 = vld [vmem:[#allocation2 + $0x5b8] sm:$0xff]
    %v383 = vld [vmem:[#allocation2 + $0x5c0] sm:$0xff]
    %v384 = vld [vmem:[#allocation2 + $0x5c8] sm:$0xff]
    %v385 = vld [vmem:[#allocation2 + $0x5d0] sm:$0xff]
    %v386 = vld [vmem:[#allocation2 + $0x5d8] sm:$0xff]
    %v387 = vld [vmem:[#allocation2 + $0x5e0] sm:$0xff]
    %v388 = vld [vmem:[#allocation2 + $0x5e8] sm:$0xff]
    %v389 = vld [vmem:[#allocation2 + $0x5f0] sm:$0xff]
    %v390 = vld [vmem:[#allocation2 + $0x5f8] sm:$0xff]
    %v391 = vld [vmem:[#allocation2 + $0x600] sm:$0xff]
    %v392 = vld [vmem:[#allocation2 + $0x608] sm:$0xff]
    %v393 = vld [vmem:[#allocation2 + $0x610] sm:$0xff]
    %v394 = vld [vmem:[#allocation2 + $0x618] sm:$0xff]
    %v395 = vld [vmem:[#allocation2 + $0x620] sm:$0xff]
    %v396 = vld [vmem:[#allocation2 + $0x628] sm:$0xff]
    %v397 = vld [vmem:[#allocation2 + $0x630] sm:$0xff]
    %v398 = vld [vmem:[#allocation2 + $0x638] sm:$0xff]
    %v399 = vld [vmem:[#allocation2 + $0x640] sm:$0xff]
    %v400 = vld [vmem:[#allocation2 + $0x648] sm:$0xff]
    %v401 = vld [vmem:[#allocation2 + $0x650] sm:$0xff]
    %v402 = vld [vmem:[#allocation2 + $0x658] sm:$0xff]
    %v403 = vld [vmem:[#allocation2 + $0x660] sm:$0xff]
    %v404 = vld [vmem:[#allocation2 + $0x668] sm:$0xff]
    %v405 = vld [vmem:[#allocation2 + $0x670] sm:$0xff]
    %v406 = vld [vmem:[#allocation2 + $0x678] sm:$0xff]
    %v407 = vld [vmem:[#allocation2 + $0x680] sm:$0xff]
    %v408 = vld [vmem:[#allocation2 + $0x688] sm:$0xff]
    %v409 = vld [vmem:[#allocation2 + $0x690] sm:$0xff]
    %v410 = vld [vmem:[#allocation2 + $0x698] sm:$0xff]
    %v411 = vld [vmem:[#allocation2 + $0x6a0] sm:$0xff]
    %v412 = vld [vmem:[#allocation2 + $0x6a8] sm:$0xff]
    %v413 = vld [vmem:[#allocation2 + $0x6b0] sm:$0xff]
    %v414 = vld [vmem:[#allocation2 + $0x6b8] sm:$0xff]
    %v415 = vld [vmem:[#allocation2 + $0x6c0] sm:$0xff]
    %v416 = vld [vmem:[#allocation2 + $0x6c8] sm:$0xff]
    %v417 = vld [vmem:[#allocation2 + $0x6d0] sm:$0xff]
    %v418 = vld [vmem:[#allocation2 + $0x6d8] sm:$0xff]
    %v419 = vld [vmem:[#allocation2 + $0x6e0] sm:$0xff]
    %v420 = vld [vmem:[#allocation2 + $0x6e8] sm:$0xff]
    %v421 = vld [vmem:[#allocation2 + $0x6f0] sm:$0xff]
    %v422 = vld [vmem:[#allocation2 + $0x6f8] sm:$0xff]
    %v423 = vld [vmem:[#allocation2 + $0x700] sm:$0xff]
    %v424 = vld [vmem:[#allocation2 + $0x708] sm:$0xff]
    %v425 = vld [vmem:[#allocation2 + $0x710] sm:$0xff]
    %v426 = vld [vmem:[#allocation2 + $0x718] sm:$0xff]
    %v427 = vld [vmem:[#allocation2 + $0x720] sm:$0xff]
    %v428 = vld [vmem:[#allocation2 + $0x728] sm:$0xff]
    %v429 = vld [vmem:[#allocation2 + $0x730] sm:$0xff]
    %v430 = vld [vmem:[#allocation2 + $0x738] sm:$0xff]
    %v431 = vld [vmem:[#allocation2 + $0x740] sm:$0xff]
    %v432 = vld [vmem:[#allocation2 + $0x748] sm:$0xff]
    %v433 = vld [vmem:[#allocation2 + $0x750] sm:$0xff]
    %v434 = vld [vmem:[#allocation2 + $0x758] sm:$0xff]
    %v435 = vld [vmem:[#allocation2 + $0x760] sm:$0xff]
    %v436 = vld [vmem:[#allocation2 + $0x768] sm:$0xff]
    %v437 = vld [vmem:[#allocation2 + $0x770] sm:$0xff]
    %v438 = vld [vmem:[#allocation2 + $0x778] sm:$0xff]
    %v439 = vld [vmem:[#allocation2 + $0x780] sm:$0xff]
    %v440 = vld [vmem:[#allocation2 + $0x788] sm:$0xff]
    %v441 = vld [vmem:[#allocation2 + $0x790] sm:$0xff]
    %v442 = vld [vmem:[#allocation2 + $0x798] sm:$0xff]
    %v443 = vld [vmem:[#allocation2 + $0x7a0] sm:$0xff]
    %v444 = vld [vmem:[#allocation2 + $0x7a8] sm:$0xff]
    %v445 = vld [vmem:[#allocation2 + $0x7b0] sm:$0xff]
    %v446 = vld [vmem:[#allocation2 + $0x7b8] sm:$0xff]
    %v447 = vld [vmem:[#allocation2 + $0x7c0] sm:$0xff]
    %v448 = vld [vmem:[#allocation2 + $0x7c8] sm:$0xff]
    %v449 = vld [vmem:[#allocation2 + $0x7d0] sm:$0xff]
    %v450 = vld [vmem:[#allocation2 + $0x7d8] sm:$0xff]
    %v451 = vld [vmem:[#allocation2 + $0x7e0] sm:$0xff]
    %v452 = vld [vmem:[#allocation2 + $0x7e8] sm:$0xff]
    %v453 = vld [vmem:[#allocation2 + $0x7f0] sm:$0xff]
    %v454 = vld [vmem:[#allocation2 + $0x7f8] sm:$0xff]
    %v455 = vld [vmem:[#allocation2 + $0x800] sm:$0xff]
    %v456 = vld [vmem:[#allocation2 + $0x808] sm:$0xff]
    %v457 = vld [vmem:[#allocation2 + $0x810] sm:$0xff]
    %v458 = vld [vmem:[#allocation2 + $0x818] sm:$0xff]
    %v459 = vld [vmem:[#allocation2 + $0x820] sm:$0xff]
    %v460 = vld [vmem:[#allocation2 + $0x828] sm:$0xff]
    %v461 = vld [vmem:[#allocation2 + $0x830] sm:$0xff]
    %v462 = vld [vmem:[#allocation2 + $0x838] sm:$0xff]
    %v463 = vld [vmem:[#allocation2 + $0x840] sm:$0xff]
    %v464 = vld [vmem:[#allocation2 + $0x848] sm:$0xff]
    %v465 = vld [vmem:[#allocation2 + $0x850] sm:$0xff]
    %v466 = vld [vmem:[#allocation2 + $0x858] sm:$0xff]
    %v467 = vld [vmem:[#allocation2 + $0x860] sm:$0xff]
    %v468 = vld [vmem:[#allocation2 + $0x868] sm:$0xff]
    %v469 = vld [vmem:[#allocation2 + $0x870] sm:$0xff]
    %v470 = vld [vmem:[#allocation2 + $0x878] sm:$0xff]
    %v471 = vld [vmem:[#allocation2 + $0x880] sm:$0xff]
    %v472 = vld [vmem:[#allocation2 + $0x888] sm:$0xff]
    %v473 = vld [vmem:[#allocation2 + $0x890] sm:$0xff]
    %v474 = vld [vmem:[#allocation2 + $0x898] sm:$0xff]
    %v475 = vld [vmem:[#allocation2 + $0x8a0] sm:$0xff]
    %v476 = vld [vmem:[#allocation2 + $0x8a8] sm:$0xff]
    %v477 = vld [vmem:[#allocation2 + $0x8b0] sm:$0xff]
    %v478 = vld [vmem:[#allocation2 + $0x8b8] sm:$0xff]
    %v479 = vld [vmem:[#allocation2 + $0x8c0] sm:$0xff]
    %v480 = vld [vmem:[#allocation2 + $0x8c8] sm:$0xff]
    %v481 = vld [vmem:[#allocation2 + $0x8d0] sm:$0xff]
    %v482 = vld [vmem:[#allocation2 + $0x8d8] sm:$0xff]
    %v483 = vld [vmem:[#allocation2 + $0x8e0] sm:$0xff]
    %v484 = vld [vmem:[#allocation2 + $0x8e8] sm:$0xff]
    %v485 = vld [vmem:[#allocation2 + $0x8f0] sm:$0xff]
    %v486 = vld [vmem:[#allocation2 + $0x8f8] sm:$0xff]
    %v487 = vld [vmem:[#allocation2 + $0x900] sm:$0xff]
    %v488 = vld [vmem:[#allocation2 + $0x908] sm:$0xff]
    %v489 = vld [vmem:[#allocation2 + $0x910] sm:$0xff]
    %v490 = vld [vmem:[#allocation2 + $0x918] sm:$0xff]
    %v491 = vld [vmem:[#allocation2 + $0x920] sm:$0xff]
    %v492 = vld [vmem:[#allocation2 + $0x928] sm:$0xff]
    %v493 = vld [vmem:[#allocation2 + $0x930] sm:$0xff]
    %v494 = vld [vmem:[#allocation2 + $0x938] sm:$0xff]
    %v495 = vld [vmem:[#allocation2 + $0x940] sm:$0xff]
    %v496 = vld [vmem:[#allocation2 + $0x948] sm:$0xff]
    %v497 = vld [vmem:[#allocation2 + $0x950] sm:$0xff]
    %v498 = vld [vmem:[#allocation2 + $0x958] sm:$0xff]
    %v499 = vld [vmem:[#allocation2 + $0x960] sm:$0xff]
    %v500 = vld [vmem:[#allocation2 + $0x968] sm:$0xff]
    %v501 = vld [vmem:[#allocation2 + $0x970] sm:$0xff]
    %v502 = vld [vmem:[#allocation2 + $0x978] sm:$0xff]
    %v503 = vld [vmem:[#allocation2 + $0x980] sm:$0xff]
    %v504 = vld [vmem:[#allocation2 + $0x988] sm:$0xff]
    %v505 = vld [vmem:[#allocation2 + $0x990] sm:$0xff]
    %v506 = vld [vmem:[#allocation2 + $0x998] sm:$0xff]
    %v507 = vld [vmem:[#allocation2 + $0x9a0] sm:$0xff]
    %v508 = vld [vmem:[#allocation2 + $0x9a8] sm:$0xff]
    %v509 = vld [vmem:[#allocation2 + $0x9b0] sm:$0xff]
    %v510 = vld [vmem:[#allocation2 + $0x9b8] sm:$0xff]
    %v511 = vld [vmem:[#allocation2 + $0x9c0] sm:$0xff]
    %v512 = vld [vmem:[#allocation2 + $0x9c8] sm:$0xff]
    %v513 = vld [vmem:[#allocation2 + $0x9d0] sm:$0xff]
    %v514 = vld [vmem:[#allocation2 + $0x9d8] sm:$0xff]
    %v515 = vld [vmem:[#allocation2 + $0x9e0] sm:$0xff]
    %v516 = vld [vmem:[#allocation2 + $0x9e8] sm:$0xff]
    %v517 = vld [vmem:[#allocation2 + $0x9f0] sm:$0xff]
    %v518 = vld [vmem:[#allocation2 + $0x9f8] sm:$0xff]
    %v519 = vld [vmem:[#allocation2 + $0xa00] sm:$0xff]
    %v520 = vld [vmem:[#allocation2 + $0xa08] sm:$0xff]
    %v521 = vld [vmem:[#allocation2 + $0xa10] sm:$0xff]
    %v522 = vld [vmem:[#allocation2 + $0xa18] sm:$0xff]
    %v523 = vld [vmem:[#allocation2 + $0xa20] sm:$0xff]
    %v524 = vld [vmem:[#allocation2 + $0xa28] sm:$0xff]
    %v525 = vld [vmem:[#allocation2 + $0xa30] sm:$0xff]
    %v526 = vld [vmem:[#allocation2 + $0xa38] sm:$0xff]
    %v527 = vld [vmem:[#allocation2 + $0xa40] sm:$0xff]
    %v528 = vld [vmem:[#allocation2 + $0xa48] sm:$0xff]
    %v529 = vld [vmem:[#allocation2 + $0xa50] sm:$0xff]
    %v530 = vld [vmem:[#allocation2 + $0xa58] sm:$0xff]
    %v531 = vld [vmem:[#allocation2 + $0xa60] sm:$0xff]
    %v532 = vld [vmem:[#allocation2 + $0xa68] sm:$0xff]
    %v533 = vld [vmem:[#allocation2 + $0xa70] sm:$0xff]
    %v534 = vld [vmem:[#allocation2 + $0xa78] sm:$0xff]
    %v535 = vld [vmem:[#allocation2 + $0xa80] sm:$0xff]
    %v536 = vld [vmem:[#allocation2 + $0xa88] sm:$0xff]
    %v537 = vld [vmem:[#allocation2 + $0xa90] sm:$0xff]
    %v538 = vld [vmem:[#allocation2 + $0xa98] sm:$0xff]
    %v539 = vld [vmem:[#allocation2 + $0xaa0] sm:$0xff]
    %v540 = vld [vmem:[#allocation2 + $0xaa8] sm:$0xff]
    %v541 = vld [vmem:[#allocation2 + $0xab0] sm:$0xff]
    %v542 = vld [vmem:[#allocation2 + $0xab8] sm:$0xff]
    %v543 = vld [vmem:[#allocation2 + $0xac0] sm:$0xff]
    %v544 = vld [vmem:[#allocation2 + $0xac8] sm:$0xff]
    %v545 = vld [vmem:[#allocation2 + $0xad0] sm:$0xff]
    %v546 = vld [vmem:[#allocation2 + $0xad8] sm:$0xff]
    %v547 = vld [vmem:[#allocation2 + $0xae0] sm:$0xff]
    %v548 = vld [vmem:[#allocation2 + $0xae8] sm:$0xff]
    %v549 = vld [vmem:[#allocation2 + $0xaf0] sm:$0xff]
    %v550 = vld [vmem:[#allocation2 + $0xaf8] sm:$0xff]
    %v551 = vld [vmem:[#allocation2 + $0xb00] sm:$0xff]
    %v552 = vld [vmem:[#allocation2 + $0xb08] sm:$0xff]
    %v553 = vld [vmem:[#allocation2 + $0xb10] sm:$0xff]
    %v554 = vld [vmem:[#allocation2 + $0xb18] sm:$0xff]
    %v555 = vld [vmem:[#allocation2 + $0xb20] sm:$0xff]
    %v556 = vld [vmem:[#allocation2 + $0xb28] sm:$0xff]
    %v557 = vld [vmem:[#allocation2 + $0xb30] sm:$0xff]
    %v558 = vld [vmem:[#allocation2 + $0xb38] sm:$0xff]
    %v559 = vld [vmem:[#allocation2 + $0xb40] sm:$0xff]
    %v560 = vld [vmem:[#allocation2 + $0xb48] sm:$0xff]
    %v561 = vld [vmem:[#allocation2 + $0xb50] sm:$0xff]
    %v562 = vld [vmem:[#allocation2 + $0xb58] sm:$0xff]
    %v563 = vld [vmem:[#allocation2 + $0xb60] sm:$0xff]
    %v564 = vld [vmem:[#allocation2 + $0xb68] sm:$0xff]
    %v565 = vld [vmem:[#allocation2 + $0xb70] sm:$0xff]
    %v566 = vld [vmem:[#allocation2 + $0xb78] sm:$0xff]
    %v567 = vld [vmem:[#allocation2 + $0xb80] sm:$0xff]
    %v568 = vld [vmem:[#allocation2 + $0xb88] sm:$0xff]
    %v569 = vld [vmem:[#allocation2 + $0xb90] sm:$0xff]
    %v570 = vld [vmem:[#allocation2 + $0xb98] sm:$0xff]
    %v571 = vld [vmem:[#allocation2 + $0xba0] sm:$0xff]
    %v572 = vld [vmem:[#allocation2 + $0xba8] sm:$0xff]
    %v573 = vld [vmem:[#allocation2 + $0xbb0] sm:$0xff]
    %v574 = vld [vmem:[#allocation2 + $0xbb8] sm:$0xff]
    %v575 = vld [vmem:[#allocation2 + $0xbc0] sm:$0xff]
    %v576 = vld [vmem:[#allocation2 + $0xbc8] sm:$0xff]
    %v577 = vld [vmem:[#allocation2 + $0xbd0] sm:$0xff]
    %v578 = vld [vmem:[#allocation2 + $0xbd8] sm:$0xff]
    %v579 = vld [vmem:[#allocation2 + $0xbe0] sm:$0xff]
    %v580 = vld [vmem:[#allocation2 + $0xbe8] sm:$0xff]
    %v581 = vld [vmem:[#allocation2 + $0xbf0] sm:$0xff]
    %v582 = vld [vmem:[#allocation2 + $0xbf8] sm:$0xff]
    %v583 = vld [vmem:[#allocation2 + $0xc00] sm:$0xff]
    %v584 = vld [vmem:[#allocation2 + $0xc08] sm:$0xff]
    %v585 = vld [vmem:[#allocation2 + $0xc10] sm:$0xff]
    %v586 = vld [vmem:[#allocation2 + $0xc18] sm:$0xff]
    %v587 = vld [vmem:[#allocation2 + $0xc20] sm:$0xff]
    %v588 = vld [vmem:[#allocation2 + $0xc28] sm:$0xff]
    %v589 = vld [vmem:[#allocation2 + $0xc30] sm:$0xff]
    %v590 = vld [vmem:[#allocation2 + $0xc38] sm:$0xff]
    %v591 = vunpack.c.l.s8.bf16 %v199
    %v592 = vunpack.c.l.s8.bf16 %v200
    %v593 = vunpack.c.l.s8.bf16 %v201
    %v594 = vunpack.c.l.s8.bf16 %v202
    %v595 = vunpack.c.l.s8.bf16 %v203
    %v596 = vunpack.c.l.s8.bf16 %v204
    %v597 = vunpack.c.l.s8.bf16 %v205
    %v598 = vunpack.c.h.s8.bf16 %v199
    %v599 = vunpack.c.h.s8.bf16 %v200
    %v600 = vunpack.c.h.s8.bf16 %v201
    %v601 = vunpack.c.h.s8.bf16 %v202
    %v602 = vunpack.c.h.s8.bf16 %v203
    %v603 = vunpack.c.h.s8.bf16 %v204
    %v604 = vunpack.c.h.s8.bf16 %v205
    %v605 = vunpack.c.l.s8.bf16 %v206
    %v606 = vunpack.c.l.s8.bf16 %v207
    %v607 = vunpack.c.l.s8.bf16 %v208
    %v608 = vunpack.c.l.s8.bf16 %v209
    %v609 = vunpack.c.l.s8.bf16 %v210
    %v610 = vunpack.c.l.s8.bf16 %v211
    %v611 = vunpack.c.l.s8.bf16 %v212
    %v612 = vunpack.c.h.s8.bf16 %v206
    %v613 = vunpack.c.h.s8.bf16 %v207
    %v614 = vunpack.c.h.s8.bf16 %v208
    %v615 = vunpack.c.h.s8.bf16 %v209
    %v616 = vunpack.c.h.s8.bf16 %v210
    %v617 = vunpack.c.h.s8.bf16 %v211
    %v618 = vunpack.c.h.s8.bf16 %v212
    %v619 = vunpack.c.l.s8.bf16 %v213
    %v620 = vunpack.c.l.s8.bf16 %v214
    %v621 = vunpack.c.l.s8.bf16 %v215
    %v622 = vunpack.c.l.s8.bf16 %v216
    %v623 = vunpack.c.l.s8.bf16 %v217
    %v624 = vunpack.c.l.s8.bf16 %v218
    %v625 = vunpack.c.l.s8.bf16 %v219
    %v626 = vunpack.c.h.s8.bf16 %v213
    %v627 = vunpack.c.h.s8.bf16 %v214
    %v628 = vunpack.c.h.s8.bf16 %v215
    %v629 = vunpack.c.h.s8.bf16 %v216
    %v630 = vunpack.c.h.s8.bf16 %v217
    %v631 = vunpack.c.h.s8.bf16 %v218
    %v632 = vunpack.c.h.s8.bf16 %v219
    %v633 = vunpack.c.l.s8.bf16 %v220
    %v634 = vunpack.c.l.s8.bf16 %v221
    %v635 = vunpack.c.l.s8.bf16 %v222
    %v636 = vunpack.c.l.s8.bf16 %v223
    %v637 = vunpack.c.l.s8.bf16 %v224
    %v638 = vunpack.c.l.s8.bf16 %v225
    %v639 = vunpack.c.l.s8.bf16 %v226
    %v640 = vunpack.c.h.s8.bf16 %v220
    %v641 = vunpack.c.h.s8.bf16 %v221
    %v642 = vunpack.c.h.s8.bf16 %v222
    %v643 = vunpack.c.h.s8.bf16 %v223
    %v644 = vunpack.c.h.s8.bf16 %v224
    %v645 = vunpack.c.h.s8.bf16 %v225
    %v646 = vunpack.c.h.s8.bf16 %v226
    %v647 = vunpack.c.l.s8.bf16 %v227
    %v648 = vunpack.c.l.s8.bf16 %v228
    %v649 = vunpack.c.l.s8.bf16 %v229
    %v650 = vunpack.c.l.s8.bf16 %v230
    %v651 = vunpack.c.l.s8.bf16 %v231
    %v652 = vunpack.c.l.s8.bf16 %v232
    %v653 = vunpack.c.l.s8.bf16 %v233
    %v654 = vunpack.c.h.s8.bf16 %v227
    %v655 = vunpack.c.h.s8.bf16 %v228
    %v656 = vunpack.c.h.s8.bf16 %v229
    %v657 = vunpack.c.h.s8.bf16 %v230
    %v658 = vunpack.c.h.s8.bf16 %v231
    %v659 = vunpack.c.h.s8.bf16 %v232
    %v660 = vunpack.c.h.s8.bf16 %v233
    %v661 = vunpack.c.l.s8.bf16 %v234
    %v662 = vunpack.c.l.s8.bf16 %v235
    %v663 = vunpack.c.l.s8.bf16 %v236
    %v664 = vunpack.c.l.s8.bf16 %v237
    %v665 = vunpack.c.l.s8.bf16 %v238
    %v666 = vunpack.c.l.s8.bf16 %v239
    %v667 = vunpack.c.l.s8.bf16 %v240
    %v668 = vunpack.c.h.s8.bf16 %v234
    %v669 = vunpack.c.h.s8.bf16 %v235
    %v670 = vunpack.c.h.s8.bf16 %v236
    %v671 = vunpack.c.h.s8.bf16 %v237
    %v672 = vunpack.c.h.s8.bf16 %v238
    %v673 = vunpack.c.h.s8.bf16 %v239
    %v674 = vunpack.c.h.s8.bf16 %v240
    %v675 = vunpack.c.l.s8.bf16 %v241
    %v676 = vunpack.c.l.s8.bf16 %v242
    %v677 = vunpack.c.l.s8.bf16 %v243
    %v678 = vunpack.c.l.s8.bf16 %v244
    %v679 = vunpack.c.l.s8.bf16 %v245
    %v680 = vunpack.c.l.s8.bf16 %v246
    %v681 = vunpack.c.l.s8.bf16 %v247
    %v682 = vunpack.c.h.s8.bf16 %v241
    %v683 = vunpack.c.h.s8.bf16 %v242
    %v684 = vunpack.c.h.s8.bf16 %v243
    %v685 = vunpack.c.h.s8.bf16 %v244
    %v686 = vunpack.c.h.s8.bf16 %v245
    %v687 = vunpack.c.h.s8.bf16 %v246
    %v688 = vunpack.c.h.s8.bf16 %v247
    %v689 = vunpack.c.l.s8.bf16 %v248
    %v690 = vunpack.c.l.s8.bf16 %v249
    %v691 = vunpack.c.l.s8.bf16 %v250
    %v692 = vunpack.c.l.s8.bf16 %v251
    %v693 = vunpack.c.l.s8.bf16 %v252
    %v694 = vunpack.c.l.s8.bf16 %v253
    %v695 = vunpack.c.l.s8.bf16 %v254
    %v696 = vunpack.c.h.s8.bf16 %v248
    %v697 = vunpack.c.h.s8.bf16 %v249
    %v698 = vunpack.c.h.s8.bf16 %v250
    %v699 = vunpack.c.h.s8.bf16 %v251
    %v700 = vunpack.c.h.s8.bf16 %v252
    %v701 = vunpack.c.h.s8.bf16 %v253
    %v702 = vunpack.c.h.s8.bf16 %v254
    %v703 = vunpack.c.l.s8.bf16 %v255
    %v704 = vunpack.c.l.s8.bf16 %v256
    %v705 = vunpack.c.l.s8.bf16 %v257
    %v706 = vunpack.c.l.s8.bf16 %v258
    %v707 = vunpack.c.l.s8.bf16 %v259
    %v708 = vunpack.c.l.s8.bf16 %v260
    %v709 = vunpack.c.l.s8.bf16 %v261
    %v710 = vunpack.c.h.s8.bf16 %v255
    %v711 = vunpack.c.h.s8.bf16 %v256
    %v712 = vunpack.c.h.s8.bf16 %v257
    %v713 = vunpack.c.h.s8.bf16 %v258
    %v714 = vunpack.c.h.s8.bf16 %v259
    %v715 = vunpack.c.h.s8.bf16 %v260
    %v716 = vunpack.c.h.s8.bf16 %v261
    %v717 = vunpack.c.l.s8.bf16 %v262
    %v718 = vunpack.c.l.s8.bf16 %v263
    %v719 = vunpack.c.l.s8.bf16 %v264
    %v720 = vunpack.c.l.s8.bf16 %v265
    %v721 = vunpack.c.l.s8.bf16 %v266
    %v722 = vunpack.c.l.s8.bf16 %v267
    %v723 = vunpack.c.l.s8.bf16 %v268
    %v724 = vunpack.c.h.s8.bf16 %v262
    %v725 = vunpack.c.h.s8.bf16 %v263
    %v726 = vunpack.c.h.s8.bf16 %v264
    %v727 = vunpack.c.h.s8.bf16 %v265
    %v728 = vunpack.c.h.s8.bf16 %v266
    %v729 = vunpack.c.h.s8.bf16 %v267
    %v730 = vunpack.c.h.s8.bf16 %v268
    %v731 = vunpack.c.l.s8.bf16 %v269
    %v732 = vunpack.c.l.s8.bf16 %v270
    %v733 = vunpack.c.l.s8.bf16 %v271
    %v734 = vunpack.c.l.s8.bf16 %v272
    %v735 = vunpack.c.l.s8.bf16 %v273
    %v736 = vunpack.c.l.s8.bf16 %v274
    %v737 = vunpack.c.l.s8.bf16 %v275
    %v738 = vunpack.c.h.s8.bf16 %v269
    %v739 = vunpack.c.h.s8.bf16 %v270
    %v740 = vunpack.c.h.s8.bf16 %v271
    %v741 = vunpack.c.h.s8.bf16 %v272
    %v742 = vunpack.c.h.s8.bf16 %v273
    %v743 = vunpack.c.h.s8.bf16 %v274
    %v744 = vunpack.c.h.s8.bf16 %v275
    %v745 = vunpack.c.l.s8.bf16 %v276
    %v746 = vunpack.c.l.s8.bf16 %v277
    %v747 = vunpack.c.l.s8.bf16 %v278
    %v748 = vunpack.c.l.s8.bf16 %v279
    %v749 = vunpack.c.l.s8.bf16 %v280
    %v750 = vunpack.c.l.s8.bf16 %v281
    %v751 = vunpack.c.l.s8.bf16 %v282
    %v752 = vunpack.c.h.s8.bf16 %v276
    %v753 = vunpack.c.h.s8.bf16 %v277
    %v754 = vunpack.c.h.s8.bf16 %v278
    %v755 = vunpack.c.h.s8.bf16 %v279
    %v756 = vunpack.c.h.s8.bf16 %v280
    %v757 = vunpack.c.h.s8.bf16 %v281
    %v758 = vunpack.c.h.s8.bf16 %v282
    %v759 = vunpack.c.l.s8.bf16 %v283
    %v760 = vunpack.c.l.s8.bf16 %v284
    %v761 = vunpack.c.l.s8.bf16 %v285
    %v762 = vunpack.c.l.s8.bf16 %v286
    %v763 = vunpack.c.l.s8.bf16 %v287
    %v764 = vunpack.c.l.s8.bf16 %v288
    %v765 = vunpack.c.l.s8.bf16 %v289
    %v766 = vunpack.c.h.s8.bf16 %v283
    %v767 = vunpack.c.h.s8.bf16 %v284
    %v768 = vunpack.c.h.s8.bf16 %v285
    %v769 = vunpack.c.h.s8.bf16 %v286
    %v770 = vunpack.c.h.s8.bf16 %v287
    %v771 = vunpack.c.h.s8.bf16 %v288
    %v772 = vunpack.c.h.s8.bf16 %v289
    %v773 = vunpack.c.l.s8.bf16 %v290
    %v774 = vunpack.c.l.s8.bf16 %v291
    %v775 = vunpack.c.l.s8.bf16 %v292
    %v776 = vunpack.c.l.s8.bf16 %v293
    %v777 = vunpack.c.l.s8.bf16 %v294
    %v778 = vunpack.c.l.s8.bf16 %v295
    %v779 = vunpack.c.l.s8.bf16 %v296
    %v780 = vunpack.c.h.s8.bf16 %v290
    %v781 = vunpack.c.h.s8.bf16 %v291
    %v782 = vunpack.c.h.s8.bf16 %v292
    %v783 = vunpack.c.h.s8.bf16 %v293
    %v784 = vunpack.c.h.s8.bf16 %v294
    %v785 = vunpack.c.h.s8.bf16 %v295
    %v786 = vunpack.c.h.s8.bf16 %v296
    %v787 = vunpack.c.l.s8.bf16 %v297
    %v788 = vunpack.c.l.s8.bf16 %v298
    %v789 = vunpack.c.l.s8.bf16 %v299
    %v790 = vunpack.c.l.s8.bf16 %v300
    %v791 = vunpack.c.l.s8.bf16 %v301
    %v792 = vunpack.c.l.s8.bf16 %v302
    %v793 = vunpack.c.l.s8.bf16 %v303
    %v794 = vunpack.c.h.s8.bf16 %v297
    %v795 = vunpack.c.h.s8.bf16 %v298
    %v796 = vunpack.c.h.s8.bf16 %v299
    %v797 = vunpack.c.h.s8.bf16 %v300
    %v798 = vunpack.c.h.s8.bf16 %v301
    %v799 = vunpack.c.h.s8.bf16 %v302
    %v800 = vunpack.c.h.s8.bf16 %v303
    %v801 = vunpack.c.l.s8.bf16 %v304
    %v802 = vunpack.c.l.s8.bf16 %v305
    %v803 = vunpack.c.l.s8.bf16 %v306
    %v804 = vunpack.c.l.s8.bf16 %v307
    %v805 = vunpack.c.l.s8.bf16 %v308
    %v806 = vunpack.c.l.s8.bf16 %v309
    %v807 = vunpack.c.l.s8.bf16 %v310
    %v808 = vunpack.c.h.s8.bf16 %v304
    %v809 = vunpack.c.h.s8.bf16 %v305
    %v810 = vunpack.c.h.s8.bf16 %v306
    %v811 = vunpack.c.h.s8.bf16 %v307
    %v812 = vunpack.c.h.s8.bf16 %v308
    %v813 = vunpack.c.h.s8.bf16 %v309
    %v814 = vunpack.c.h.s8.bf16 %v310
    %v815 = vunpack.c.l.s8.bf16 %v311
    %v816 = vunpack.c.l.s8.bf16 %v312
    %v817 = vunpack.c.l.s8.bf16 %v313
    %v818 = vunpack.c.l.s8.bf16 %v314
    %v819 = vunpack.c.l.s8.bf16 %v315
    %v820 = vunpack.c.l.s8.bf16 %v316
    %v821 = vunpack.c.l.s8.bf16 %v317
    %v822 = vunpack.c.h.s8.bf16 %v311
    %v823 = vunpack.c.h.s8.bf16 %v312
    %v824 = vunpack.c.h.s8.bf16 %v313
    %v825 = vunpack.c.h.s8.bf16 %v314
    %v826 = vunpack.c.h.s8.bf16 %v315
    %v827 = vunpack.c.h.s8.bf16 %v316
    %v828 = vunpack.c.h.s8.bf16 %v317
    %v829 = vunpack.c.l.s8.bf16 %v318
    %v830 = vunpack.c.l.s8.bf16 %v319
    %v831 = vunpack.c.l.s8.bf16 %v320
    %v832 = vunpack.c.l.s8.bf16 %v321
    %v833 = vunpack.c.l.s8.bf16 %v322
    %v834 = vunpack.c.l.s8.bf16 %v323
    %v835 = vunpack.c.l.s8.bf16 %v324
    %v836 = vunpack.c.h.s8.bf16 %v318
    %v837 = vunpack.c.h.s8.bf16 %v319
    %v838 = vunpack.c.h.s8.bf16 %v320
    %v839 = vunpack.c.h.s8.bf16 %v321
    %v840 = vunpack.c.h.s8.bf16 %v322
    %v841 = vunpack.c.h.s8.bf16 %v323
    %v842 = vunpack.c.h.s8.bf16 %v324
    %v843 = vunpack.c.l.s8.bf16 %v325
    %v844 = vunpack.c.l.s8.bf16 %v326
    %v845 = vunpack.c.l.s8.bf16 %v327
    %v846 = vunpack.c.l.s8.bf16 %v328
    %v847 = vunpack.c.l.s8.bf16 %v329
    %v848 = vunpack.c.l.s8.bf16 %v330
    %v849 = vunpack.c.l.s8.bf16 %v331
    %v850 = vunpack.c.h.s8.bf16 %v325
    %v851 = vunpack.c.h.s8.bf16 %v326
    %v852 = vunpack.c.h.s8.bf16 %v327
    %v853 = vunpack.c.h.s8.bf16 %v328
    %v854 = vunpack.c.h.s8.bf16 %v329
    %v855 = vunpack.c.h.s8.bf16 %v330
    %v856 = vunpack.c.h.s8.bf16 %v331
    %v857 = vunpack.c.l.s8.bf16 %v332
    %v858 = vunpack.c.l.s8.bf16 %v333
    %v859 = vunpack.c.l.s8.bf16 %v334
    %v860 = vunpack.c.l.s8.bf16 %v335
    %v861 = vunpack.c.l.s8.bf16 %v336
    %v862 = vunpack.c.l.s8.bf16 %v337
    %v863 = vunpack.c.l.s8.bf16 %v338
    %v864 = vunpack.c.h.s8.bf16 %v332
    %v865 = vunpack.c.h.s8.bf16 %v333
    %v866 = vunpack.c.h.s8.bf16 %v334
    %v867 = vunpack.c.h.s8.bf16 %v335
    %v868 = vunpack.c.h.s8.bf16 %v336
    %v869 = vunpack.c.h.s8.bf16 %v337
    %v870 = vunpack.c.h.s8.bf16 %v338
    %v871 = vunpack.c.l.s8.bf16 %v339
    %v872 = vunpack.c.l.s8.bf16 %v340
    %v873 = vunpack.c.l.s8.bf16 %v341
    %v874 = vunpack.c.l.s8.bf16 %v342
    %v875 = vunpack.c.l.s8.bf16 %v343
    %v876 = vunpack.c.l.s8.bf16 %v344
    %v877 = vunpack.c.l.s8.bf16 %v345
    %v878 = vunpack.c.h.s8.bf16 %v339
    %v879 = vunpack.c.h.s8.bf16 %v340
    %v880 = vunpack.c.h.s8.bf16 %v341
    %v881 = vunpack.c.h.s8.bf16 %v342
    %v882 = vunpack.c.h.s8.bf16 %v343
    %v883 = vunpack.c.h.s8.bf16 %v344
    %v884 = vunpack.c.h.s8.bf16 %v345
    %v885 = vunpack.c.l.s8.bf16 %v346
    %v886 = vunpack.c.l.s8.bf16 %v347
    %v887 = vunpack.c.l.s8.bf16 %v348
    %v888 = vunpack.c.l.s8.bf16 %v349
    %v889 = vunpack.c.l.s8.bf16 %v350
    %v890 = vunpack.c.l.s8.bf16 %v351
    %v891 = vunpack.c.l.s8.bf16 %v352
    %v892 = vunpack.c.h.s8.bf16 %v346
    %v893 = vunpack.c.h.s8.bf16 %v347
    %v894 = vunpack.c.h.s8.bf16 %v348
    %v895 = vunpack.c.h.s8.bf16 %v349
    %v896 = vunpack.c.h.s8.bf16 %v350
    %v897 = vunpack.c.h.s8.bf16 %v351
    %v898 = vunpack.c.h.s8.bf16 %v352
    %v899 = vunpack.c.l.s8.bf16 %v353
    %v900 = vunpack.c.l.s8.bf16 %v354
    %v901 = vunpack.c.l.s8.bf16 %v355
    %v902 = vunpack.c.l.s8.bf16 %v356
    %v903 = vunpack.c.l.s8.bf16 %v357
    %v904 = vunpack.c.l.s8.bf16 %v358
    %v905 = vunpack.c.l.s8.bf16 %v359
    %v906 = vunpack.c.h.s8.bf16 %v353
    %v907 = vunpack.c.h.s8.bf16 %v354
    %v908 = vunpack.c.h.s8.bf16 %v355
    %v909 = vunpack.c.h.s8.bf16 %v356
    %v910 = vunpack.c.h.s8.bf16 %v357
    %v911 = vunpack.c.h.s8.bf16 %v358
    %v912 = vunpack.c.h.s8.bf16 %v359
    %v913 = vunpack.c.l.s8.bf16 %v360
    %v914 = vunpack.c.l.s8.bf16 %v361
    %v915 = vunpack.c.l.s8.bf16 %v362
    %v916 = vunpack.c.l.s8.bf16 %v363
    %v917 = vunpack.c.l.s8.bf16 %v364
    %v918 = vunpack.c.l.s8.bf16 %v365
    %v919 = vunpack.c.l.s8.bf16 %v366
    %v920 = vunpack.c.h.s8.bf16 %v360
    %v921 = vunpack.c.h.s8.bf16 %v361
    %v922 = vunpack.c.h.s8.bf16 %v362
    %v923 = vunpack.c.h.s8.bf16 %v363
    %v924 = vunpack.c.h.s8.bf16 %v364
    %v925 = vunpack.c.h.s8.bf16 %v365
    %v926 = vunpack.c.h.s8.bf16 %v366
    %v927 = vunpack.c.l.s8.bf16 %v367
    %v928 = vunpack.c.l.s8.bf16 %v368
    %v929 = vunpack.c.l.s8.bf16 %v369
    %v930 = vunpack.c.l.s8.bf16 %v370
    %v931 = vunpack.c.l.s8.bf16 %v371
    %v932 = vunpack.c.l.s8.bf16 %v372
    %v933 = vunpack.c.l.s8.bf16 %v373
    %v934 = vunpack.c.h.s8.bf16 %v367
    %v935 = vunpack.c.h.s8.bf16 %v368
    %v936 = vunpack.c.h.s8.bf16 %v369
    %v937 = vunpack.c.h.s8.bf16 %v370
    %v938 = vunpack.c.h.s8.bf16 %v371
    %v939 = vunpack.c.h.s8.bf16 %v372
    %v940 = vunpack.c.h.s8.bf16 %v373
    %v941 = vunpack.c.l.s8.bf16 %v374
    %v942 = vunpack.c.l.s8.bf16 %v375
    %v943 = vunpack.c.l.s8.bf16 %v376
    %v944 = vunpack.c.l.s8.bf16 %v377
    %v945 = vunpack.c.l.s8.bf16 %v378
    %v946 = vunpack.c.l.s8.bf16 %v379
    %v947 = vunpack.c.l.s8.bf16 %v380
    %v948 = vunpack.c.h.s8.bf16 %v374
    %v949 = vunpack.c.h.s8.bf16 %v375
    %v950 = vunpack.c.h.s8.bf16 %v376
    %v951 = vunpack.c.h.s8.bf16 %v377
    %v952 = vunpack.c.h.s8.bf16 %v378
    %v953 = vunpack.c.h.s8.bf16 %v379
    %v954 = vunpack.c.h.s8.bf16 %v380
    %v955 = vunpack.c.l.s8.bf16 %v381
    %v956 = vunpack.c.l.s8.bf16 %v382
    %v957 = vunpack.c.l.s8.bf16 %v383
    %v958 = vunpack.c.l.s8.bf16 %v384
    %v959 = vunpack.c.l.s8.bf16 %v385
    %v960 = vunpack.c.l.s8.bf16 %v386
    %v961 = vunpack.c.l.s8.bf16 %v387
    %v962 = vunpack.c.h.s8.bf16 %v381
    %v963 = vunpack.c.h.s8.bf16 %v382
    %v964 = vunpack.c.h.s8.bf16 %v383
    %v965 = vunpack.c.h.s8.bf16 %v384
    %v966 = vunpack.c.h.s8.bf16 %v385
    %v967 = vunpack.c.h.s8.bf16 %v386
    %v968 = vunpack.c.h.s8.bf16 %v387
    %v969 = vunpack.c.l.s8.bf16 %v388
    %v970 = vunpack.c.l.s8.bf16 %v389
    %v971 = vunpack.c.l.s8.bf16 %v390
    %v972 = vunpack.c.l.s8.bf16 %v391
    %v973 = vunpack.c.l.s8.bf16 %v392
    %v974 = vunpack.c.l.s8.bf16 %v393
    %v975 = vunpack.c.l.s8.bf16 %v394
    %v976 = vunpack.c.h.s8.bf16 %v388
    %v977 = vunpack.c.h.s8.bf16 %v389
    %v978 = vunpack.c.h.s8.bf16 %v390
    %v979 = vunpack.c.h.s8.bf16 %v391
    %v980 = vunpack.c.h.s8.bf16 %v392
    %v981 = vunpack.c.h.s8.bf16 %v393
    %v982 = vunpack.c.h.s8.bf16 %v394
    %v983 = vunpack.c.l.s8.bf16 %v395
    %v984 = vunpack.c.l.s8.bf16 %v396
    %v985 = vunpack.c.l.s8.bf16 %v397
    %v986 = vunpack.c.l.s8.bf16 %v398
    %v987 = vunpack.c.l.s8.bf16 %v399
    %v988 = vunpack.c.l.s8.bf16 %v400
    %v989 = vunpack.c.l.s8.bf16 %v401
    %v990 = vunpack.c.h.s8.bf16 %v395
    %v991 = vunpack.c.h.s8.bf16 %v396
    %v992 = vunpack.c.h.s8.bf16 %v397
    %v993 = vunpack.c.h.s8.bf16 %v398
    %v994 = vunpack.c.h.s8.bf16 %v399
    %v995 = vunpack.c.h.s8.bf16 %v400
    %v996 = vunpack.c.h.s8.bf16 %v401
    %v997 = vunpack.c.l.s8.bf16 %v402
    %v998 = vunpack.c.l.s8.bf16 %v403
    %v999 = vunpack.c.l.s8.bf16 %v404
    %v1000 = vunpack.c.l.s8.bf16 %v405
    %v1001 = vunpack.c.l.s8.bf16 %v406
    %v1002 = vunpack.c.l.s8.bf16 %v407
    %v1003 = vunpack.c.l.s8.bf16 %v408
    %v1004 = vunpack.c.h.s8.bf16 %v402
    %v1005 = vunpack.c.h.s8.bf16 %v403
    %v1006 = vunpack.c.h.s8.bf16 %v404
    %v1007 = vunpack.c.h.s8.bf16 %v405
    %v1008 = vunpack.c.h.s8.bf16 %v406
    %v1009 = vunpack.c.h.s8.bf16 %v407
    %v1010 = vunpack.c.h.s8.bf16 %v408
    %v1011 = vunpack.c.l.s8.bf16 %v409
    %v1012 = vunpack.c.l.s8.bf16 %v410
    %v1013 = vunpack.c.l.s8.bf16 %v411
    %v1014 = vunpack.c.l.s8.bf16 %v412
    %v1015 = vunpack.c.l.s8.bf16 %v413
    %v1016 = vunpack.c.l.s8.bf16 %v414
    %v1017 = vunpack.c.l.s8.bf16 %v415
    %v1018 = vunpack.c.h.s8.bf16 %v409
    %v1019 = vunpack.c.h.s8.bf16 %v410
    %v1020 = vunpack.c.h.s8.bf16 %v411
    %v1021 = vunpack.c.h.s8.bf16 %v412
    %v1022 = vunpack.c.h.s8.bf16 %v413
    %v1023 = vunpack.c.h.s8.bf16 %v414
    %v1024 = vunpack.c.h.s8.bf16 %v415
    %v1025 = vunpack.c.l.s8.bf16 %v416
    %v1026 = vunpack.c.l.s8.bf16 %v417
    %v1027 = vunpack.c.l.s8.bf16 %v418
    %v1028 = vunpack.c.l.s8.bf16 %v419
    %v1029 = vunpack.c.l.s8.bf16 %v420
    %v1030 = vunpack.c.l.s8.bf16 %v421
    %v1031 = vunpack.c.l.s8.bf16 %v422
    %v1032 = vunpack.c.h.s8.bf16 %v416
    %v1033 = vunpack.c.h.s8.bf16 %v417
    %v1034 = vunpack.c.h.s8.bf16 %v418
    %v1035 = vunpack.c.h.s8.bf16 %v419
    %v1036 = vunpack.c.h.s8.bf16 %v420
    %v1037 = vunpack.c.h.s8.bf16 %v421
    %v1038 = vunpack.c.h.s8.bf16 %v422
    %v1039 = vunpack.c.l.s8.bf16 %v423
    %v1040 = vunpack.c.l.s8.bf16 %v424
    %v1041 = vunpack.c.l.s8.bf16 %v425
    %v1042 = vunpack.c.l.s8.bf16 %v426
    %v1043 = vunpack.c.l.s8.bf16 %v427
    %v1044 = vunpack.c.l.s8.bf16 %v428
    %v1045 = vunpack.c.l.s8.bf16 %v429
    %v1046 = vunpack.c.h.s8.bf16 %v423
    %v1047 = vunpack.c.h.s8.bf16 %v424
    %v1048 = vunpack.c.h.s8.bf16 %v425
    %v1049 = vunpack.c.h.s8.bf16 %v426
    %v1050 = vunpack.c.h.s8.bf16 %v427
    %v1051 = vunpack.c.h.s8.bf16 %v428
    %v1052 = vunpack.c.h.s8.bf16 %v429
    %v1053 = vunpack.c.l.s8.bf16 %v430
    %v1054 = vunpack.c.l.s8.bf16 %v431
    %v1055 = vunpack.c.l.s8.bf16 %v432
    %v1056 = vunpack.c.l.s8.bf16 %v433
    %v1057 = vunpack.c.l.s8.bf16 %v434
    %v1058 = vunpack.c.l.s8.bf16 %v435
    %v1059 = vunpack.c.l.s8.bf16 %v436
    %v1060 = vunpack.c.h.s8.bf16 %v430
    %v1061 = vunpack.c.h.s8.bf16 %v431
    %v1062 = vunpack.c.h.s8.bf16 %v432
    %v1063 = vunpack.c.h.s8.bf16 %v433
    %v1064 = vunpack.c.h.s8.bf16 %v434
    %v1065 = vunpack.c.h.s8.bf16 %v435
    %v1066 = vunpack.c.h.s8.bf16 %v436
    %v1067 = vunpack.c.l.s8.bf16 %v437
    %v1068 = vunpack.c.l.s8.bf16 %v438
    %v1069 = vunpack.c.l.s8.bf16 %v439
    %v1070 = vunpack.c.l.s8.bf16 %v440
    %v1071 = vunpack.c.l.s8.bf16 %v441
    %v1072 = vunpack.c.l.s8.bf16 %v442
    %v1073 = vunpack.c.l.s8.bf16 %v443
    %v1074 = vunpack.c.h.s8.bf16 %v437
    %v1075 = vunpack.c.h.s8.bf16 %v438
    %v1076 = vunpack.c.h.s8.bf16 %v439
    %v1077 = vunpack.c.h.s8.bf16 %v440
    %v1078 = vunpack.c.h.s8.bf16 %v441
    %v1079 = vunpack.c.h.s8.bf16 %v442
    %v1080 = vunpack.c.h.s8.bf16 %v443
    %v1081 = vunpack.c.l.s8.bf16 %v444
    %v1082 = vunpack.c.l.s8.bf16 %v445
    %v1083 = vunpack.c.l.s8.bf16 %v446
    %v1084 = vunpack.c.l.s8.bf16 %v447
    %v1085 = vunpack.c.l.s8.bf16 %v448
    %v1086 = vunpack.c.l.s8.bf16 %v449
    %v1087 = vunpack.c.l.s8.bf16 %v450
    %v1088 = vunpack.c.h.s8.bf16 %v444
    %v1089 = vunpack.c.h.s8.bf16 %v445
    %v1090 = vunpack.c.h.s8.bf16 %v446
    %v1091 = vunpack.c.h.s8.bf16 %v447
    %v1092 = vunpack.c.h.s8.bf16 %v448
    %v1093 = vunpack.c.h.s8.bf16 %v449
    %v1094 = vunpack.c.h.s8.bf16 %v450
    %v1095 = vunpack.c.l.s8.bf16 %v451
    %v1096 = vunpack.c.l.s8.bf16 %v452
    %v1097 = vunpack.c.l.s8.bf16 %v453
    %v1098 = vunpack.c.l.s8.bf16 %v454
    %v1099 = vunpack.c.l.s8.bf16 %v455
    %v1100 = vunpack.c.l.s8.bf16 %v456
    %v1101 = vunpack.c.l.s8.bf16 %v457
    %v1102 = vunpack.c.h.s8.bf16 %v451
    %v1103 = vunpack.c.h.s8.bf16 %v452
    %v1104 = vunpack.c.h.s8.bf16 %v453
    %v1105 = vunpack.c.h.s8.bf16 %v454
    %v1106 = vunpack.c.h.s8.bf16 %v455
    %v1107 = vunpack.c.h.s8.bf16 %v456
    %v1108 = vunpack.c.h.s8.bf16 %v457
    %v1109 = vunpack.c.l.s8.bf16 %v458
    %v1110 = vunpack.c.l.s8.bf16 %v459
    %v1111 = vunpack.c.l.s8.bf16 %v460
    %v1112 = vunpack.c.l.s8.bf16 %v461
    %v1113 = vunpack.c.l.s8.bf16 %v462
    %v1114 = vunpack.c.l.s8.bf16 %v463
    %v1115 = vunpack.c.l.s8.bf16 %v464
    %v1116 = vunpack.c.h.s8.bf16 %v458
    %v1117 = vunpack.c.h.s8.bf16 %v459
    %v1118 = vunpack.c.h.s8.bf16 %v460
    %v1119 = vunpack.c.h.s8.bf16 %v461
    %v1120 = vunpack.c.h.s8.bf16 %v462
    %v1121 = vunpack.c.h.s8.bf16 %v463
    %v1122 = vunpack.c.h.s8.bf16 %v464
    %v1123 = vunpack.c.l.s8.bf16 %v465
    %v1124 = vunpack.c.l.s8.bf16 %v466
    %v1125 = vunpack.c.l.s8.bf16 %v467
    %v1126 = vunpack.c.l.s8.bf16 %v468
    %v1127 = vunpack.c.l.s8.bf16 %v469
    %v1128 = vunpack.c.l.s8.bf16 %v470
    %v1129 = vunpack.c.l.s8.bf16 %v471
    %v1130 = vunpack.c.h.s8.bf16 %v465
    %v1131 = vunpack.c.h.s8.bf16 %v466
    %v1132 = vunpack.c.h.s8.bf16 %v467
    %v1133 = vunpack.c.h.s8.bf16 %v468
    %v1134 = vunpack.c.h.s8.bf16 %v469
    %v1135 = vunpack.c.h.s8.bf16 %v470
    %v1136 = vunpack.c.h.s8.bf16 %v471
    %v1137 = vunpack.c.l.s8.bf16 %v472
    %v1138 = vunpack.c.l.s8.bf16 %v473
    %v1139 = vunpack.c.l.s8.bf16 %v474
    %v1140 = vunpack.c.l.s8.bf16 %v475
    %v1141 = vunpack.c.l.s8.bf16 %v476
    %v1142 = vunpack.c.l.s8.bf16 %v477
    %v1143 = vunpack.c.l.s8.bf16 %v478
    %v1144 = vunpack.c.h.s8.bf16 %v472
    %v1145 = vunpack.c.h.s8.bf16 %v473
    %v1146 = vunpack.c.h.s8.bf16 %v474
    %v1147 = vunpack.c.h.s8.bf16 %v475
    %v1148 = vunpack.c.h.s8.bf16 %v476
    %v1149 = vunpack.c.h.s8.bf16 %v477
    %v1150 = vunpack.c.h.s8.bf16 %v478
    %v1151 = vunpack.c.l.s8.bf16 %v479
    %v1152 = vunpack.c.l.s8.bf16 %v480
    %v1153 = vunpack.c.l.s8.bf16 %v481
    %v1154 = vunpack.c.l.s8.bf16 %v482
    %v1155 = vunpack.c.l.s8.bf16 %v483
    %v1156 = vunpack.c.l.s8.bf16 %v484
    %v1157 = vunpack.c.l.s8.bf16 %v485
    %v1158 = vunpack.c.h.s8.bf16 %v479
    %v1159 = vunpack.c.h.s8.bf16 %v480
    %v1160 = vunpack.c.h.s8.bf16 %v481
    %v1161 = vunpack.c.h.s8.bf16 %v482
    %v1162 = vunpack.c.h.s8.bf16 %v483
    %v1163 = vunpack.c.h.s8.bf16 %v484
    %v1164 = vunpack.c.h.s8.bf16 %v485
    %v1165 = vunpack.c.l.s8.bf16 %v486
    %v1166 = vunpack.c.l.s8.bf16 %v487
    %v1167 = vunpack.c.l.s8.bf16 %v488
    %v1168 = vunpack.c.l.s8.bf16 %v489
    %v1169 = vunpack.c.l.s8.bf16 %v490
    %v1170 = vunpack.c.l.s8.bf16 %v491
    %v1171 = vunpack.c.l.s8.bf16 %v492
    %v1172 = vunpack.c.h.s8.bf16 %v486
    %v1173 = vunpack.c.h.s8.bf16 %v487
    %v1174 = vunpack.c.h.s8.bf16 %v488
    %v1175 = vunpack.c.h.s8.bf16 %v489
    %v1176 = vunpack.c.h.s8.bf16 %v490
    %v1177 = vunpack.c.h.s8.bf16 %v491
    %v1178 = vunpack.c.h.s8.bf16 %v492
    %v1179 = vunpack.c.l.s8.bf16 %v493
    %v1180 = vunpack.c.l.s8.bf16 %v494
    %v1181 = vunpack.c.l.s8.bf16 %v495
    %v1182 = vunpack.c.l.s8.bf16 %v496
    %v1183 = vunpack.c.l.s8.bf16 %v497
    %v1184 = vunpack.c.l.s8.bf16 %v498
    %v1185 = vunpack.c.l.s8.bf16 %v499
    %v1186 = vunpack.c.h.s8.bf16 %v493
    %v1187 = vunpack.c.h.s8.bf16 %v494
    %v1188 = vunpack.c.h.s8.bf16 %v495
    %v1189 = vunpack.c.h.s8.bf16 %v496
    %v1190 = vunpack.c.h.s8.bf16 %v497
    %v1191 = vunpack.c.h.s8.bf16 %v498
    %v1192 = vunpack.c.h.s8.bf16 %v499
    %v1193 = vunpack.c.l.s8.bf16 %v500
    %v1194 = vunpack.c.l.s8.bf16 %v501
    %v1195 = vunpack.c.l.s8.bf16 %v502
    %v1196 = vunpack.c.l.s8.bf16 %v503
    %v1197 = vunpack.c.l.s8.bf16 %v504
    %v1198 = vunpack.c.l.s8.bf16 %v505
    %v1199 = vunpack.c.l.s8.bf16 %v506
    %v1200 = vunpack.c.h.s8.bf16 %v500
    %v1201 = vunpack.c.h.s8.bf16 %v501
    %v1202 = vunpack.c.h.s8.bf16 %v502
    %v1203 = vunpack.c.h.s8.bf16 %v503
    %v1204 = vunpack.c.h.s8.bf16 %v504
    %v1205 = vunpack.c.h.s8.bf16 %v505
    %v1206 = vunpack.c.h.s8.bf16 %v506
    %v1207 = vunpack.c.l.s8.bf16 %v507
    %v1208 = vunpack.c.l.s8.bf16 %v508
    %v1209 = vunpack.c.l.s8.bf16 %v509
    %v1210 = vunpack.c.l.s8.bf16 %v510
    %v1211 = vunpack.c.l.s8.bf16 %v511
    %v1212 = vunpack.c.l.s8.bf16 %v512
    %v1213 = vunpack.c.l.s8.bf16 %v513
    %v1214 = vunpack.c.h.s8.bf16 %v507
    %v1215 = vunpack.c.h.s8.bf16 %v508
    %v1216 = vunpack.c.h.s8.bf16 %v509
    %v1217 = vunpack.c.h.s8.bf16 %v510
    %v1218 = vunpack.c.h.s8.bf16 %v511
    %v1219 = vunpack.c.h.s8.bf16 %v512
    %v1220 = vunpack.c.h.s8.bf16 %v513
    %v1221 = vunpack.c.l.s8.bf16 %v514
    %v1222 = vunpack.c.l.s8.bf16 %v515
    %v1223 = vunpack.c.l.s8.bf16 %v516
    %v1224 = vunpack.c.l.s8.bf16 %v517
    %v1225 = vunpack.c.l.s8.bf16 %v518
    %v1226 = vunpack.c.l.s8.bf16 %v519
    %v1227 = vunpack.c.l.s8.bf16 %v520
    %v1228 = vunpack.c.h.s8.bf16 %v514
    %v1229 = vunpack.c.h.s8.bf16 %v515
    %v1230 = vunpack.c.h.s8.bf16 %v516
    %v1231 = vunpack.c.h.s8.bf16 %v517
    %v1232 = vunpack.c.h.s8.bf16 %v518
    %v1233 = vunpack.c.h.s8.bf16 %v519
    %v1234 = vunpack.c.h.s8.bf16 %v520
    %v1235 = vunpack.c.l.s8.bf16 %v521
    %v1236 = vunpack.c.l.s8.bf16 %v522
    %v1237 = vunpack.c.l.s8.bf16 %v523
    %v1238 = vunpack.c.l.s8.bf16 %v524
    %v1239 = vunpack.c.l.s8.bf16 %v525
    %v1240 = vunpack.c.l.s8.bf16 %v526
    %v1241 = vunpack.c.l.s8.bf16 %v527
    %v1242 = vunpack.c.h.s8.bf16 %v521
    %v1243 = vunpack.c.h.s8.bf16 %v522
    %v1244 = vunpack.c.h.s8.bf16 %v523
    %v1245 = vunpack.c.h.s8.bf16 %v524
    %v1246 = vunpack.c.h.s8.bf16 %v525
    %v1247 = vunpack.c.h.s8.bf16 %v526
    %v1248 = vunpack.c.h.s8.bf16 %v527
    %v1249 = vunpack.c.l.s8.bf16 %v528
    %v1250 = vunpack.c.l.s8.bf16 %v529
    %v1251 = vunpack.c.l.s8.bf16 %v530
    %v1252 = vunpack.c.l.s8.bf16 %v531
    %v1253 = vunpack.c.l.s8.bf16 %v532
    %v1254 = vunpack.c.l.s8.bf16 %v533
    %v1255 = vunpack.c.l.s8.bf16 %v534
    %v1256 = vunpack.c.h.s8.bf16 %v528
    %v1257 = vunpack.c.h.s8.bf16 %v529
    %v1258 = vunpack.c.h.s8.bf16 %v530
    %v1259 = vunpack.c.h.s8.bf16 %v531
    %v1260 = vunpack.c.h.s8.bf16 %v532
    %v1261 = vunpack.c.h.s8.bf16 %v533
    %v1262 = vunpack.c.h.s8.bf16 %v534
    %v1263 = vunpack.c.l.s8.bf16 %v535
    %v1264 = vunpack.c.l.s8.bf16 %v536
    %v1265 = vunpack.c.l.s8.bf16 %v537
    %v1266 = vunpack.c.l.s8.bf16 %v538
    %v1267 = vunpack.c.l.s8.bf16 %v539
    %v1268 = vunpack.c.l.s8.bf16 %v540
    %v1269 = vunpack.c.l.s8.bf16 %v541
    %v1270 = vunpack.c.h.s8.bf16 %v535
    %v1271 = vunpack.c.h.s8.bf16 %v536
    %v1272 = vunpack.c.h.s8.bf16 %v537
    %v1273 = vunpack.c.h.s8.bf16 %v538
    %v1274 = vunpack.c.h.s8.bf16 %v539
    %v1275 = vunpack.c.h.s8.bf16 %v540
    %v1276 = vunpack.c.h.s8.bf16 %v541
    %v1277 = vunpack.c.l.s8.bf16 %v542
    %v1278 = vunpack.c.l.s8.bf16 %v543
    %v1279 = vunpack.c.l.s8.bf16 %v544
    %v1280 = vunpack.c.l.s8.bf16 %v545
    %v1281 = vunpack.c.l.s8.bf16 %v546
    %v1282 = vunpack.c.l.s8.bf16 %v547
    %v1283 = vunpack.c.l.s8.bf16 %v548
    %v1284 = vunpack.c.h.s8.bf16 %v542
    %v1285 = vunpack.c.h.s8.bf16 %v543
    %v1286 = vunpack.c.h.s8.bf16 %v544
    %v1287 = vunpack.c.h.s8.bf16 %v545
    %v1288 = vunpack.c.h.s8.bf16 %v546
    %v1289 = vunpack.c.h.s8.bf16 %v547
    %v1290 = vunpack.c.h.s8.bf16 %v548
    %v1291 = vunpack.c.l.s8.bf16 %v549
    %v1292 = vunpack.c.l.s8.bf16 %v550
    %v1293 = vunpack.c.l.s8.bf16 %v551
    %v1294 = vunpack.c.l.s8.bf16 %v552
    %v1295 = vunpack.c.l.s8.bf16 %v553
    %v1296 = vunpack.c.l.s8.bf16 %v554
    %v1297 = vunpack.c.l.s8.bf16 %v555
    %v1298 = vunpack.c.h.s8.bf16 %v549
    %v1299 = vunpack.c.h.s8.bf16 %v550
    %v1300 = vunpack.c.h.s8.bf16 %v551
    %v1301 = vunpack.c.h.s8.bf16 %v552
    %v1302 = vunpack.c.h.s8.bf16 %v553
    %v1303 = vunpack.c.h.s8.bf16 %v554
    %v1304 = vunpack.c.h.s8.bf16 %v555
    %v1305 = vunpack.c.l.s8.bf16 %v556
    %v1306 = vunpack.c.l.s8.bf16 %v557
    %v1307 = vunpack.c.l.s8.bf16 %v558
    %v1308 = vunpack.c.l.s8.bf16 %v559
    %v1309 = vunpack.c.l.s8.bf16 %v560
    %v1310 = vunpack.c.l.s8.bf16 %v561
    %v1311 = vunpack.c.l.s8.bf16 %v562
    %v1312 = vunpack.c.h.s8.bf16 %v556
    %v1313 = vunpack.c.h.s8.bf16 %v557
    %v1314 = vunpack.c.h.s8.bf16 %v558
    %v1315 = vunpack.c.h.s8.bf16 %v559
    %v1316 = vunpack.c.h.s8.bf16 %v560
    %v1317 = vunpack.c.h.s8.bf16 %v561
    %v1318 = vunpack.c.h.s8.bf16 %v562
    %v1319 = vunpack.c.l.s8.bf16 %v563
    %v1320 = vunpack.c.l.s8.bf16 %v564
    %v1321 = vunpack.c.l.s8.bf16 %v565
    %v1322 = vunpack.c.l.s8.bf16 %v566
    %v1323 = vunpack.c.l.s8.bf16 %v567
    %v1324 = vunpack.c.l.s8.bf16 %v568
    %v1325 = vunpack.c.l.s8.bf16 %v569
    %v1326 = vunpack.c.h.s8.bf16 %v563
    %v1327 = vunpack.c.h.s8.bf16 %v564
    %v1328 = vunpack.c.h.s8.bf16 %v565
    %v1329 = vunpack.c.h.s8.bf16 %v566
    %v1330 = vunpack.c.h.s8.bf16 %v567
    %v1331 = vunpack.c.h.s8.bf16 %v568
    %v1332 = vunpack.c.h.s8.bf16 %v569
    %v1333 = vunpack.c.l.s8.bf16 %v570
    %v1334 = vunpack.c.l.s8.bf16 %v571
    %v1335 = vunpack.c.l.s8.bf16 %v572
    %v1336 = vunpack.c.l.s8.bf16 %v573
    %v1337 = vunpack.c.l.s8.bf16 %v574
    %v1338 = vunpack.c.l.s8.bf16 %v575
    %v1339 = vunpack.c.l.s8.bf16 %v576
    %v1340 = vunpack.c.h.s8.bf16 %v570
    %v1341 = vunpack.c.h.s8.bf16 %v571
    %v1342 = vunpack.c.h.s8.bf16 %v572
    %v1343 = vunpack.c.h.s8.bf16 %v573
    %v1344 = vunpack.c.h.s8.bf16 %v574
    %v1345 = vunpack.c.h.s8.bf16 %v575
    %v1346 = vunpack.c.h.s8.bf16 %v576
    %v1347 = vunpack.c.l.s8.bf16 %v577
    %v1348 = vunpack.c.l.s8.bf16 %v578
    %v1349 = vunpack.c.l.s8.bf16 %v579
    %v1350 = vunpack.c.l.s8.bf16 %v580
    %v1351 = vunpack.c.l.s8.bf16 %v581
    %v1352 = vunpack.c.l.s8.bf16 %v582
    %v1353 = vunpack.c.l.s8.bf16 %v583
    %v1354 = vunpack.c.h.s8.bf16 %v577
    %v1355 = vunpack.c.h.s8.bf16 %v578
    %v1356 = vunpack.c.h.s8.bf16 %v579
    %v1357 = vunpack.c.h.s8.bf16 %v580
    %v1358 = vunpack.c.h.s8.bf16 %v581
    %v1359 = vunpack.c.h.s8.bf16 %v582
    %v1360 = vunpack.c.h.s8.bf16 %v583
    %v1361 = vunpack.c.l.s8.bf16 %v584
    %v1362 = vunpack.c.l.s8.bf16 %v585
    %v1363 = vunpack.c.l.s8.bf16 %v586
    %v1364 = vunpack.c.l.s8.bf16 %v587
    %v1365 = vunpack.c.l.s8.bf16 %v588
    %v1366 = vunpack.c.l.s8.bf16 %v589
    %v1367 = vunpack.c.l.s8.bf16 %v590
    %v1368 = vunpack.c.h.s8.bf16 %v584
    %v1369 = vunpack.c.h.s8.bf16 %v585
    %v1370 = vunpack.c.h.s8.bf16 %v586
    %v1371 = vunpack.c.h.s8.bf16 %v587
    %v1372 = vunpack.c.h.s8.bf16 %v588
    %v1373 = vunpack.c.h.s8.bf16 %v589
    %v1374 = vunpack.c.h.s8.bf16 %v590
    %v1382 = vunpack.c.l.b16 %v192
    %v1383 = vunpack.c.h.b16 %v192
    %v1384 = vunpack.c.l.b16 %v193
    %v1385 = vunpack.c.h.b16 %v193
    %v1386 = vunpack.c.l.b16 %v194
    %v1387 = vunpack.c.h.b16 %v194
    %v1388 = vunpack.c.l.b16 %v195
    %v1389 = vunpack.c.h.b16 %v195
    %v1390 = vunpack.c.l.b16 %v196
    %v1391 = vunpack.c.h.b16 %v196
    %v1392 = vunpack.c.l.b16 %v197
    %v1393 = vunpack.c.h.b16 %v197
    %v1394 = vunpack.c.l.b16 %v198
    %v1395 = vunpack.c.h.b16 %v198
    %v1396 = vpack.c.b16 %v1382, %v1382
    %v1397 = vpack.c.b16 %v1383, %v1383
    %v1398 = vpack.c.b16 %v1384, %v1384
    %v1399 = vpack.c.b16 %v1385, %v1385
    %v1400 = vpack.c.b16 %v1386, %v1386
    %v1401 = vpack.c.b16 %v1387, %v1387
    %v1402 = vpack.c.b16 %v1388, %v1388
    %v1403 = vpack.c.b16 %v1389, %v1389
    %v1404 = vpack.c.b16 %v1390, %v1390
    %v1405 = vpack.c.b16 %v1391, %v1391
    %v1406 = vpack.c.b16 %v1392, %v1392
    %v1407 = vpack.c.b16 %v1393, %v1393
    %v1408 = vpack.c.b16 %v1394, %v1394
    %v1409 = vpack.c.b16 %v1395, %v1395
    %1424 = vmatprep.subr.bf16.mxu0 %v641
    %1425 = vmatpush1.bf16.msra.mxu0 %v640
    %1426 = vmatprep.subr.bf16.mxu0 %v634
    %1427 = vmatpush1.bf16.msra.mxu0 %v633
    %1428 = vmatprep.subr.bf16.mxu0 %v627
    %1429 = vmatpush1.bf16.msra.mxu0 %v626
    %1430 = vmatprep.subr.bf16.mxu0 %v620
    %1431 = vmatpush1.bf16.msra.mxu0 %v619
    %1432 = vmatprep.subr.bf16.mxu0 %v613
    %1433 = vmatpush1.bf16.msra.mxu0 %v612
    %1434 = vmatprep.subr.bf16.mxu0 %v606
    %1435 = vmatpush1.bf16.msra.mxu0 %v605
    %1436 = vmatprep.subr.bf16.mxu0 %v599
    %1437 = vmatpush1.bf16.msra.mxu0 %v598
    %1438 = vmatprep.subr.bf16.mxu0 %v592
    %1439 = vmatpush1.bf16.msra.mxu0 %v591
    %1440 = vmatprep.subr.bf16.mxu0 %v697
    %1441 = vmatpush2.bf16.msra.mxu0 %v696
    %1442 = vmatprep.subr.bf16.mxu0 %v690
    %1443 = vmatpush2.bf16.msra.mxu0 %v689
    %1444 = vmatprep.subr.bf16.mxu0 %v683
    %1445 = vmatpush2.bf16.msra.mxu0 %v682
    %1446 = vmatprep.subr.bf16.mxu0 %v676
    %1447 = vmatpush2.bf16.msra.mxu0 %v675
    %1448 = vmatprep.subr.bf16.mxu0 %v669
    %1449 = vmatpush2.bf16.msra.mxu0 %v668
    %1450 = vmatprep.subr.bf16.mxu0 %v662
    %1451 = vmatpush2.bf16.msra.mxu0 %v661
    %1452 = vmatprep.subr.bf16.mxu0 %v655
    %1453 = vmatpush2.bf16.msra.mxu0 %v654
    %1454 = vmatprep.subr.bf16.mxu0 %v648
    %1455 = vmatpush2.bf16.msra.mxu0 %v647
    %1456 = vmatprep.mubr.bf16.mxu0 %v1397
    %1457 = vmatmul.mubr.bf16.gmra.mxu0 %v1396
    %v1458 = vpop.f32.mrf.mxu0
    %v1459 = vadd.f32 0.0, %v1458
    %v1460 = vpop.f32.mrf.mxu0
    %v1461 = vadd.f32 0.0, %v1460
    %v1462 = vpop.f32.mrf.mxu0
    %v1463 = vpop.f32.mrf.mxu0
    %1464 = vdwg.mxu0
    %1465 = vmatprep.subr.bf16.mxu0 %v753
    %1466 = vmatpush1.bf16.msra.mxu0 %v752
    %1467 = vmatprep.subr.bf16.mxu0 %v746
    %1468 = vmatpush1.bf16.msra.mxu0 %v745
    %1469 = vmatprep.subr.bf16.mxu0 %v739
    %1470 = vmatpush1.bf16.msra.mxu0 %v738
    %1471 = vmatprep.subr.bf16.mxu0 %v732
    %1472 = vmatpush1.bf16.msra.mxu0 %v731
    %1473 = vmatprep.subr.bf16.mxu0 %v725
    %1474 = vmatpush1.bf16.msra.mxu0 %v724
    %1475 = vmatprep.subr.bf16.mxu0 %v718
    %1476 = vmatpush1.bf16.msra.mxu0 %v717
    %1477 = vmatprep.subr.bf16.mxu0 %v711
    %1478 = vmatpush1.bf16.msra.mxu0 %v710
    %1479 = vmatprep.subr.bf16.mxu0 %v704
    %1480 = vmatpush1.bf16.msra.mxu0 %v703
    %1481 = vmatprep.subr.bf16.mxu0 %v809
    %1482 = vmatpush2.bf16.msra.mxu0 %v808
    %1483 = vmatprep.subr.bf16.mxu0 %v802
    %1484 = vmatpush2.bf16.msra.mxu0 %v801
    %1485 = vmatprep.subr.bf16.mxu0 %v795
    %1486 = vmatpush2.bf16.msra.mxu0 %v794
    %1487 = vmatprep.subr.bf16.mxu0 %v788
    %1488 = vmatpush2.bf16.msra.mxu0 %v787
    %1489 = vmatprep.subr.bf16.mxu0 %v781
    %1490 = vmatpush2.bf16.msra.mxu0 %v780
    %1491 = vmatprep.subr.bf16.mxu0 %v774
    %1492 = vmatpush2.bf16.msra.mxu0 %v773
    %1493 = vmatprep.subr.bf16.mxu0 %v767
    %1494 = vmatpush2.bf16.msra.mxu0 %v766
    %1495 = vmatprep.subr.bf16.mxu0 %v760
    %1496 = vmatpush2.bf16.msra.mxu0 %v759
    %1497 = vmatprep.mubr.bf16.mxu0 %v1399
    %1498 = vmatmul.mubr.bf16.gmra.mxu0 %v1398
    %v1499 = vpop.f32.mrf.mxu0
    %v1500 = vadd.f32 %v1459, %v1499
    %v1501 = vpop.f32.mrf.mxu0
    %v1502 = vadd.f32 %v1461, %v1501
    %v1503 = vpop.f32.mrf.mxu0
    %v1504 = vpop.f32.mrf.mxu0
    %1505 = vdwg.mxu0
    %1506 = vmatprep.subr.bf16.mxu0 %v865
    %1507 = vmatpush1.bf16.msra.mxu0 %v864
    %1508 = vmatprep.subr.bf16.mxu0 %v858
    %1509 = vmatpush1.bf16.msra.mxu0 %v857
    %1510 = vmatprep.subr.bf16.mxu0 %v851
    %1511 = vmatpush1.bf16.msra.mxu0 %v850
    %1512 = vmatprep.subr.bf16.mxu0 %v844
    %1513 = vmatpush1.bf16.msra.mxu0 %v843
    %1514 = vmatprep.subr.bf16.mxu0 %v837
    %1515 = vmatpush1.bf16.msra.mxu0 %v836
    %1516 = vmatprep.subr.bf16.mxu0 %v830
    %1517 = vmatpush1.bf16.msra.mxu0 %v829
    %1518 = vmatprep.subr.bf16.mxu0 %v823
    %1519 = vmatpush1.bf16.msra.mxu0 %v822
    %1520 = vmatprep.subr.bf16.mxu0 %v816
    %1521 = vmatpush1.bf16.msra.mxu0 %v815
    %1522 = vmatprep.subr.bf16.mxu0 %v921
    %1523 = vmatpush2.bf16.msra.mxu0 %v920
    %1524 = vmatprep.subr.bf16.mxu0 %v914
    %1525 = vmatpush2.bf16.msra.mxu0 %v913
    %1526 = vmatprep.subr.bf16.mxu0 %v907
    %1527 = vmatpush2.bf16.msra.mxu0 %v906
    %1528 = vmatprep.subr.bf16.mxu0 %v900
    %1529 = vmatpush2.bf16.msra.mxu0 %v899
    %1530 = vmatprep.subr.bf16.mxu0 %v893
    %1531 = vmatpush2.bf16.msra.mxu0 %v892
    %1532 = vmatprep.subr.bf16.mxu0 %v886
    %1533 = vmatpush2.bf16.msra.mxu0 %v885
    %1534 = vmatprep.subr.bf16.mxu0 %v879
    %1535 = vmatpush2.bf16.msra.mxu0 %v878
    %1536 = vmatprep.subr.bf16.mxu0 %v872
    %1537 = vmatpush2.bf16.msra.mxu0 %v871
    %1538 = vmatprep.mubr.bf16.mxu0 %v1401
    %1539 = vmatmul.mubr.bf16.gmra.mxu0 %v1400
    %v1540 = vpop.f32.mrf.mxu0
    %v1541 = vadd.f32 %v1500, %v1540
    %v1542 = vpop.f32.mrf.mxu0
    %v1543 = vadd.f32 %v1502, %v1542
    %v1544 = vpop.f32.mrf.mxu0
    %v1545 = vpop.f32.mrf.mxu0
    %1546 = vdwg.mxu0
    %1547 = vmatprep.subr.bf16.mxu0 %v977
    %1548 = vmatpush1.bf16.msra.mxu0 %v976
    %1549 = vmatprep.subr.bf16.mxu0 %v970
    %1550 = vmatpush1.bf16.msra.mxu0 %v969
    %1551 = vmatprep.subr.bf16.mxu0 %v963
    %1552 = vmatpush1.bf16.msra.mxu0 %v962
    %1553 = vmatprep.subr.bf16.mxu0 %v956
    %1554 = vmatpush1.bf16.msra.mxu0 %v955
    %1555 = vmatprep.subr.bf16.mxu0 %v949
    %1556 = vmatpush1.bf16.msra.mxu0 %v948
    %1557 = vmatprep.subr.bf16.mxu0 %v942
    %1558 = vmatpush1.bf16.msra.mxu0 %v941
    %1559 = vmatprep.subr.bf16.mxu0 %v935
    %1560 = vmatpush1.bf16.msra.mxu0 %v934
    %1561 = vmatprep.subr.bf16.mxu0 %v928
    %1562 = vmatpush1.bf16.msra.mxu0 %v927
    %1563 = vmatprep.subr.bf16.mxu0 %v1033
    %1564 = vmatpush2.bf16.msra.mxu0 %v1032
    %1565 = vmatprep.subr.bf16.mxu0 %v1026
    %1566 = vmatpush2.bf16.msra.mxu0 %v1025
    %1567 = vmatprep.subr.bf16.mxu0 %v1019
    %1568 = vmatpush2.bf16.msra.mxu0 %v1018
    %1569 = vmatprep.subr.bf16.mxu0 %v1012
    %1570 = vmatpush2.bf16.msra.mxu0 %v1011
    %1571 = vmatprep.subr.bf16.mxu0 %v1005
    %1572 = vmatpush2.bf16.msra.mxu0 %v1004
    %1573 = vmatprep.subr.bf16.mxu0 %v998
    %1574 = vmatpush2.bf16.msra.mxu0 %v997
    %1575 = vmatprep.subr.bf16.mxu0 %v991
    %1576 = vmatpush2.bf16.msra.mxu0 %v990
    %1577 = vmatprep.subr.bf16.mxu0 %v984
    %1578 = vmatpush2.bf16.msra.mxu0 %v983
    %1579 = vmatprep.mubr.bf16.mxu0 %v1403
    %1580 = vmatmul.mubr.bf16.gmra.mxu0 %v1402
    %v1581 = vpop.f32.mrf.mxu0
    %v1582 = vadd.f32 %v1541, %v1581
    %v1583 = vpop.f32.mrf.mxu0
    %v1584 = vadd.f32 %v1543, %v1583
    %v1585 = vpop.f32.mrf.mxu0
    %v1586 = vpop.f32.mrf.mxu0
    %1587 = vdwg.mxu0
    %1588 = vmatprep.subr.bf16.mxu0 %v1089
    %1589 = vmatpush1.bf16.msra.mxu0 %v1088
    %1590 = vmatprep.subr.bf16.mxu0 %v1082
    %1591 = vmatpush1.bf16.msra.mxu0 %v1081
    %1592 = vmatprep.subr.bf16.mxu0 %v1075
    %1593 = vmatpush1.bf16.msra.mxu0 %v1074
    %1594 = vmatprep.subr.bf16.mxu0 %v1068
    %1595 = vmatpush1.bf16.msra.mxu0 %v1067
    %1596 = vmatprep.subr.bf16.mxu0 %v1061
    %1597 = vmatpush1.bf16.msra.mxu0 %v1060
    %1598 = vmatprep.subr.bf16.mxu0 %v1054
    %1599 = vmatpush1.bf16.msra.mxu0 %v1053
    %1600 = vmatprep.subr.bf16.mxu0 %v1047
    %1601 = vmatpush1.bf16.msra.mxu0 %v1046
    %1602 = vmatprep.subr.bf16.mxu0 %v1040
    %1603 = vmatpush1.bf16.msra.mxu0 %v1039
    %1604 = vmatprep.subr.bf16.mxu0 %v1145
    %1605 = vmatpush2.bf16.msra.mxu0 %v1144
    %1606 = vmatprep.subr.bf16.mxu0 %v1138
    %1607 = vmatpush2.bf16.msra.mxu0 %v1137
    %1608 = vmatprep.subr.bf16.mxu0 %v1131
    %1609 = vmatpush2.bf16.msra.mxu0 %v1130
    %1610 = vmatprep.subr.bf16.mxu0 %v1124
    %1611 = vmatpush2.bf16.msra.mxu0 %v1123
    %1612 = vmatprep.subr.bf16.mxu0 %v1117
    %1613 = vmatpush2.bf16.msra.mxu0 %v1116
    %1614 = vmatprep.subr.bf16.mxu0 %v1110
    %1615 = vmatpush2.bf16.msra.mxu0 %v1109
    %1616 = vmatprep.subr.bf16.mxu0 %v1103
    %1617 = vmatpush2.bf16.msra.mxu0 %v1102
    %1618 = vmatprep.subr.bf16.mxu0 %v1096
    %1619 = vmatpush2.bf16.msra.mxu0 %v1095
    %1620 = vmatprep.mubr.bf16.mxu0 %v1405
    %1621 = vmatmul.mubr.bf16.gmra.mxu0 %v1404
    %v1622 = vpop.f32.mrf.mxu0
    %v1623 = vadd.f32 %v1582, %v1622
    %v1624 = vpop.f32.mrf.mxu0
    %v1625 = vadd.f32 %v1584, %v1624
    %v1626 = vpop.f32.mrf.mxu0
    %v1627 = vpop.f32.mrf.mxu0
    %1628 = vdwg.mxu0
    %1629 = vmatprep.subr.bf16.mxu0 %v1201
    %1630 = vmatpush1.bf16.msra.mxu0 %v1200
    %1631 = vmatprep.subr.bf16.mxu0 %v1194
    %1632 = vmatpush1.bf16.msra.mxu0 %v1193
    %1633 = vmatprep.subr.bf16.mxu0 %v1187
    %1634 = vmatpush1.bf16.msra.mxu0 %v1186
    %1635 = vmatprep.subr.bf16.mxu0 %v1180
    %1636 = vmatpush1.bf16.msra.mxu0 %v1179
    %1637 = vmatprep.subr.bf16.mxu0 %v1173
    %1638 = vmatpush1.bf16.msra.mxu0 %v1172
    %1639 = vmatprep.subr.bf16.mxu0 %v1166
    %1640 = vmatpush1.bf16.msra.mxu0 %v1165
    %1641 = vmatprep.subr.bf16.mxu0 %v1159
    %1642 = vmatpush1.bf16.msra.mxu0 %v1158
    %1643 = vmatprep.subr.bf16.mxu0 %v1152
    %1644 = vmatpush1.bf16.msra.mxu0 %v1151
    %1645 = vmatprep.subr.bf16.mxu0 %v1257
    %1646 = vmatpush2.bf16.msra.mxu0 %v1256
    %1647 = vmatprep.subr.bf16.mxu0 %v1250
    %1648 = vmatpush2.bf16.msra.mxu0 %v1249
    %1649 = vmatprep.subr.bf16.mxu0 %v1243
    %1650 = vmatpush2.bf16.msra.mxu0 %v1242
    %1651 = vmatprep.subr.bf16.mxu0 %v1236
    %1652 = vmatpush2.bf16.msra.mxu0 %v1235
    %1653 = vmatprep.subr.bf16.mxu0 %v1229
    %1654 = vmatpush2.bf16.msra.mxu0 %v1228
    %1655 = vmatprep.subr.bf16.mxu0 %v1222
    %1656 = vmatpush2.bf16.msra.mxu0 %v1221
    %1657 = vmatprep.subr.bf16.mxu0 %v1215
    %1658 = vmatpush2.bf16.msra.mxu0 %v1214
    %1659 = vmatprep.subr.bf16.mxu0 %v1208
    %1660 = vmatpush2.bf16.msra.mxu0 %v1207
    %1661 = vmatprep.mubr.bf16.mxu0 %v1407
    %1662 = vmatmul.mubr.bf16.gmra.mxu0 %v1406
    %v1663 = vpop.f32.mrf.mxu0
    %v1664 = vadd.f32 %v1623, %v1663
    %v1665 = vpop.f32.mrf.mxu0
    %v1666 = vadd.f32 %v1625, %v1665
    %v1667 = vpop.f32.mrf.mxu0
    %v1668 = vpop.f32.mrf.mxu0
    %1669 = vdwg.mxu0
    %1670 = vmatprep.subr.bf16.mxu0 %v1313
    %1671 = vmatpush1.bf16.msra.mxu0 %v1312
    %1672 = vmatprep.subr.bf16.mxu0 %v1306
    %1673 = vmatpush1.bf16.msra.mxu0 %v1305
    %1674 = vmatprep.subr.bf16.mxu0 %v1299
    %1675 = vmatpush1.bf16.msra.mxu0 %v1298
    %1676 = vmatprep.subr.bf16.mxu0 %v1292
    %1677 = vmatpush1.bf16.msra.mxu0 %v1291
    %1678 = vmatprep.subr.bf16.mxu0 %v1285
    %1679 = vmatpush1.bf16.msra.mxu0 %v1284
    %1680 = vmatprep.subr.bf16.mxu0 %v1278
    %1681 = vmatpush1.bf16.msra.mxu0 %v1277
    %1682 = vmatprep.subr.bf16.mxu0 %v1271
    %1683 = vmatpush1.bf16.msra.mxu0 %v1270
    %1684 = vmatprep.subr.bf16.mxu0 %v1264
    %1685 = vmatpush1.bf16.msra.mxu0 %v1263
    %1686 = vmatprep.subr.bf16.mxu0 %v1369
    %1687 = vmatpush2.bf16.msra.mxu0 %v1368
    %1688 = vmatprep.subr.bf16.mxu0 %v1362
    %1689 = vmatpush2.bf16.msra.mxu0 %v1361
    %1690 = vmatprep.subr.bf16.mxu0 %v1355
    %1691 = vmatpush2.bf16.msra.mxu0 %v1354
    %1692 = vmatprep.subr.bf16.mxu0 %v1348
    %1693 = vmatpush2.bf16.msra.mxu0 %v1347
    %1694 = vmatprep.subr.bf16.mxu0 %v1341
    %1695 = vmatpush2.bf16.msra.mxu0 %v1340
    %1696 = vmatprep.subr.bf16.mxu0 %v1334
    %1697 = vmatpush2.bf16.msra.mxu0 %v1333
    %1698 = vmatprep.subr.bf16.mxu0 %v1327
    %1699 = vmatpush2.bf16.msra.mxu0 %v1326
    %1700 = vmatprep.subr.bf16.mxu0 %v1320
    %1701 = vmatpush2.bf16.msra.mxu0 %v1319
    %1702 = vmatprep.mubr.bf16.mxu0 %v1409
    %1703 = vmatmul.mubr.bf16.gmra.mxu0 %v1408
    %v1704 = vpop.f32.mrf.mxu0
    %v1705 = vadd.f32 %v1664, %v1704
    %v1706 = vpop.f32.mrf.mxu0
    %v1707 = vadd.f32 %v1666, %v1706
    %v1708 = vpop.f32.mrf.mxu0
    %v1709 = vpop.f32.mrf.mxu0
    %1710 = vdwg.mxu0
    %1711 = vmatprep.subr.bf16.mxu0 %v643
    %1712 = vmatpush1.bf16.msra.mxu0 %v642
    %1713 = vmatprep.subr.bf16.mxu0 %v636
    %1714 = vmatpush1.bf16.msra.mxu0 %v635
    %1715 = vmatprep.subr.bf16.mxu0 %v629
    %1716 = vmatpush1.bf16.msra.mxu0 %v628
    %1717 = vmatprep.subr.bf16.mxu0 %v622
    %1718 = vmatpush1.bf16.msra.mxu0 %v621
    %1719 = vmatprep.subr.bf16.mxu0 %v615
    %1720 = vmatpush1.bf16.msra.mxu0 %v614
    %1721 = vmatprep.subr.bf16.mxu0 %v608
    %1722 = vmatpush1.bf16.msra.mxu0 %v607
    %1723 = vmatprep.subr.bf16.mxu0 %v601
    %1724 = vmatpush1.bf16.msra.mxu0 %v600
    %1725 = vmatprep.subr.bf16.mxu0 %v594
    %1726 = vmatpush1.bf16.msra.mxu0 %v593
    %1727 = vmatprep.subr.bf16.mxu0 %v699
    %1728 = vmatpush2.bf16.msra.mxu0 %v698
    %1729 = vmatprep.subr.bf16.mxu0 %v692
    %1730 = vmatpush2.bf16.msra.mxu0 %v691
    %1731 = vmatprep.subr.bf16.mxu0 %v685
    %1732 = vmatpush2.bf16.msra.mxu0 %v684
    %1733 = vmatprep.subr.bf16.mxu0 %v678
    %1734 = vmatpush2.bf16.msra.mxu0 %v677
    %1735 = vmatprep.subr.bf16.mxu0 %v671
    %1736 = vmatpush2.bf16.msra.mxu0 %v670
    %1737 = vmatprep.subr.bf16.mxu0 %v664
    %1738 = vmatpush2.bf16.msra.mxu0 %v663
    %1739 = vmatprep.subr.bf16.mxu0 %v657
    %1740 = vmatpush2.bf16.msra.mxu0 %v656
    %1741 = vmatprep.subr.bf16.mxu0 %v650
    %1742 = vmatpush2.bf16.msra.mxu0 %v649
    %1743 = vmatprep.mubr.bf16.mxu0 %v1397
    %1744 = vmatmul.mubr.bf16.gmra.mxu0 %v1396
    %v1745 = vpop.f32.mrf.mxu0
    %v1746 = vadd.f32 0.0, %v1745
    %v1747 = vpop.f32.mrf.mxu0
    %v1748 = vadd.f32 0.0, %v1747
    %v1749 = vpop.f32.mrf.mxu0
    %v1750 = vpop.f32.mrf.mxu0
    %1751 = vdwg.mxu0
    %1752 = vmatprep.subr.bf16.mxu0 %v755
    %1753 = vmatpush1.bf16.msra.mxu0 %v754
    %1754 = vmatprep.subr.bf16.mxu0 %v748
    %1755 = vmatpush1.bf16.msra.mxu0 %v747
    %1756 = vmatprep.subr.bf16.mxu0 %v741
    %1757 = vmatpush1.bf16.msra.mxu0 %v740
    %1758 = vmatprep.subr.bf16.mxu0 %v734
    %1759 = vmatpush1.bf16.msra.mxu0 %v733
    %1760 = vmatprep.subr.bf16.mxu0 %v727
    %1761 = vmatpush1.bf16.msra.mxu0 %v726
    %1762 = vmatprep.subr.bf16.mxu0 %v720
    %1763 = vmatpush1.bf16.msra.mxu0 %v719
    %1764 = vmatprep.subr.bf16.mxu0 %v713
    %1765 = vmatpush1.bf16.msra.mxu0 %v712
    %1766 = vmatprep.subr.bf16.mxu0 %v706
    %1767 = vmatpush1.bf16.msra.mxu0 %v705
    %1768 = vmatprep.subr.bf16.mxu0 %v811
    %1769 = vmatpush2.bf16.msra.mxu0 %v810
    %1770 = vmatprep.subr.bf16.mxu0 %v804
    %1771 = vmatpush2.bf16.msra.mxu0 %v803
    %1772 = vmatprep.subr.bf16.mxu0 %v797
    %1773 = vmatpush2.bf16.msra.mxu0 %v796
    %1774 = vmatprep.subr.bf16.mxu0 %v790
    %1775 = vmatpush2.bf16.msra.mxu0 %v789
    %1776 = vmatprep.subr.bf16.mxu0 %v783
    %1777 = vmatpush2.bf16.msra.mxu0 %v782
    %1778 = vmatprep.subr.bf16.mxu0 %v776
    %1779 = vmatpush2.bf16.msra.mxu0 %v775
    %1780 = vmatprep.subr.bf16.mxu0 %v769
    %1781 = vmatpush2.bf16.msra.mxu0 %v768
    %1782 = vmatprep.subr.bf16.mxu0 %v762
    %1783 = vmatpush2.bf16.msra.mxu0 %v761
    %1784 = vmatprep.mubr.bf16.mxu0 %v1399
    %1785 = vmatmul.mubr.bf16.gmra.mxu0 %v1398
    %v1786 = vpop.f32.mrf.mxu0
    %v1787 = vadd.f32 %v1746, %v1786
    %v1788 = vpop.f32.mrf.mxu0
    %v1789 = vadd.f32 %v1748, %v1788
    %v1790 = vpop.f32.mrf.mxu0
    %v1791 = vpop.f32.mrf.mxu0
    %1792 = vdwg.mxu0
    %1793 = vmatprep.subr.bf16.mxu0 %v867
    %1794 = vmatpush1.bf16.msra.mxu0 %v866
    %1795 = vmatprep.subr.bf16.mxu0 %v860
    %1796 = vmatpush1.bf16.msra.mxu0 %v859
    %1797 = vmatprep.subr.bf16.mxu0 %v853
    %1798 = vmatpush1.bf16.msra.mxu0 %v852
    %1799 = vmatprep.subr.bf16.mxu0 %v846
    %1800 = vmatpush1.bf16.msra.mxu0 %v845
    %1801 = vmatprep.subr.bf16.mxu0 %v839
    %1802 = vmatpush1.bf16.msra.mxu0 %v838
    %1803 = vmatprep.subr.bf16.mxu0 %v832
    %1804 = vmatpush1.bf16.msra.mxu0 %v831
    %1805 = vmatprep.subr.bf16.mxu0 %v825
    %1806 = vmatpush1.bf16.msra.mxu0 %v824
    %1807 = vmatprep.subr.bf16.mxu0 %v818
    %1808 = vmatpush1.bf16.msra.mxu0 %v817
    %1809 = vmatprep.subr.bf16.mxu0 %v923
    %1810 = vmatpush2.bf16.msra.mxu0 %v922
    %1811 = vmatprep.subr.bf16.mxu0 %v916
    %1812 = vmatpush2.bf16.msra.mxu0 %v915
    %1813 = vmatprep.subr.bf16.mxu0 %v909
    %1814 = vmatpush2.bf16.msra.mxu0 %v908
    %1815 = vmatprep.subr.bf16.mxu0 %v902
    %1816 = vmatpush2.bf16.msra.mxu0 %v901
    %1817 = vmatprep.subr.bf16.mxu0 %v895
    %1818 = vmatpush2.bf16.msra.mxu0 %v894
    %1819 = vmatprep.subr.bf16.mxu0 %v888
    %1820 = vmatpush2.bf16.msra.mxu0 %v887
    %1821 = vmatprep.subr.bf16.mxu0 %v881
    %1822 = vmatpush2.bf16.msra.mxu0 %v880
    %1823 = vmatprep.subr.bf16.mxu0 %v874
    %1824 = vmatpush2.bf16.msra.mxu0 %v873
    %1825 = vmatprep.mubr.bf16.mxu0 %v1401
    %1826 = vmatmul.mubr.bf16.gmra.mxu0 %v1400
    %v1827 = vpop.f32.mrf.mxu0
    %v1828 = vadd.f32 %v1787, %v1827
    %v1829 = vpop.f32.mrf.mxu0
    %v1830 = vadd.f32 %v1789, %v1829
    %v1831 = vpop.f32.mrf.mxu0
    %v1832 = vpop.f32.mrf.mxu0
    %1833 = vdwg.mxu0
    %1834 = vmatprep.subr.bf16.mxu0 %v979
    %1835 = vmatpush1.bf16.msra.mxu0 %v978
    %1836 = vmatprep.subr.bf16.mxu0 %v972
    %1837 = vmatpush1.bf16.msra.mxu0 %v971
    %1838 = vmatprep.subr.bf16.mxu0 %v965
    %1839 = vmatpush1.bf16.msra.mxu0 %v964
    %1840 = vmatprep.subr.bf16.mxu0 %v958
    %1841 = vmatpush1.bf16.msra.mxu0 %v957
    %1842 = vmatprep.subr.bf16.mxu0 %v951
    %1843 = vmatpush1.bf16.msra.mxu0 %v950
    %1844 = vmatprep.subr.bf16.mxu0 %v944
    %1845 = vmatpush1.bf16.msra.mxu0 %v943
    %1846 = vmatprep.subr.bf16.mxu0 %v937
    %1847 = vmatpush1.bf16.msra.mxu0 %v936
    %1848 = vmatprep.subr.bf16.mxu0 %v930
    %1849 = vmatpush1.bf16.msra.mxu0 %v929
    %1850 = vmatprep.subr.bf16.mxu0 %v1035
    %1851 = vmatpush2.bf16.msra.mxu0 %v1034
    %1852 = vmatprep.subr.bf16.mxu0 %v1028
    %1853 = vmatpush2.bf16.msra.mxu0 %v1027
    %1854 = vmatprep.subr.bf16.mxu0 %v1021
    %1855 = vmatpush2.bf16.msra.mxu0 %v1020
    %1856 = vmatprep.subr.bf16.mxu0 %v1014
    %1857 = vmatpush2.bf16.msra.mxu0 %v1013
    %1858 = vmatprep.subr.bf16.mxu0 %v1007
    %1859 = vmatpush2.bf16.msra.mxu0 %v1006
    %1860 = vmatprep.subr.bf16.mxu0 %v1000
    %1861 = vmatpush2.bf16.msra.mxu0 %v999
    %1862 = vmatprep.subr.bf16.mxu0 %v993
    %1863 = vmatpush2.bf16.msra.mxu0 %v992
    %1864 = vmatprep.subr.bf16.mxu0 %v986
    %1865 = vmatpush2.bf16.msra.mxu0 %v985
    %1866 = vmatprep.mubr.bf16.mxu0 %v1403
    %1867 = vmatmul.mubr.bf16.gmra.mxu0 %v1402
    %v1868 = vpop.f32.mrf.mxu0
    %v1869 = vadd.f32 %v1828, %v1868
    %v1870 = vpop.f32.mrf.mxu0
    %v1871 = vadd.f32 %v1830, %v1870
    %v1872 = vpop.f32.mrf.mxu0
    %v1873 = vpop.f32.mrf.mxu0
    %1874 = vdwg.mxu0
    %1875 = vmatprep.subr.bf16.mxu0 %v1091
    %1876 = vmatpush1.bf16.msra.mxu0 %v1090
    %1877 = vmatprep.subr.bf16.mxu0 %v1084
    %1878 = vmatpush1.bf16.msra.mxu0 %v1083
    %1879 = vmatprep.subr.bf16.mxu0 %v1077
    %1880 = vmatpush1.bf16.msra.mxu0 %v1076
    %1881 = vmatprep.subr.bf16.mxu0 %v1070
    %1882 = vmatpush1.bf16.msra.mxu0 %v1069
    %1883 = vmatprep.subr.bf16.mxu0 %v1063
    %1884 = vmatpush1.bf16.msra.mxu0 %v1062
    %1885 = vmatprep.subr.bf16.mxu0 %v1056
    %1886 = vmatpush1.bf16.msra.mxu0 %v1055
    %1887 = vmatprep.subr.bf16.mxu0 %v1049
    %1888 = vmatpush1.bf16.msra.mxu0 %v1048
    %1889 = vmatprep.subr.bf16.mxu0 %v1042
    %1890 = vmatpush1.bf16.msra.mxu0 %v1041
    %1891 = vmatprep.subr.bf16.mxu0 %v1147
    %1892 = vmatpush2.bf16.msra.mxu0 %v1146
    %1893 = vmatprep.subr.bf16.mxu0 %v1140
    %1894 = vmatpush2.bf16.msra.mxu0 %v1139
    %1895 = vmatprep.subr.bf16.mxu0 %v1133
    %1896 = vmatpush2.bf16.msra.mxu0 %v1132
    %1897 = vmatprep.subr.bf16.mxu0 %v1126
    %1898 = vmatpush2.bf16.msra.mxu0 %v1125
    %1899 = vmatprep.subr.bf16.mxu0 %v1119
    %1900 = vmatpush2.bf16.msra.mxu0 %v1118
    %1901 = vmatprep.subr.bf16.mxu0 %v1112
    %1902 = vmatpush2.bf16.msra.mxu0 %v1111
    %1903 = vmatprep.subr.bf16.mxu0 %v1105
    %1904 = vmatpush2.bf16.msra.mxu0 %v1104
    %1905 = vmatprep.subr.bf16.mxu0 %v1098
    %1906 = vmatpush2.bf16.msra.mxu0 %v1097
    %1907 = vmatprep.mubr.bf16.mxu0 %v1405
    %1908 = vmatmul.mubr.bf16.gmra.mxu0 %v1404
    %v1909 = vpop.f32.mrf.mxu0
    %v1910 = vadd.f32 %v1869, %v1909
    %v1911 = vpop.f32.mrf.mxu0
    %v1912 = vadd.f32 %v1871, %v1911
    %v1913 = vpop.f32.mrf.mxu0
    %v1914 = vpop.f32.mrf.mxu0
    %1915 = vdwg.mxu0
    %1916 = vmatprep.subr.bf16.mxu0 %v1203
    %1917 = vmatpush1.bf16.msra.mxu0 %v1202
    %1918 = vmatprep.subr.bf16.mxu0 %v1196
    %1919 = vmatpush1.bf16.msra.mxu0 %v1195
    %1920 = vmatprep.subr.bf16.mxu0 %v1189
    %1921 = vmatpush1.bf16.msra.mxu0 %v1188
    %1922 = vmatprep.subr.bf16.mxu0 %v1182
    %1923 = vmatpush1.bf16.msra.mxu0 %v1181
    %1924 = vmatprep.subr.bf16.mxu0 %v1175
    %1925 = vmatpush1.bf16.msra.mxu0 %v1174
    %1926 = vmatprep.subr.bf16.mxu0 %v1168
    %1927 = vmatpush1.bf16.msra.mxu0 %v1167
    %1928 = vmatprep.subr.bf16.mxu0 %v1161
    %1929 = vmatpush1.bf16.msra.mxu0 %v1160
    %1930 = vmatprep.subr.bf16.mxu0 %v1154
    %1931 = vmatpush1.bf16.msra.mxu0 %v1153
    %1932 = vmatprep.subr.bf16.mxu0 %v1259
    %1933 = vmatpush2.bf16.msra.mxu0 %v1258
    %1934 = vmatprep.subr.bf16.mxu0 %v1252
    %1935 = vmatpush2.bf16.msra.mxu0 %v1251
    %1936 = vmatprep.subr.bf16.mxu0 %v1245
    %1937 = vmatpush2.bf16.msra.mxu0 %v1244
    %1938 = vmatprep.subr.bf16.mxu0 %v1238
    %1939 = vmatpush2.bf16.msra.mxu0 %v1237
    %1940 = vmatprep.subr.bf16.mxu0 %v1231
    %1941 = vmatpush2.bf16.msra.mxu0 %v1230
    %1942 = vmatprep.subr.bf16.mxu0 %v1224
    %1943 = vmatpush2.bf16.msra.mxu0 %v1223
    %1944 = vmatprep.subr.bf16.mxu0 %v1217
    %1945 = vmatpush2.bf16.msra.mxu0 %v1216
    %1946 = vmatprep.subr.bf16.mxu0 %v1210
    %1947 = vmatpush2.bf16.msra.mxu0 %v1209
    %1948 = vmatprep.mubr.bf16.mxu0 %v1407
    %1949 = vmatmul.mubr.bf16.gmra.mxu0 %v1406
    %v1950 = vpop.f32.mrf.mxu0
    %v1951 = vadd.f32 %v1910, %v1950
    %v1952 = vpop.f32.mrf.mxu0
    %v1953 = vadd.f32 %v1912, %v1952
    %v1954 = vpop.f32.mrf.mxu0
    %v1955 = vpop.f32.mrf.mxu0
    %1956 = vdwg.mxu0
    %1957 = vmatprep.subr.bf16.mxu0 %v1315
    %1958 = vmatpush1.bf16.msra.mxu0 %v1314
    %1959 = vmatprep.subr.bf16.mxu0 %v1308
    %1960 = vmatpush1.bf16.msra.mxu0 %v1307
    %1961 = vmatprep.subr.bf16.mxu0 %v1301
    %1962 = vmatpush1.bf16.msra.mxu0 %v1300
    %1963 = vmatprep.subr.bf16.mxu0 %v1294
    %1964 = vmatpush1.bf16.msra.mxu0 %v1293
    %1965 = vmatprep.subr.bf16.mxu0 %v1287
    %1966 = vmatpush1.bf16.msra.mxu0 %v1286
    %1967 = vmatprep.subr.bf16.mxu0 %v1280
    %1968 = vmatpush1.bf16.msra.mxu0 %v1279
    %1969 = vmatprep.subr.bf16.mxu0 %v1273
    %1970 = vmatpush1.bf16.msra.mxu0 %v1272
    %1971 = vmatprep.subr.bf16.mxu0 %v1266
    %1972 = vmatpush1.bf16.msra.mxu0 %v1265
    %1973 = vmatprep.subr.bf16.mxu0 %v1371
    %1974 = vmatpush2.bf16.msra.mxu0 %v1370
    %1975 = vmatprep.subr.bf16.mxu0 %v1364
    %1976 = vmatpush2.bf16.msra.mxu0 %v1363
    %1977 = vmatprep.subr.bf16.mxu0 %v1357
    %1978 = vmatpush2.bf16.msra.mxu0 %v1356
    %1979 = vmatprep.subr.bf16.mxu0 %v1350
    %1980 = vmatpush2.bf16.msra.mxu0 %v1349
    %1981 = vmatprep.subr.bf16.mxu0 %v1343
    %1982 = vmatpush2.bf16.msra.mxu0 %v1342
    %1983 = vmatprep.subr.bf16.mxu0 %v1336
    %1984 = vmatpush2.bf16.msra.mxu0 %v1335
    %1985 = vmatprep.subr.bf16.mxu0 %v1329
    %1986 = vmatpush2.bf16.msra.mxu0 %v1328
    %1987 = vmatprep.subr.bf16.mxu0 %v1322
    %1988 = vmatpush2.bf16.msra.mxu0 %v1321
    %1989 = vmatprep.mubr.bf16.mxu0 %v1409
    %1990 = vmatmul.mubr.bf16.gmra.mxu0 %v1408
    %v1991 = vpop.f32.mrf.mxu0
    %v1992 = vadd.f32 %v1951, %v1991
    %v1993 = vpop.f32.mrf.mxu0
    %v1994 = vadd.f32 %v1953, %v1993
    %v1995 = vpop.f32.mrf.mxu0
    %v1996 = vpop.f32.mrf.mxu0
    %1997 = vdwg.mxu0
    %1998 = vmatprep.subr.bf16.mxu0 %v645
    %1999 = vmatpush1.bf16.msra.mxu0 %v644
    %2000 = vmatprep.subr.bf16.mxu0 %v638
    %2001 = vmatpush1.bf16.msra.mxu0 %v637
    %2002 = vmatprep.subr.bf16.mxu0 %v631
    %2003 = vmatpush1.bf16.msra.mxu0 %v630
    %2004 = vmatprep.subr.bf16.mxu0 %v624
    %2005 = vmatpush1.bf16.msra.mxu0 %v623
    %2006 = vmatprep.subr.bf16.mxu0 %v617
    %2007 = vmatpush1.bf16.msra.mxu0 %v616
    %2008 = vmatprep.subr.bf16.mxu0 %v610
    %2009 = vmatpush1.bf16.msra.mxu0 %v609
    %2010 = vmatprep.subr.bf16.mxu0 %v603
    %2011 = vmatpush1.bf16.msra.mxu0 %v602
    %2012 = vmatprep.subr.bf16.mxu0 %v596
    %2013 = vmatpush1.bf16.msra.mxu0 %v595
    %2014 = vmatprep.subr.bf16.mxu0 %v701
    %2015 = vmatpush2.bf16.msra.mxu0 %v700
    %2016 = vmatprep.subr.bf16.mxu0 %v694
    %2017 = vmatpush2.bf16.msra.mxu0 %v693
    %2018 = vmatprep.subr.bf16.mxu0 %v687
    %2019 = vmatpush2.bf16.msra.mxu0 %v686
    %2020 = vmatprep.subr.bf16.mxu0 %v680
    %2021 = vmatpush2.bf16.msra.mxu0 %v679
    %2022 = vmatprep.subr.bf16.mxu0 %v673
    %2023 = vmatpush2.bf16.msra.mxu0 %v672
    %2024 = vmatprep.subr.bf16.mxu0 %v666
    %2025 = vmatpush2.bf16.msra.mxu0 %v665
    %2026 = vmatprep.subr.bf16.mxu0 %v659
    %2027 = vmatpush2.bf16.msra.mxu0 %v658
    %2028 = vmatprep.subr.bf16.mxu0 %v652
    %2029 = vmatpush2.bf16.msra.mxu0 %v651
    %2030 = vmatprep.mubr.bf16.mxu0 %v1397
    %2031 = vmatmul.mubr.bf16.gmra.mxu0 %v1396
    %v2032 = vpop.f32.mrf.mxu0
    %v2033 = vadd.f32 0.0, %v2032
    %v2034 = vpop.f32.mrf.mxu0
    %v2035 = vadd.f32 0.0, %v2034
    %v2036 = vpop.f32.mrf.mxu0
    %v2037 = vpop.f32.mrf.mxu0
    %2038 = vdwg.mxu0
    %2039 = vmatprep.subr.bf16.mxu0 %v757
    %2040 = vmatpush1.bf16.msra.mxu0 %v756
    %2041 = vmatprep.subr.bf16.mxu0 %v750
    %2042 = vmatpush1.bf16.msra.mxu0 %v749
    %2043 = vmatprep.subr.bf16.mxu0 %v743
    %2044 = vmatpush1.bf16.msra.mxu0 %v742
    %2045 = vmatprep.subr.bf16.mxu0 %v736
    %2046 = vmatpush1.bf16.msra.mxu0 %v735
    %2047 = vmatprep.subr.bf16.mxu0 %v729
    %2048 = vmatpush1.bf16.msra.mxu0 %v728
    %2049 = vmatprep.subr.bf16.mxu0 %v722
    %2050 = vmatpush1.bf16.msra.mxu0 %v721
    %2051 = vmatprep.subr.bf16.mxu0 %v715
    %2052 = vmatpush1.bf16.msra.mxu0 %v714
    %2053 = vmatprep.subr.bf16.mxu0 %v708
    %2054 = vmatpush1.bf16.msra.mxu0 %v707
    %2055 = vmatprep.subr.bf16.mxu0 %v813
    %2056 = vmatpush2.bf16.msra.mxu0 %v812
    %2057 = vmatprep.subr.bf16.mxu0 %v806
    %2058 = vmatpush2.bf16.msra.mxu0 %v805
    %2059 = vmatprep.subr.bf16.mxu0 %v799
    %2060 = vmatpush2.bf16.msra.mxu0 %v798
    %2061 = vmatprep.subr.bf16.mxu0 %v792
    %2062 = vmatpush2.bf16.msra.mxu0 %v791
    %2063 = vmatprep.subr.bf16.mxu0 %v785
    %2064 = vmatpush2.bf16.msra.mxu0 %v784
    %2065 = vmatprep.subr.bf16.mxu0 %v778
    %2066 = vmatpush2.bf16.msra.mxu0 %v777
    %2067 = vmatprep.subr.bf16.mxu0 %v771
    %2068 = vmatpush2.bf16.msra.mxu0 %v770
    %2069 = vmatprep.subr.bf16.mxu0 %v764
    %2070 = vmatpush2.bf16.msra.mxu0 %v763
    %2071 = vmatprep.mubr.bf16.mxu0 %v1399
    %2072 = vmatmul.mubr.bf16.gmra.mxu0 %v1398
    %v2073 = vpop.f32.mrf.mxu0
    %v2074 = vadd.f32 %v2033, %v2073
    %v2075 = vpop.f32.mrf.mxu0
    %v2076 = vadd.f32 %v2035, %v2075
    %v2077 = vpop.f32.mrf.mxu0
    %v2078 = vpop.f32.mrf.mxu0
    %2079 = vdwg.mxu0
    %2080 = vmatprep.subr.bf16.mxu0 %v869
    %2081 = vmatpush1.bf16.msra.mxu0 %v868
    %2082 = vmatprep.subr.bf16.mxu0 %v862
    %2083 = vmatpush1.bf16.msra.mxu0 %v861
    %2084 = vmatprep.subr.bf16.mxu0 %v855
    %2085 = vmatpush1.bf16.msra.mxu0 %v854
    %2086 = vmatprep.subr.bf16.mxu0 %v848
    %2087 = vmatpush1.bf16.msra.mxu0 %v847
    %2088 = vmatprep.subr.bf16.mxu0 %v841
    %2089 = vmatpush1.bf16.msra.mxu0 %v840
    %2090 = vmatprep.subr.bf16.mxu0 %v834
    %2091 = vmatpush1.bf16.msra.mxu0 %v833
    %2092 = vmatprep.subr.bf16.mxu0 %v827
    %2093 = vmatpush1.bf16.msra.mxu0 %v826
    %2094 = vmatprep.subr.bf16.mxu0 %v820
    %2095 = vmatpush1.bf16.msra.mxu0 %v819
    %2096 = vmatprep.subr.bf16.mxu0 %v925
    %2097 = vmatpush2.bf16.msra.mxu0 %v924
    %2098 = vmatprep.subr.bf16.mxu0 %v918
    %2099 = vmatpush2.bf16.msra.mxu0 %v917
    %2100 = vmatprep.subr.bf16.mxu0 %v911
    %2101 = vmatpush2.bf16.msra.mxu0 %v910
    %2102 = vmatprep.subr.bf16.mxu0 %v904
    %2103 = vmatpush2.bf16.msra.mxu0 %v903
    %2104 = vmatprep.subr.bf16.mxu0 %v897
    %2105 = vmatpush2.bf16.msra.mxu0 %v896
    %2106 = vmatprep.subr.bf16.mxu0 %v890
    %2107 = vmatpush2.bf16.msra.mxu0 %v889
    %2108 = vmatprep.subr.bf16.mxu0 %v883
    %2109 = vmatpush2.bf16.msra.mxu0 %v882
    %2110 = vmatprep.subr.bf16.mxu0 %v876
    %2111 = vmatpush2.bf16.msra.mxu0 %v875
    %2112 = vmatprep.mubr.bf16.mxu0 %v1401
    %2113 = vmatmul.mubr.bf16.gmra.mxu0 %v1400
    %v2114 = vpop.f32.mrf.mxu0
    %v2115 = vadd.f32 %v2074, %v2114
    %v2116 = vpop.f32.mrf.mxu0
    %v2117 = vadd.f32 %v2076, %v2116
    %v2118 = vpop.f32.mrf.mxu0
    %v2119 = vpop.f32.mrf.mxu0
    %2120 = vdwg.mxu0
    %2121 = vmatprep.subr.bf16.mxu0 %v981
    %2122 = vmatpush1.bf16.msra.mxu0 %v980
    %2123 = vmatprep.subr.bf16.mxu0 %v974
    %2124 = vmatpush1.bf16.msra.mxu0 %v973
    %2125 = vmatprep.subr.bf16.mxu0 %v967
    %2126 = vmatpush1.bf16.msra.mxu0 %v966
    %2127 = vmatprep.subr.bf16.mxu0 %v960
    %2128 = vmatpush1.bf16.msra.mxu0 %v959
    %2129 = vmatprep.subr.bf16.mxu0 %v953
    %2130 = vmatpush1.bf16.msra.mxu0 %v952
    %2131 = vmatprep.subr.bf16.mxu0 %v946
    %2132 = vmatpush1.bf16.msra.mxu0 %v945
    %2133 = vmatprep.subr.bf16.mxu0 %v939
    %2134 = vmatpush1.bf16.msra.mxu0 %v938
    %2135 = vmatprep.subr.bf16.mxu0 %v932
    %2136 = vmatpush1.bf16.msra.mxu0 %v931
    %2137 = vmatprep.subr.bf16.mxu0 %v1037
    %2138 = vmatpush2.bf16.msra.mxu0 %v1036
    %2139 = vmatprep.subr.bf16.mxu0 %v1030
    %2140 = vmatpush2.bf16.msra.mxu0 %v1029
    %2141 = vmatprep.subr.bf16.mxu0 %v1023
    %2142 = vmatpush2.bf16.msra.mxu0 %v1022
    %2143 = vmatprep.subr.bf16.mxu0 %v1016
    %2144 = vmatpush2.bf16.msra.mxu0 %v1015
    %2145 = vmatprep.subr.bf16.mxu0 %v1009
    %2146 = vmatpush2.bf16.msra.mxu0 %v1008
    %2147 = vmatprep.subr.bf16.mxu0 %v1002
    %2148 = vmatpush2.bf16.msra.mxu0 %v1001
    %2149 = vmatprep.subr.bf16.mxu0 %v995
    %2150 = vmatpush2.bf16.msra.mxu0 %v994
    %2151 = vmatprep.subr.bf16.mxu0 %v988
    %2152 = vmatpush2.bf16.msra.mxu0 %v987
    %2153 = vmatprep.mubr.bf16.mxu0 %v1403
    %2154 = vmatmul.mubr.bf16.gmra.mxu0 %v1402
    %v2155 = vpop.f32.mrf.mxu0
    %v2156 = vadd.f32 %v2115, %v2155
    %v2157 = vpop.f32.mrf.mxu0
    %v2158 = vadd.f32 %v2117, %v2157
    %v2159 = vpop.f32.mrf.mxu0
    %v2160 = vpop.f32.mrf.mxu0
    %2161 = vdwg.mxu0
    %2162 = vmatprep.subr.bf16.mxu0 %v1093
    %2163 = vmatpush1.bf16.msra.mxu0 %v1092
    %2164 = vmatprep.subr.bf16.mxu0 %v1086
    %2165 = vmatpush1.bf16.msra.mxu0 %v1085
    %2166 = vmatprep.subr.bf16.mxu0 %v1079
    %2167 = vmatpush1.bf16.msra.mxu0 %v1078
    %2168 = vmatprep.subr.bf16.mxu0 %v1072
    %2169 = vmatpush1.bf16.msra.mxu0 %v1071
    %2170 = vmatprep.subr.bf16.mxu0 %v1065
    %2171 = vmatpush1.bf16.msra.mxu0 %v1064
    %2172 = vmatprep.subr.bf16.mxu0 %v1058
    %2173 = vmatpush1.bf16.msra.mxu0 %v1057
    %2174 = vmatprep.subr.bf16.mxu0 %v1051
    %2175 = vmatpush1.bf16.msra.mxu0 %v1050
    %2176 = vmatprep.subr.bf16.mxu0 %v1044
    %2177 = vmatpush1.bf16.msra.mxu0 %v1043
    %2178 = vmatprep.subr.bf16.mxu0 %v1149
    %2179 = vmatpush2.bf16.msra.mxu0 %v1148
    %2180 = vmatprep.subr.bf16.mxu0 %v1142
    %2181 = vmatpush2.bf16.msra.mxu0 %v1141
    %2182 = vmatprep.subr.bf16.mxu0 %v1135
    %2183 = vmatpush2.bf16.msra.mxu0 %v1134
    %2184 = vmatprep.subr.bf16.mxu0 %v1128
    %2185 = vmatpush2.bf16.msra.mxu0 %v1127
    %2186 = vmatprep.subr.bf16.mxu0 %v1121
    %2187 = vmatpush2.bf16.msra.mxu0 %v1120
    %2188 = vmatprep.subr.bf16.mxu0 %v1114
    %2189 = vmatpush2.bf16.msra.mxu0 %v1113
    %2190 = vmatprep.subr.bf16.mxu0 %v1107
    %2191 = vmatpush2.bf16.msra.mxu0 %v1106
    %2192 = vmatprep.subr.bf16.mxu0 %v1100
    %2193 = vmatpush2.bf16.msra.mxu0 %v1099
    %2194 = vmatprep.mubr.bf16.mxu0 %v1405
    %2195 = vmatmul.mubr.bf16.gmra.mxu0 %v1404
    %v2196 = vpop.f32.mrf.mxu0
    %v2197 = vadd.f32 %v2156, %v2196
    %v2198 = vpop.f32.mrf.mxu0
    %v2199 = vadd.f32 %v2158, %v2198
    %v2200 = vpop.f32.mrf.mxu0
    %v2201 = vpop.f32.mrf.mxu0
    %2202 = vdwg.mxu0
    %2203 = vmatprep.subr.bf16.mxu0 %v1205
    %2204 = vmatpush1.bf16.msra.mxu0 %v1204
    %2205 = vmatprep.subr.bf16.mxu0 %v1198
    %2206 = vmatpush1.bf16.msra.mxu0 %v1197
    %2207 = vmatprep.subr.bf16.mxu0 %v1191
    %2208 = vmatpush1.bf16.msra.mxu0 %v1190
    %2209 = vmatprep.subr.bf16.mxu0 %v1184
    %2210 = vmatpush1.bf16.msra.mxu0 %v1183
    %2211 = vmatprep.subr.bf16.mxu0 %v1177
    %2212 = vmatpush1.bf16.msra.mxu0 %v1176
    %2213 = vmatprep.subr.bf16.mxu0 %v1170
    %2214 = vmatpush1.bf16.msra.mxu0 %v1169
    %2215 = vmatprep.subr.bf16.mxu0 %v1163
    %2216 = vmatpush1.bf16.msra.mxu0 %v1162
    %2217 = vmatprep.subr.bf16.mxu0 %v1156
    %2218 = vmatpush1.bf16.msra.mxu0 %v1155
    %2219 = vmatprep.subr.bf16.mxu0 %v1261
    %2220 = vmatpush2.bf16.msra.mxu0 %v1260
    %2221 = vmatprep.subr.bf16.mxu0 %v1254
    %2222 = vmatpush2.bf16.msra.mxu0 %v1253
    %2223 = vmatprep.subr.bf16.mxu0 %v1247
    %2224 = vmatpush2.bf16.msra.mxu0 %v1246
    %2225 = vmatprep.subr.bf16.mxu0 %v1240
    %2226 = vmatpush2.bf16.msra.mxu0 %v1239
    %2227 = vmatprep.subr.bf16.mxu0 %v1233
    %2228 = vmatpush2.bf16.msra.mxu0 %v1232
    %2229 = vmatprep.subr.bf16.mxu0 %v1226
    %2230 = vmatpush2.bf16.msra.mxu0 %v1225
    %2231 = vmatprep.subr.bf16.mxu0 %v1219
    %2232 = vmatpush2.bf16.msra.mxu0 %v1218
    %2233 = vmatprep.subr.bf16.mxu0 %v1212
    %2234 = vmatpush2.bf16.msra.mxu0 %v1211
    %2235 = vmatprep.mubr.bf16.mxu0 %v1407
    %2236 = vmatmul.mubr.bf16.gmra.mxu0 %v1406
    %v2237 = vpop.f32.mrf.mxu0
    %v2238 = vadd.f32 %v2197, %v2237
    %v2239 = vpop.f32.mrf.mxu0
    %v2240 = vadd.f32 %v2199, %v2239
    %v2241 = vpop.f32.mrf.mxu0
    %v2242 = vpop.f32.mrf.mxu0
    %2243 = vdwg.mxu0
    %2244 = vmatprep.subr.bf16.mxu0 %v1317
    %2245 = vmatpush1.bf16.msra.mxu0 %v1316
    %2246 = vmatprep.subr.bf16.mxu0 %v1310
    %2247 = vmatpush1.bf16.msra.mxu0 %v1309
    %2248 = vmatprep.subr.bf16.mxu0 %v1303
    %2249 = vmatpush1.bf16.msra.mxu0 %v1302
    %2250 = vmatprep.subr.bf16.mxu0 %v1296
    %2251 = vmatpush1.bf16.msra.mxu0 %v1295
    %2252 = vmatprep.subr.bf16.mxu0 %v1289
    %2253 = vmatpush1.bf16.msra.mxu0 %v1288
    %2254 = vmatprep.subr.bf16.mxu0 %v1282
    %2255 = vmatpush1.bf16.msra.mxu0 %v1281
    %2256 = vmatprep.subr.bf16.mxu0 %v1275
    %2257 = vmatpush1.bf16.msra.mxu0 %v1274
    %2258 = vmatprep.subr.bf16.mxu0 %v1268
    %2259 = vmatpush1.bf16.msra.mxu0 %v1267
    %2260 = vmatprep.subr.bf16.mxu0 %v1373
    %2261 = vmatpush2.bf16.msra.mxu0 %v1372
    %2262 = vmatprep.subr.bf16.mxu0 %v1366
    %2263 = vmatpush2.bf16.msra.mxu0 %v1365
    %2264 = vmatprep.subr.bf16.mxu0 %v1359
    %2265 = vmatpush2.bf16.msra.mxu0 %v1358
    %2266 = vmatprep.subr.bf16.mxu0 %v1352
    %2267 = vmatpush2.bf16.msra.mxu0 %v1351
    %2268 = vmatprep.subr.bf16.mxu0 %v1345
    %2269 = vmatpush2.bf16.msra.mxu0 %v1344
    %2270 = vmatprep.subr.bf16.mxu0 %v1338
    %2271 = vmatpush2.bf16.msra.mxu0 %v1337
    %2272 = vmatprep.subr.bf16.mxu0 %v1331
    %2273 = vmatpush2.bf16.msra.mxu0 %v1330
    %2274 = vmatprep.subr.bf16.mxu0 %v1324
    %2275 = vmatpush2.bf16.msra.mxu0 %v1323
    %2276 = vmatprep.mubr.bf16.mxu0 %v1409
    %2277 = vmatmul.mubr.bf16.gmra.mxu0 %v1408
    %v2278 = vpop.f32.mrf.mxu0
    %v2279 = vadd.f32 %v2238, %v2278
    %v2280 = vpop.f32.mrf.mxu0
    %v2281 = vadd.f32 %v2240, %v2280
    %v2282 = vpop.f32.mrf.mxu0
    %v2283 = vpop.f32.mrf.mxu0
    %2284 = vdwg.mxu0
    %2285 = vmatprep.subr.bf16.mxu0 0
    %2286 = vmatpush1.bf16.msra.mxu0 %v646
    %2287 = vmatprep.subr.bf16.mxu0 0
    %2288 = vmatpush1.bf16.msra.mxu0 %v639
    %2289 = vmatprep.subr.bf16.mxu0 0
    %2290 = vmatpush1.bf16.msra.mxu0 %v632
    %2291 = vmatprep.subr.bf16.mxu0 0
    %2292 = vmatpush1.bf16.msra.mxu0 %v625
    %2293 = vmatprep.subr.bf16.mxu0 0
    %2294 = vmatpush1.bf16.msra.mxu0 %v618
    %2295 = vmatprep.subr.bf16.mxu0 0
    %2296 = vmatpush1.bf16.msra.mxu0 %v611
    %2297 = vmatprep.subr.bf16.mxu0 0
    %2298 = vmatpush1.bf16.msra.mxu0 %v604
    %2299 = vmatprep.subr.bf16.mxu0 0
    %2300 = vmatpush1.bf16.msra.mxu0 %v597
    %2301 = vmatprep.subr.bf16.mxu0 0
    %2302 = vmatpush2.bf16.msra.mxu0 %v702
    %2303 = vmatprep.subr.bf16.mxu0 0
    %2304 = vmatpush2.bf16.msra.mxu0 %v695
    %2305 = vmatprep.subr.bf16.mxu0 0
    %2306 = vmatpush2.bf16.msra.mxu0 %v688
    %2307 = vmatprep.subr.bf16.mxu0 0
    %2308 = vmatpush2.bf16.msra.mxu0 %v681
    %2309 = vmatprep.subr.bf16.mxu0 0
    %2310 = vmatpush2.bf16.msra.mxu0 %v674
    %2311 = vmatprep.subr.bf16.mxu0 0
    %2312 = vmatpush2.bf16.msra.mxu0 %v667
    %2313 = vmatprep.subr.bf16.mxu0 0
    %2314 = vmatpush2.bf16.msra.mxu0 %v660
    %2315 = vmatprep.subr.bf16.mxu0 0
    %2316 = vmatpush2.bf16.msra.mxu0 %v653
    %2317 = vmatprep.mubr.bf16.mxu0 %v1397
    %2318 = vmatmul.mubr.bf16.gmra.mxu0 %v1396
    %v2319 = vpop.f32.mrf.mxu0
    %v2320 = vadd.f32 0.0, %v2319
    %v2321 = vpop.f32.mrf.mxu0
    %v2322 = vpop.f32.mrf.mxu0
    %v2323 = vpop.f32.mrf.mxu0
    %2324 = vdwg.mxu0
    %2325 = vmatprep.subr.bf16.mxu0 0
    %2326 = vmatpush1.bf16.msra.mxu0 %v758
    %2327 = vmatprep.subr.bf16.mxu0 0
    %2328 = vmatpush1.bf16.msra.mxu0 %v751
    %2329 = vmatprep.subr.bf16.mxu0 0
    %2330 = vmatpush1.bf16.msra.mxu0 %v744
    %2331 = vmatprep.subr.bf16.mxu0 0
    %2332 = vmatpush1.bf16.msra.mxu0 %v737
    %2333 = vmatprep.subr.bf16.mxu0 0
    %2334 = vmatpush1.bf16.msra.mxu0 %v730
    %2335 = vmatprep.subr.bf16.mxu0 0
    %2336 = vmatpush1.bf16.msra.mxu0 %v723
    %2337 = vmatprep.subr.bf16.mxu0 0
    %2338 = vmatpush1.bf16.msra.mxu0 %v716
    %2339 = vmatprep.subr.bf16.mxu0 0
    %2340 = vmatpush1.bf16.msra.mxu0 %v709
    %2341 = vmatprep.subr.bf16.mxu0 0
    %2342 = vmatpush2.bf16.msra.mxu0 %v814
    %2343 = vmatprep.subr.bf16.mxu0 0
    %2344 = vmatpush2.bf16.msra.mxu0 %v807
    %2345 = vmatprep.subr.bf16.mxu0 0
    %2346 = vmatpush2.bf16.msra.mxu0 %v800
    %2347 = vmatprep.subr.bf16.mxu0 0
    %2348 = vmatpush2.bf16.msra.mxu0 %v793
    %2349 = vmatprep.subr.bf16.mxu0 0
    %2350 = vmatpush2.bf16.msra.mxu0 %v786
    %2351 = vmatprep.subr.bf16.mxu0 0
    %2352 = vmatpush2.bf16.msra.mxu0 %v779
    %2353 = vmatprep.subr.bf16.mxu0 0
    %2354 = vmatpush2.bf16.msra.mxu0 %v772
    %2355 = vmatprep.subr.bf16.mxu0 0
    %2356 = vmatpush2.bf16.msra.mxu0 %v765
    %2357 = vmatprep.mubr.bf16.mxu0 %v1399
    %2358 = vmatmul.mubr.bf16.gmra.mxu0 %v1398
    %v2359 = vpop.f32.mrf.mxu0
    %v2360 = vadd.f32 %v2320, %v2359
    %v2361 = vpop.f32.mrf.mxu0
    %v2362 = vpop.f32.mrf.mxu0
    %v2363 = vpop.f32.mrf.mxu0
    %2364 = vdwg.mxu0
    %2365 = vmatprep.subr.bf16.mxu0 0
    %2366 = vmatpush1.bf16.msra.mxu0 %v870
    %2367 = vmatprep.subr.bf16.mxu0 0
    %2368 = vmatpush1.bf16.msra.mxu0 %v863
    %2369 = vmatprep.subr.bf16.mxu0 0
    %2370 = vmatpush1.bf16.msra.mxu0 %v856
    %2371 = vmatprep.subr.bf16.mxu0 0
    %2372 = vmatpush1.bf16.msra.mxu0 %v849
    %2373 = vmatprep.subr.bf16.mxu0 0
    %2374 = vmatpush1.bf16.msra.mxu0 %v842
    %2375 = vmatprep.subr.bf16.mxu0 0
    %2376 = vmatpush1.bf16.msra.mxu0 %v835
    %2377 = vmatprep.subr.bf16.mxu0 0
    %2378 = vmatpush1.bf16.msra.mxu0 %v828
    %2379 = vmatprep.subr.bf16.mxu0 0
    %2380 = vmatpush1.bf16.msra.mxu0 %v821
    %2381 = vmatprep.subr.bf16.mxu0 0
    %2382 = vmatpush2.bf16.msra.mxu0 %v926
    %2383 = vmatprep.subr.bf16.mxu0 0
    %2384 = vmatpush2.bf16.msra.mxu0 %v919
    %2385 = vmatprep.subr.bf16.mxu0 0
    %2386 = vmatpush2.bf16.msra.mxu0 %v912
    %2387 = vmatprep.subr.bf16.mxu0 0
    %2388 = vmatpush2.bf16.msra.mxu0 %v905
    %2389 = vmatprep.subr.bf16.mxu0 0
    %2390 = vmatpush2.bf16.msra.mxu0 %v898
    %2391 = vmatprep.subr.bf16.mxu0 0
    %2392 = vmatpush2.bf16.msra.mxu0 %v891
    %2393 = vmatprep.subr.bf16.mxu0 0
    %2394 = vmatpush2.bf16.msra.mxu0 %v884
    %2395 = vmatprep.subr.bf16.mxu0 0
    %2396 = vmatpush2.bf16.msra.mxu0 %v877
    %2397 = vmatprep.mubr.bf16.mxu0 %v1401
    %2398 = vmatmul.mubr.bf16.gmra.mxu0 %v1400
    %v2399 = vpop.f32.mrf.mxu0
    %v2400 = vadd.f32 %v2360, %v2399
    %v2401 = vpop.f32.mrf.mxu0
    %v2402 = vpop.f32.mrf.mxu0
    %v2403 = vpop.f32.mrf.mxu0
    %2404 = vdwg.mxu0
    %2405 = vmatprep.subr.bf16.mxu0 0
    %2406 = vmatpush1.bf16.msra.mxu0 %v982
    %2407 = vmatprep.subr.bf16.mxu0 0
    %2408 = vmatpush1.bf16.msra.mxu0 %v975
    %2409 = vmatprep.subr.bf16.mxu0 0
    %2410 = vmatpush1.bf16.msra.mxu0 %v968
    %2411 = vmatprep.subr.bf16.mxu0 0
    %2412 = vmatpush1.bf16.msra.mxu0 %v961
    %2413 = vmatprep.subr.bf16.mxu0 0
    %2414 = vmatpush1.bf16.msra.mxu0 %v954
    %2415 = vmatprep.subr.bf16.mxu0 0
    %2416 = vmatpush1.bf16.msra.mxu0 %v947
    %2417 = vmatprep.subr.bf16.mxu0 0
    %2418 = vmatpush1.bf16.msra.mxu0 %v940
    %2419 = vmatprep.subr.bf16.mxu0 0
    %2420 = vmatpush1.bf16.msra.mxu0 %v933
    %2421 = vmatprep.subr.bf16.mxu0 0
    %2422 = vmatpush2.bf16.msra.mxu0 %v1038
    %2423 = vmatprep.subr.bf16.mxu0 0
    %2424 = vmatpush2.bf16.msra.mxu0 %v1031
    %2425 = vmatprep.subr.bf16.mxu0 0
    %2426 = vmatpush2.bf16.msra.mxu0 %v1024
    %2427 = vmatprep.subr.bf16.mxu0 0
    %2428 = vmatpush2.bf16.msra.mxu0 %v1017
    %2429 = vmatprep.subr.bf16.mxu0 0
    %2430 = vmatpush2.bf16.msra.mxu0 %v1010
    %2431 = vmatprep.subr.bf16.mxu0 0
    %2432 = vmatpush2.bf16.msra.mxu0 %v1003
    %2433 = vmatprep.subr.bf16.mxu0 0
    %2434 = vmatpush2.bf16.msra.mxu0 %v996
    %2435 = vmatprep.subr.bf16.mxu0 0
    %2436 = vmatpush2.bf16.msra.mxu0 %v989
    %2437 = vmatprep.mubr.bf16.mxu0 %v1403
    %2438 = vmatmul.mubr.bf16.gmra.mxu0 %v1402
    %v2439 = vpop.f32.mrf.mxu0
    %v2440 = vadd.f32 %v2400, %v2439
    %v2441 = vpop.f32.mrf.mxu0
    %v2442 = vpop.f32.mrf.mxu0
    %v2443 = vpop.f32.mrf.mxu0
    %2444 = vdwg.mxu0
    %2445 = vmatprep.subr.bf16.mxu0 0
    %2446 = vmatpush1.bf16.msra.mxu0 %v1094
    %2447 = vmatprep.subr.bf16.mxu0 0
    %2448 = vmatpush1.bf16.msra.mxu0 %v1087
    %2449 = vmatprep.subr.bf16.mxu0 0
    %2450 = vmatpush1.bf16.msra.mxu0 %v1080
    %2451 = vmatprep.subr.bf16.mxu0 0
    %2452 = vmatpush1.bf16.msra.mxu0 %v1073
    %2453 = vmatprep.subr.bf16.mxu0 0
    %2454 = vmatpush1.bf16.msra.mxu0 %v1066
    %2455 = vmatprep.subr.bf16.mxu0 0
    %2456 = vmatpush1.bf16.msra.mxu0 %v1059
    %2457 = vmatprep.subr.bf16.mxu0 0
    %2458 = vmatpush1.bf16.msra.mxu0 %v1052
    %2459 = vmatprep.subr.bf16.mxu0 0
    %2460 = vmatpush1.bf16.msra.mxu0 %v1045
    %2461 = vmatprep.subr.bf16.mxu0 0
    %2462 = vmatpush2.bf16.msra.mxu0 %v1150
    %2463 = vmatprep.subr.bf16.mxu0 0
    %2464 = vmatpush2.bf16.msra.mxu0 %v1143
    %2465 = vmatprep.subr.bf16.mxu0 0
    %2466 = vmatpush2.bf16.msra.mxu0 %v1136
    %2467 = vmatprep.subr.bf16.mxu0 0
    %2468 = vmatpush2.bf16.msra.mxu0 %v1129
    %2469 = vmatprep.subr.bf16.mxu0 0
    %2470 = vmatpush2.bf16.msra.mxu0 %v1122
    %2471 = vmatprep.subr.bf16.mxu0 0
    %2472 = vmatpush2.bf16.msra.mxu0 %v1115
    %2473 = vmatprep.subr.bf16.mxu0 0
    %2474 = vmatpush2.bf16.msra.mxu0 %v1108
    %2475 = vmatprep.subr.bf16.mxu0 0
    %2476 = vmatpush2.bf16.msra.mxu0 %v1101
    %2477 = vmatprep.mubr.bf16.mxu0 %v1405
    %2478 = vmatmul.mubr.bf16.gmra.mxu0 %v1404
    %v2479 = vpop.f32.mrf.mxu0
    %v2480 = vadd.f32 %v2440, %v2479
    %v2481 = vpop.f32.mrf.mxu0
    %v2482 = vpop.f32.mrf.mxu0
    %v2483 = vpop.f32.mrf.mxu0
    %2484 = vdwg.mxu0
    %2485 = vmatprep.subr.bf16.mxu0 0
    %2486 = vmatpush1.bf16.msra.mxu0 %v1206
    %2487 = vmatprep.subr.bf16.mxu0 0
    %2488 = vmatpush1.bf16.msra.mxu0 %v1199
    %2489 = vmatprep.subr.bf16.mxu0 0
    %2490 = vmatpush1.bf16.msra.mxu0 %v1192
    %2491 = vmatprep.subr.bf16.mxu0 0
    %2492 = vmatpush1.bf16.msra.mxu0 %v1185
    %2493 = vmatprep.subr.bf16.mxu0 0
    %2494 = vmatpush1.bf16.msra.mxu0 %v1178
    %2495 = vmatprep.subr.bf16.mxu0 0
    %2496 = vmatpush1.bf16.msra.mxu0 %v1171
    %2497 = vmatprep.subr.bf16.mxu0 0
    %2498 = vmatpush1.bf16.msra.mxu0 %v1164
    %2499 = vmatprep.subr.bf16.mxu0 0
    %2500 = vmatpush1.bf16.msra.mxu0 %v1157
    %2501 = vmatprep.subr.bf16.mxu0 0
    %2502 = vmatpush2.bf16.msra.mxu0 %v1262
    %2503 = vmatprep.subr.bf16.mxu0 0
    %2504 = vmatpush2.bf16.msra.mxu0 %v1255
    %2505 = vmatprep.subr.bf16.mxu0 0
    %2506 = vmatpush2.bf16.msra.mxu0 %v1248
    %2507 = vmatprep.subr.bf16.mxu0 0
    %2508 = vmatpush2.bf16.msra.mxu0 %v1241
    %2509 = vmatprep.subr.bf16.mxu0 0
    %2510 = vmatpush2.bf16.msra.mxu0 %v1234
    %2511 = vmatprep.subr.bf16.mxu0 0
    %2512 = vmatpush2.bf16.msra.mxu0 %v1227
    %2513 = vmatprep.subr.bf16.mxu0 0
    %2514 = vmatpush2.bf16.msra.mxu0 %v1220
    %2515 = vmatprep.subr.bf16.mxu0 0
    %2516 = vmatpush2.bf16.msra.mxu0 %v1213
    %2517 = vmatprep.mubr.bf16.mxu0 %v1407
    %2518 = vmatmul.mubr.bf16.gmra.mxu0 %v1406
    %v2519 = vpop.f32.mrf.mxu0
    %v2520 = vadd.f32 %v2480, %v2519
    %v2521 = vpop.f32.mrf.mxu0
    %v2522 = vpop.f32.mrf.mxu0
    %v2523 = vpop.f32.mrf.mxu0
    %2524 = vdwg.mxu0
    %2525 = vmatprep.subr.bf16.mxu0 0
    %2526 = vmatpush1.bf16.msra.mxu0 %v1318
    %2527 = vmatprep.subr.bf16.mxu0 0
    %2528 = vmatpush1.bf16.msra.mxu0 %v1311
    %2529 = vmatprep.subr.bf16.mxu0 0
    %2530 = vmatpush1.bf16.msra.mxu0 %v1304
    %2531 = vmatprep.subr.bf16.mxu0 0
    %2532 = vmatpush1.bf16.msra.mxu0 %v1297
    %2533 = vmatprep.subr.bf16.mxu0 0
    %2534 = vmatpush1.bf16.msra.mxu0 %v1290
    %2535 = vmatprep.subr.bf16.mxu0 0
    %2536 = vmatpush1.bf16.msra.mxu0 %v1283
    %2537 = vmatprep.subr.bf16.mxu0 0
    %2538 = vmatpush1.bf16.msra.mxu0 %v1276
    %2539 = vmatprep.subr.bf16.mxu0 0
    %2540 = vmatpush1.bf16.msra.mxu0 %v1269
    %2541 = vmatprep.subr.bf16.mxu0 0
    %2542 = vmatpush2.bf16.msra.mxu0 %v1374
    %2543 = vmatprep.subr.bf16.mxu0 0
    %2544 = vmatpush2.bf16.msra.mxu0 %v1367
    %2545 = vmatprep.subr.bf16.mxu0 0
    %2546 = vmatpush2.bf16.msra.mxu0 %v1360
    %2547 = vmatprep.subr.bf16.mxu0 0
    %2548 = vmatpush2.bf16.msra.mxu0 %v1353
    %2549 = vmatprep.subr.bf16.mxu0 0
    %2550 = vmatpush2.bf16.msra.mxu0 %v1346
    %2551 = vmatprep.subr.bf16.mxu0 0
    %2552 = vmatpush2.bf16.msra.mxu0 %v1339
    %2553 = vmatprep.subr.bf16.mxu0 0
    %2554 = vmatpush2.bf16.msra.mxu0 %v1332
    %2555 = vmatprep.subr.bf16.mxu0 0
    %2556 = vmatpush2.bf16.msra.mxu0 %v1325
    %2557 = vmatprep.mubr.bf16.mxu0 %v1409
    %2558 = vmatmul.mubr.bf16.gmra.mxu0 %v1408
    %v2559 = vpop.f32.mrf.mxu0
    %v2560 = vadd.f32 %v2520, %v2559
    %v2561 = vpop.f32.mrf.mxu0
    %v2562 = vpop.f32.mrf.mxu0
    %v2563 = vpop.f32.mrf.mxu0
    %2564 = vdwg.mxu0
    %v2565 = vld [vmem:[#allocation4] sm:$0xff]
    %v2567 = vlaneseq
    %v2568 = vshrl.u32 %v2567, 7
    %v2569 = vsub.s32 0, %v2568
    %v2570 = vrot.slane %v2565, %v2569
    %v2571 = vlaneseq
    %v2572 = vshrl.u32 %v2571, 7
    %v2573 = vsub.s32 1, %v2572
    %v2574 = vrot.slane %v2565, %v2573
    %v2575 = vlaneseq
    %v2576 = vshrl.u32 %v2575, 7
    %v2577 = vsub.s32 2, %v2576
    %v2578 = vrot.slane %v2565, %v2577
    %v2579 = vlaneseq
    %v2580 = vshrl.u32 %v2579, 7
    %v2581 = vsub.s32 3, %v2580
    %v2582 = vrot.slane %v2565, %v2581
    %v2583 = vlaneseq
    %v2584 = vshrl.u32 %v2583, 7
    %v2585 = vsub.s32 4, %v2584
    %v2586 = vrot.slane %v2565, %v2585
    %v2587 = vlaneseq
    %v2588 = vshrl.u32 %v2587, 7
    %v2589 = vsub.s32 5, %v2588
    %v2590 = vrot.slane %v2565, %v2589
    %v2591 = vlaneseq
    %v2592 = vshrl.u32 %v2591, 7
    %v2593 = vsub.s32 6, %v2592
    %v2594 = vrot.slane %v2565, %v2593
    %v2602 = vmul.f32 %v1705, %v2570
    %v2603 = vmul.f32 %v1707, %v2574
    %v2604 = vmul.f32 %v1992, %v2578
    %v2605 = vmul.f32 %v1994, %v2582
    %v2606 = vmul.f32 %v2279, %v2586
    %v2607 = vmul.f32 %v2281, %v2590
    %v2608 = vmul.f32 %v2560, %v2594
    %v2609 = vld [vmem:[#allocation6] sm:$0xff]
    %v2611 = vlaneseq
    %v2612 = vshrl.u32 %v2611, 7
    %v2613 = vsub.s32 0, %v2612
    %v2614 = vrot.slane %v2609, %v2613
    %v2615 = vlaneseq
    %v2616 = vshrl.u32 %v2615, 7
    %v2617 = vsub.s32 1, %v2616
    %v2618 = vrot.slane %v2609, %v2617
    %v2619 = vlaneseq
    %v2620 = vshrl.u32 %v2619, 7
    %v2621 = vsub.s32 2, %v2620
    %v2622 = vrot.slane %v2609, %v2621
    %v2623 = vlaneseq
    %v2624 = vshrl.u32 %v2623, 7
    %v2625 = vsub.s32 3, %v2624
    %v2626 = vrot.slane %v2609, %v2625
    %v2627 = vlaneseq
    %v2628 = vshrl.u32 %v2627, 7
    %v2629 = vsub.s32 4, %v2628
    %v2630 = vrot.slane %v2609, %v2629
    %v2631 = vlaneseq
    %v2632 = vshrl.u32 %v2631, 7
    %v2633 = vsub.s32 5, %v2632
    %v2634 = vrot.slane %v2609, %v2633
    %v2635 = vlaneseq
    %v2636 = vshrl.u32 %v2635, 7
    %v2637 = vsub.s32 6, %v2636
    %v2638 = vrot.slane %v2609, %v2637
    %v2646 = vadd.f32 %v2602, %v2614
    %v2647 = vadd.f32 %v2603, %v2618
    %v2648 = vadd.f32 %v2604, %v2622
    %v2649 = vadd.f32 %v2605, %v2626
    %v2650 = vadd.f32 %v2606, %v2630
    %v2651 = vadd.f32 %v2607, %v2634
    %v2652 = vadd.f32 %v2608, %v2638
    %v2653 = vxor.u32 %v2646, 2147483648
    %v2654 = vxor.u32 %v2647, 2147483648
    %v2655 = vxor.u32 %v2648, 2147483648
    %v2656 = vxor.u32 %v2649, 2147483648
    %v2657 = vxor.u32 %v2650, 2147483648
    %v2658 = vxor.u32 %v2651, 2147483648
    %v2659 = vxor.u32 %v2652, 2147483648
    %v2660 = vmul.f32 %v2653, 1.442695
    %v2661 = vpow.pop %v2660
    %v2662 = vmul.f32 %v2654, 1.442695
    %v2663 = vpow.pop %v2662
    %v2664 = vmul.f32 %v2655, 1.442695
    %v2665 = vpow.pop %v2664
    %v2666 = vmul.f32 %v2656, 1.442695
    %v2667 = vpow.pop %v2666
    %v2668 = vmul.f32 %v2657, 1.442695
    %v2669 = vpow.pop %v2668
    %v2670 = vmul.f32 %v2658, 1.442695
    %v2671 = vpow.pop %v2670
    %v2672 = vmul.f32 %v2659, 1.442695
    %v2673 = vpow.pop %v2672
    %v2674 = vadd.f32 %v2661, 1.0
    %v2675 = vadd.f32 %v2663, 1.0
    %v2676 = vadd.f32 %v2665, 1.0
    %v2677 = vadd.f32 %v2667, 1.0
    %v2678 = vadd.f32 %v2669, 1.0
    %v2679 = vadd.f32 %v2671, 1.0
    %v2680 = vadd.f32 %v2673, 1.0
    %v2681 = vrcp.pop %v2674
    %v2682 = vmul.f32 1.0, %v2681
    %v2683 = vrcp.pop %v2675
    %v2684 = vmul.f32 1.0, %v2683
    %v2685 = vrcp.pop %v2676
    %v2686 = vmul.f32 1.0, %v2685
    %v2687 = vrcp.pop %v2677
    %v2688 = vmul.f32 1.0, %v2687
    %v2689 = vrcp.pop %v2678
    %v2690 = vmul.f32 1.0, %v2689
    %v2691 = vrcp.pop %v2679
    %v2692 = vmul.f32 1.0, %v2691
    %v2693 = vrcp.pop %v2680
    %v2694 = vmul.f32 1.0, %v2693
    %v2695 = vpack.c.bf16 %v2682, %v2682
    %v2696 = vpack.c.bf16 %v2684, %v2684
    %v2697 = vpack.c.bf16 %v2686, %v2686
    %v2698 = vpack.c.bf16 %v2688, %v2688
    %v2699 = vpack.c.bf16 %v2690, %v2690
    %v2700 = vpack.c.bf16 %v2692, %v2692
    %v2701 = vpack.c.bf16 %v2694, %v2694
    %v2702 = vld [vmem:[#allocation7] sm:$0xff]
    %v2703 = vld [vmem:[#allocation7 + $0x8] sm:$0xff]
    %v2704 = vld [vmem:[#allocation7 + $0x10] sm:$0xff]
    %v2705 = vld [vmem:[#allocation7 + $0x18] sm:$0xff]
    %v2706 = vld [vmem:[#allocation7 + $0x20] sm:$0xff]
    %v2707 = vld [vmem:[#allocation7 + $0x28] sm:$0xff]
    %v2708 = vld [vmem:[#allocation7 + $0x30] sm:$0xff]
    %v2709 = vld [vmem:[#allocation7 + $0x38] sm:$0xff]
    %v2710 = vld [vmem:[#allocation7 + $0x40] sm:$0xff]
    %v2711 = vld [vmem:[#allocation7 + $0x48] sm:$0xff]
    %v2712 = vld [vmem:[#allocation7 + $0x50] sm:$0xff]
    %v2713 = vld [vmem:[#allocation7 + $0x58] sm:$0xff]
    %v2714 = vld [vmem:[#allocation7 + $0x60] sm:$0xff]
    %v2715 = vld [vmem:[#allocation7 + $0x68] sm:$0xff]
    %v2716 = vld [vmem:[#allocation7 + $0x70] sm:$0xff]
    %v2717 = vld [vmem:[#allocation7 + $0x78] sm:$0xff]
    %v2718 = vld [vmem:[#allocation7 + $0x80] sm:$0xff]
    %v2719 = vld [vmem:[#allocation7 + $0x88] sm:$0xff]
    %v2720 = vld [vmem:[#allocation7 + $0x90] sm:$0xff]
    %v2721 = vld [vmem:[#allocation7 + $0x98] sm:$0xff]
    %v2722 = vld [vmem:[#allocation7 + $0xa0] sm:$0xff]
    %v2723 = vld [vmem:[#allocation7 + $0xa8] sm:$0xff]
    %v2724 = vld [vmem:[#allocation7 + $0xb0] sm:$0xff]
    %v2725 = vld [vmem:[#allocation7 + $0xb8] sm:$0xff]
    %v2726 = vld [vmem:[#allocation7 + $0xc0] sm:$0xff]
    %v2727 = vld [vmem:[#allocation7 + $0xc8] sm:$0xff]
    %v2728 = vld [vmem:[#allocation7 + $0xd0] sm:$0xff]
    %v2729 = vld [vmem:[#allocation7 + $0xd8] sm:$0xff]
    %v2730 = vld [vmem:[#allocation7 + $0xe0] sm:$0xff]
    %v2731 = vld [vmem:[#allocation7 + $0xe8] sm:$0xff]
    %v2732 = vld [vmem:[#allocation7 + $0xf0] sm:$0xff]
    %v2733 = vld [vmem:[#allocation7 + $0xf8] sm:$0xff]
    %v2734 = vld [vmem:[#allocation7 + $0x100] sm:$0xff]
    %v2735 = vld [vmem:[#allocation7 + $0x108] sm:$0xff]
    %v2736 = vld [vmem:[#allocation7 + $0x110] sm:$0xff]
    %v2737 = vld [vmem:[#allocation7 + $0x118] sm:$0xff]
    %v2738 = vld [vmem:[#allocation7 + $0x120] sm:$0xff]
    %v2739 = vld [vmem:[#allocation7 + $0x128] sm:$0xff]
    %v2740 = vld [vmem:[#allocation7 + $0x130] sm:$0xff]
    %v2741 = vld [vmem:[#allocation7 + $0x138] sm:$0xff]
    %v2742 = vld [vmem:[#allocation7 + $0x140] sm:$0xff]
    %v2743 = vld [vmem:[#allocation7 + $0x148] sm:$0xff]
    %v2744 = vld [vmem:[#allocation7 + $0x150] sm:$0xff]
    %v2745 = vld [vmem:[#allocation7 + $0x158] sm:$0xff]
    %v2746 = vld [vmem:[#allocation7 + $0x160] sm:$0xff]
    %v2747 = vld [vmem:[#allocation7 + $0x168] sm:$0xff]
    %v2748 = vld [vmem:[#allocation7 + $0x170] sm:$0xff]
    %v2749 = vld [vmem:[#allocation7 + $0x178] sm:$0xff]
    %v2750 = vld [vmem:[#allocation7 + $0x180] sm:$0xff]
    %v2751 = vld [vmem:[#allocation7 + $0x188] sm:$0xff]
    %v2752 = vld [vmem:[#allocation7 + $0x190] sm:$0xff]
    %v2753 = vld [vmem:[#allocation7 + $0x198] sm:$0xff]
    %v2754 = vld [vmem:[#allocation7 + $0x1a0] sm:$0xff]
    %v2755 = vld [vmem:[#allocation7 + $0x1a8] sm:$0xff]
    %v2756 = vld [vmem:[#allocation7 + $0x1b0] sm:$0xff]
    %v2757 = vld [vmem:[#allocation7 + $0x1b8] sm:$0xff]
    %v2758 = vld [vmem:[#allocation7 + $0x1c0] sm:$0xff]
    %v2759 = vld [vmem:[#allocation7 + $0x1c8] sm:$0xff]
    %v2760 = vld [vmem:[#allocation7 + $0x1d0] sm:$0xff]
    %v2761 = vld [vmem:[#allocation7 + $0x1d8] sm:$0xff]
    %v2762 = vld [vmem:[#allocation7 + $0x1e0] sm:$0xff]
    %v2763 = vld [vmem:[#allocation7 + $0x1e8] sm:$0xff]
    %v2764 = vld [vmem:[#allocation7 + $0x1f0] sm:$0xff]
    %v2765 = vld [vmem:[#allocation7 + $0x1f8] sm:$0xff]
    %v2766 = vld [vmem:[#allocation7 + $0x200] sm:$0xff]
    %v2767 = vld [vmem:[#allocation7 + $0x208] sm:$0xff]
    %v2768 = vld [vmem:[#allocation7 + $0x210] sm:$0xff]
    %v2769 = vld [vmem:[#allocation7 + $0x218] sm:$0xff]
    %v2770 = vld [vmem:[#allocation7 + $0x220] sm:$0xff]
    %v2771 = vld [vmem:[#allocation7 + $0x228] sm:$0xff]
    %v2772 = vld [vmem:[#allocation7 + $0x230] sm:$0xff]
    %v2773 = vld [vmem:[#allocation7 + $0x238] sm:$0xff]
    %v2774 = vld [vmem:[#allocation7 + $0x240] sm:$0xff]
    %v2775 = vld [vmem:[#allocation7 + $0x248] sm:$0xff]
    %v2776 = vld [vmem:[#allocation7 + $0x250] sm:$0xff]
    %v2777 = vld [vmem:[#allocation7 + $0x258] sm:$0xff]
    %v2778 = vld [vmem:[#allocation7 + $0x260] sm:$0xff]
    %v2779 = vld [vmem:[#allocation7 + $0x268] sm:$0xff]
    %v2780 = vld [vmem:[#allocation7 + $0x270] sm:$0xff]
    %v2781 = vld [vmem:[#allocation7 + $0x278] sm:$0xff]
    %v2782 = vld [vmem:[#allocation7 + $0x280] sm:$0xff]
    %v2783 = vld [vmem:[#allocation7 + $0x288] sm:$0xff]
    %v2784 = vld [vmem:[#allocation7 + $0x290] sm:$0xff]
    %v2785 = vld [vmem:[#allocation7 + $0x298] sm:$0xff]
    %v2786 = vld [vmem:[#allocation7 + $0x2a0] sm:$0xff]
    %v2787 = vld [vmem:[#allocation7 + $0x2a8] sm:$0xff]
    %v2788 = vld [vmem:[#allocation7 + $0x2b0] sm:$0xff]
    %v2789 = vld [vmem:[#allocation7 + $0x2b8] sm:$0xff]
    %v2790 = vld [vmem:[#allocation7 + $0x2c0] sm:$0xff]
    %v2791 = vld [vmem:[#allocation7 + $0x2c8] sm:$0xff]
    %v2792 = vld [vmem:[#allocation7 + $0x2d0] sm:$0xff]
    %v2793 = vld [vmem:[#allocation7 + $0x2d8] sm:$0xff]
    %v2794 = vld [vmem:[#allocation7 + $0x2e0] sm:$0xff]
    %v2795 = vld [vmem:[#allocation7 + $0x2e8] sm:$0xff]
    %v2796 = vld [vmem:[#allocation7 + $0x2f0] sm:$0xff]
    %v2797 = vld [vmem:[#allocation7 + $0x2f8] sm:$0xff]
    %v2798 = vld [vmem:[#allocation7 + $0x300] sm:$0xff]
    %v2799 = vld [vmem:[#allocation7 + $0x308] sm:$0xff]
    %v2800 = vld [vmem:[#allocation7 + $0x310] sm:$0xff]
    %v2801 = vld [vmem:[#allocation7 + $0x318] sm:$0xff]
    %v2802 = vld [vmem:[#allocation7 + $0x320] sm:$0xff]
    %v2803 = vld [vmem:[#allocation7 + $0x328] sm:$0xff]
    %v2804 = vld [vmem:[#allocation7 + $0x330] sm:$0xff]
    %v2805 = vld [vmem:[#allocation7 + $0x338] sm:$0xff]
    %v2806 = vld [vmem:[#allocation7 + $0x340] sm:$0xff]
    %v2807 = vld [vmem:[#allocation7 + $0x348] sm:$0xff]
    %v2808 = vld [vmem:[#allocation7 + $0x350] sm:$0xff]
    %v2809 = vld [vmem:[#allocation7 + $0x358] sm:$0xff]
    %v2810 = vld [vmem:[#allocation7 + $0x360] sm:$0xff]
    %v2811 = vld [vmem:[#allocation7 + $0x368] sm:$0xff]
    %v2812 = vld [vmem:[#allocation7 + $0x370] sm:$0xff]
    %v2813 = vld [vmem:[#allocation7 + $0x378] sm:$0xff]
    %v2814 = vunpack.c.l.s8.bf16 %v2702
    %v2815 = vunpack.c.l.s8.bf16 %v2703
    %v2816 = vunpack.c.l.s8.bf16 %v2704
    %v2817 = vunpack.c.l.s8.bf16 %v2705
    %v2818 = vunpack.c.h.s8.bf16 %v2702
    %v2819 = vunpack.c.h.s8.bf16 %v2703
    %v2820 = vunpack.c.h.s8.bf16 %v2704
    %v2821 = vunpack.c.h.s8.bf16 %v2705
    %v2822 = vunpack.c.l.s8.bf16 %v2706
    %v2823 = vunpack.c.l.s8.bf16 %v2707
    %v2824 = vunpack.c.l.s8.bf16 %v2708
    %v2825 = vunpack.c.l.s8.bf16 %v2709
    %v2826 = vunpack.c.h.s8.bf16 %v2706
    %v2827 = vunpack.c.h.s8.bf16 %v2707
    %v2828 = vunpack.c.h.s8.bf16 %v2708
    %v2829 = vunpack.c.h.s8.bf16 %v2709
    %v2830 = vunpack.c.l.s8.bf16 %v2710
    %v2831 = vunpack.c.l.s8.bf16 %v2711
    %v2832 = vunpack.c.l.s8.bf16 %v2712
    %v2833 = vunpack.c.l.s8.bf16 %v2713
    %v2834 = vunpack.c.h.s8.bf16 %v2710
    %v2835 = vunpack.c.h.s8.bf16 %v2711
    %v2836 = vunpack.c.h.s8.bf16 %v2712
    %v2837 = vunpack.c.h.s8.bf16 %v2713
    %v2838 = vunpack.c.l.s8.bf16 %v2714
    %v2839 = vunpack.c.l.s8.bf16 %v2715
    %v2840 = vunpack.c.l.s8.bf16 %v2716
    %v2841 = vunpack.c.l.s8.bf16 %v2717
    %v2842 = vunpack.c.h.s8.bf16 %v2714
    %v2843 = vunpack.c.h.s8.bf16 %v2715
    %v2844 = vunpack.c.h.s8.bf16 %v2716
    %v2845 = vunpack.c.h.s8.bf16 %v2717
    %v2846 = vunpack.c.l.s8.bf16 %v2718
    %v2847 = vunpack.c.l.s8.bf16 %v2719
    %v2848 = vunpack.c.l.s8.bf16 %v2720
    %v2849 = vunpack.c.l.s8.bf16 %v2721
    %v2850 = vunpack.c.h.s8.bf16 %v2718
    %v2851 = vunpack.c.h.s8.bf16 %v2719
    %v2852 = vunpack.c.h.s8.bf16 %v2720
    %v2853 = vunpack.c.h.s8.bf16 %v2721
    %v2854 = vunpack.c.l.s8.bf16 %v2722
    %v2855 = vunpack.c.l.s8.bf16 %v2723
    %v2856 = vunpack.c.l.s8.bf16 %v2724
    %v2857 = vunpack.c.l.s8.bf16 %v2725
    %v2858 = vunpack.c.h.s8.bf16 %v2722
    %v2859 = vunpack.c.h.s8.bf16 %v2723
    %v2860 = vunpack.c.h.s8.bf16 %v2724
    %v2861 = vunpack.c.h.s8.bf16 %v2725
    %v2862 = vunpack.c.l.s8.bf16 %v2726
    %v2863 = vunpack.c.l.s8.bf16 %v2727
    %v2864 = vunpack.c.l.s8.bf16 %v2728
    %v2865 = vunpack.c.l.s8.bf16 %v2729
    %v2866 = vunpack.c.h.s8.bf16 %v2726
    %v2867 = vunpack.c.h.s8.bf16 %v2727
    %v2868 = vunpack.c.h.s8.bf16 %v2728
    %v2869 = vunpack.c.h.s8.bf16 %v2729
    %v2870 = vunpack.c.l.s8.bf16 %v2730
    %v2871 = vunpack.c.l.s8.bf16 %v2731
    %v2872 = vunpack.c.l.s8.bf16 %v2732
    %v2873 = vunpack.c.l.s8.bf16 %v2733
    %v2874 = vunpack.c.h.s8.bf16 %v2730
    %v2875 = vunpack.c.h.s8.bf16 %v2731
    %v2876 = vunpack.c.h.s8.bf16 %v2732
    %v2877 = vunpack.c.h.s8.bf16 %v2733
    %v2878 = vunpack.c.l.s8.bf16 %v2734
    %v2879 = vunpack.c.l.s8.bf16 %v2735
    %v2880 = vunpack.c.l.s8.bf16 %v2736
    %v2881 = vunpack.c.l.s8.bf16 %v2737
    %v2882 = vunpack.c.h.s8.bf16 %v2734
    %v2883 = vunpack.c.h.s8.bf16 %v2735
    %v2884 = vunpack.c.h.s8.bf16 %v2736
    %v2885 = vunpack.c.h.s8.bf16 %v2737
    %v2886 = vunpack.c.l.s8.bf16 %v2738
    %v2887 = vunpack.c.l.s8.bf16 %v2739
    %v2888 = vunpack.c.l.s8.bf16 %v2740
    %v2889 = vunpack.c.l.s8.bf16 %v2741
    %v2890 = vunpack.c.h.s8.bf16 %v2738
    %v2891 = vunpack.c.h.s8.bf16 %v2739
    %v2892 = vunpack.c.h.s8.bf16 %v2740
    %v2893 = vunpack.c.h.s8.bf16 %v2741
    %v2894 = vunpack.c.l.s8.bf16 %v2742
    %v2895 = vunpack.c.l.s8.bf16 %v2743
    %v2896 = vunpack.c.l.s8.bf16 %v2744
    %v2897 = vunpack.c.l.s8.bf16 %v2745
    %v2898 = vunpack.c.h.s8.bf16 %v2742
    %v2899 = vunpack.c.h.s8.bf16 %v2743
    %v2900 = vunpack.c.h.s8.bf16 %v2744
    %v2901 = vunpack.c.h.s8.bf16 %v2745
    %v2902 = vunpack.c.l.s8.bf16 %v2746
    %v2903 = vunpack.c.l.s8.bf16 %v2747
    %v2904 = vunpack.c.l.s8.bf16 %v2748
    %v2905 = vunpack.c.l.s8.bf16 %v2749
    %v2906 = vunpack.c.h.s8.bf16 %v2746
    %v2907 = vunpack.c.h.s8.bf16 %v2747
    %v2908 = vunpack.c.h.s8.bf16 %v2748
    %v2909 = vunpack.c.h.s8.bf16 %v2749
    %v2910 = vunpack.c.l.s8.bf16 %v2750
    %v2911 = vunpack.c.l.s8.bf16 %v2751
    %v2912 = vunpack.c.l.s8.bf16 %v2752
    %v2913 = vunpack.c.l.s8.bf16 %v2753
    %v2914 = vunpack.c.h.s8.bf16 %v2750
    %v2915 = vunpack.c.h.s8.bf16 %v2751
    %v2916 = vunpack.c.h.s8.bf16 %v2752
    %v2917 = vunpack.c.h.s8.bf16 %v2753
    %v2918 = vunpack.c.l.s8.bf16 %v2754
    %v2919 = vunpack.c.l.s8.bf16 %v2755
    %v2920 = vunpack.c.l.s8.bf16 %v2756
    %v2921 = vunpack.c.l.s8.bf16 %v2757
    %v2922 = vunpack.c.h.s8.bf16 %v2754
    %v2923 = vunpack.c.h.s8.bf16 %v2755
    %v2924 = vunpack.c.h.s8.bf16 %v2756
    %v2925 = vunpack.c.h.s8.bf16 %v2757
    %v2926 = vunpack.c.l.s8.bf16 %v2758
    %v2927 = vunpack.c.l.s8.bf16 %v2759
    %v2928 = vunpack.c.l.s8.bf16 %v2760
    %v2929 = vunpack.c.l.s8.bf16 %v2761
    %v2930 = vunpack.c.h.s8.bf16 %v2758
    %v2931 = vunpack.c.h.s8.bf16 %v2759
    %v2932 = vunpack.c.h.s8.bf16 %v2760
    %v2933 = vunpack.c.h.s8.bf16 %v2761
    %v2934 = vunpack.c.l.s8.bf16 %v2762
    %v2935 = vunpack.c.l.s8.bf16 %v2763
    %v2936 = vunpack.c.l.s8.bf16 %v2764
    %v2937 = vunpack.c.l.s8.bf16 %v2765
    %v2938 = vunpack.c.h.s8.bf16 %v2762
    %v2939 = vunpack.c.h.s8.bf16 %v2763
    %v2940 = vunpack.c.h.s8.bf16 %v2764
    %v2941 = vunpack.c.h.s8.bf16 %v2765
    %v2942 = vunpack.c.l.s8.bf16 %v2766
    %v2943 = vunpack.c.l.s8.bf16 %v2767
    %v2944 = vunpack.c.l.s8.bf16 %v2768
    %v2945 = vunpack.c.l.s8.bf16 %v2769
    %v2946 = vunpack.c.h.s8.bf16 %v2766
    %v2947 = vunpack.c.h.s8.bf16 %v2767
    %v2948 = vunpack.c.h.s8.bf16 %v2768
    %v2949 = vunpack.c.h.s8.bf16 %v2769
    %v2950 = vunpack.c.l.s8.bf16 %v2770
    %v2951 = vunpack.c.l.s8.bf16 %v2771
    %v2952 = vunpack.c.l.s8.bf16 %v2772
    %v2953 = vunpack.c.l.s8.bf16 %v2773
    %v2954 = vunpack.c.h.s8.bf16 %v2770
    %v2955 = vunpack.c.h.s8.bf16 %v2771
    %v2956 = vunpack.c.h.s8.bf16 %v2772
    %v2957 = vunpack.c.h.s8.bf16 %v2773
    %v2958 = vunpack.c.l.s8.bf16 %v2774
    %v2959 = vunpack.c.l.s8.bf16 %v2775
    %v2960 = vunpack.c.l.s8.bf16 %v2776
    %v2961 = vunpack.c.l.s8.bf16 %v2777
    %v2962 = vunpack.c.h.s8.bf16 %v2774
    %v2963 = vunpack.c.h.s8.bf16 %v2775
    %v2964 = vunpack.c.h.s8.bf16 %v2776
    %v2965 = vunpack.c.h.s8.bf16 %v2777
    %v2966 = vunpack.c.l.s8.bf16 %v2778
    %v2967 = vunpack.c.l.s8.bf16 %v2779
    %v2968 = vunpack.c.l.s8.bf16 %v2780
    %v2969 = vunpack.c.l.s8.bf16 %v2781
    %v2970 = vunpack.c.h.s8.bf16 %v2778
    %v2971 = vunpack.c.h.s8.bf16 %v2779
    %v2972 = vunpack.c.h.s8.bf16 %v2780
    %v2973 = vunpack.c.h.s8.bf16 %v2781
    %v2974 = vunpack.c.l.s8.bf16 %v2782
    %v2975 = vunpack.c.l.s8.bf16 %v2783
    %v2976 = vunpack.c.l.s8.bf16 %v2784
    %v2977 = vunpack.c.l.s8.bf16 %v2785
    %v2978 = vunpack.c.h.s8.bf16 %v2782
    %v2979 = vunpack.c.h.s8.bf16 %v2783
    %v2980 = vunpack.c.h.s8.bf16 %v2784
    %v2981 = vunpack.c.h.s8.bf16 %v2785
    %v2982 = vunpack.c.l.s8.bf16 %v2786
    %v2983 = vunpack.c.l.s8.bf16 %v2787
    %v2984 = vunpack.c.l.s8.bf16 %v2788
    %v2985 = vunpack.c.l.s8.bf16 %v2789
    %v2986 = vunpack.c.h.s8.bf16 %v2786
    %v2987 = vunpack.c.h.s8.bf16 %v2787
    %v2988 = vunpack.c.h.s8.bf16 %v2788
    %v2989 = vunpack.c.h.s8.bf16 %v2789
    %v2990 = vunpack.c.l.s8.bf16 %v2790
    %v2991 = vunpack.c.l.s8.bf16 %v2791
    %v2992 = vunpack.c.l.s8.bf16 %v2792
    %v2993 = vunpack.c.l.s8.bf16 %v2793
    %v2994 = vunpack.c.h.s8.bf16 %v2790
    %v2995 = vunpack.c.h.s8.bf16 %v2791
    %v2996 = vunpack.c.h.s8.bf16 %v2792
    %v2997 = vunpack.c.h.s8.bf16 %v2793
    %v2998 = vunpack.c.l.s8.bf16 %v2794
    %v2999 = vunpack.c.l.s8.bf16 %v2795
    %v3000 = vunpack.c.l.s8.bf16 %v2796
    %v3001 = vunpack.c.l.s8.bf16 %v2797
    %v3002 = vunpack.c.h.s8.bf16 %v2794
    %v3003 = vunpack.c.h.s8.bf16 %v2795
    %v3004 = vunpack.c.h.s8.bf16 %v2796
    %v3005 = vunpack.c.h.s8.bf16 %v2797
    %v3006 = vunpack.c.l.s8.bf16 %v2798
    %v3007 = vunpack.c.l.s8.bf16 %v2799
    %v3008 = vunpack.c.l.s8.bf16 %v2800
    %v3009 = vunpack.c.l.s8.bf16 %v2801
    %v3010 = vunpack.c.h.s8.bf16 %v2798
    %v3011 = vunpack.c.h.s8.bf16 %v2799
    %v3012 = vunpack.c.h.s8.bf16 %v2800
    %v3013 = vunpack.c.h.s8.bf16 %v2801
    %v3014 = vunpack.c.l.s8.bf16 %v2802
    %v3015 = vunpack.c.l.s8.bf16 %v2803
    %v3016 = vunpack.c.l.s8.bf16 %v2804
    %v3017 = vunpack.c.l.s8.bf16 %v2805
    %v3018 = vunpack.c.h.s8.bf16 %v2802
    %v3019 = vunpack.c.h.s8.bf16 %v2803
    %v3020 = vunpack.c.h.s8.bf16 %v2804
    %v3021 = vunpack.c.h.s8.bf16 %v2805
    %v3022 = vunpack.c.l.s8.bf16 %v2806
    %v3023 = vunpack.c.l.s8.bf16 %v2807
    %v3024 = vunpack.c.l.s8.bf16 %v2808
    %v3025 = vunpack.c.l.s8.bf16 %v2809
    %v3026 = vunpack.c.h.s8.bf16 %v2806
    %v3027 = vunpack.c.h.s8.bf16 %v2807
    %v3028 = vunpack.c.h.s8.bf16 %v2808
    %v3029 = vunpack.c.h.s8.bf16 %v2809
    %v3030 = vunpack.c.l.s8.bf16 %v2810
    %v3031 = vunpack.c.l.s8.bf16 %v2811
    %v3032 = vunpack.c.l.s8.bf16 %v2812
    %v3033 = vunpack.c.l.s8.bf16 %v2813
    %v3034 = vunpack.c.h.s8.bf16 %v2810
    %v3035 = vunpack.c.h.s8.bf16 %v2811
    %v3036 = vunpack.c.h.s8.bf16 %v2812
    %v3037 = vunpack.c.h.s8.bf16 %v2813
    %3038 = vmatprep.subr.bf16.mxu0 %v2843
    %3039 = vmatpush1.bf16.msra.mxu0 %v2842
    %3040 = vmatprep.subr.bf16.mxu0 %v2839
    %3041 = vmatpush1.bf16.msra.mxu0 %v2838
    %3042 = vmatprep.subr.bf16.mxu0 %v2835
    %3043 = vmatpush1.bf16.msra.mxu0 %v2834
    %3044 = vmatprep.subr.bf16.mxu0 %v2831
    %3045 = vmatpush1.bf16.msra.mxu0 %v2830
    %3046 = vmatprep.subr.bf16.mxu0 %v2827
    %3047 = vmatpush1.bf16.msra.mxu0 %v2826
    %3048 = vmatprep.subr.bf16.mxu0 %v2823
    %3049 = vmatpush1.bf16.msra.mxu0 %v2822
    %3050 = vmatprep.subr.bf16.mxu0 %v2819
    %3051 = vmatpush1.bf16.msra.mxu0 %v2818
    %3052 = vmatprep.subr.bf16.mxu0 %v2815
    %3053 = vmatpush1.bf16.msra.mxu0 %v2814
    %3054 = vmatprep.subr.bf16.mxu0 %v2875
    %3055 = vmatpush2.bf16.msra.mxu0 %v2874
    %3056 = vmatprep.subr.bf16.mxu0 %v2871
    %3057 = vmatpush2.bf16.msra.mxu0 %v2870
    %3058 = vmatprep.subr.bf16.mxu0 %v2867
    %3059 = vmatpush2.bf16.msra.mxu0 %v2866
    %3060 = vmatprep.subr.bf16.mxu0 %v2863
    %3061 = vmatpush2.bf16.msra.mxu0 %v2862
    %3062 = vmatprep.subr.bf16.mxu0 %v2859
    %3063 = vmatpush2.bf16.msra.mxu0 %v2858
    %3064 = vmatprep.subr.bf16.mxu0 %v2855
    %3065 = vmatpush2.bf16.msra.mxu0 %v2854
    %3066 = vmatprep.subr.bf16.mxu0 %v2851
    %3067 = vmatpush2.bf16.msra.mxu0 %v2850
    %3068 = vmatprep.subr.bf16.mxu0 %v2847
    %3069 = vmatpush2.bf16.msra.mxu0 %v2846
    %3070 = vmatprep.mubr.bf16.mxu0 %v2696
    %3071 = vmatmul.mubr.bf16.gmra.mxu0 %v2695
    %v3072 = vpop.f32.mrf.mxu0
    %v3073 = vadd.f32 0.0, %v3072
    %v3074 = vpop.f32.mrf.mxu0
    %v3075 = vadd.f32 0.0, %v3074
    %v3076 = vpop.f32.mrf.mxu0
    %v3077 = vpop.f32.mrf.mxu0
    %3078 = vdwg.mxu0
    %3079 = vmatprep.subr.bf16.mxu0 %v2907
    %3080 = vmatpush1.bf16.msra.mxu0 %v2906
    %3081 = vmatprep.subr.bf16.mxu0 %v2903
    %3082 = vmatpush1.bf16.msra.mxu0 %v2902
    %3083 = vmatprep.subr.bf16.mxu0 %v2899
    %3084 = vmatpush1.bf16.msra.mxu0 %v2898
    %3085 = vmatprep.subr.bf16.mxu0 %v2895
    %3086 = vmatpush1.bf16.msra.mxu0 %v2894
    %3087 = vmatprep.subr.bf16.mxu0 %v2891
    %3088 = vmatpush1.bf16.msra.mxu0 %v2890
    %3089 = vmatprep.subr.bf16.mxu0 %v2887
    %3090 = vmatpush1.bf16.msra.mxu0 %v2886
    %3091 = vmatprep.subr.bf16.mxu0 %v2883
    %3092 = vmatpush1.bf16.msra.mxu0 %v2882
    %3093 = vmatprep.subr.bf16.mxu0 %v2879
    %3094 = vmatpush1.bf16.msra.mxu0 %v2878
    %3095 = vmatprep.subr.bf16.mxu0 %v2939
    %3096 = vmatpush2.bf16.msra.mxu0 %v2938
    %3097 = vmatprep.subr.bf16.mxu0 %v2935
    %3098 = vmatpush2.bf16.msra.mxu0 %v2934
    %3099 = vmatprep.subr.bf16.mxu0 %v2931
    %3100 = vmatpush2.bf16.msra.mxu0 %v2930
    %3101 = vmatprep.subr.bf16.mxu0 %v2927
    %3102 = vmatpush2.bf16.msra.mxu0 %v2926
    %3103 = vmatprep.subr.bf16.mxu0 %v2923
    %3104 = vmatpush2.bf16.msra.mxu0 %v2922
    %3105 = vmatprep.subr.bf16.mxu0 %v2919
    %3106 = vmatpush2.bf16.msra.mxu0 %v2918
    %3107 = vmatprep.subr.bf16.mxu0 %v2915
    %3108 = vmatpush2.bf16.msra.mxu0 %v2914
    %3109 = vmatprep.subr.bf16.mxu0 %v2911
    %3110 = vmatpush2.bf16.msra.mxu0 %v2910
    %3111 = vmatprep.mubr.bf16.mxu0 %v2698
    %3112 = vmatmul.mubr.bf16.gmra.mxu0 %v2697
    %v3113 = vpop.f32.mrf.mxu0
    %v3114 = vadd.f32 %v3073, %v3113
    %v3115 = vpop.f32.mrf.mxu0
    %v3116 = vadd.f32 %v3075, %v3115
    %v3117 = vpop.f32.mrf.mxu0
    %v3118 = vpop.f32.mrf.mxu0
    %3119 = vdwg.mxu0
    %3120 = vmatprep.subr.bf16.mxu0 %v2971
    %3121 = vmatpush1.bf16.msra.mxu0 %v2970
    %3122 = vmatprep.subr.bf16.mxu0 %v2967
    %3123 = vmatpush1.bf16.msra.mxu0 %v2966
    %3124 = vmatprep.subr.bf16.mxu0 %v2963
    %3125 = vmatpush1.bf16.msra.mxu0 %v2962
    %3126 = vmatprep.subr.bf16.mxu0 %v2959
    %3127 = vmatpush1.bf16.msra.mxu0 %v2958
    %3128 = vmatprep.subr.bf16.mxu0 %v2955
    %3129 = vmatpush1.bf16.msra.mxu0 %v2954
    %3130 = vmatprep.subr.bf16.mxu0 %v2951
    %3131 = vmatpush1.bf16.msra.mxu0 %v2950
    %3132 = vmatprep.subr.bf16.mxu0 %v2947
    %3133 = vmatpush1.bf16.msra.mxu0 %v2946
    %3134 = vmatprep.subr.bf16.mxu0 %v2943
    %3135 = vmatpush1.bf16.msra.mxu0 %v2942
    %3136 = vmatprep.subr.bf16.mxu0 %v3003
    %3137 = vmatpush2.bf16.msra.mxu0 %v3002
    %3138 = vmatprep.subr.bf16.mxu0 %v2999
    %3139 = vmatpush2.bf16.msra.mxu0 %v2998
    %3140 = vmatprep.subr.bf16.mxu0 %v2995
    %3141 = vmatpush2.bf16.msra.mxu0 %v2994
    %3142 = vmatprep.subr.bf16.mxu0 %v2991
    %3143 = vmatpush2.bf16.msra.mxu0 %v2990
    %3144 = vmatprep.subr.bf16.mxu0 %v2987
    %3145 = vmatpush2.bf16.msra.mxu0 %v2986
    %3146 = vmatprep.subr.bf16.mxu0 %v2983
    %3147 = vmatpush2.bf16.msra.mxu0 %v2982
    %3148 = vmatprep.subr.bf16.mxu0 %v2979
    %3149 = vmatpush2.bf16.msra.mxu0 %v2978
    %3150 = vmatprep.subr.bf16.mxu0 %v2975
    %3151 = vmatpush2.bf16.msra.mxu0 %v2974
    %3152 = vmatprep.mubr.bf16.mxu0 %v2700
    %3153 = vmatmul.mubr.bf16.gmra.mxu0 %v2699
    %v3154 = vpop.f32.mrf.mxu0
    %v3155 = vadd.f32 %v3114, %v3154
    %v3156 = vpop.f32.mrf.mxu0
    %v3157 = vadd.f32 %v3116, %v3156
    %v3158 = vpop.f32.mrf.mxu0
    %v3159 = vpop.f32.mrf.mxu0
    %3160 = vdwg.mxu0
    %3161 = vmatprep.subr.bf16.mxu0 %v3035
    %3162 = vmatpush1.bf16.msra.mxu0 %v3034
    %3163 = vmatprep.subr.bf16.mxu0 %v3031
    %3164 = vmatpush1.bf16.msra.mxu0 %v3030
    %3165 = vmatprep.subr.bf16.mxu0 %v3027
    %3166 = vmatpush1.bf16.msra.mxu0 %v3026
    %3167 = vmatprep.subr.bf16.mxu0 %v3023
    %3168 = vmatpush1.bf16.msra.mxu0 %v3022
    %3169 = vmatprep.subr.bf16.mxu0 %v3019
    %3170 = vmatpush1.bf16.msra.mxu0 %v3018
    %3171 = vmatprep.subr.bf16.mxu0 %v3015
    %3172 = vmatpush1.bf16.msra.mxu0 %v3014
    %3173 = vmatprep.subr.bf16.mxu0 %v3011
    %3174 = vmatpush1.bf16.msra.mxu0 %v3010
    %3175 = vmatprep.subr.bf16.mxu0 %v3007
    %3176 = vmatpush1.bf16.msra.mxu0 %v3006
    %3177 = vmatprep.subr.bf16.mxu0 0
    %3178 = vmatpush2.bf16.msra.mxu0 0
    %3179 = vmatprep.subr.bf16.mxu0 0
    %3180 = vmatpush2.bf16.msra.mxu0 0
    %3181 = vmatprep.subr.bf16.mxu0 0
    %3182 = vmatpush2.bf16.msra.mxu0 0
    %3183 = vmatprep.subr.bf16.mxu0 0
    %3184 = vmatpush2.bf16.msra.mxu0 0
    %3185 = vmatprep.subr.bf16.mxu0 0
    %3186 = vmatpush2.bf16.msra.mxu0 0
    %3187 = vmatprep.subr.bf16.mxu0 0
    %3188 = vmatpush2.bf16.msra.mxu0 0
    %3189 = vmatprep.subr.bf16.mxu0 0
    %3190 = vmatpush2.bf16.msra.mxu0 0
    %3191 = vmatprep.subr.bf16.mxu0 0
    %3192 = vmatpush2.bf16.msra.mxu0 0
    %3193 = vmatprep.mubr.bf16.mxu0 0
    %3194 = vmatmul.mubr.bf16.gmra.mxu0 %v2701
    %v3195 = vpop.f32.mrf.mxu0
    %v3196 = vadd.f32 %v3155, %v3195
    %v3197 = vpop.f32.mrf.mxu0
    %v3198 = vadd.f32 %v3157, %v3197
    %v3199 = vpop.f32.mrf.mxu0
    %v3200 = vpop.f32.mrf.mxu0
    %3201 = vdwg.mxu0
    %3202 = vmatprep.subr.bf16.mxu0 %v2845
    %3203 = vmatpush1.bf16.msra.mxu0 %v2844
    %3204 = vmatprep.subr.bf16.mxu0 %v2841
    %3205 = vmatpush1.bf16.msra.mxu0 %v2840
    %3206 = vmatprep.subr.bf16.mxu0 %v2837
    %3207 = vmatpush1.bf16.msra.mxu0 %v2836
    %3208 = vmatprep.subr.bf16.mxu0 %v2833
    %3209 = vmatpush1.bf16.msra.mxu0 %v2832
    %3210 = vmatprep.subr.bf16.mxu0 %v2829
    %3211 = vmatpush1.bf16.msra.mxu0 %v2828
    %3212 = vmatprep.subr.bf16.mxu0 %v2825
    %3213 = vmatpush1.bf16.msra.mxu0 %v2824
    %3214 = vmatprep.subr.bf16.mxu0 %v2821
    %3215 = vmatpush1.bf16.msra.mxu0 %v2820
    %3216 = vmatprep.subr.bf16.mxu0 %v2817
    %3217 = vmatpush1.bf16.msra.mxu0 %v2816
    %3218 = vmatprep.subr.bf16.mxu0 %v2877
    %3219 = vmatpush2.bf16.msra.mxu0 %v2876
    %3220 = vmatprep.subr.bf16.mxu0 %v2873
    %3221 = vmatpush2.bf16.msra.mxu0 %v2872
    %3222 = vmatprep.subr.bf16.mxu0 %v2869
    %3223 = vmatpush2.bf16.msra.mxu0 %v2868
    %3224 = vmatprep.subr.bf16.mxu0 %v2865
    %3225 = vmatpush2.bf16.msra.mxu0 %v2864
    %3226 = vmatprep.subr.bf16.mxu0 %v2861
    %3227 = vmatpush2.bf16.msra.mxu0 %v2860
    %3228 = vmatprep.subr.bf16.mxu0 %v2857
    %3229 = vmatpush2.bf16.msra.mxu0 %v2856
    %3230 = vmatprep.subr.bf16.mxu0 %v2853
    %3231 = vmatpush2.bf16.msra.mxu0 %v2852
    %3232 = vmatprep.subr.bf16.mxu0 %v2849
    %3233 = vmatpush2.bf16.msra.mxu0 %v2848
    %3234 = vmatprep.mubr.bf16.mxu0 %v2696
    %3235 = vmatmul.mubr.bf16.gmra.mxu0 %v2695
    %v3236 = vpop.f32.mrf.mxu0
    %v3237 = vadd.f32 0.0, %v3236
    %v3238 = vpop.f32.mrf.mxu0
    %v3239 = vadd.f32 0.0, %v3238
    %v3240 = vpop.f32.mrf.mxu0
    %v3241 = vpop.f32.mrf.mxu0
    %3242 = vdwg.mxu0
    %3243 = vmatprep.subr.bf16.mxu0 %v2909
    %3244 = vmatpush1.bf16.msra.mxu0 %v2908
    %3245 = vmatprep.subr.bf16.mxu0 %v2905
    %3246 = vmatpush1.bf16.msra.mxu0 %v2904
    %3247 = vmatprep.subr.bf16.mxu0 %v2901
    %3248 = vmatpush1.bf16.msra.mxu0 %v2900
    %3249 = vmatprep.subr.bf16.mxu0 %v2897
    %3250 = vmatpush1.bf16.msra.mxu0 %v2896
    %3251 = vmatprep.subr.bf16.mxu0 %v2893
    %3252 = vmatpush1.bf16.msra.mxu0 %v2892
    %3253 = vmatprep.subr.bf16.mxu0 %v2889
    %3254 = vmatpush1.bf16.msra.mxu0 %v2888
    %3255 = vmatprep.subr.bf16.mxu0 %v2885
    %3256 = vmatpush1.bf16.msra.mxu0 %v2884
    %3257 = vmatprep.subr.bf16.mxu0 %v2881
    %3258 = vmatpush1.bf16.msra.mxu0 %v2880
    %3259 = vmatprep.subr.bf16.mxu0 %v2941
    %3260 = vmatpush2.bf16.msra.mxu0 %v2940
    %3261 = vmatprep.subr.bf16.mxu0 %v2937
    %3262 = vmatpush2.bf16.msra.mxu0 %v2936
    %3263 = vmatprep.subr.bf16.mxu0 %v2933
    %3264 = vmatpush2.bf16.msra.mxu0 %v2932
    %3265 = vmatprep.subr.bf16.mxu0 %v2929
    %3266 = vmatpush2.bf16.msra.mxu0 %v2928
    %3267 = vmatprep.subr.bf16.mxu0 %v2925
    %3268 = vmatpush2.bf16.msra.mxu0 %v2924
    %3269 = vmatprep.subr.bf16.mxu0 %v2921
    %3270 = vmatpush2.bf16.msra.mxu0 %v2920
    %3271 = vmatprep.subr.bf16.mxu0 %v2917
    %3272 = vmatpush2.bf16.msra.mxu0 %v2916
    %3273 = vmatprep.subr.bf16.mxu0 %v2913
    %3274 = vmatpush2.bf16.msra.mxu0 %v2912
    %3275 = vmatprep.mubr.bf16.mxu0 %v2698
    %3276 = vmatmul.mubr.bf16.gmra.mxu0 %v2697
    %v3277 = vpop.f32.mrf.mxu0
    %v3278 = vadd.f32 %v3237, %v3277
    %v3279 = vpop.f32.mrf.mxu0
    %v3280 = vadd.f32 %v3239, %v3279
    %v3281 = vpop.f32.mrf.mxu0
    %v3282 = vpop.f32.mrf.mxu0
    %3283 = vdwg.mxu0
    %3284 = vmatprep.subr.bf16.mxu0 %v2973
    %3285 = vmatpush1.bf16.msra.mxu0 %v2972
    %3286 = vmatprep.subr.bf16.mxu0 %v2969
    %3287 = vmatpush1.bf16.msra.mxu0 %v2968
    %3288 = vmatprep.subr.bf16.mxu0 %v2965
    %3289 = vmatpush1.bf16.msra.mxu0 %v2964
    %3290 = vmatprep.subr.bf16.mxu0 %v2961
    %3291 = vmatpush1.bf16.msra.mxu0 %v2960
    %3292 = vmatprep.subr.bf16.mxu0 %v2957
    %3293 = vmatpush1.bf16.msra.mxu0 %v2956
    %3294 = vmatprep.subr.bf16.mxu0 %v2953
    %3295 = vmatpush1.bf16.msra.mxu0 %v2952
    %3296 = vmatprep.subr.bf16.mxu0 %v2949
    %3297 = vmatpush1.bf16.msra.mxu0 %v2948
    %3298 = vmatprep.subr.bf16.mxu0 %v2945
    %3299 = vmatpush1.bf16.msra.mxu0 %v2944
    %3300 = vmatprep.subr.bf16.mxu0 %v3005
    %3301 = vmatpush2.bf16.msra.mxu0 %v3004
    %3302 = vmatprep.subr.bf16.mxu0 %v3001
    %3303 = vmatpush2.bf16.msra.mxu0 %v3000
    %3304 = vmatprep.subr.bf16.mxu0 %v2997
    %3305 = vmatpush2.bf16.msra.mxu0 %v2996
    %3306 = vmatprep.subr.bf16.mxu0 %v2993
    %3307 = vmatpush2.bf16.msra.mxu0 %v2992
    %3308 = vmatprep.subr.bf16.mxu0 %v2989
    %3309 = vmatpush2.bf16.msra.mxu0 %v2988
    %3310 = vmatprep.subr.bf16.mxu0 %v2985
    %3311 = vmatpush2.bf16.msra.mxu0 %v2984
    %3312 = vmatprep.subr.bf16.mxu0 %v2981
    %3313 = vmatpush2.bf16.msra.mxu0 %v2980
    %3314 = vmatprep.subr.bf16.mxu0 %v2977
    %3315 = vmatpush2.bf16.msra.mxu0 %v2976
    %3316 = vmatprep.mubr.bf16.mxu0 %v2700
    %3317 = vmatmul.mubr.bf16.gmra.mxu0 %v2699
    %v3318 = vpop.f32.mrf.mxu0
    %v3319 = vadd.f32 %v3278, %v3318
    %v3320 = vpop.f32.mrf.mxu0
    %v3321 = vadd.f32 %v3280, %v3320
    %v3322 = vpop.f32.mrf.mxu0
    %v3323 = vpop.f32.mrf.mxu0
    %3324 = vdwg.mxu0
    %3325 = vmatprep.subr.bf16.mxu0 %v3037
    %3326 = vmatpush1.bf16.msra.mxu0 %v3036
    %3327 = vmatprep.subr.bf16.mxu0 %v3033
    %3328 = vmatpush1.bf16.msra.mxu0 %v3032
    %3329 = vmatprep.subr.bf16.mxu0 %v3029
    %3330 = vmatpush1.bf16.msra.mxu0 %v3028
    %3331 = vmatprep.subr.bf16.mxu0 %v3025
    %3332 = vmatpush1.bf16.msra.mxu0 %v3024
    %3333 = vmatprep.subr.bf16.mxu0 %v3021
    %3334 = vmatpush1.bf16.msra.mxu0 %v3020
    %3335 = vmatprep.subr.bf16.mxu0 %v3017
    %3336 = vmatpush1.bf16.msra.mxu0 %v3016
    %3337 = vmatprep.subr.bf16.mxu0 %v3013
    %3338 = vmatpush1.bf16.msra.mxu0 %v3012
    %3339 = vmatprep.subr.bf16.mxu0 %v3009
    %3340 = vmatpush1.bf16.msra.mxu0 %v3008
    %3341 = vmatprep.subr.bf16.mxu0 0
    %3342 = vmatpush2.bf16.msra.mxu0 0
    %3343 = vmatprep.subr.bf16.mxu0 0
    %3344 = vmatpush2.bf16.msra.mxu0 0
    %3345 = vmatprep.subr.bf16.mxu0 0
    %3346 = vmatpush2.bf16.msra.mxu0 0
    %3347 = vmatprep.subr.bf16.mxu0 0
    %3348 = vmatpush2.bf16.msra.mxu0 0
    %3349 = vmatprep.subr.bf16.mxu0 0
    %3350 = vmatpush2.bf16.msra.mxu0 0
    %3351 = vmatprep.subr.bf16.mxu0 0
    %3352 = vmatpush2.bf16.msra.mxu0 0
    %3353 = vmatprep.subr.bf16.mxu0 0
    %3354 = vmatpush2.bf16.msra.mxu0 0
    %3355 = vmatprep.subr.bf16.mxu0 0
    %3356 = vmatpush2.bf16.msra.mxu0 0
    %3357 = vmatprep.mubr.bf16.mxu0 0
    %3358 = vmatmul.mubr.bf16.gmra.mxu0 %v2701
    %v3359 = vpop.f32.mrf.mxu0
    %v3360 = vadd.f32 %v3319, %v3359
    %v3361 = vpop.f32.mrf.mxu0
    %v3362 = vadd.f32 %v3321, %v3361
    %v3363 = vpop.f32.mrf.mxu0
    %v3364 = vpop.f32.mrf.mxu0
    %3365 = vdwg.mxu0
    %v3366 = vld [vmem:[#allocation9] sm:$0xf]
    %v3368 = vlaneseq
    %v3369 = vshrl.u32 %v3368, 7
    %v3370 = vsub.s32 0, %v3369
    %v3371 = vrot.slane %v3366, %v3370
    %v3372 = vlaneseq
    %v3373 = vshrl.u32 %v3372, 7
    %v3374 = vsub.s32 1, %v3373
    %v3375 = vrot.slane %v3366, %v3374
    %v3376 = vlaneseq
    %v3377 = vshrl.u32 %v3376, 7
    %v3378 = vsub.s32 2, %v3377
    %v3379 = vrot.slane %v3366, %v3378
    %v3380 = vlaneseq
    %v3381 = vshrl.u32 %v3380, 7
    %v3382 = vsub.s32 3, %v3381
    %v3383 = vrot.slane %v3366, %v3382
    %v3388 = vmul.f32 %v3196, %v3371
    %v3389 = vmul.f32 %v3198, %v3375
    %v3390 = vmul.f32 %v3360, %v3379
    %v3391 = vmul.f32 %v3362, %v3383
    %v3392 = vld [vmem:[#allocation10] sm:$0xf]
    %v3394 = vlaneseq
    %v3395 = vshrl.u32 %v3394, 7
    %v3396 = vsub.s32 0, %v3395
    %v3397 = vrot.slane %v3392, %v3396
    %v3398 = vlaneseq
    %v3399 = vshrl.u32 %v3398, 7
    %v3400 = vsub.s32 1, %v3399
    %v3401 = vrot.slane %v3392, %v3400
    %v3402 = vlaneseq
    %v3403 = vshrl.u32 %v3402, 7
    %v3404 = vsub.s32 2, %v3403
    %v3405 = vrot.slane %v3392, %v3404
    %v3406 = vlaneseq
    %v3407 = vshrl.u32 %v3406, 7
    %v3408 = vsub.s32 3, %v3407
    %v3409 = vrot.slane %v3392, %v3408
    %v3414 = vadd.f32 %v3388, %v3397
    %v3415 = vadd.f32 %v3389, %v3401
    %v3416 = vadd.f32 %v3390, %v3405
    %v3417 = vadd.f32 %v3391, %v3409
    %v3418 = vxor.u32 %v3414, 2147483648
    %v3419 = vxor.u32 %v3415, 2147483648
    %v3420 = vxor.u32 %v3416, 2147483648
    %v3421 = vxor.u32 %v3417, 2147483648
    %v3422 = vmul.f32 %v3418, 1.442695
    %v3423 = vpow.pop %v3422
    %v3424 = vmul.f32 %v3419, 1.442695
    %v3425 = vpow.pop %v3424
    %v3426 = vmul.f32 %v3420, 1.442695
    %v3427 = vpow.pop %v3426
    %v3428 = vmul.f32 %v3421, 1.442695
    %v3429 = vpow.pop %v3428
    %v3430 = vadd.f32 %v3423, 1.0
    %v3431 = vadd.f32 %v3425, 1.0
    %v3432 = vadd.f32 %v3427, 1.0
    %v3433 = vadd.f32 %v3429, 1.0
    %v3434 = vrcp.pop %v3430
    %v3435 = vmul.f32 1.0, %v3434
    %v3436 = vrcp.pop %v3431
    %v3437 = vmul.f32 1.0, %v3436
    %v3438 = vrcp.pop %v3432
    %v3439 = vmul.f32 1.0, %v3438
    %v3440 = vrcp.pop %v3433
    %v3441 = vmul.f32 1.0, %v3440
    %v3442 = vpack.c.bf16 %v3435, %v3435
    %v3443 = vpack.c.bf16 %v3437, %v3437
    %v3444 = vpack.c.bf16 %v3439, %v3439
    %v3445 = vpack.c.bf16 %v3441, %v3441
    %v3446 = vld [vmem:[#allocation12] sm:$0xff]
    %v3447 = vld [vmem:[#allocation12 + $0x8] sm:$0xff]
    %v3448 = vld [vmem:[#allocation12 + $0x10] sm:$0xff]
    %v3449 = vld [vmem:[#allocation12 + $0x18] sm:$0xff]
    %v3450 = vld [vmem:[#allocation12 + $0x20] sm:$0xff]
    %v3451 = vld [vmem:[#allocation12 + $0x28] sm:$0xff]
    %v3452 = vld [vmem:[#allocation12 + $0x30] sm:$0xff]
    %v3453 = vld [vmem:[#allocation12 + $0x38] sm:$0xff]
    %v3454 = vld [vmem:[#allocation12 + $0x40] sm:$0xff]
    %v3455 = vld [vmem:[#allocation12 + $0x48] sm:$0xff]
    %v3456 = vld [vmem:[#allocation12 + $0x50] sm:$0xff]
    %v3457 = vld [vmem:[#allocation12 + $0x58] sm:$0xff]
    %v3458 = vld [vmem:[#allocation12 + $0x60] sm:$0xff]
    %v3459 = vld [vmem:[#allocation12 + $0x68] sm:$0xff]
    %v3460 = vld [vmem:[#allocation12 + $0x70] sm:$0xff]
    %v3461 = vld [vmem:[#allocation12 + $0x78] sm:$0xff]
    %v3462 = vld [vmem:[#allocation12 + $0x80] sm:$0xff]
    %v3463 = vld [vmem:[#allocation12 + $0x88] sm:$0xff]
    %v3464 = vld [vmem:[#allocation12 + $0x90] sm:$0xff]
    %v3465 = vld [vmem:[#allocation12 + $0x98] sm:$0xff]
    %v3466 = vld [vmem:[#allocation12 + $0xa0] sm:$0xff]
    %v3467 = vld [vmem:[#allocation12 + $0xa8] sm:$0xff]
    %v3468 = vld [vmem:[#allocation12 + $0xb0] sm:$0xff]
    %v3469 = vld [vmem:[#allocation12 + $0xb8] sm:$0xff]
    %v3470 = vld [vmem:[#allocation12 + $0xc0] sm:$0xff]
    %v3471 = vld [vmem:[#allocation12 + $0xc8] sm:$0xff]
    %v3472 = vld [vmem:[#allocation12 + $0xd0] sm:$0xff]
    %v3473 = vld [vmem:[#allocation12 + $0xd8] sm:$0xff]
    %v3474 = vld [vmem:[#allocation12 + $0xe0] sm:$0xff]
    %v3475 = vld [vmem:[#allocation12 + $0xe8] sm:$0xff]
    %v3476 = vld [vmem:[#allocation12 + $0xf0] sm:$0xff]
    %v3477 = vld [vmem:[#allocation12 + $0xf8] sm:$0xff]
    %v3478 = vld [vmem:[#allocation12 + $0x100] sm:$0xff]
    %v3479 = vld [vmem:[#allocation12 + $0x108] sm:$0xff]
    %v3480 = vld [vmem:[#allocation12 + $0x110] sm:$0xff]
    %v3481 = vld [vmem:[#allocation12 + $0x118] sm:$0xff]
    %v3482 = vld [vmem:[#allocation12 + $0x120] sm:$0xff]
    %v3483 = vld [vmem:[#allocation12 + $0x128] sm:$0xff]
    %v3484 = vld [vmem:[#allocation12 + $0x130] sm:$0xff]
    %v3485 = vld [vmem:[#allocation12 + $0x138] sm:$0xff]
    %v3486 = vld [vmem:[#allocation12 + $0x140] sm:$0xff]
    %v3487 = vld [vmem:[#allocation12 + $0x148] sm:$0xff]
    %v3488 = vld [vmem:[#allocation12 + $0x150] sm:$0xff]
    %v3489 = vld [vmem:[#allocation12 + $0x158] sm:$0xff]
    %v3490 = vld [vmem:[#allocation12 + $0x160] sm:$0xff]
    %v3491 = vld [vmem:[#allocation12 + $0x168] sm:$0xff]
    %v3492 = vld [vmem:[#allocation12 + $0x170] sm:$0xff]
    %v3493 = vld [vmem:[#allocation12 + $0x178] sm:$0xff]
    %v3494 = vld [vmem:[#allocation12 + $0x180] sm:$0xff]
    %v3495 = vld [vmem:[#allocation12 + $0x188] sm:$0xff]
    %v3496 = vld [vmem:[#allocation12 + $0x190] sm:$0xff]
    %v3497 = vld [vmem:[#allocation12 + $0x198] sm:$0xff]
    %v3498 = vld [vmem:[#allocation12 + $0x1a0] sm:$0xff]
    %v3499 = vld [vmem:[#allocation12 + $0x1a8] sm:$0xff]
    %v3500 = vld [vmem:[#allocation12 + $0x1b0] sm:$0xff]
    %v3501 = vld [vmem:[#allocation12 + $0x1b8] sm:$0xff]
    %v3502 = vld [vmem:[#allocation12 + $0x1c0] sm:$0xff]
    %v3503 = vld [vmem:[#allocation12 + $0x1c8] sm:$0xff]
    %v3504 = vld [vmem:[#allocation12 + $0x1d0] sm:$0xff]
    %v3505 = vld [vmem:[#allocation12 + $0x1d8] sm:$0xff]
    %v3506 = vld [vmem:[#allocation12 + $0x1e0] sm:$0xff]
    %v3507 = vld [vmem:[#allocation12 + $0x1e8] sm:$0xff]
    %v3508 = vld [vmem:[#allocation12 + $0x1f0] sm:$0xff]
    %v3509 = vld [vmem:[#allocation12 + $0x1f8] sm:$0xff]
    %v3510 = vld [vmem:[#allocation12 + $0x200] sm:$0xff]
    %v3511 = vld [vmem:[#allocation12 + $0x208] sm:$0xff]
    %v3512 = vld [vmem:[#allocation12 + $0x210] sm:$0xff]
    %v3513 = vld [vmem:[#allocation12 + $0x218] sm:$0xff]
    %v3514 = vld [vmem:[#allocation12 + $0x220] sm:$0xff]
    %v3515 = vld [vmem:[#allocation12 + $0x228] sm:$0xff]
    %v3516 = vld [vmem:[#allocation12 + $0x230] sm:$0xff]
    %v3517 = vld [vmem:[#allocation12 + $0x238] sm:$0xff]
    %v3518 = vld [vmem:[#allocation12 + $0x240] sm:$0xff]
    %v3519 = vld [vmem:[#allocation12 + $0x248] sm:$0xff]
    %v3520 = vld [vmem:[#allocation12 + $0x250] sm:$0xff]
    %v3521 = vld [vmem:[#allocation12 + $0x258] sm:$0xff]
    %v3522 = vld [vmem:[#allocation12 + $0x260] sm:$0xff]
    %v3523 = vld [vmem:[#allocation12 + $0x268] sm:$0xff]
    %v3524 = vld [vmem:[#allocation12 + $0x270] sm:$0xff]
    %v3525 = vld [vmem:[#allocation12 + $0x278] sm:$0xff]
    %v3526 = vld [vmem:[#allocation12 + $0x280] sm:$0xff]
    %v3527 = vld [vmem:[#allocation12 + $0x288] sm:$0xff]
    %v3528 = vld [vmem:[#allocation12 + $0x290] sm:$0xff]
    %v3529 = vld [vmem:[#allocation12 + $0x298] sm:$0xff]
    %v3530 = vld [vmem:[#allocation12 + $0x2a0] sm:$0xff]
    %v3531 = vld [vmem:[#allocation12 + $0x2a8] sm:$0xff]
    %v3532 = vld [vmem:[#allocation12 + $0x2b0] sm:$0xff]
    %v3533 = vld [vmem:[#allocation12 + $0x2b8] sm:$0xff]
    %v3534 = vld [vmem:[#allocation12 + $0x2c0] sm:$0xff]
    %v3535 = vld [vmem:[#allocation12 + $0x2c8] sm:$0xff]
    %v3536 = vld [vmem:[#allocation12 + $0x2d0] sm:$0xff]
    %v3537 = vld [vmem:[#allocation12 + $0x2d8] sm:$0xff]
    %v3538 = vld [vmem:[#allocation12 + $0x2e0] sm:$0xff]
    %v3539 = vld [vmem:[#allocation12 + $0x2e8] sm:$0xff]
    %v3540 = vld [vmem:[#allocation12 + $0x2f0] sm:$0xff]
    %v3541 = vld [vmem:[#allocation12 + $0x2f8] sm:$0xff]
    %v3542 = vld [vmem:[#allocation12 + $0x300] sm:$0xff]
    %v3543 = vld [vmem:[#allocation12 + $0x308] sm:$0xff]
    %v3544 = vld [vmem:[#allocation12 + $0x310] sm:$0xff]
    %v3545 = vld [vmem:[#allocation12 + $0x318] sm:$0xff]
    %v3546 = vld [vmem:[#allocation12 + $0x320] sm:$0xff]
    %v3547 = vld [vmem:[#allocation12 + $0x328] sm:$0xff]
    %v3548 = vld [vmem:[#allocation12 + $0x330] sm:$0xff]
    %v3549 = vld [vmem:[#allocation12 + $0x338] sm:$0xff]
    %v3550 = vld [vmem:[#allocation12 + $0x340] sm:$0xff]
    %v3551 = vld [vmem:[#allocation12 + $0x348] sm:$0xff]
    %v3552 = vld [vmem:[#allocation12 + $0x350] sm:$0xff]
    %v3553 = vld [vmem:[#allocation12 + $0x358] sm:$0xff]
    %v3554 = vld [vmem:[#allocation12 + $0x360] sm:$0xff]
    %v3555 = vld [vmem:[#allocation12 + $0x368] sm:$0xff]
    %v3556 = vld [vmem:[#allocation12 + $0x370] sm:$0xff]
    %v3557 = vld [vmem:[#allocation12 + $0x378] sm:$0xff]
    %v3558 = vunpack.c.l.s8.bf16 %v3446
    %v3559 = vunpack.c.l.s8.bf16 %v3447
    %v3560 = vunpack.c.l.s8.bf16 %v3448
    %v3561 = vunpack.c.l.s8.bf16 %v3449
    %v3562 = vunpack.c.l.s8.bf16 %v3450
    %v3563 = vunpack.c.l.s8.bf16 %v3451
    %v3564 = vunpack.c.l.s8.bf16 %v3452
    %v3565 = vunpack.c.h.s8.bf16 %v3446
    %v3566 = vunpack.c.h.s8.bf16 %v3447
    %v3567 = vunpack.c.h.s8.bf16 %v3448
    %v3568 = vunpack.c.h.s8.bf16 %v3449
    %v3569 = vunpack.c.h.s8.bf16 %v3450
    %v3570 = vunpack.c.h.s8.bf16 %v3451
    %v3571 = vunpack.c.h.s8.bf16 %v3452
    %v3572 = vunpack.c.l.s8.bf16 %v3453
    %v3573 = vunpack.c.l.s8.bf16 %v3454
    %v3574 = vunpack.c.l.s8.bf16 %v3455
    %v3575 = vunpack.c.l.s8.bf16 %v3456
    %v3576 = vunpack.c.l.s8.bf16 %v3457
    %v3577 = vunpack.c.l.s8.bf16 %v3458
    %v3578 = vunpack.c.l.s8.bf16 %v3459
    %v3579 = vunpack.c.h.s8.bf16 %v3453
    %v3580 = vunpack.c.h.s8.bf16 %v3454
    %v3581 = vunpack.c.h.s8.bf16 %v3455
    %v3582 = vunpack.c.h.s8.bf16 %v3456
    %v3583 = vunpack.c.h.s8.bf16 %v3457
    %v3584 = vunpack.c.h.s8.bf16 %v3458
    %v3585 = vunpack.c.h.s8.bf16 %v3459
    %v3586 = vunpack.c.l.s8.bf16 %v3460
    %v3587 = vunpack.c.l.s8.bf16 %v3461
    %v3588 = vunpack.c.l.s8.bf16 %v3462
    %v3589 = vunpack.c.l.s8.bf16 %v3463
    %v3590 = vunpack.c.l.s8.bf16 %v3464
    %v3591 = vunpack.c.l.s8.bf16 %v3465
    %v3592 = vunpack.c.l.s8.bf16 %v3466
    %v3593 = vunpack.c.h.s8.bf16 %v3460
    %v3594 = vunpack.c.h.s8.bf16 %v3461
    %v3595 = vunpack.c.h.s8.bf16 %v3462
    %v3596 = vunpack.c.h.s8.bf16 %v3463
    %v3597 = vunpack.c.h.s8.bf16 %v3464
    %v3598 = vunpack.c.h.s8.bf16 %v3465
    %v3599 = vunpack.c.h.s8.bf16 %v3466
    %v3600 = vunpack.c.l.s8.bf16 %v3467
    %v3601 = vunpack.c.l.s8.bf16 %v3468
    %v3602 = vunpack.c.l.s8.bf16 %v3469
    %v3603 = vunpack.c.l.s8.bf16 %v3470
    %v3604 = vunpack.c.l.s8.bf16 %v3471
    %v3605 = vunpack.c.l.s8.bf16 %v3472
    %v3606 = vunpack.c.l.s8.bf16 %v3473
    %v3607 = vunpack.c.h.s8.bf16 %v3467
    %v3608 = vunpack.c.h.s8.bf16 %v3468
    %v3609 = vunpack.c.h.s8.bf16 %v3469
    %v3610 = vunpack.c.h.s8.bf16 %v3470
    %v3611 = vunpack.c.h.s8.bf16 %v3471
    %v3612 = vunpack.c.h.s8.bf16 %v3472
    %v3613 = vunpack.c.h.s8.bf16 %v3473
    %v3614 = vunpack.c.l.s8.bf16 %v3474
    %v3615 = vunpack.c.l.s8.bf16 %v3475
    %v3616 = vunpack.c.l.s8.bf16 %v3476
    %v3617 = vunpack.c.l.s8.bf16 %v3477
    %v3618 = vunpack.c.l.s8.bf16 %v3478
    %v3619 = vunpack.c.l.s8.bf16 %v3479
    %v3620 = vunpack.c.l.s8.bf16 %v3480
    %v3621 = vunpack.c.h.s8.bf16 %v3474
    %v3622 = vunpack.c.h.s8.bf16 %v3475
    %v3623 = vunpack.c.h.s8.bf16 %v3476
    %v3624 = vunpack.c.h.s8.bf16 %v3477
    %v3625 = vunpack.c.h.s8.bf16 %v3478
    %v3626 = vunpack.c.h.s8.bf16 %v3479
    %v3627 = vunpack.c.h.s8.bf16 %v3480
    %v3628 = vunpack.c.l.s8.bf16 %v3481
    %v3629 = vunpack.c.l.s8.bf16 %v3482
    %v3630 = vunpack.c.l.s8.bf16 %v3483
    %v3631 = vunpack.c.l.s8.bf16 %v3484
    %v3632 = vunpack.c.l.s8.bf16 %v3485
    %v3633 = vunpack.c.l.s8.bf16 %v3486
    %v3634 = vunpack.c.l.s8.bf16 %v3487
    %v3635 = vunpack.c.h.s8.bf16 %v3481
    %v3636 = vunpack.c.h.s8.bf16 %v3482
    %v3637 = vunpack.c.h.s8.bf16 %v3483
    %v3638 = vunpack.c.h.s8.bf16 %v3484
    %v3639 = vunpack.c.h.s8.bf16 %v3485
    %v3640 = vunpack.c.h.s8.bf16 %v3486
    %v3641 = vunpack.c.h.s8.bf16 %v3487
    %v3642 = vunpack.c.l.s8.bf16 %v3488
    %v3643 = vunpack.c.l.s8.bf16 %v3489
    %v3644 = vunpack.c.l.s8.bf16 %v3490
    %v3645 = vunpack.c.l.s8.bf16 %v3491
    %v3646 = vunpack.c.l.s8.bf16 %v3492
    %v3647 = vunpack.c.l.s8.bf16 %v3493
    %v3648 = vunpack.c.l.s8.bf16 %v3494
    %v3649 = vunpack.c.h.s8.bf16 %v3488
    %v3650 = vunpack.c.h.s8.bf16 %v3489
    %v3651 = vunpack.c.h.s8.bf16 %v3490
    %v3652 = vunpack.c.h.s8.bf16 %v3491
    %v3653 = vunpack.c.h.s8.bf16 %v3492
    %v3654 = vunpack.c.h.s8.bf16 %v3493
    %v3655 = vunpack.c.h.s8.bf16 %v3494
    %v3656 = vunpack.c.l.s8.bf16 %v3495
    %v3657 = vunpack.c.l.s8.bf16 %v3496
    %v3658 = vunpack.c.l.s8.bf16 %v3497
    %v3659 = vunpack.c.l.s8.bf16 %v3498
    %v3660 = vunpack.c.l.s8.bf16 %v3499
    %v3661 = vunpack.c.l.s8.bf16 %v3500
    %v3662 = vunpack.c.l.s8.bf16 %v3501
    %v3663 = vunpack.c.h.s8.bf16 %v3495
    %v3664 = vunpack.c.h.s8.bf16 %v3496
    %v3665 = vunpack.c.h.s8.bf16 %v3497
    %v3666 = vunpack.c.h.s8.bf16 %v3498
    %v3667 = vunpack.c.h.s8.bf16 %v3499
    %v3668 = vunpack.c.h.s8.bf16 %v3500
    %v3669 = vunpack.c.h.s8.bf16 %v3501
    %v3670 = vunpack.c.l.s8.bf16 %v3502
    %v3671 = vunpack.c.l.s8.bf16 %v3503
    %v3672 = vunpack.c.l.s8.bf16 %v3504
    %v3673 = vunpack.c.l.s8.bf16 %v3505
    %v3674 = vunpack.c.l.s8.bf16 %v3506
    %v3675 = vunpack.c.l.s8.bf16 %v3507
    %v3676 = vunpack.c.l.s8.bf16 %v3508
    %v3677 = vunpack.c.h.s8.bf16 %v3502
    %v3678 = vunpack.c.h.s8.bf16 %v3503
    %v3679 = vunpack.c.h.s8.bf16 %v3504
    %v3680 = vunpack.c.h.s8.bf16 %v3505
    %v3681 = vunpack.c.h.s8.bf16 %v3506
    %v3682 = vunpack.c.h.s8.bf16 %v3507
    %v3683 = vunpack.c.h.s8.bf16 %v3508
    %v3684 = vunpack.c.l.s8.bf16 %v3509
    %v3685 = vunpack.c.l.s8.bf16 %v3510
    %v3686 = vunpack.c.l.s8.bf16 %v3511
    %v3687 = vunpack.c.l.s8.bf16 %v3512
    %v3688 = vunpack.c.l.s8.bf16 %v3513
    %v3689 = vunpack.c.l.s8.bf16 %v3514
    %v3690 = vunpack.c.l.s8.bf16 %v3515
    %v3691 = vunpack.c.h.s8.bf16 %v3509
    %v3692 = vunpack.c.h.s8.bf16 %v3510
    %v3693 = vunpack.c.h.s8.bf16 %v3511
    %v3694 = vunpack.c.h.s8.bf16 %v3512
    %v3695 = vunpack.c.h.s8.bf16 %v3513
    %v3696 = vunpack.c.h.s8.bf16 %v3514
    %v3697 = vunpack.c.h.s8.bf16 %v3515
    %v3698 = vunpack.c.l.s8.bf16 %v3516
    %v3699 = vunpack.c.l.s8.bf16 %v3517
    %v3700 = vunpack.c.l.s8.bf16 %v3518
    %v3701 = vunpack.c.l.s8.bf16 %v3519
    %v3702 = vunpack.c.l.s8.bf16 %v3520
    %v3703 = vunpack.c.l.s8.bf16 %v3521
    %v3704 = vunpack.c.l.s8.bf16 %v3522
    %v3705 = vunpack.c.h.s8.bf16 %v3516
    %v3706 = vunpack.c.h.s8.bf16 %v3517
    %v3707 = vunpack.c.h.s8.bf16 %v3518
    %v3708 = vunpack.c.h.s8.bf16 %v3519
    %v3709 = vunpack.c.h.s8.bf16 %v3520
    %v3710 = vunpack.c.h.s8.bf16 %v3521
    %v3711 = vunpack.c.h.s8.bf16 %v3522
    %v3712 = vunpack.c.l.s8.bf16 %v3523
    %v3713 = vunpack.c.l.s8.bf16 %v3524
    %v3714 = vunpack.c.l.s8.bf16 %v3525
    %v3715 = vunpack.c.l.s8.bf16 %v3526
    %v3716 = vunpack.c.l.s8.bf16 %v3527
    %v3717 = vunpack.c.l.s8.bf16 %v3528
    %v3718 = vunpack.c.l.s8.bf16 %v3529
    %v3719 = vunpack.c.h.s8.bf16 %v3523
    %v3720 = vunpack.c.h.s8.bf16 %v3524
    %v3721 = vunpack.c.h.s8.bf16 %v3525
    %v3722 = vunpack.c.h.s8.bf16 %v3526
    %v3723 = vunpack.c.h.s8.bf16 %v3527
    %v3724 = vunpack.c.h.s8.bf16 %v3528
    %v3725 = vunpack.c.h.s8.bf16 %v3529
    %v3726 = vunpack.c.l.s8.bf16 %v3530
    %v3727 = vunpack.c.l.s8.bf16 %v3531
    %v3728 = vunpack.c.l.s8.bf16 %v3532
    %v3729 = vunpack.c.l.s8.bf16 %v3533
    %v3730 = vunpack.c.l.s8.bf16 %v3534
    %v3731 = vunpack.c.l.s8.bf16 %v3535
    %v3732 = vunpack.c.l.s8.bf16 %v3536
    %v3733 = vunpack.c.h.s8.bf16 %v3530
    %v3734 = vunpack.c.h.s8.bf16 %v3531
    %v3735 = vunpack.c.h.s8.bf16 %v3532
    %v3736 = vunpack.c.h.s8.bf16 %v3533
    %v3737 = vunpack.c.h.s8.bf16 %v3534
    %v3738 = vunpack.c.h.s8.bf16 %v3535
    %v3739 = vunpack.c.h.s8.bf16 %v3536
    %v3740 = vunpack.c.l.s8.bf16 %v3537
    %v3741 = vunpack.c.l.s8.bf16 %v3538
    %v3742 = vunpack.c.l.s8.bf16 %v3539
    %v3743 = vunpack.c.l.s8.bf16 %v3540
    %v3744 = vunpack.c.l.s8.bf16 %v3541
    %v3745 = vunpack.c.l.s8.bf16 %v3542
    %v3746 = vunpack.c.l.s8.bf16 %v3543
    %v3747 = vunpack.c.h.s8.bf16 %v3537
    %v3748 = vunpack.c.h.s8.bf16 %v3538
    %v3749 = vunpack.c.h.s8.bf16 %v3539
    %v3750 = vunpack.c.h.s8.bf16 %v3540
    %v3751 = vunpack.c.h.s8.bf16 %v3541
    %v3752 = vunpack.c.h.s8.bf16 %v3542
    %v3753 = vunpack.c.h.s8.bf16 %v3543
    %v3754 = vunpack.c.l.s8.bf16 %v3544
    %v3755 = vunpack.c.l.s8.bf16 %v3545
    %v3756 = vunpack.c.l.s8.bf16 %v3546
    %v3757 = vunpack.c.l.s8.bf16 %v3547
    %v3758 = vunpack.c.l.s8.bf16 %v3548
    %v3759 = vunpack.c.l.s8.bf16 %v3549
    %v3760 = vunpack.c.l.s8.bf16 %v3550
    %v3761 = vunpack.c.h.s8.bf16 %v3544
    %v3762 = vunpack.c.h.s8.bf16 %v3545
    %v3763 = vunpack.c.h.s8.bf16 %v3546
    %v3764 = vunpack.c.h.s8.bf16 %v3547
    %v3765 = vunpack.c.h.s8.bf16 %v3548
    %v3766 = vunpack.c.h.s8.bf16 %v3549
    %v3767 = vunpack.c.h.s8.bf16 %v3550
    %v3768 = vunpack.c.l.s8.bf16 %v3551
    %v3769 = vunpack.c.l.s8.bf16 %v3552
    %v3770 = vunpack.c.l.s8.bf16 %v3553
    %v3771 = vunpack.c.l.s8.bf16 %v3554
    %v3772 = vunpack.c.l.s8.bf16 %v3555
    %v3773 = vunpack.c.l.s8.bf16 %v3556
    %v3774 = vunpack.c.l.s8.bf16 %v3557
    %v3775 = vunpack.c.h.s8.bf16 %v3551
    %v3776 = vunpack.c.h.s8.bf16 %v3552
    %v3777 = vunpack.c.h.s8.bf16 %v3553
    %v3778 = vunpack.c.h.s8.bf16 %v3554
    %v3779 = vunpack.c.h.s8.bf16 %v3555
    %v3780 = vunpack.c.h.s8.bf16 %v3556
    %v3781 = vunpack.c.h.s8.bf16 %v3557
    %3782 = vmatprep.subr.bf16.mxu0 %v3608
    %3783 = vmatpush1.bf16.msra.mxu0 %v3607
    %3784 = vmatprep.subr.bf16.mxu0 %v3601
    %3785 = vmatpush1.bf16.msra.mxu0 %v3600
    %3786 = vmatprep.subr.bf16.mxu0 %v3594
    %3787 = vmatpush1.bf16.msra.mxu0 %v3593
    %3788 = vmatprep.subr.bf16.mxu0 %v3587
    %3789 = vmatpush1.bf16.msra.mxu0 %v3586
    %3790 = vmatprep.subr.bf16.mxu0 %v3580
    %3791 = vmatpush1.bf16.msra.mxu0 %v3579
    %3792 = vmatprep.subr.bf16.mxu0 %v3573
    %3793 = vmatpush1.bf16.msra.mxu0 %v3572
    %3794 = vmatprep.subr.bf16.mxu0 %v3566
    %3795 = vmatpush1.bf16.msra.mxu0 %v3565
    %3796 = vmatprep.subr.bf16.mxu0 %v3559
    %3797 = vmatpush1.bf16.msra.mxu0 %v3558
    %3798 = vmatprep.subr.bf16.mxu0 %v3664
    %3799 = vmatpush2.bf16.msra.mxu0 %v3663
    %3800 = vmatprep.subr.bf16.mxu0 %v3657
    %3801 = vmatpush2.bf16.msra.mxu0 %v3656
    %3802 = vmatprep.subr.bf16.mxu0 %v3650
    %3803 = vmatpush2.bf16.msra.mxu0 %v3649
    %3804 = vmatprep.subr.bf16.mxu0 %v3643
    %3805 = vmatpush2.bf16.msra.mxu0 %v3642
    %3806 = vmatprep.subr.bf16.mxu0 %v3636
    %3807 = vmatpush2.bf16.msra.mxu0 %v3635
    %3808 = vmatprep.subr.bf16.mxu0 %v3629
    %3809 = vmatpush2.bf16.msra.mxu0 %v3628
    %3810 = vmatprep.subr.bf16.mxu0 %v3622
    %3811 = vmatpush2.bf16.msra.mxu0 %v3621
    %3812 = vmatprep.subr.bf16.mxu0 %v3615
    %3813 = vmatpush2.bf16.msra.mxu0 %v3614
    %3814 = vmatprep.mubr.bf16.mxu0 %v3443
    %3815 = vmatmul.mubr.bf16.gmra.mxu0 %v3442
    %v3816 = vpop.f32.mrf.mxu0
    %v3817 = vadd.f32 0.0, %v3816
    %v3818 = vpop.f32.mrf.mxu0
    %v3819 = vadd.f32 0.0, %v3818
    %v3820 = vpop.f32.mrf.mxu0
    %v3821 = vpop.f32.mrf.mxu0
    %3822 = vdwg.mxu0
    %3823 = vmatprep.subr.bf16.mxu0 %v3720
    %3824 = vmatpush1.bf16.msra.mxu0 %v3719
    %3825 = vmatprep.subr.bf16.mxu0 %v3713
    %3826 = vmatpush1.bf16.msra.mxu0 %v3712
    %3827 = vmatprep.subr.bf16.mxu0 %v3706
    %3828 = vmatpush1.bf16.msra.mxu0 %v3705
    %3829 = vmatprep.subr.bf16.mxu0 %v3699
    %3830 = vmatpush1.bf16.msra.mxu0 %v3698
    %3831 = vmatprep.subr.bf16.mxu0 %v3692
    %3832 = vmatpush1.bf16.msra.mxu0 %v3691
    %3833 = vmatprep.subr.bf16.mxu0 %v3685
    %3834 = vmatpush1.bf16.msra.mxu0 %v3684
    %3835 = vmatprep.subr.bf16.mxu0 %v3678
    %3836 = vmatpush1.bf16.msra.mxu0 %v3677
    %3837 = vmatprep.subr.bf16.mxu0 %v3671
    %3838 = vmatpush1.bf16.msra.mxu0 %v3670
    %3839 = vmatprep.subr.bf16.mxu0 %v3776
    %3840 = vmatpush2.bf16.msra.mxu0 %v3775
    %3841 = vmatprep.subr.bf16.mxu0 %v3769
    %3842 = vmatpush2.bf16.msra.mxu0 %v3768
    %3843 = vmatprep.subr.bf16.mxu0 %v3762
    %3844 = vmatpush2.bf16.msra.mxu0 %v3761
    %3845 = vmatprep.subr.bf16.mxu0 %v3755
    %3846 = vmatpush2.bf16.msra.mxu0 %v3754
    %3847 = vmatprep.subr.bf16.mxu0 %v3748
    %3848 = vmatpush2.bf16.msra.mxu0 %v3747
    %3849 = vmatprep.subr.bf16.mxu0 %v3741
    %3850 = vmatpush2.bf16.msra.mxu0 %v3740
    %3851 = vmatprep.subr.bf16.mxu0 %v3734
    %3852 = vmatpush2.bf16.msra.mxu0 %v3733
    %3853 = vmatprep.subr.bf16.mxu0 %v3727
    %3854 = vmatpush2.bf16.msra.mxu0 %v3726
    %3855 = vmatprep.mubr.bf16.mxu0 %v3445
    %3856 = vmatmul.mubr.bf16.gmra.mxu0 %v3444
    %v3857 = vpop.f32.mrf.mxu0
    %v3858 = vadd.f32 %v3817, %v3857
    %v3859 = vpop.f32.mrf.mxu0
    %v3860 = vadd.f32 %v3819, %v3859
    %v3861 = vpop.f32.mrf.mxu0
    %v3862 = vpop.f32.mrf.mxu0
    %3863 = vdwg.mxu0
    %3864 = vmatprep.subr.bf16.mxu0 %v3610
    %3865 = vmatpush1.bf16.msra.mxu0 %v3609
    %3866 = vmatprep.subr.bf16.mxu0 %v3603
    %3867 = vmatpush1.bf16.msra.mxu0 %v3602
    %3868 = vmatprep.subr.bf16.mxu0 %v3596
    %3869 = vmatpush1.bf16.msra.mxu0 %v3595
    %3870 = vmatprep.subr.bf16.mxu0 %v3589
    %3871 = vmatpush1.bf16.msra.mxu0 %v3588
    %3872 = vmatprep.subr.bf16.mxu0 %v3582
    %3873 = vmatpush1.bf16.msra.mxu0 %v3581
    %3874 = vmatprep.subr.bf16.mxu0 %v3575
    %3875 = vmatpush1.bf16.msra.mxu0 %v3574
    %3876 = vmatprep.subr.bf16.mxu0 %v3568
    %3877 = vmatpush1.bf16.msra.mxu0 %v3567
    %3878 = vmatprep.subr.bf16.mxu0 %v3561
    %3879 = vmatpush1.bf16.msra.mxu0 %v3560
    %3880 = vmatprep.subr.bf16.mxu0 %v3666
    %3881 = vmatpush2.bf16.msra.mxu0 %v3665
    %3882 = vmatprep.subr.bf16.mxu0 %v3659
    %3883 = vmatpush2.bf16.msra.mxu0 %v3658
    %3884 = vmatprep.subr.bf16.mxu0 %v3652
    %3885 = vmatpush2.bf16.msra.mxu0 %v3651
    %3886 = vmatprep.subr.bf16.mxu0 %v3645
    %3887 = vmatpush2.bf16.msra.mxu0 %v3644
    %3888 = vmatprep.subr.bf16.mxu0 %v3638
    %3889 = vmatpush2.bf16.msra.mxu0 %v3637
    %3890 = vmatprep.subr.bf16.mxu0 %v3631
    %3891 = vmatpush2.bf16.msra.mxu0 %v3630
    %3892 = vmatprep.subr.bf16.mxu0 %v3624
    %3893 = vmatpush2.bf16.msra.mxu0 %v3623
    %3894 = vmatprep.subr.bf16.mxu0 %v3617
    %3895 = vmatpush2.bf16.msra.mxu0 %v3616
    %3896 = vmatprep.mubr.bf16.mxu0 %v3443
    %3897 = vmatmul.mubr.bf16.gmra.mxu0 %v3442
    %v3898 = vpop.f32.mrf.mxu0
    %v3899 = vadd.f32 0.0, %v3898
    %v3900 = vpop.f32.mrf.mxu0
    %v3901 = vadd.f32 0.0, %v3900
    %v3902 = vpop.f32.mrf.mxu0
    %v3903 = vpop.f32.mrf.mxu0
    %3904 = vdwg.mxu0
    %3905 = vmatprep.subr.bf16.mxu0 %v3722
    %3906 = vmatpush1.bf16.msra.mxu0 %v3721
    %3907 = vmatprep.subr.bf16.mxu0 %v3715
    %3908 = vmatpush1.bf16.msra.mxu0 %v3714
    %3909 = vmatprep.subr.bf16.mxu0 %v3708
    %3910 = vmatpush1.bf16.msra.mxu0 %v3707
    %3911 = vmatprep.subr.bf16.mxu0 %v3701
    %3912 = vmatpush1.bf16.msra.mxu0 %v3700
    %3913 = vmatprep.subr.bf16.mxu0 %v3694
    %3914 = vmatpush1.bf16.msra.mxu0 %v3693
    %3915 = vmatprep.subr.bf16.mxu0 %v3687
    %3916 = vmatpush1.bf16.msra.mxu0 %v3686
    %3917 = vmatprep.subr.bf16.mxu0 %v3680
    %3918 = vmatpush1.bf16.msra.mxu0 %v3679
    %3919 = vmatprep.subr.bf16.mxu0 %v3673
    %3920 = vmatpush1.bf16.msra.mxu0 %v3672
    %3921 = vmatprep.subr.bf16.mxu0 %v3778
    %3922 = vmatpush2.bf16.msra.mxu0 %v3777
    %3923 = vmatprep.subr.bf16.mxu0 %v3771
    %3924 = vmatpush2.bf16.msra.mxu0 %v3770
    %3925 = vmatprep.subr.bf16.mxu0 %v3764
    %3926 = vmatpush2.bf16.msra.mxu0 %v3763
    %3927 = vmatprep.subr.bf16.mxu0 %v3757
    %3928 = vmatpush2.bf16.msra.mxu0 %v3756
    %3929 = vmatprep.subr.bf16.mxu0 %v3750
    %3930 = vmatpush2.bf16.msra.mxu0 %v3749
    %3931 = vmatprep.subr.bf16.mxu0 %v3743
    %3932 = vmatpush2.bf16.msra.mxu0 %v3742
    %3933 = vmatprep.subr.bf16.mxu0 %v3736
    %3934 = vmatpush2.bf16.msra.mxu0 %v3735
    %3935 = vmatprep.subr.bf16.mxu0 %v3729
    %3936 = vmatpush2.bf16.msra.mxu0 %v3728
    %3937 = vmatprep.mubr.bf16.mxu0 %v3445
    %3938 = vmatmul.mubr.bf16.gmra.mxu0 %v3444
    %v3939 = vpop.f32.mrf.mxu0
    %v3940 = vadd.f32 %v3899, %v3939
    %v3941 = vpop.f32.mrf.mxu0
    %v3942 = vadd.f32 %v3901, %v3941
    %v3943 = vpop.f32.mrf.mxu0
    %v3944 = vpop.f32.mrf.mxu0
    %3945 = vdwg.mxu0
    %3946 = vmatprep.subr.bf16.mxu0 %v3612
    %3947 = vmatpush1.bf16.msra.mxu0 %v3611
    %3948 = vmatprep.subr.bf16.mxu0 %v3605
    %3949 = vmatpush1.bf16.msra.mxu0 %v3604
    %3950 = vmatprep.subr.bf16.mxu0 %v3598
    %3951 = vmatpush1.bf16.msra.mxu0 %v3597
    %3952 = vmatprep.subr.bf16.mxu0 %v3591
    %3953 = vmatpush1.bf16.msra.mxu0 %v3590
    %3954 = vmatprep.subr.bf16.mxu0 %v3584
    %3955 = vmatpush1.bf16.msra.mxu0 %v3583
    %3956 = vmatprep.subr.bf16.mxu0 %v3577
    %3957 = vmatpush1.bf16.msra.mxu0 %v3576
    %3958 = vmatprep.subr.bf16.mxu0 %v3570
    %3959 = vmatpush1.bf16.msra.mxu0 %v3569
    %3960 = vmatprep.subr.bf16.mxu0 %v3563
    %3961 = vmatpush1.bf16.msra.mxu0 %v3562
    %3962 = vmatprep.subr.bf16.mxu0 %v3668
    %3963 = vmatpush2.bf16.msra.mxu0 %v3667
    %3964 = vmatprep.subr.bf16.mxu0 %v3661
    %3965 = vmatpush2.bf16.msra.mxu0 %v3660
    %3966 = vmatprep.subr.bf16.mxu0 %v3654
    %3967 = vmatpush2.bf16.msra.mxu0 %v3653
    %3968 = vmatprep.subr.bf16.mxu0 %v3647
    %3969 = vmatpush2.bf16.msra.mxu0 %v3646
    %3970 = vmatprep.subr.bf16.mxu0 %v3640
    %3971 = vmatpush2.bf16.msra.mxu0 %v3639
    %3972 = vmatprep.subr.bf16.mxu0 %v3633
    %3973 = vmatpush2.bf16.msra.mxu0 %v3632
    %3974 = vmatprep.subr.bf16.mxu0 %v3626
    %3975 = vmatpush2.bf16.msra.mxu0 %v3625
    %3976 = vmatprep.subr.bf16.mxu0 %v3619
    %3977 = vmatpush2.bf16.msra.mxu0 %v3618
    %3978 = vmatprep.mubr.bf16.mxu0 %v3443
    %3979 = vmatmul.mubr.bf16.gmra.mxu0 %v3442
    %v3980 = vpop.f32.mrf.mxu0
    %v3981 = vadd.f32 0.0, %v3980
    %v3982 = vpop.f32.mrf.mxu0
    %v3983 = vadd.f32 0.0, %v3982
    %v3984 = vpop.f32.mrf.mxu0
    %v3985 = vpop.f32.mrf.mxu0
    %3986 = vdwg.mxu0
    %3987 = vmatprep.subr.bf16.mxu0 %v3724
    %3988 = vmatpush1.bf16.msra.mxu0 %v3723
    %3989 = vmatprep.subr.bf16.mxu0 %v3717
    %3990 = vmatpush1.bf16.msra.mxu0 %v3716
    %3991 = vmatprep.subr.bf16.mxu0 %v3710
    %3992 = vmatpush1.bf16.msra.mxu0 %v3709
    %3993 = vmatprep.subr.bf16.mxu0 %v3703
    %3994 = vmatpush1.bf16.msra.mxu0 %v3702
    %3995 = vmatprep.subr.bf16.mxu0 %v3696
    %3996 = vmatpush1.bf16.msra.mxu0 %v3695
    %3997 = vmatprep.subr.bf16.mxu0 %v3689
    %3998 = vmatpush1.bf16.msra.mxu0 %v3688
    %3999 = vmatprep.subr.bf16.mxu0 %v3682
    %4000 = vmatpush1.bf16.msra.mxu0 %v3681
    %4001 = vmatprep.subr.bf16.mxu0 %v3675
    %4002 = vmatpush1.bf16.msra.mxu0 %v3674
    %4003 = vmatprep.subr.bf16.mxu0 %v3780
    %4004 = vmatpush2.bf16.msra.mxu0 %v3779
    %4005 = vmatprep.subr.bf16.mxu0 %v3773
    %4006 = vmatpush2.bf16.msra.mxu0 %v3772
    %4007 = vmatprep.subr.bf16.mxu0 %v3766
    %4008 = vmatpush2.bf16.msra.mxu0 %v3765
    %4009 = vmatprep.subr.bf16.mxu0 %v3759
    %4010 = vmatpush2.bf16.msra.mxu0 %v3758
    %4011 = vmatprep.subr.bf16.mxu0 %v3752
    %4012 = vmatpush2.bf16.msra.mxu0 %v3751
    %4013 = vmatprep.subr.bf16.mxu0 %v3745
    %4014 = vmatpush2.bf16.msra.mxu0 %v3744
    %4015 = vmatprep.subr.bf16.mxu0 %v3738
    %4016 = vmatpush2.bf16.msra.mxu0 %v3737
    %4017 = vmatprep.subr.bf16.mxu0 %v3731
    %4018 = vmatpush2.bf16.msra.mxu0 %v3730
    %4019 = vmatprep.mubr.bf16.mxu0 %v3445
    %4020 = vmatmul.mubr.bf16.gmra.mxu0 %v3444
    %v4021 = vpop.f32.mrf.mxu0
    %v4022 = vadd.f32 %v3981, %v4021
    %v4023 = vpop.f32.mrf.mxu0
    %v4024 = vadd.f32 %v3983, %v4023
    %v4025 = vpop.f32.mrf.mxu0
    %v4026 = vpop.f32.mrf.mxu0
    %4027 = vdwg.mxu0
    %4028 = vmatprep.subr.bf16.mxu0 0
    %4029 = vmatpush1.bf16.msra.mxu0 %v3613
    %4030 = vmatprep.subr.bf16.mxu0 0
    %4031 = vmatpush1.bf16.msra.mxu0 %v3606
    %4032 = vmatprep.subr.bf16.mxu0 0
    %4033 = vmatpush1.bf16.msra.mxu0 %v3599
    %4034 = vmatprep.subr.bf16.mxu0 0
    %4035 = vmatpush1.bf16.msra.mxu0 %v3592
    %4036 = vmatprep.subr.bf16.mxu0 0
    %4037 = vmatpush1.bf16.msra.mxu0 %v3585
    %4038 = vmatprep.subr.bf16.mxu0 0
    %4039 = vmatpush1.bf16.msra.mxu0 %v3578
    %4040 = vmatprep.subr.bf16.mxu0 0
    %4041 = vmatpush1.bf16.msra.mxu0 %v3571
    %4042 = vmatprep.subr.bf16.mxu0 0
    %4043 = vmatpush1.bf16.msra.mxu0 %v3564
    %4044 = vmatprep.subr.bf16.mxu0 0
    %4045 = vmatpush2.bf16.msra.mxu0 %v3669
    %4046 = vmatprep.subr.bf16.mxu0 0
    %4047 = vmatpush2.bf16.msra.mxu0 %v3662
    %4048 = vmatprep.subr.bf16.mxu0 0
    %4049 = vmatpush2.bf16.msra.mxu0 %v3655
    %4050 = vmatprep.subr.bf16.mxu0 0
    %4051 = vmatpush2.bf16.msra.mxu0 %v3648
    %4052 = vmatprep.subr.bf16.mxu0 0
    %4053 = vmatpush2.bf16.msra.mxu0 %v3641
    %4054 = vmatprep.subr.bf16.mxu0 0
    %4055 = vmatpush2.bf16.msra.mxu0 %v3634
    %4056 = vmatprep.subr.bf16.mxu0 0
    %4057 = vmatpush2.bf16.msra.mxu0 %v3627
    %4058 = vmatprep.subr.bf16.mxu0 0
    %4059 = vmatpush2.bf16.msra.mxu0 %v3620
    %4060 = vmatprep.mubr.bf16.mxu0 %v3443
    %4061 = vmatmul.mubr.bf16.gmra.mxu0 %v3442
    %v4062 = vpop.f32.mrf.mxu0
    %v4063 = vadd.f32 0.0, %v4062
    %v4064 = vpop.f32.mrf.mxu0
    %v4065 = vpop.f32.mrf.mxu0
    %v4066 = vpop.f32.mrf.mxu0
    %4067 = vdwg.mxu0
    %4068 = vmatprep.subr.bf16.mxu0 0
    %4069 = vmatpush1.bf16.msra.mxu0 %v3725
    %4070 = vmatprep.subr.bf16.mxu0 0
    %4071 = vmatpush1.bf16.msra.mxu0 %v3718
    %4072 = vmatprep.subr.bf16.mxu0 0
    %4073 = vmatpush1.bf16.msra.mxu0 %v3711
    %4074 = vmatprep.subr.bf16.mxu0 0
    %4075 = vmatpush1.bf16.msra.mxu0 %v3704
    %4076 = vmatprep.subr.bf16.mxu0 0
    %4077 = vmatpush1.bf16.msra.mxu0 %v3697
    %4078 = vmatprep.subr.bf16.mxu0 0
    %4079 = vmatpush1.bf16.msra.mxu0 %v3690
    %4080 = vmatprep.subr.bf16.mxu0 0
    %4081 = vmatpush1.bf16.msra.mxu0 %v3683
    %4082 = vmatprep.subr.bf16.mxu0 0
    %4083 = vmatpush1.bf16.msra.mxu0 %v3676
    %4084 = vmatprep.subr.bf16.mxu0 0
    %4085 = vmatpush2.bf16.msra.mxu0 %v3781
    %4086 = vmatprep.subr.bf16.mxu0 0
    %4087 = vmatpush2.bf16.msra.mxu0 %v3774
    %4088 = vmatprep.subr.bf16.mxu0 0
    %4089 = vmatpush2.bf16.msra.mxu0 %v3767
    %4090 = vmatprep.subr.bf16.mxu0 0
    %4091 = vmatpush2.bf16.msra.mxu0 %v3760
    %4092 = vmatprep.subr.bf16.mxu0 0
    %4093 = vmatpush2.bf16.msra.mxu0 %v3753
    %4094 = vmatprep.subr.bf16.mxu0 0
    %4095 = vmatpush2.bf16.msra.mxu0 %v3746
    %4096 = vmatprep.subr.bf16.mxu0 0
    %4097 = vmatpush2.bf16.msra.mxu0 %v3739
    %4098 = vmatprep.subr.bf16.mxu0 0
    %4099 = vmatpush2.bf16.msra.mxu0 %v3732
    %4100 = vmatprep.mubr.bf16.mxu0 %v3445
    %4101 = vmatmul.mubr.bf16.gmra.mxu0 %v3444
    %v4102 = vpop.f32.mrf.mxu0
    %v4103 = vadd.f32 %v4063, %v4102
    %v4104 = vpop.f32.mrf.mxu0
    %v4105 = vpop.f32.mrf.mxu0
    %v4106 = vpop.f32.mrf.mxu0
    %4107 = vdwg.mxu0
    %v4108 = vld [vmem:[#allocation13] sm:$0xff]
    %v4110 = vlaneseq
    %v4111 = vshrl.u32 %v4110, 7
    %v4112 = vsub.s32 0, %v4111
    %v4113 = vrot.slane %v4108, %v4112
    %v4114 = vlaneseq
    %v4115 = vshrl.u32 %v4114, 7
    %v4116 = vsub.s32 1, %v4115
    %v4117 = vrot.slane %v4108, %v4116
    %v4118 = vlaneseq
    %v4119 = vshrl.u32 %v4118, 7
    %v4120 = vsub.s32 2, %v4119
    %v4121 = vrot.slane %v4108, %v4120
    %v4122 = vlaneseq
    %v4123 = vshrl.u32 %v4122, 7
    %v4124 = vsub.s32 3, %v4123
    %v4125 = vrot.slane %v4108, %v4124
    %v4126 = vlaneseq
    %v4127 = vshrl.u32 %v4126, 7
    %v4128 = vsub.s32 4, %v4127
    %v4129 = vrot.slane %v4108, %v4128
    %v4130 = vlaneseq
    %v4131 = vshrl.u32 %v4130, 7
    %v4132 = vsub.s32 5, %v4131
    %v4133 = vrot.slane %v4108, %v4132
    %v4134 = vlaneseq
    %v4135 = vshrl.u32 %v4134, 7
    %v4136 = vsub.s32 6, %v4135
    %v4137 = vrot.slane %v4108, %v4136
    %v4145 = vmul.f32 %v3858, %v4113
    %v4146 = vmul.f32 %v3860, %v4117
    %v4147 = vmul.f32 %v3940, %v4121
    %v4148 = vmul.f32 %v3942, %v4125
    %v4149 = vmul.f32 %v4022, %v4129
    %v4150 = vmul.f32 %v4024, %v4133
    %v4151 = vmul.f32 %v4103, %v4137
    %v4152 = vld [vmem:[#allocation15] sm:$0xff]
    %v4154 = vlaneseq
    %v4155 = vshrl.u32 %v4154, 7
    %v4156 = vsub.s32 0, %v4155
    %v4157 = vrot.slane %v4152, %v4156
    %v4158 = vlaneseq
    %v4159 = vshrl.u32 %v4158, 7
    %v4160 = vsub.s32 1, %v4159
    %v4161 = vrot.slane %v4152, %v4160
    %v4162 = vlaneseq
    %v4163 = vshrl.u32 %v4162, 7
    %v4164 = vsub.s32 2, %v4163
    %v4165 = vrot.slane %v4152, %v4164
    %v4166 = vlaneseq
    %v4167 = vshrl.u32 %v4166, 7
    %v4168 = vsub.s32 3, %v4167
    %v4169 = vrot.slane %v4152, %v4168
    %v4170 = vlaneseq
    %v4171 = vshrl.u32 %v4170, 7
    %v4172 = vsub.s32 4, %v4171
    %v4173 = vrot.slane %v4152, %v4172
    %v4174 = vlaneseq
    %v4175 = vshrl.u32 %v4174, 7
    %v4176 = vsub.s32 5, %v4175
    %v4177 = vrot.slane %v4152, %v4176
    %v4178 = vlaneseq
    %v4179 = vshrl.u32 %v4178, 7
    %v4180 = vsub.s32 6, %v4179
    %v4181 = vrot.slane %v4152, %v4180
    %v4189 = vadd.f32 %v4145, %v4157
    %v4190 = vadd.f32 %v4146, %v4161
    %v4191 = vadd.f32 %v4147, %v4165
    %v4192 = vadd.f32 %v4148, %v4169
    %v4193 = vadd.f32 %v4149, %v4173
    %v4194 = vadd.f32 %v4150, %v4177
    %v4195 = vadd.f32 %v4151, %v4181
    %v4196 = vxor.u32 %v4189, 2147483648
    %v4197 = vxor.u32 %v4190, 2147483648
    %v4198 = vxor.u32 %v4191, 2147483648
    %v4199 = vxor.u32 %v4192, 2147483648
    %v4200 = vxor.u32 %v4193, 2147483648
    %v4201 = vxor.u32 %v4194, 2147483648
    %v4202 = vxor.u32 %v4195, 2147483648
    %v4203 = vmul.f32 %v4196, 1.442695
    %v4204 = vpow.pop %v4203
    %v4205 = vmul.f32 %v4197, 1.442695
    %v4206 = vpow.pop %v4205
    %v4207 = vmul.f32 %v4198, 1.442695
    %v4208 = vpow.pop %v4207
    %v4209 = vmul.f32 %v4199, 1.442695
    %v4210 = vpow.pop %v4209
    %v4211 = vmul.f32 %v4200, 1.442695
    %v4212 = vpow.pop %v4211
    %v4213 = vmul.f32 %v4201, 1.442695
    %v4214 = vpow.pop %v4213
    %v4215 = vmul.f32 %v4202, 1.442695
    %v4216 = vpow.pop %v4215
    %v4217 = vadd.f32 %v4204, 1.0
    %v4218 = vadd.f32 %v4206, 1.0
    %v4219 = vadd.f32 %v4208, 1.0
    %v4220 = vadd.f32 %v4210, 1.0
    %v4221 = vadd.f32 %v4212, 1.0
    %v4222 = vadd.f32 %v4214, 1.0
    %v4223 = vadd.f32 %v4216, 1.0
    %v4224 = vrcp.pop %v4217
    %v4225 = vmul.f32 1.0, %v4224
    %v4226 = vrcp.pop %v4218
    %v4227 = vmul.f32 1.0, %v4226
    %v4228 = vrcp.pop %v4219
    %v4229 = vmul.f32 1.0, %v4228
    %v4230 = vrcp.pop %v4220
    %v4231 = vmul.f32 1.0, %v4230
    %v4232 = vrcp.pop %v4221
    %v4233 = vmul.f32 1.0, %v4232
    %v4234 = vrcp.pop %v4222
    %v4235 = vmul.f32 1.0, %v4234
    %v4236 = vrcp.pop %v4223
    %v4237 = vmul.f32 1.0, %v4236
    %v4238 = vpack.c.bf16 %v4225, %v4225
    %v4239 = vpack.c.bf16 %v4227, %v4227
    %v4240 = vpack.c.bf16 %v4229, %v4229
    %v4241 = vpack.c.bf16 %v4231, %v4231
    %v4242 = vpack.c.bf16 %v4233, %v4233
    %v4243 = vpack.c.bf16 %v4235, %v4235
    %v4244 = vpack.c.bf16 %v4237, %v4237
    %v4245 = vld [vmem:[#allocation16] sm:$0xff]
    %v4246 = vld [vmem:[#allocation16 + $0x8] sm:$0xff]
    %v4247 = vld [vmem:[#allocation16 + $0x10] sm:$0xff]
    %v4248 = vld [vmem:[#allocation16 + $0x18] sm:$0xff]
    %v4249 = vld [vmem:[#allocation16 + $0x20] sm:$0xff]
    %v4250 = vld [vmem:[#allocation16 + $0x28] sm:$0xff]
    %v4251 = vld [vmem:[#allocation16 + $0x30] sm:$0xff]
    %v4252 = vld [vmem:[#allocation16 + $0x38] sm:$0xff]
    %v4253 = vld [vmem:[#allocation16 + $0x40] sm:$0xff]
    %v4254 = vld [vmem:[#allocation16 + $0x48] sm:$0xff]
    %v4255 = vld [vmem:[#allocation16 + $0x50] sm:$0xff]
    %v4256 = vld [vmem:[#allocation16 + $0x58] sm:$0xff]
    %v4257 = vld [vmem:[#allocation16 + $0x60] sm:$0xff]
    %v4258 = vld [vmem:[#allocation16 + $0x68] sm:$0xff]
    %v4259 = vld [vmem:[#allocation16 + $0x70] sm:$0xff]
    %v4260 = vld [vmem:[#allocation16 + $0x78] sm:$0xff]
    %v4261 = vld [vmem:[#allocation16 + $0x80] sm:$0xff]
    %v4262 = vld [vmem:[#allocation16 + $0x88] sm:$0xff]
    %v4263 = vld [vmem:[#allocation16 + $0x90] sm:$0xff]
    %v4264 = vld [vmem:[#allocation16 + $0x98] sm:$0xff]
    %v4265 = vld [vmem:[#allocation16 + $0xa0] sm:$0xff]
    %v4266 = vld [vmem:[#allocation16 + $0xa8] sm:$0xff]
    %v4267 = vld [vmem:[#allocation16 + $0xb0] sm:$0xff]
    %v4268 = vld [vmem:[#allocation16 + $0xb8] sm:$0xff]
    %v4269 = vld [vmem:[#allocation16 + $0xc0] sm:$0xff]
    %v4270 = vld [vmem:[#allocation16 + $0xc8] sm:$0xff]
    %v4271 = vld [vmem:[#allocation16 + $0xd0] sm:$0xff]
    %v4272 = vld [vmem:[#allocation16 + $0xd8] sm:$0xff]
    %v4273 = vld [vmem:[#allocation16 + $0xe0] sm:$0xff]
    %v4274 = vld [vmem:[#allocation16 + $0xe8] sm:$0xff]
    %v4275 = vld [vmem:[#allocation16 + $0xf0] sm:$0xff]
    %v4276 = vld [vmem:[#allocation16 + $0xf8] sm:$0xff]
    %v4277 = vld [vmem:[#allocation16 + $0x100] sm:$0xff]
    %v4278 = vld [vmem:[#allocation16 + $0x108] sm:$0xff]
    %v4279 = vld [vmem:[#allocation16 + $0x110] sm:$0xff]
    %v4280 = vld [vmem:[#allocation16 + $0x118] sm:$0xff]
    %v4281 = vld [vmem:[#allocation16 + $0x120] sm:$0xff]
    %v4282 = vld [vmem:[#allocation16 + $0x128] sm:$0xff]
    %v4283 = vld [vmem:[#allocation16 + $0x130] sm:$0xff]
    %v4284 = vld [vmem:[#allocation16 + $0x138] sm:$0xff]
    %v4285 = vld [vmem:[#allocation16 + $0x140] sm:$0xff]
    %v4286 = vld [vmem:[#allocation16 + $0x148] sm:$0xff]
    %v4287 = vld [vmem:[#allocation16 + $0x150] sm:$0xff]
    %v4288 = vld [vmem:[#allocation16 + $0x158] sm:$0xff]
    %v4289 = vld [vmem:[#allocation16 + $0x160] sm:$0xff]
    %v4290 = vld [vmem:[#allocation16 + $0x168] sm:$0xff]
    %v4291 = vld [vmem:[#allocation16 + $0x170] sm:$0xff]
    %v4292 = vld [vmem:[#allocation16 + $0x178] sm:$0xff]
    %v4293 = vld [vmem:[#allocation16 + $0x180] sm:$0xff]
    %v4294 = vld [vmem:[#allocation16 + $0x188] sm:$0xff]
    %v4295 = vld [vmem:[#allocation16 + $0x190] sm:$0xff]
    %v4296 = vld [vmem:[#allocation16 + $0x198] sm:$0xff]
    %v4297 = vld [vmem:[#allocation16 + $0x1a0] sm:$0xff]
    %v4298 = vld [vmem:[#allocation16 + $0x1a8] sm:$0xff]
    %v4299 = vld [vmem:[#allocation16 + $0x1b0] sm:$0xff]
    %v4300 = vld [vmem:[#allocation16 + $0x1b8] sm:$0xff]
    %v4301 = vld [vmem:[#allocation16 + $0x1c0] sm:$0xff]
    %v4302 = vld [vmem:[#allocation16 + $0x1c8] sm:$0xff]
    %v4303 = vld [vmem:[#allocation16 + $0x1d0] sm:$0xff]
    %v4304 = vld [vmem:[#allocation16 + $0x1d8] sm:$0xff]
    %v4305 = vld [vmem:[#allocation16 + $0x1e0] sm:$0xff]
    %v4306 = vld [vmem:[#allocation16 + $0x1e8] sm:$0xff]
    %v4307 = vld [vmem:[#allocation16 + $0x1f0] sm:$0xff]
    %v4308 = vld [vmem:[#allocation16 + $0x1f8] sm:$0xff]
    %v4309 = vld [vmem:[#allocation16 + $0x200] sm:$0xff]
    %v4310 = vld [vmem:[#allocation16 + $0x208] sm:$0xff]
    %v4311 = vld [vmem:[#allocation16 + $0x210] sm:$0xff]
    %v4312 = vld [vmem:[#allocation16 + $0x218] sm:$0xff]
    %v4313 = vld [vmem:[#allocation16 + $0x220] sm:$0xff]
    %v4314 = vld [vmem:[#allocation16 + $0x228] sm:$0xff]
    %v4315 = vld [vmem:[#allocation16 + $0x230] sm:$0xff]
    %v4316 = vld [vmem:[#allocation16 + $0x238] sm:$0xff]
    %v4317 = vld [vmem:[#allocation16 + $0x240] sm:$0xff]
    %v4318 = vld [vmem:[#allocation16 + $0x248] sm:$0xff]
    %v4319 = vld [vmem:[#allocation16 + $0x250] sm:$0xff]
    %v4320 = vld [vmem:[#allocation16 + $0x258] sm:$0xff]
    %v4321 = vld [vmem:[#allocation16 + $0x260] sm:$0xff]
    %v4322 = vld [vmem:[#allocation16 + $0x268] sm:$0xff]
    %v4323 = vld [vmem:[#allocation16 + $0x270] sm:$0xff]
    %v4324 = vld [vmem:[#allocation16 + $0x278] sm:$0xff]
    %v4325 = vld [vmem:[#allocation16 + $0x280] sm:$0xff]
    %v4326 = vld [vmem:[#allocation16 + $0x288] sm:$0xff]
    %v4327 = vld [vmem:[#allocation16 + $0x290] sm:$0xff]
    %v4328 = vld [vmem:[#allocation16 + $0x298] sm:$0xff]
    %v4329 = vld [vmem:[#allocation16 + $0x2a0] sm:$0xff]
    %v4330 = vld [vmem:[#allocation16 + $0x2a8] sm:$0xff]
    %v4331 = vld [vmem:[#allocation16 + $0x2b0] sm:$0xff]
    %v4332 = vld [vmem:[#allocation16 + $0x2b8] sm:$0xff]
    %v4333 = vld [vmem:[#allocation16 + $0x2c0] sm:$0xff]
    %v4334 = vld [vmem:[#allocation16 + $0x2c8] sm:$0xff]
    %v4335 = vld [vmem:[#allocation16 + $0x2d0] sm:$0xff]
    %v4336 = vld [vmem:[#allocation16 + $0x2d8] sm:$0xff]
    %v4337 = vld [vmem:[#allocation16 + $0x2e0] sm:$0xff]
    %v4338 = vld [vmem:[#allocation16 + $0x2e8] sm:$0xff]
    %v4339 = vld [vmem:[#allocation16 + $0x2f0] sm:$0xff]
    %v4340 = vld [vmem:[#allocation16 + $0x2f8] sm:$0xff]
    %v4341 = vld [vmem:[#allocation16 + $0x300] sm:$0xff]
    %v4342 = vld [vmem:[#allocation16 + $0x308] sm:$0xff]
    %v4343 = vld [vmem:[#allocation16 + $0x310] sm:$0xff]
    %v4344 = vld [vmem:[#allocation16 + $0x318] sm:$0xff]
    %v4345 = vld [vmem:[#allocation16 + $0x320] sm:$0xff]
    %v4346 = vld [vmem:[#allocation16 + $0x328] sm:$0xff]
    %v4347 = vld [vmem:[#allocation16 + $0x330] sm:$0xff]
    %v4348 = vld [vmem:[#allocation16 + $0x338] sm:$0xff]
    %v4349 = vld [vmem:[#allocation16 + $0x340] sm:$0xff]
    %v4350 = vld [vmem:[#allocation16 + $0x348] sm:$0xff]
    %v4351 = vld [vmem:[#allocation16 + $0x350] sm:$0xff]
    %v4352 = vld [vmem:[#allocation16 + $0x358] sm:$0xff]
    %v4353 = vld [vmem:[#allocation16 + $0x360] sm:$0xff]
    %v4354 = vld [vmem:[#allocation16 + $0x368] sm:$0xff]
    %v4355 = vld [vmem:[#allocation16 + $0x370] sm:$0xff]
    %v4356 = vld [vmem:[#allocation16 + $0x378] sm:$0xff]
    %v4357 = vld [vmem:[#allocation16 + $0x380] sm:$0xff]
    %v4358 = vld [vmem:[#allocation16 + $0x388] sm:$0xff]
    %v4359 = vld [vmem:[#allocation16 + $0x390] sm:$0xff]
    %v4360 = vld [vmem:[#allocation16 + $0x398] sm:$0xff]
    %v4361 = vld [vmem:[#allocation16 + $0x3a0] sm:$0xff]
    %v4362 = vld [vmem:[#allocation16 + $0x3a8] sm:$0xff]
    %v4363 = vld [vmem:[#allocation16 + $0x3b0] sm:$0xff]
    %v4364 = vld [vmem:[#allocation16 + $0x3b8] sm:$0xff]
    %v4365 = vld [vmem:[#allocation16 + $0x3c0] sm:$0xff]
    %v4366 = vld [vmem:[#allocation16 + $0x3c8] sm:$0xff]
    %v4367 = vld [vmem:[#allocation16 + $0x3d0] sm:$0xff]
    %v4368 = vld [vmem:[#allocation16 + $0x3d8] sm:$0xff]
    %v4369 = vld [vmem:[#allocation16 + $0x3e0] sm:$0xff]
    %v4370 = vld [vmem:[#allocation16 + $0x3e8] sm:$0xff]
    %v4371 = vld [vmem:[#allocation16 + $0x3f0] sm:$0xff]
    %v4372 = vld [vmem:[#allocation16 + $0x3f8] sm:$0xff]
    %v4373 = vld [vmem:[#allocation16 + $0x400] sm:$0xff]
    %v4374 = vld [vmem:[#allocation16 + $0x408] sm:$0xff]
    %v4375 = vld [vmem:[#allocation16 + $0x410] sm:$0xff]
    %v4376 = vld [vmem:[#allocation16 + $0x418] sm:$0xff]
    %v4377 = vld [vmem:[#allocation16 + $0x420] sm:$0xff]
    %v4378 = vld [vmem:[#allocation16 + $0x428] sm:$0xff]
    %v4379 = vld [vmem:[#allocation16 + $0x430] sm:$0xff]
    %v4380 = vld [vmem:[#allocation16 + $0x438] sm:$0xff]
    %v4381 = vld [vmem:[#allocation16 + $0x440] sm:$0xff]
    %v4382 = vld [vmem:[#allocation16 + $0x448] sm:$0xff]
    %v4383 = vld [vmem:[#allocation16 + $0x450] sm:$0xff]
    %v4384 = vld [vmem:[#allocation16 + $0x458] sm:$0xff]
    %v4385 = vld [vmem:[#allocation16 + $0x460] sm:$0xff]
    %v4386 = vld [vmem:[#allocation16 + $0x468] sm:$0xff]
    %v4387 = vld [vmem:[#allocation16 + $0x470] sm:$0xff]
    %v4388 = vld [vmem:[#allocation16 + $0x478] sm:$0xff]
    %v4389 = vld [vmem:[#allocation16 + $0x480] sm:$0xff]
    %v4390 = vld [vmem:[#allocation16 + $0x488] sm:$0xff]
    %v4391 = vld [vmem:[#allocation16 + $0x490] sm:$0xff]
    %v4392 = vld [vmem:[#allocation16 + $0x498] sm:$0xff]
    %v4393 = vld [vmem:[#allocation16 + $0x4a0] sm:$0xff]
    %v4394 = vld [vmem:[#allocation16 + $0x4a8] sm:$0xff]
    %v4395 = vld [vmem:[#allocation16 + $0x4b0] sm:$0xff]
    %v4396 = vld [vmem:[#allocation16 + $0x4b8] sm:$0xff]
    %v4397 = vld [vmem:[#allocation16 + $0x4c0] sm:$0xff]
    %v4398 = vld [vmem:[#allocation16 + $0x4c8] sm:$0xff]
    %v4399 = vld [vmem:[#allocation16 + $0x4d0] sm:$0xff]
    %v4400 = vld [vmem:[#allocation16 + $0x4d8] sm:$0xff]
    %v4401 = vld [vmem:[#allocation16 + $0x4e0] sm:$0xff]
    %v4402 = vld [vmem:[#allocation16 + $0x4e8] sm:$0xff]
    %v4403 = vld [vmem:[#allocation16 + $0x4f0] sm:$0xff]
    %v4404 = vld [vmem:[#allocation16 + $0x4f8] sm:$0xff]
    %v4405 = vld [vmem:[#allocation16 + $0x500] sm:$0xff]
    %v4406 = vld [vmem:[#allocation16 + $0x508] sm:$0xff]
    %v4407 = vld [vmem:[#allocation16 + $0x510] sm:$0xff]
    %v4408 = vld [vmem:[#allocation16 + $0x518] sm:$0xff]
    %v4409 = vld [vmem:[#allocation16 + $0x520] sm:$0xff]
    %v4410 = vld [vmem:[#allocation16 + $0x528] sm:$0xff]
    %v4411 = vld [vmem:[#allocation16 + $0x530] sm:$0xff]
    %v4412 = vld [vmem:[#allocation16 + $0x538] sm:$0xff]
    %v4413 = vld [vmem:[#allocation16 + $0x540] sm:$0xff]
    %v4414 = vld [vmem:[#allocation16 + $0x548] sm:$0xff]
    %v4415 = vld [vmem:[#allocation16 + $0x550] sm:$0xff]
    %v4416 = vld [vmem:[#allocation16 + $0x558] sm:$0xff]
    %v4417 = vld [vmem:[#allocation16 + $0x560] sm:$0xff]
    %v4418 = vld [vmem:[#allocation16 + $0x568] sm:$0xff]
    %v4419 = vld [vmem:[#allocation16 + $0x570] sm:$0xff]
    %v4420 = vld [vmem:[#allocation16 + $0x578] sm:$0xff]
    %v4421 = vld [vmem:[#allocation16 + $0x580] sm:$0xff]
    %v4422 = vld [vmem:[#allocation16 + $0x588] sm:$0xff]
    %v4423 = vld [vmem:[#allocation16 + $0x590] sm:$0xff]
    %v4424 = vld [vmem:[#allocation16 + $0x598] sm:$0xff]
    %v4425 = vld [vmem:[#allocation16 + $0x5a0] sm:$0xff]
    %v4426 = vld [vmem:[#allocation16 + $0x5a8] sm:$0xff]
    %v4427 = vld [vmem:[#allocation16 + $0x5b0] sm:$0xff]
    %v4428 = vld [vmem:[#allocation16 + $0x5b8] sm:$0xff]
    %v4429 = vld [vmem:[#allocation16 + $0x5c0] sm:$0xff]
    %v4430 = vld [vmem:[#allocation16 + $0x5c8] sm:$0xff]
    %v4431 = vld [vmem:[#allocation16 + $0x5d0] sm:$0xff]
    %v4432 = vld [vmem:[#allocation16 + $0x5d8] sm:$0xff]
    %v4433 = vld [vmem:[#allocation16 + $0x5e0] sm:$0xff]
    %v4434 = vld [vmem:[#allocation16 + $0x5e8] sm:$0xff]
    %v4435 = vld [vmem:[#allocation16 + $0x5f0] sm:$0xff]
    %v4436 = vld [vmem:[#allocation16 + $0x5f8] sm:$0xff]
    %v4437 = vld [vmem:[#allocation16 + $0x600] sm:$0xff]
    %v4438 = vld [vmem:[#allocation16 + $0x608] sm:$0xff]
    %v4439 = vld [vmem:[#allocation16 + $0x610] sm:$0xff]
    %v4440 = vld [vmem:[#allocation16 + $0x618] sm:$0xff]
    %v4441 = vld [vmem:[#allocation16 + $0x620] sm:$0xff]
    %v4442 = vld [vmem:[#allocation16 + $0x628] sm:$0xff]
    %v4443 = vld [vmem:[#allocation16 + $0x630] sm:$0xff]
    %v4444 = vld [vmem:[#allocation16 + $0x638] sm:$0xff]
    %v4445 = vld [vmem:[#allocation16 + $0x640] sm:$0xff]
    %v4446 = vld [vmem:[#allocation16 + $0x648] sm:$0xff]
    %v4447 = vld [vmem:[#allocation16 + $0x650] sm:$0xff]
    %v4448 = vld [vmem:[#allocation16 + $0x658] sm:$0xff]
    %v4449 = vld [vmem:[#allocation16 + $0x660] sm:$0xff]
    %v4450 = vld [vmem:[#allocation16 + $0x668] sm:$0xff]
    %v4451 = vld [vmem:[#allocation16 + $0x670] sm:$0xff]
    %v4452 = vld [vmem:[#allocation16 + $0x678] sm:$0xff]
    %v4453 = vld [vmem:[#allocation16 + $0x680] sm:$0xff]
    %v4454 = vld [vmem:[#allocation16 + $0x688] sm:$0xff]
    %v4455 = vld [vmem:[#allocation16 + $0x690] sm:$0xff]
    %v4456 = vld [vmem:[#allocation16 + $0x698] sm:$0xff]
    %v4457 = vld [vmem:[#allocation16 + $0x6a0] sm:$0xff]
    %v4458 = vld [vmem:[#allocation16 + $0x6a8] sm:$0xff]
    %v4459 = vld [vmem:[#allocation16 + $0x6b0] sm:$0xff]
    %v4460 = vld [vmem:[#allocation16 + $0x6b8] sm:$0xff]
    %v4461 = vld [vmem:[#allocation16 + $0x6c0] sm:$0xff]
    %v4462 = vld [vmem:[#allocation16 + $0x6c8] sm:$0xff]
    %v4463 = vld [vmem:[#allocation16 + $0x6d0] sm:$0xff]
    %v4464 = vld [vmem:[#allocation16 + $0x6d8] sm:$0xff]
    %v4465 = vld [vmem:[#allocation16 + $0x6e0] sm:$0xff]
    %v4466 = vld [vmem:[#allocation16 + $0x6e8] sm:$0xff]
    %v4467 = vld [vmem:[#allocation16 + $0x6f0] sm:$0xff]
    %v4468 = vld [vmem:[#allocation16 + $0x6f8] sm:$0xff]
    %v4469 = vld [vmem:[#allocation16 + $0x700] sm:$0xff]
    %v4470 = vld [vmem:[#allocation16 + $0x708] sm:$0xff]
    %v4471 = vld [vmem:[#allocation16 + $0x710] sm:$0xff]
    %v4472 = vld [vmem:[#allocation16 + $0x718] sm:$0xff]
    %v4473 = vld [vmem:[#allocation16 + $0x720] sm:$0xff]
    %v4474 = vld [vmem:[#allocation16 + $0x728] sm:$0xff]
    %v4475 = vld [vmem:[#allocation16 + $0x730] sm:$0xff]
    %v4476 = vld [vmem:[#allocation16 + $0x738] sm:$0xff]
    %v4477 = vld [vmem:[#allocation16 + $0x740] sm:$0xff]
    %v4478 = vld [vmem:[#allocation16 + $0x748] sm:$0xff]
    %v4479 = vld [vmem:[#allocation16 + $0x750] sm:$0xff]
    %v4480 = vld [vmem:[#allocation16 + $0x758] sm:$0xff]
    %v4481 = vld [vmem:[#allocation16 + $0x760] sm:$0xff]
    %v4482 = vld [vmem:[#allocation16 + $0x768] sm:$0xff]
    %v4483 = vld [vmem:[#allocation16 + $0x770] sm:$0xff]
    %v4484 = vld [vmem:[#allocation16 + $0x778] sm:$0xff]
    %v4485 = vld [vmem:[#allocation16 + $0x780] sm:$0xff]
    %v4486 = vld [vmem:[#allocation16 + $0x788] sm:$0xff]
    %v4487 = vld [vmem:[#allocation16 + $0x790] sm:$0xff]
    %v4488 = vld [vmem:[#allocation16 + $0x798] sm:$0xff]
    %v4489 = vld [vmem:[#allocation16 + $0x7a0] sm:$0xff]
    %v4490 = vld [vmem:[#allocation16 + $0x7a8] sm:$0xff]
    %v4491 = vld [vmem:[#allocation16 + $0x7b0] sm:$0xff]
    %v4492 = vld [vmem:[#allocation16 + $0x7b8] sm:$0xff]
    %v4493 = vld [vmem:[#allocation16 + $0x7c0] sm:$0xff]
    %v4494 = vld [vmem:[#allocation16 + $0x7c8] sm:$0xff]
    %v4495 = vld [vmem:[#allocation16 + $0x7d0] sm:$0xff]
    %v4496 = vld [vmem:[#allocation16 + $0x7d8] sm:$0xff]
    %v4497 = vld [vmem:[#allocation16 + $0x7e0] sm:$0xff]
    %v4498 = vld [vmem:[#allocation16 + $0x7e8] sm:$0xff]
    %v4499 = vld [vmem:[#allocation16 + $0x7f0] sm:$0xff]
    %v4500 = vld [vmem:[#allocation16 + $0x7f8] sm:$0xff]
    %v4501 = vld [vmem:[#allocation16 + $0x800] sm:$0xff]
    %v4502 = vld [vmem:[#allocation16 + $0x808] sm:$0xff]
    %v4503 = vld [vmem:[#allocation16 + $0x810] sm:$0xff]
    %v4504 = vld [vmem:[#allocation16 + $0x818] sm:$0xff]
    %v4505 = vld [vmem:[#allocation16 + $0x820] sm:$0xff]
    %v4506 = vld [vmem:[#allocation16 + $0x828] sm:$0xff]
    %v4507 = vld [vmem:[#allocation16 + $0x830] sm:$0xff]
    %v4508 = vld [vmem:[#allocation16 + $0x838] sm:$0xff]
    %v4509 = vld [vmem:[#allocation16 + $0x840] sm:$0xff]
    %v4510 = vld [vmem:[#allocation16 + $0x848] sm:$0xff]
    %v4511 = vld [vmem:[#allocation16 + $0x850] sm:$0xff]
    %v4512 = vld [vmem:[#allocation16 + $0x858] sm:$0xff]
    %v4513 = vld [vmem:[#allocation16 + $0x860] sm:$0xff]
    %v4514 = vld [vmem:[#allocation16 + $0x868] sm:$0xff]
    %v4515 = vld [vmem:[#allocation16 + $0x870] sm:$0xff]
    %v4516 = vld [vmem:[#allocation16 + $0x878] sm:$0xff]
    %v4517 = vld [vmem:[#allocation16 + $0x880] sm:$0xff]
    %v4518 = vld [vmem:[#allocation16 + $0x888] sm:$0xff]
    %v4519 = vld [vmem:[#allocation16 + $0x890] sm:$0xff]
    %v4520 = vld [vmem:[#allocation16 + $0x898] sm:$0xff]
    %v4521 = vld [vmem:[#allocation16 + $0x8a0] sm:$0xff]
    %v4522 = vld [vmem:[#allocation16 + $0x8a8] sm:$0xff]
    %v4523 = vld [vmem:[#allocation16 + $0x8b0] sm:$0xff]
    %v4524 = vld [vmem:[#allocation16 + $0x8b8] sm:$0xff]
    %v4525 = vld [vmem:[#allocation16 + $0x8c0] sm:$0xff]
    %v4526 = vld [vmem:[#allocation16 + $0x8c8] sm:$0xff]
    %v4527 = vld [vmem:[#allocation16 + $0x8d0] sm:$0xff]
    %v4528 = vld [vmem:[#allocation16 + $0x8d8] sm:$0xff]
    %v4529 = vld [vmem:[#allocation16 + $0x8e0] sm:$0xff]
    %v4530 = vld [vmem:[#allocation16 + $0x8e8] sm:$0xff]
    %v4531 = vld [vmem:[#allocation16 + $0x8f0] sm:$0xff]
    %v4532 = vld [vmem:[#allocation16 + $0x8f8] sm:$0xff]
    %v4533 = vld [vmem:[#allocation16 + $0x900] sm:$0xff]
    %v4534 = vld [vmem:[#allocation16 + $0x908] sm:$0xff]
    %v4535 = vld [vmem:[#allocation16 + $0x910] sm:$0xff]
    %v4536 = vld [vmem:[#allocation16 + $0x918] sm:$0xff]
    %v4537 = vld [vmem:[#allocation16 + $0x920] sm:$0xff]
    %v4538 = vld [vmem:[#allocation16 + $0x928] sm:$0xff]
    %v4539 = vld [vmem:[#allocation16 + $0x930] sm:$0xff]
    %v4540 = vld [vmem:[#allocation16 + $0x938] sm:$0xff]
    %v4541 = vld [vmem:[#allocation16 + $0x940] sm:$0xff]
    %v4542 = vld [vmem:[#allocation16 + $0x948] sm:$0xff]
    %v4543 = vld [vmem:[#allocation16 + $0x950] sm:$0xff]
    %v4544 = vld [vmem:[#allocation16 + $0x958] sm:$0xff]
    %v4545 = vld [vmem:[#allocation16 + $0x960] sm:$0xff]
    %v4546 = vld [vmem:[#allocation16 + $0x968] sm:$0xff]
    %v4547 = vld [vmem:[#allocation16 + $0x970] sm:$0xff]
    %v4548 = vld [vmem:[#allocation16 + $0x978] sm:$0xff]
    %v4549 = vld [vmem:[#allocation16 + $0x980] sm:$0xff]
    %v4550 = vld [vmem:[#allocation16 + $0x988] sm:$0xff]
    %v4551 = vld [vmem:[#allocation16 + $0x990] sm:$0xff]
    %v4552 = vld [vmem:[#allocation16 + $0x998] sm:$0xff]
    %v4553 = vld [vmem:[#allocation16 + $0x9a0] sm:$0xff]
    %v4554 = vld [vmem:[#allocation16 + $0x9a8] sm:$0xff]
    %v4555 = vld [vmem:[#allocation16 + $0x9b0] sm:$0xff]
    %v4556 = vld [vmem:[#allocation16 + $0x9b8] sm:$0xff]
    %v4557 = vld [vmem:[#allocation16 + $0x9c0] sm:$0xff]
    %v4558 = vld [vmem:[#allocation16 + $0x9c8] sm:$0xff]
    %v4559 = vld [vmem:[#allocation16 + $0x9d0] sm:$0xff]
    %v4560 = vld [vmem:[#allocation16 + $0x9d8] sm:$0xff]
    %v4561 = vld [vmem:[#allocation16 + $0x9e0] sm:$0xff]
    %v4562 = vld [vmem:[#allocation16 + $0x9e8] sm:$0xff]
    %v4563 = vld [vmem:[#allocation16 + $0x9f0] sm:$0xff]
    %v4564 = vld [vmem:[#allocation16 + $0x9f8] sm:$0xff]
    %v4565 = vld [vmem:[#allocation16 + $0xa00] sm:$0xff]
    %v4566 = vld [vmem:[#allocation16 + $0xa08] sm:$0xff]
    %v4567 = vld [vmem:[#allocation16 + $0xa10] sm:$0xff]
    %v4568 = vld [vmem:[#allocation16 + $0xa18] sm:$0xff]
    %v4569 = vld [vmem:[#allocation16 + $0xa20] sm:$0xff]
    %v4570 = vld [vmem:[#allocation16 + $0xa28] sm:$0xff]
    %v4571 = vld [vmem:[#allocation16 + $0xa30] sm:$0xff]
    %v4572 = vld [vmem:[#allocation16 + $0xa38] sm:$0xff]
    %v4573 = vld [vmem:[#allocation16 + $0xa40] sm:$0xff]
    %v4574 = vld [vmem:[#allocation16 + $0xa48] sm:$0xff]
    %v4575 = vld [vmem:[#allocation16 + $0xa50] sm:$0xff]
    %v4576 = vld [vmem:[#allocation16 + $0xa58] sm:$0xff]
    %v4577 = vld [vmem:[#allocation16 + $0xa60] sm:$0xff]
    %v4578 = vld [vmem:[#allocation16 + $0xa68] sm:$0xff]
    %v4579 = vld [vmem:[#allocation16 + $0xa70] sm:$0xff]
    %v4580 = vld [vmem:[#allocation16 + $0xa78] sm:$0xff]
    %v4581 = vld [vmem:[#allocation16 + $0xa80] sm:$0xff]
    %v4582 = vld [vmem:[#allocation16 + $0xa88] sm:$0xff]
    %v4583 = vld [vmem:[#allocation16 + $0xa90] sm:$0xff]
    %v4584 = vld [vmem:[#allocation16 + $0xa98] sm:$0xff]
    %v4585 = vld [vmem:[#allocation16 + $0xaa0] sm:$0xff]
    %v4586 = vld [vmem:[#allocation16 + $0xaa8] sm:$0xff]
    %v4587 = vld [vmem:[#allocation16 + $0xab0] sm:$0xff]
    %v4588 = vld [vmem:[#allocation16 + $0xab8] sm:$0xff]
    %v4589 = vld [vmem:[#allocation16 + $0xac0] sm:$0xff]
    %v4590 = vld [vmem:[#allocation16 + $0xac8] sm:$0xff]
    %v4591 = vld [vmem:[#allocation16 + $0xad0] sm:$0xff]
    %v4592 = vld [vmem:[#allocation16 + $0xad8] sm:$0xff]
    %v4593 = vld [vmem:[#allocation16 + $0xae0] sm:$0xff]
    %v4594 = vld [vmem:[#allocation16 + $0xae8] sm:$0xff]
    %v4595 = vld [vmem:[#allocation16 + $0xaf0] sm:$0xff]
    %v4596 = vld [vmem:[#allocation16 + $0xaf8] sm:$0xff]
    %v4597 = vld [vmem:[#allocation16 + $0xb00] sm:$0xff]
    %v4598 = vld [vmem:[#allocation16 + $0xb08] sm:$0xff]
    %v4599 = vld [vmem:[#allocation16 + $0xb10] sm:$0xff]
    %v4600 = vld [vmem:[#allocation16 + $0xb18] sm:$0xff]
    %v4601 = vld [vmem:[#allocation16 + $0xb20] sm:$0xff]
    %v4602 = vld [vmem:[#allocation16 + $0xb28] sm:$0xff]
    %v4603 = vld [vmem:[#allocation16 + $0xb30] sm:$0xff]
    %v4604 = vld [vmem:[#allocation16 + $0xb38] sm:$0xff]
    %v4605 = vld [vmem:[#allocation16 + $0xb40] sm:$0xff]
    %v4606 = vld [vmem:[#allocation16 + $0xb48] sm:$0xff]
    %v4607 = vld [vmem:[#allocation16 + $0xb50] sm:$0xff]
    %v4608 = vld [vmem:[#allocation16 + $0xb58] sm:$0xff]
    %v4609 = vld [vmem:[#allocation16 + $0xb60] sm:$0xff]
    %v4610 = vld [vmem:[#allocation16 + $0xb68] sm:$0xff]
    %v4611 = vld [vmem:[#allocation16 + $0xb70] sm:$0xff]
    %v4612 = vld [vmem:[#allocation16 + $0xb78] sm:$0xff]
    %v4613 = vld [vmem:[#allocation16 + $0xb80] sm:$0xff]
    %v4614 = vld [vmem:[#allocation16 + $0xb88] sm:$0xff]
    %v4615 = vld [vmem:[#allocation16 + $0xb90] sm:$0xff]
    %v4616 = vld [vmem:[#allocation16 + $0xb98] sm:$0xff]
    %v4617 = vld [vmem:[#allocation16 + $0xba0] sm:$0xff]
    %v4618 = vld [vmem:[#allocation16 + $0xba8] sm:$0xff]
    %v4619 = vld [vmem:[#allocation16 + $0xbb0] sm:$0xff]
    %v4620 = vld [vmem:[#allocation16 + $0xbb8] sm:$0xff]
    %v4621 = vld [vmem:[#allocation16 + $0xbc0] sm:$0xff]
    %v4622 = vld [vmem:[#allocation16 + $0xbc8] sm:$0xff]
    %v4623 = vld [vmem:[#allocation16 + $0xbd0] sm:$0xff]
    %v4624 = vld [vmem:[#allocation16 + $0xbd8] sm:$0xff]
    %v4625 = vld [vmem:[#allocation16 + $0xbe0] sm:$0xff]
    %v4626 = vld [vmem:[#allocation16 + $0xbe8] sm:$0xff]
    %v4627 = vld [vmem:[#allocation16 + $0xbf0] sm:$0xff]
    %v4628 = vld [vmem:[#allocation16 + $0xbf8] sm:$0xff]
    %v4629 = vld [vmem:[#allocation16 + $0xc00] sm:$0xff]
    %v4630 = vld [vmem:[#allocation16 + $0xc08] sm:$0xff]
    %v4631 = vld [vmem:[#allocation16 + $0xc10] sm:$0xff]
    %v4632 = vld [vmem:[#allocation16 + $0xc18] sm:$0xff]
    %v4633 = vld [vmem:[#allocation16 + $0xc20] sm:$0xff]
    %v4634 = vld [vmem:[#allocation16 + $0xc28] sm:$0xff]
    %v4635 = vld [vmem:[#allocation16 + $0xc30] sm:$0xff]
    %v4636 = vld [vmem:[#allocation16 + $0xc38] sm:$0xff]
    %v4637 = vunpack.c.l.s8.bf16 %v4245
    %v4638 = vunpack.c.l.s8.bf16 %v4246
    %v4639 = vunpack.c.l.s8.bf16 %v4247
    %v4640 = vunpack.c.l.s8.bf16 %v4248
    %v4641 = vunpack.c.l.s8.bf16 %v4249
    %v4642 = vunpack.c.l.s8.bf16 %v4250
    %v4643 = vunpack.c.l.s8.bf16 %v4251
    %v4644 = vunpack.c.l.s8.bf16 %v4252
    %v4645 = vunpack.c.l.s8.bf16 %v4253
    %v4646 = vunpack.c.l.s8.bf16 %v4254
    %v4647 = vunpack.c.l.s8.bf16 %v4255
    %v4648 = vunpack.c.l.s8.bf16 %v4256
    %v4649 = vunpack.c.l.s8.bf16 %v4257
    %v4650 = vunpack.c.l.s8.bf16 %v4258
    %v4651 = vunpack.c.h.s8.bf16 %v4245
    %v4652 = vunpack.c.h.s8.bf16 %v4246
    %v4653 = vunpack.c.h.s8.bf16 %v4247
    %v4654 = vunpack.c.h.s8.bf16 %v4248
    %v4655 = vunpack.c.h.s8.bf16 %v4249
    %v4656 = vunpack.c.h.s8.bf16 %v4250
    %v4657 = vunpack.c.h.s8.bf16 %v4251
    %v4658 = vunpack.c.h.s8.bf16 %v4252
    %v4659 = vunpack.c.h.s8.bf16 %v4253
    %v4660 = vunpack.c.h.s8.bf16 %v4254
    %v4661 = vunpack.c.h.s8.bf16 %v4255
    %v4662 = vunpack.c.h.s8.bf16 %v4256
    %v4663 = vunpack.c.h.s8.bf16 %v4257
    %v4664 = vunpack.c.h.s8.bf16 %v4258
    %v4665 = vunpack.c.l.s8.bf16 %v4259
    %v4666 = vunpack.c.l.s8.bf16 %v4260
    %v4667 = vunpack.c.l.s8.bf16 %v4261
    %v4668 = vunpack.c.l.s8.bf16 %v4262
    %v4669 = vunpack.c.l.s8.bf16 %v4263
    %v4670 = vunpack.c.l.s8.bf16 %v4264
    %v4671 = vunpack.c.l.s8.bf16 %v4265
    %v4672 = vunpack.c.l.s8.bf16 %v4266
    %v4673 = vunpack.c.l.s8.bf16 %v4267
    %v4674 = vunpack.c.l.s8.bf16 %v4268
    %v4675 = vunpack.c.l.s8.bf16 %v4269
    %v4676 = vunpack.c.l.s8.bf16 %v4270
    %v4677 = vunpack.c.l.s8.bf16 %v4271
    %v4678 = vunpack.c.l.s8.bf16 %v4272
    %v4679 = vunpack.c.h.s8.bf16 %v4259
    %v4680 = vunpack.c.h.s8.bf16 %v4260
    %v4681 = vunpack.c.h.s8.bf16 %v4261
    %v4682 = vunpack.c.h.s8.bf16 %v4262
    %v4683 = vunpack.c.h.s8.bf16 %v4263
    %v4684 = vunpack.c.h.s8.bf16 %v4264
    %v4685 = vunpack.c.h.s8.bf16 %v4265
    %v4686 = vunpack.c.h.s8.bf16 %v4266
    %v4687 = vunpack.c.h.s8.bf16 %v4267
    %v4688 = vunpack.c.h.s8.bf16 %v4268
    %v4689 = vunpack.c.h.s8.bf16 %v4269
    %v4690 = vunpack.c.h.s8.bf16 %v4270
    %v4691 = vunpack.c.h.s8.bf16 %v4271
    %v4692 = vunpack.c.h.s8.bf16 %v4272
    %v4693 = vunpack.c.l.s8.bf16 %v4273
    %v4694 = vunpack.c.l.s8.bf16 %v4274
    %v4695 = vunpack.c.l.s8.bf16 %v4275
    %v4696 = vunpack.c.l.s8.bf16 %v4276
    %v4697 = vunpack.c.l.s8.bf16 %v4277
    %v4698 = vunpack.c.l.s8.bf16 %v4278
    %v4699 = vunpack.c.l.s8.bf16 %v4279
    %v4700 = vunpack.c.l.s8.bf16 %v4280
    %v4701 = vunpack.c.l.s8.bf16 %v4281
    %v4702 = vunpack.c.l.s8.bf16 %v4282
    %v4703 = vunpack.c.l.s8.bf16 %v4283
    %v4704 = vunpack.c.l.s8.bf16 %v4284
    %v4705 = vunpack.c.l.s8.bf16 %v4285
    %v4706 = vunpack.c.l.s8.bf16 %v4286
    %v4707 = vunpack.c.h.s8.bf16 %v4273
    %v4708 = vunpack.c.h.s8.bf16 %v4274
    %v4709 = vunpack.c.h.s8.bf16 %v4275
    %v4710 = vunpack.c.h.s8.bf16 %v4276
    %v4711 = vunpack.c.h.s8.bf16 %v4277
    %v4712 = vunpack.c.h.s8.bf16 %v4278
    %v4713 = vunpack.c.h.s8.bf16 %v4279
    %v4714 = vunpack.c.h.s8.bf16 %v4280
    %v4715 = vunpack.c.h.s8.bf16 %v4281
    %v4716 = vunpack.c.h.s8.bf16 %v4282
    %v4717 = vunpack.c.h.s8.bf16 %v4283
    %v4718 = vunpack.c.h.s8.bf16 %v4284
    %v4719 = vunpack.c.h.s8.bf16 %v4285
    %v4720 = vunpack.c.h.s8.bf16 %v4286
    %v4721 = vunpack.c.l.s8.bf16 %v4287
    %v4722 = vunpack.c.l.s8.bf16 %v4288
    %v4723 = vunpack.c.l.s8.bf16 %v4289
    %v4724 = vunpack.c.l.s8.bf16 %v4290
    %v4725 = vunpack.c.l.s8.bf16 %v4291
    %v4726 = vunpack.c.l.s8.bf16 %v4292
    %v4727 = vunpack.c.l.s8.bf16 %v4293
    %v4728 = vunpack.c.l.s8.bf16 %v4294
    %v4729 = vunpack.c.l.s8.bf16 %v4295
    %v4730 = vunpack.c.l.s8.bf16 %v4296
    %v4731 = vunpack.c.l.s8.bf16 %v4297
    %v4732 = vunpack.c.l.s8.bf16 %v4298
    %v4733 = vunpack.c.l.s8.bf16 %v4299
    %v4734 = vunpack.c.l.s8.bf16 %v4300
    %v4735 = vunpack.c.h.s8.bf16 %v4287
    %v4736 = vunpack.c.h.s8.bf16 %v4288
    %v4737 = vunpack.c.h.s8.bf16 %v4289
    %v4738 = vunpack.c.h.s8.bf16 %v4290
    %v4739 = vunpack.c.h.s8.bf16 %v4291
    %v4740 = vunpack.c.h.s8.bf16 %v4292
    %v4741 = vunpack.c.h.s8.bf16 %v4293
    %v4742 = vunpack.c.h.s8.bf16 %v4294
    %v4743 = vunpack.c.h.s8.bf16 %v4295
    %v4744 = vunpack.c.h.s8.bf16 %v4296
    %v4745 = vunpack.c.h.s8.bf16 %v4297
    %v4746 = vunpack.c.h.s8.bf16 %v4298
    %v4747 = vunpack.c.h.s8.bf16 %v4299
    %v4748 = vunpack.c.h.s8.bf16 %v4300
    %v4749 = vunpack.c.l.s8.bf16 %v4301
    %v4750 = vunpack.c.l.s8.bf16 %v4302
    %v4751 = vunpack.c.l.s8.bf16 %v4303
    %v4752 = vunpack.c.l.s8.bf16 %v4304
    %v4753 = vunpack.c.l.s8.bf16 %v4305
    %v4754 = vunpack.c.l.s8.bf16 %v4306
    %v4755 = vunpack.c.l.s8.bf16 %v4307
    %v4756 = vunpack.c.l.s8.bf16 %v4308
    %v4757 = vunpack.c.l.s8.bf16 %v4309
    %v4758 = vunpack.c.l.s8.bf16 %v4310
    %v4759 = vunpack.c.l.s8.bf16 %v4311
    %v4760 = vunpack.c.l.s8.bf16 %v4312
    %v4761 = vunpack.c.l.s8.bf16 %v4313
    %v4762 = vunpack.c.l.s8.bf16 %v4314
    %v4763 = vunpack.c.h.s8.bf16 %v4301
    %v4764 = vunpack.c.h.s8.bf16 %v4302
    %v4765 = vunpack.c.h.s8.bf16 %v4303
    %v4766 = vunpack.c.h.s8.bf16 %v4304
    %v4767 = vunpack.c.h.s8.bf16 %v4305
    %v4768 = vunpack.c.h.s8.bf16 %v4306
    %v4769 = vunpack.c.h.s8.bf16 %v4307
    %v4770 = vunpack.c.h.s8.bf16 %v4308
    %v4771 = vunpack.c.h.s8.bf16 %v4309
    %v4772 = vunpack.c.h.s8.bf16 %v4310
    %v4773 = vunpack.c.h.s8.bf16 %v4311
    %v4774 = vunpack.c.h.s8.bf16 %v4312
    %v4775 = vunpack.c.h.s8.bf16 %v4313
    %v4776 = vunpack.c.h.s8.bf16 %v4314
    %v4777 = vunpack.c.l.s8.bf16 %v4315
    %v4778 = vunpack.c.l.s8.bf16 %v4316
    %v4779 = vunpack.c.l.s8.bf16 %v4317
    %v4780 = vunpack.c.l.s8.bf16 %v4318
    %v4781 = vunpack.c.l.s8.bf16 %v4319
    %v4782 = vunpack.c.l.s8.bf16 %v4320
    %v4783 = vunpack.c.l.s8.bf16 %v4321
    %v4784 = vunpack.c.l.s8.bf16 %v4322
    %v4785 = vunpack.c.l.s8.bf16 %v4323
    %v4786 = vunpack.c.l.s8.bf16 %v4324
    %v4787 = vunpack.c.l.s8.bf16 %v4325
    %v4788 = vunpack.c.l.s8.bf16 %v4326
    %v4789 = vunpack.c.l.s8.bf16 %v4327
    %v4790 = vunpack.c.l.s8.bf16 %v4328
    %v4791 = vunpack.c.h.s8.bf16 %v4315
    %v4792 = vunpack.c.h.s8.bf16 %v4316
    %v4793 = vunpack.c.h.s8.bf16 %v4317
    %v4794 = vunpack.c.h.s8.bf16 %v4318
    %v4795 = vunpack.c.h.s8.bf16 %v4319
    %v4796 = vunpack.c.h.s8.bf16 %v4320
    %v4797 = vunpack.c.h.s8.bf16 %v4321
    %v4798 = vunpack.c.h.s8.bf16 %v4322
    %v4799 = vunpack.c.h.s8.bf16 %v4323
    %v4800 = vunpack.c.h.s8.bf16 %v4324
    %v4801 = vunpack.c.h.s8.bf16 %v4325
    %v4802 = vunpack.c.h.s8.bf16 %v4326
    %v4803 = vunpack.c.h.s8.bf16 %v4327
    %v4804 = vunpack.c.h.s8.bf16 %v4328
    %v4805 = vunpack.c.l.s8.bf16 %v4329
    %v4806 = vunpack.c.l.s8.bf16 %v4330
    %v4807 = vunpack.c.l.s8.bf16 %v4331
    %v4808 = vunpack.c.l.s8.bf16 %v4332
    %v4809 = vunpack.c.l.s8.bf16 %v4333
    %v4810 = vunpack.c.l.s8.bf16 %v4334
    %v4811 = vunpack.c.l.s8.bf16 %v4335
    %v4812 = vunpack.c.l.s8.bf16 %v4336
    %v4813 = vunpack.c.l.s8.bf16 %v4337
    %v4814 = vunpack.c.l.s8.bf16 %v4338
    %v4815 = vunpack.c.l.s8.bf16 %v4339
    %v4816 = vunpack.c.l.s8.bf16 %v4340
    %v4817 = vunpack.c.l.s8.bf16 %v4341
    %v4818 = vunpack.c.l.s8.bf16 %v4342
    %v4819 = vunpack.c.h.s8.bf16 %v4329
    %v4820 = vunpack.c.h.s8.bf16 %v4330
    %v4821 = vunpack.c.h.s8.bf16 %v4331
    %v4822 = vunpack.c.h.s8.bf16 %v4332
    %v4823 = vunpack.c.h.s8.bf16 %v4333
    %v4824 = vunpack.c.h.s8.bf16 %v4334
    %v4825 = vunpack.c.h.s8.bf16 %v4335
    %v4826 = vunpack.c.h.s8.bf16 %v4336
    %v4827 = vunpack.c.h.s8.bf16 %v4337
    %v4828 = vunpack.c.h.s8.bf16 %v4338
    %v4829 = vunpack.c.h.s8.bf16 %v4339
    %v4830 = vunpack.c.h.s8.bf16 %v4340
    %v4831 = vunpack.c.h.s8.bf16 %v4341
    %v4832 = vunpack.c.h.s8.bf16 %v4342
    %v4833 = vunpack.c.l.s8.bf16 %v4343
    %v4834 = vunpack.c.l.s8.bf16 %v4344
    %v4835 = vunpack.c.l.s8.bf16 %v4345
    %v4836 = vunpack.c.l.s8.bf16 %v4346
    %v4837 = vunpack.c.l.s8.bf16 %v4347
    %v4838 = vunpack.c.l.s8.bf16 %v4348
    %v4839 = vunpack.c.l.s8.bf16 %v4349
    %v4840 = vunpack.c.l.s8.bf16 %v4350
    %v4841 = vunpack.c.l.s8.bf16 %v4351
    %v4842 = vunpack.c.l.s8.bf16 %v4352
    %v4843 = vunpack.c.l.s8.bf16 %v4353
    %v4844 = vunpack.c.l.s8.bf16 %v4354
    %v4845 = vunpack.c.l.s8.bf16 %v4355
    %v4846 = vunpack.c.l.s8.bf16 %v4356
    %v4847 = vunpack.c.h.s8.bf16 %v4343
    %v4848 = vunpack.c.h.s8.bf16 %v4344
    %v4849 = vunpack.c.h.s8.bf16 %v4345
    %v4850 = vunpack.c.h.s8.bf16 %v4346
    %v4851 = vunpack.c.h.s8.bf16 %v4347
    %v4852 = vunpack.c.h.s8.bf16 %v4348
    %v4853 = vunpack.c.h.s8.bf16 %v4349
    %v4854 = vunpack.c.h.s8.bf16 %v4350
    %v4855 = vunpack.c.h.s8.bf16 %v4351
    %v4856 = vunpack.c.h.s8.bf16 %v4352
    %v4857 = vunpack.c.h.s8.bf16 %v4353
    %v4858 = vunpack.c.h.s8.bf16 %v4354
    %v4859 = vunpack.c.h.s8.bf16 %v4355
    %v4860 = vunpack.c.h.s8.bf16 %v4356
    %v4861 = vunpack.c.l.s8.bf16 %v4357
    %v4862 = vunpack.c.l.s8.bf16 %v4358
    %v4863 = vunpack.c.l.s8.bf16 %v4359
    %v4864 = vunpack.c.l.s8.bf16 %v4360
    %v4865 = vunpack.c.l.s8.bf16 %v4361
    %v4866 = vunpack.c.l.s8.bf16 %v4362
    %v4867 = vunpack.c.l.s8.bf16 %v4363
    %v4868 = vunpack.c.l.s8.bf16 %v4364
    %v4869 = vunpack.c.l.s8.bf16 %v4365
    %v4870 = vunpack.c.l.s8.bf16 %v4366
    %v4871 = vunpack.c.l.s8.bf16 %v4367
    %v4872 = vunpack.c.l.s8.bf16 %v4368
    %v4873 = vunpack.c.l.s8.bf16 %v4369
    %v4874 = vunpack.c.l.s8.bf16 %v4370
    %v4875 = vunpack.c.h.s8.bf16 %v4357
    %v4876 = vunpack.c.h.s8.bf16 %v4358
    %v4877 = vunpack.c.h.s8.bf16 %v4359
    %v4878 = vunpack.c.h.s8.bf16 %v4360
    %v4879 = vunpack.c.h.s8.bf16 %v4361
    %v4880 = vunpack.c.h.s8.bf16 %v4362
    %v4881 = vunpack.c.h.s8.bf16 %v4363
    %v4882 = vunpack.c.h.s8.bf16 %v4364
    %v4883 = vunpack.c.h.s8.bf16 %v4365
    %v4884 = vunpack.c.h.s8.bf16 %v4366
    %v4885 = vunpack.c.h.s8.bf16 %v4367
    %v4886 = vunpack.c.h.s8.bf16 %v4368
    %v4887 = vunpack.c.h.s8.bf16 %v4369
    %v4888 = vunpack.c.h.s8.bf16 %v4370
    %v4889 = vunpack.c.l.s8.bf16 %v4371
    %v4890 = vunpack.c.l.s8.bf16 %v4372
    %v4891 = vunpack.c.l.s8.bf16 %v4373
    %v4892 = vunpack.c.l.s8.bf16 %v4374
    %v4893 = vunpack.c.l.s8.bf16 %v4375
    %v4894 = vunpack.c.l.s8.bf16 %v4376
    %v4895 = vunpack.c.l.s8.bf16 %v4377
    %v4896 = vunpack.c.l.s8.bf16 %v4378
    %v4897 = vunpack.c.l.s8.bf16 %v4379
    %v4898 = vunpack.c.l.s8.bf16 %v4380
    %v4899 = vunpack.c.l.s8.bf16 %v4381
    %v4900 = vunpack.c.l.s8.bf16 %v4382
    %v4901 = vunpack.c.l.s8.bf16 %v4383
    %v4902 = vunpack.c.l.s8.bf16 %v4384
    %v4903 = vunpack.c.h.s8.bf16 %v4371
    %v4904 = vunpack.c.h.s8.bf16 %v4372
    %v4905 = vunpack.c.h.s8.bf16 %v4373
    %v4906 = vunpack.c.h.s8.bf16 %v4374
    %v4907 = vunpack.c.h.s8.bf16 %v4375
    %v4908 = vunpack.c.h.s8.bf16 %v4376
    %v4909 = vunpack.c.h.s8.bf16 %v4377
    %v4910 = vunpack.c.h.s8.bf16 %v4378
    %v4911 = vunpack.c.h.s8.bf16 %v4379
    %v4912 = vunpack.c.h.s8.bf16 %v4380
    %v4913 = vunpack.c.h.s8.bf16 %v4381
    %v4914 = vunpack.c.h.s8.bf16 %v4382
    %v4915 = vunpack.c.h.s8.bf16 %v4383
    %v4916 = vunpack.c.h.s8.bf16 %v4384
    %v4917 = vunpack.c.l.s8.bf16 %v4385
    %v4918 = vunpack.c.l.s8.bf16 %v4386
    %v4919 = vunpack.c.l.s8.bf16 %v4387
    %v4920 = vunpack.c.l.s8.bf16 %v4388
    %v4921 = vunpack.c.l.s8.bf16 %v4389
    %v4922 = vunpack.c.l.s8.bf16 %v4390
    %v4923 = vunpack.c.l.s8.bf16 %v4391
    %v4924 = vunpack.c.l.s8.bf16 %v4392
    %v4925 = vunpack.c.l.s8.bf16 %v4393
    %v4926 = vunpack.c.l.s8.bf16 %v4394
    %v4927 = vunpack.c.l.s8.bf16 %v4395
    %v4928 = vunpack.c.l.s8.bf16 %v4396
    %v4929 = vunpack.c.l.s8.bf16 %v4397
    %v4930 = vunpack.c.l.s8.bf16 %v4398
    %v4931 = vunpack.c.h.s8.bf16 %v4385
    %v4932 = vunpack.c.h.s8.bf16 %v4386
    %v4933 = vunpack.c.h.s8.bf16 %v4387
    %v4934 = vunpack.c.h.s8.bf16 %v4388
    %v4935 = vunpack.c.h.s8.bf16 %v4389
    %v4936 = vunpack.c.h.s8.bf16 %v4390
    %v4937 = vunpack.c.h.s8.bf16 %v4391
    %v4938 = vunpack.c.h.s8.bf16 %v4392
    %v4939 = vunpack.c.h.s8.bf16 %v4393
    %v4940 = vunpack.c.h.s8.bf16 %v4394
    %v4941 = vunpack.c.h.s8.bf16 %v4395
    %v4942 = vunpack.c.h.s8.bf16 %v4396
    %v4943 = vunpack.c.h.s8.bf16 %v4397
    %v4944 = vunpack.c.h.s8.bf16 %v4398
    %v4945 = vunpack.c.l.s8.bf16 %v4399
    %v4946 = vunpack.c.l.s8.bf16 %v4400
    %v4947 = vunpack.c.l.s8.bf16 %v4401
    %v4948 = vunpack.c.l.s8.bf16 %v4402
    %v4949 = vunpack.c.l.s8.bf16 %v4403
    %v4950 = vunpack.c.l.s8.bf16 %v4404
    %v4951 = vunpack.c.l.s8.bf16 %v4405
    %v4952 = vunpack.c.l.s8.bf16 %v4406
    %v4953 = vunpack.c.l.s8.bf16 %v4407
    %v4954 = vunpack.c.l.s8.bf16 %v4408
    %v4955 = vunpack.c.l.s8.bf16 %v4409
    %v4956 = vunpack.c.l.s8.bf16 %v4410
    %v4957 = vunpack.c.l.s8.bf16 %v4411
    %v4958 = vunpack.c.l.s8.bf16 %v4412
    %v4959 = vunpack.c.h.s8.bf16 %v4399
    %v4960 = vunpack.c.h.s8.bf16 %v4400
    %v4961 = vunpack.c.h.s8.bf16 %v4401
    %v4962 = vunpack.c.h.s8.bf16 %v4402
    %v4963 = vunpack.c.h.s8.bf16 %v4403
    %v4964 = vunpack.c.h.s8.bf16 %v4404
    %v4965 = vunpack.c.h.s8.bf16 %v4405
    %v4966 = vunpack.c.h.s8.bf16 %v4406
    %v4967 = vunpack.c.h.s8.bf16 %v4407
    %v4968 = vunpack.c.h.s8.bf16 %v4408
    %v4969 = vunpack.c.h.s8.bf16 %v4409
    %v4970 = vunpack.c.h.s8.bf16 %v4410
    %v4971 = vunpack.c.h.s8.bf16 %v4411
    %v4972 = vunpack.c.h.s8.bf16 %v4412
    %v4973 = vunpack.c.l.s8.bf16 %v4413
    %v4974 = vunpack.c.l.s8.bf16 %v4414
    %v4975 = vunpack.c.l.s8.bf16 %v4415
    %v4976 = vunpack.c.l.s8.bf16 %v4416
    %v4977 = vunpack.c.l.s8.bf16 %v4417
    %v4978 = vunpack.c.l.s8.bf16 %v4418
    %v4979 = vunpack.c.l.s8.bf16 %v4419
    %v4980 = vunpack.c.l.s8.bf16 %v4420
    %v4981 = vunpack.c.l.s8.bf16 %v4421
    %v4982 = vunpack.c.l.s8.bf16 %v4422
    %v4983 = vunpack.c.l.s8.bf16 %v4423
    %v4984 = vunpack.c.l.s8.bf16 %v4424
    %v4985 = vunpack.c.l.s8.bf16 %v4425
    %v4986 = vunpack.c.l.s8.bf16 %v4426
    %v4987 = vunpack.c.h.s8.bf16 %v4413
    %v4988 = vunpack.c.h.s8.bf16 %v4414
    %v4989 = vunpack.c.h.s8.bf16 %v4415
    %v4990 = vunpack.c.h.s8.bf16 %v4416
    %v4991 = vunpack.c.h.s8.bf16 %v4417
    %v4992 = vunpack.c.h.s8.bf16 %v4418
    %v4993 = vunpack.c.h.s8.bf16 %v4419
    %v4994 = vunpack.c.h.s8.bf16 %v4420
    %v4995 = vunpack.c.h.s8.bf16 %v4421
    %v4996 = vunpack.c.h.s8.bf16 %v4422
    %v4997 = vunpack.c.h.s8.bf16 %v4423
    %v4998 = vunpack.c.h.s8.bf16 %v4424
    %v4999 = vunpack.c.h.s8.bf16 %v4425
    %v5000 = vunpack.c.h.s8.bf16 %v4426
    %v5001 = vunpack.c.l.s8.bf16 %v4427
    %v5002 = vunpack.c.l.s8.bf16 %v4428
    %v5003 = vunpack.c.l.s8.bf16 %v4429
    %v5004 = vunpack.c.l.s8.bf16 %v4430
    %v5005 = vunpack.c.l.s8.bf16 %v4431
    %v5006 = vunpack.c.l.s8.bf16 %v4432
    %v5007 = vunpack.c.l.s8.bf16 %v4433
    %v5008 = vunpack.c.l.s8.bf16 %v4434
    %v5009 = vunpack.c.l.s8.bf16 %v4435
    %v5010 = vunpack.c.l.s8.bf16 %v4436
    %v5011 = vunpack.c.l.s8.bf16 %v4437
    %v5012 = vunpack.c.l.s8.bf16 %v4438
    %v5013 = vunpack.c.l.s8.bf16 %v4439
    %v5014 = vunpack.c.l.s8.bf16 %v4440
    %v5015 = vunpack.c.h.s8.bf16 %v4427
    %v5016 = vunpack.c.h.s8.bf16 %v4428
    %v5017 = vunpack.c.h.s8.bf16 %v4429
    %v5018 = vunpack.c.h.s8.bf16 %v4430
    %v5019 = vunpack.c.h.s8.bf16 %v4431
    %v5020 = vunpack.c.h.s8.bf16 %v4432
    %v5021 = vunpack.c.h.s8.bf16 %v4433
    %v5022 = vunpack.c.h.s8.bf16 %v4434
    %v5023 = vunpack.c.h.s8.bf16 %v4435
    %v5024 = vunpack.c.h.s8.bf16 %v4436
    %v5025 = vunpack.c.h.s8.bf16 %v4437
    %v5026 = vunpack.c.h.s8.bf16 %v4438
    %v5027 = vunpack.c.h.s8.bf16 %v4439
    %v5028 = vunpack.c.h.s8.bf16 %v4440
    %v5029 = vunpack.c.l.s8.bf16 %v4441
    %v5030 = vunpack.c.l.s8.bf16 %v4442
    %v5031 = vunpack.c.l.s8.bf16 %v4443
    %v5032 = vunpack.c.l.s8.bf16 %v4444
    %v5033 = vunpack.c.l.s8.bf16 %v4445
    %v5034 = vunpack.c.l.s8.bf16 %v4446
    %v5035 = vunpack.c.l.s8.bf16 %v4447
    %v5036 = vunpack.c.l.s8.bf16 %v4448
    %v5037 = vunpack.c.l.s8.bf16 %v4449
    %v5038 = vunpack.c.l.s8.bf16 %v4450
    %v5039 = vunpack.c.l.s8.bf16 %v4451
    %v5040 = vunpack.c.l.s8.bf16 %v4452
    %v5041 = vunpack.c.l.s8.bf16 %v4453
    %v5042 = vunpack.c.l.s8.bf16 %v4454
    %v5043 = vunpack.c.h.s8.bf16 %v4441
    %v5044 = vunpack.c.h.s8.bf16 %v4442
    %v5045 = vunpack.c.h.s8.bf16 %v4443
    %v5046 = vunpack.c.h.s8.bf16 %v4444
    %v5047 = vunpack.c.h.s8.bf16 %v4445
    %v5048 = vunpack.c.h.s8.bf16 %v4446
    %v5049 = vunpack.c.h.s8.bf16 %v4447
    %v5050 = vunpack.c.h.s8.bf16 %v4448
    %v5051 = vunpack.c.h.s8.bf16 %v4449
    %v5052 = vunpack.c.h.s8.bf16 %v4450
    %v5053 = vunpack.c.h.s8.bf16 %v4451
    %v5054 = vunpack.c.h.s8.bf16 %v4452
    %v5055 = vunpack.c.h.s8.bf16 %v4453
    %v5056 = vunpack.c.h.s8.bf16 %v4454
    %v5057 = vunpack.c.l.s8.bf16 %v4455
    %v5058 = vunpack.c.l.s8.bf16 %v4456
    %v5059 = vunpack.c.l.s8.bf16 %v4457
    %v5060 = vunpack.c.l.s8.bf16 %v4458
    %v5061 = vunpack.c.l.s8.bf16 %v4459
    %v5062 = vunpack.c.l.s8.bf16 %v4460
    %v5063 = vunpack.c.l.s8.bf16 %v4461
    %v5064 = vunpack.c.l.s8.bf16 %v4462
    %v5065 = vunpack.c.l.s8.bf16 %v4463
    %v5066 = vunpack.c.l.s8.bf16 %v4464
    %v5067 = vunpack.c.l.s8.bf16 %v4465
    %v5068 = vunpack.c.l.s8.bf16 %v4466
    %v5069 = vunpack.c.l.s8.bf16 %v4467
    %v5070 = vunpack.c.l.s8.bf16 %v4468
    %v5071 = vunpack.c.h.s8.bf16 %v4455
    %v5072 = vunpack.c.h.s8.bf16 %v4456
    %v5073 = vunpack.c.h.s8.bf16 %v4457
    %v5074 = vunpack.c.h.s8.bf16 %v4458
    %v5075 = vunpack.c.h.s8.bf16 %v4459
    %v5076 = vunpack.c.h.s8.bf16 %v4460
    %v5077 = vunpack.c.h.s8.bf16 %v4461
    %v5078 = vunpack.c.h.s8.bf16 %v4462
    %v5079 = vunpack.c.h.s8.bf16 %v4463
    %v5080 = vunpack.c.h.s8.bf16 %v4464
    %v5081 = vunpack.c.h.s8.bf16 %v4465
    %v5082 = vunpack.c.h.s8.bf16 %v4466
    %v5083 = vunpack.c.h.s8.bf16 %v4467
    %v5084 = vunpack.c.h.s8.bf16 %v4468
    %v5085 = vunpack.c.l.s8.bf16 %v4469
    %v5086 = vunpack.c.l.s8.bf16 %v4470
    %v5087 = vunpack.c.l.s8.bf16 %v4471
    %v5088 = vunpack.c.l.s8.bf16 %v4472
    %v5089 = vunpack.c.l.s8.bf16 %v4473
    %v5090 = vunpack.c.l.s8.bf16 %v4474
    %v5091 = vunpack.c.l.s8.bf16 %v4475
    %v5092 = vunpack.c.l.s8.bf16 %v4476
    %v5093 = vunpack.c.l.s8.bf16 %v4477
    %v5094 = vunpack.c.l.s8.bf16 %v4478
    %v5095 = vunpack.c.l.s8.bf16 %v4479
    %v5096 = vunpack.c.l.s8.bf16 %v4480
    %v5097 = vunpack.c.l.s8.bf16 %v4481
    %v5098 = vunpack.c.l.s8.bf16 %v4482
    %v5099 = vunpack.c.h.s8.bf16 %v4469
    %v5100 = vunpack.c.h.s8.bf16 %v4470
    %v5101 = vunpack.c.h.s8.bf16 %v4471
    %v5102 = vunpack.c.h.s8.bf16 %v4472
    %v5103 = vunpack.c.h.s8.bf16 %v4473
    %v5104 = vunpack.c.h.s8.bf16 %v4474
    %v5105 = vunpack.c.h.s8.bf16 %v4475
    %v5106 = vunpack.c.h.s8.bf16 %v4476
    %v5107 = vunpack.c.h.s8.bf16 %v4477
    %v5108 = vunpack.c.h.s8.bf16 %v4478
    %v5109 = vunpack.c.h.s8.bf16 %v4479
    %v5110 = vunpack.c.h.s8.bf16 %v4480
    %v5111 = vunpack.c.h.s8.bf16 %v4481
    %v5112 = vunpack.c.h.s8.bf16 %v4482
    %v5113 = vunpack.c.l.s8.bf16 %v4483
    %v5114 = vunpack.c.l.s8.bf16 %v4484
    %v5115 = vunpack.c.l.s8.bf16 %v4485
    %v5116 = vunpack.c.l.s8.bf16 %v4486
    %v5117 = vunpack.c.l.s8.bf16 %v4487
    %v5118 = vunpack.c.l.s8.bf16 %v4488
    %v5119 = vunpack.c.l.s8.bf16 %v4489
    %v5120 = vunpack.c.l.s8.bf16 %v4490
    %v5121 = vunpack.c.l.s8.bf16 %v4491
    %v5122 = vunpack.c.l.s8.bf16 %v4492
    %v5123 = vunpack.c.l.s8.bf16 %v4493
    %v5124 = vunpack.c.l.s8.bf16 %v4494
    %v5125 = vunpack.c.l.s8.bf16 %v4495
    %v5126 = vunpack.c.l.s8.bf16 %v4496
    %v5127 = vunpack.c.h.s8.bf16 %v4483
    %v5128 = vunpack.c.h.s8.bf16 %v4484
    %v5129 = vunpack.c.h.s8.bf16 %v4485
    %v5130 = vunpack.c.h.s8.bf16 %v4486
    %v5131 = vunpack.c.h.s8.bf16 %v4487
    %v5132 = vunpack.c.h.s8.bf16 %v4488
    %v5133 = vunpack.c.h.s8.bf16 %v4489
    %v5134 = vunpack.c.h.s8.bf16 %v4490
    %v5135 = vunpack.c.h.s8.bf16 %v4491
    %v5136 = vunpack.c.h.s8.bf16 %v4492
    %v5137 = vunpack.c.h.s8.bf16 %v4493
    %v5138 = vunpack.c.h.s8.bf16 %v4494
    %v5139 = vunpack.c.h.s8.bf16 %v4495
    %v5140 = vunpack.c.h.s8.bf16 %v4496
    %v5141 = vunpack.c.l.s8.bf16 %v4497
    %v5142 = vunpack.c.l.s8.bf16 %v4498
    %v5143 = vunpack.c.l.s8.bf16 %v4499
    %v5144 = vunpack.c.l.s8.bf16 %v4500
    %v5145 = vunpack.c.l.s8.bf16 %v4501
    %v5146 = vunpack.c.l.s8.bf16 %v4502
    %v5147 = vunpack.c.l.s8.bf16 %v4503
    %v5148 = vunpack.c.l.s8.bf16 %v4504
    %v5149 = vunpack.c.l.s8.bf16 %v4505
    %v5150 = vunpack.c.l.s8.bf16 %v4506
    %v5151 = vunpack.c.l.s8.bf16 %v4507
    %v5152 = vunpack.c.l.s8.bf16 %v4508
    %v5153 = vunpack.c.l.s8.bf16 %v4509
    %v5154 = vunpack.c.l.s8.bf16 %v4510
    %v5155 = vunpack.c.h.s8.bf16 %v4497
    %v5156 = vunpack.c.h.s8.bf16 %v4498
    %v5157 = vunpack.c.h.s8.bf16 %v4499
    %v5158 = vunpack.c.h.s8.bf16 %v4500
    %v5159 = vunpack.c.h.s8.bf16 %v4501
    %v5160 = vunpack.c.h.s8.bf16 %v4502
    %v5161 = vunpack.c.h.s8.bf16 %v4503
    %v5162 = vunpack.c.h.s8.bf16 %v4504
    %v5163 = vunpack.c.h.s8.bf16 %v4505
    %v5164 = vunpack.c.h.s8.bf16 %v4506
    %v5165 = vunpack.c.h.s8.bf16 %v4507
    %v5166 = vunpack.c.h.s8.bf16 %v4508
    %v5167 = vunpack.c.h.s8.bf16 %v4509
    %v5168 = vunpack.c.h.s8.bf16 %v4510
    %v5169 = vunpack.c.l.s8.bf16 %v4511
    %v5170 = vunpack.c.l.s8.bf16 %v4512
    %v5171 = vunpack.c.l.s8.bf16 %v4513
    %v5172 = vunpack.c.l.s8.bf16 %v4514
    %v5173 = vunpack.c.l.s8.bf16 %v4515
    %v5174 = vunpack.c.l.s8.bf16 %v4516
    %v5175 = vunpack.c.l.s8.bf16 %v4517
    %v5176 = vunpack.c.l.s8.bf16 %v4518
    %v5177 = vunpack.c.l.s8.bf16 %v4519
    %v5178 = vunpack.c.l.s8.bf16 %v4520
    %v5179 = vunpack.c.l.s8.bf16 %v4521
    %v5180 = vunpack.c.l.s8.bf16 %v4522
    %v5181 = vunpack.c.l.s8.bf16 %v4523
    %v5182 = vunpack.c.l.s8.bf16 %v4524
    %v5183 = vunpack.c.h.s8.bf16 %v4511
    %v5184 = vunpack.c.h.s8.bf16 %v4512
    %v5185 = vunpack.c.h.s8.bf16 %v4513
    %v5186 = vunpack.c.h.s8.bf16 %v4514
    %v5187 = vunpack.c.h.s8.bf16 %v4515
    %v5188 = vunpack.c.h.s8.bf16 %v4516
    %v5189 = vunpack.c.h.s8.bf16 %v4517
    %v5190 = vunpack.c.h.s8.bf16 %v4518
    %v5191 = vunpack.c.h.s8.bf16 %v4519
    %v5192 = vunpack.c.h.s8.bf16 %v4520
    %v5193 = vunpack.c.h.s8.bf16 %v4521
    %v5194 = vunpack.c.h.s8.bf16 %v4522
    %v5195 = vunpack.c.h.s8.bf16 %v4523
    %v5196 = vunpack.c.h.s8.bf16 %v4524
    %v5197 = vunpack.c.l.s8.bf16 %v4525
    %v5198 = vunpack.c.l.s8.bf16 %v4526
    %v5199 = vunpack.c.l.s8.bf16 %v4527
    %v5200 = vunpack.c.l.s8.bf16 %v4528
    %v5201 = vunpack.c.l.s8.bf16 %v4529
    %v5202 = vunpack.c.l.s8.bf16 %v4530
    %v5203 = vunpack.c.l.s8.bf16 %v4531
    %v5204 = vunpack.c.l.s8.bf16 %v4532
    %v5205 = vunpack.c.l.s8.bf16 %v4533
    %v5206 = vunpack.c.l.s8.bf16 %v4534
    %v5207 = vunpack.c.l.s8.bf16 %v4535
    %v5208 = vunpack.c.l.s8.bf16 %v4536
    %v5209 = vunpack.c.l.s8.bf16 %v4537
    %v5210 = vunpack.c.l.s8.bf16 %v4538
    %v5211 = vunpack.c.h.s8.bf16 %v4525
    %v5212 = vunpack.c.h.s8.bf16 %v4526
    %v5213 = vunpack.c.h.s8.bf16 %v4527
    %v5214 = vunpack.c.h.s8.bf16 %v4528
    %v5215 = vunpack.c.h.s8.bf16 %v4529
    %v5216 = vunpack.c.h.s8.bf16 %v4530
    %v5217 = vunpack.c.h.s8.bf16 %v4531
    %v5218 = vunpack.c.h.s8.bf16 %v4532
    %v5219 = vunpack.c.h.s8.bf16 %v4533
    %v5220 = vunpack.c.h.s8.bf16 %v4534
    %v5221 = vunpack.c.h.s8.bf16 %v4535
    %v5222 = vunpack.c.h.s8.bf16 %v4536
    %v5223 = vunpack.c.h.s8.bf16 %v4537
    %v5224 = vunpack.c.h.s8.bf16 %v4538
    %v5225 = vunpack.c.l.s8.bf16 %v4539
    %v5226 = vunpack.c.l.s8.bf16 %v4540
    %v5227 = vunpack.c.l.s8.bf16 %v4541
    %v5228 = vunpack.c.l.s8.bf16 %v4542
    %v5229 = vunpack.c.l.s8.bf16 %v4543
    %v5230 = vunpack.c.l.s8.bf16 %v4544
    %v5231 = vunpack.c.l.s8.bf16 %v4545
    %v5232 = vunpack.c.l.s8.bf16 %v4546
    %v5233 = vunpack.c.l.s8.bf16 %v4547
    %v5234 = vunpack.c.l.s8.bf16 %v4548
    %v5235 = vunpack.c.l.s8.bf16 %v4549
    %v5236 = vunpack.c.l.s8.bf16 %v4550
    %v5237 = vunpack.c.l.s8.bf16 %v4551
    %v5238 = vunpack.c.l.s8.bf16 %v4552
    %v5239 = vunpack.c.h.s8.bf16 %v4539
    %v5240 = vunpack.c.h.s8.bf16 %v4540
    %v5241 = vunpack.c.h.s8.bf16 %v4541
    %v5242 = vunpack.c.h.s8.bf16 %v4542
    %v5243 = vunpack.c.h.s8.bf16 %v4543
    %v5244 = vunpack.c.h.s8.bf16 %v4544
    %v5245 = vunpack.c.h.s8.bf16 %v4545
    %v5246 = vunpack.c.h.s8.bf16 %v4546
    %v5247 = vunpack.c.h.s8.bf16 %v4547
    %v5248 = vunpack.c.h.s8.bf16 %v4548
    %v5249 = vunpack.c.h.s8.bf16 %v4549
    %v5250 = vunpack.c.h.s8.bf16 %v4550
    %v5251 = vunpack.c.h.s8.bf16 %v4551
    %v5252 = vunpack.c.h.s8.bf16 %v4552
    %v5253 = vunpack.c.l.s8.bf16 %v4553
    %v5254 = vunpack.c.l.s8.bf16 %v4554
    %v5255 = vunpack.c.l.s8.bf16 %v4555
    %v5256 = vunpack.c.l.s8.bf16 %v4556
    %v5257 = vunpack.c.l.s8.bf16 %v4557
    %v5258 = vunpack.c.l.s8.bf16 %v4558
    %v5259 = vunpack.c.l.s8.bf16 %v4559
    %v5260 = vunpack.c.l.s8.bf16 %v4560
    %v5261 = vunpack.c.l.s8.bf16 %v4561
    %v5262 = vunpack.c.l.s8.bf16 %v4562
    %v5263 = vunpack.c.l.s8.bf16 %v4563
    %v5264 = vunpack.c.l.s8.bf16 %v4564
    %v5265 = vunpack.c.l.s8.bf16 %v4565
    %v5266 = vunpack.c.l.s8.bf16 %v4566
    %v5267 = vunpack.c.h.s8.bf16 %v4553
    %v5268 = vunpack.c.h.s8.bf16 %v4554
    %v5269 = vunpack.c.h.s8.bf16 %v4555
    %v5270 = vunpack.c.h.s8.bf16 %v4556
    %v5271 = vunpack.c.h.s8.bf16 %v4557
    %v5272 = vunpack.c.h.s8.bf16 %v4558
    %v5273 = vunpack.c.h.s8.bf16 %v4559
    %v5274 = vunpack.c.h.s8.bf16 %v4560
    %v5275 = vunpack.c.h.s8.bf16 %v4561
    %v5276 = vunpack.c.h.s8.bf16 %v4562
    %v5277 = vunpack.c.h.s8.bf16 %v4563
    %v5278 = vunpack.c.h.s8.bf16 %v4564
    %v5279 = vunpack.c.h.s8.bf16 %v4565
    %v5280 = vunpack.c.h.s8.bf16 %v4566
    %v5281 = vunpack.c.l.s8.bf16 %v4567
    %v5282 = vunpack.c.l.s8.bf16 %v4568
    %v5283 = vunpack.c.l.s8.bf16 %v4569
    %v5284 = vunpack.c.l.s8.bf16 %v4570
    %v5285 = vunpack.c.l.s8.bf16 %v4571
    %v5286 = vunpack.c.l.s8.bf16 %v4572
    %v5287 = vunpack.c.l.s8.bf16 %v4573
    %v5288 = vunpack.c.l.s8.bf16 %v4574
    %v5289 = vunpack.c.l.s8.bf16 %v4575
    %v5290 = vunpack.c.l.s8.bf16 %v4576
    %v5291 = vunpack.c.l.s8.bf16 %v4577
    %v5292 = vunpack.c.l.s8.bf16 %v4578
    %v5293 = vunpack.c.l.s8.bf16 %v4579
    %v5294 = vunpack.c.l.s8.bf16 %v4580
    %v5295 = vunpack.c.h.s8.bf16 %v4567
    %v5296 = vunpack.c.h.s8.bf16 %v4568
    %v5297 = vunpack.c.h.s8.bf16 %v4569
    %v5298 = vunpack.c.h.s8.bf16 %v4570
    %v5299 = vunpack.c.h.s8.bf16 %v4571
    %v5300 = vunpack.c.h.s8.bf16 %v4572
    %v5301 = vunpack.c.h.s8.bf16 %v4573
    %v5302 = vunpack.c.h.s8.bf16 %v4574
    %v5303 = vunpack.c.h.s8.bf16 %v4575
    %v5304 = vunpack.c.h.s8.bf16 %v4576
    %v5305 = vunpack.c.h.s8.bf16 %v4577
    %v5306 = vunpack.c.h.s8.bf16 %v4578
    %v5307 = vunpack.c.h.s8.bf16 %v4579
    %v5308 = vunpack.c.h.s8.bf16 %v4580
    %v5309 = vunpack.c.l.s8.bf16 %v4581
    %v5310 = vunpack.c.l.s8.bf16 %v4582
    %v5311 = vunpack.c.l.s8.bf16 %v4583
    %v5312 = vunpack.c.l.s8.bf16 %v4584
    %v5313 = vunpack.c.l.s8.bf16 %v4585
    %v5314 = vunpack.c.l.s8.bf16 %v4586
    %v5315 = vunpack.c.l.s8.bf16 %v4587
    %v5316 = vunpack.c.l.s8.bf16 %v4588
    %v5317 = vunpack.c.l.s8.bf16 %v4589
    %v5318 = vunpack.c.l.s8.bf16 %v4590
    %v5319 = vunpack.c.l.s8.bf16 %v4591
    %v5320 = vunpack.c.l.s8.bf16 %v4592
    %v5321 = vunpack.c.l.s8.bf16 %v4593
    %v5322 = vunpack.c.l.s8.bf16 %v4594
    %v5323 = vunpack.c.h.s8.bf16 %v4581
    %v5324 = vunpack.c.h.s8.bf16 %v4582
    %v5325 = vunpack.c.h.s8.bf16 %v4583
    %v5326 = vunpack.c.h.s8.bf16 %v4584
    %v5327 = vunpack.c.h.s8.bf16 %v4585
    %v5328 = vunpack.c.h.s8.bf16 %v4586
    %v5329 = vunpack.c.h.s8.bf16 %v4587
    %v5330 = vunpack.c.h.s8.bf16 %v4588
    %v5331 = vunpack.c.h.s8.bf16 %v4589
    %v5332 = vunpack.c.h.s8.bf16 %v4590
    %v5333 = vunpack.c.h.s8.bf16 %v4591
    %v5334 = vunpack.c.h.s8.bf16 %v4592
    %v5335 = vunpack.c.h.s8.bf16 %v4593
    %v5336 = vunpack.c.h.s8.bf16 %v4594
    %v5337 = vunpack.c.l.s8.bf16 %v4595
    %v5338 = vunpack.c.l.s8.bf16 %v4596
    %v5339 = vunpack.c.l.s8.bf16 %v4597
    %v5340 = vunpack.c.l.s8.bf16 %v4598
    %v5341 = vunpack.c.l.s8.bf16 %v4599
    %v5342 = vunpack.c.l.s8.bf16 %v4600
    %v5343 = vunpack.c.l.s8.bf16 %v4601
    %v5344 = vunpack.c.l.s8.bf16 %v4602
    %v5345 = vunpack.c.l.s8.bf16 %v4603
    %v5346 = vunpack.c.l.s8.bf16 %v4604
    %v5347 = vunpack.c.l.s8.bf16 %v4605
    %v5348 = vunpack.c.l.s8.bf16 %v4606
    %v5349 = vunpack.c.l.s8.bf16 %v4607
    %v5350 = vunpack.c.l.s8.bf16 %v4608
    %v5351 = vunpack.c.h.s8.bf16 %v4595
    %v5352 = vunpack.c.h.s8.bf16 %v4596
    %v5353 = vunpack.c.h.s8.bf16 %v4597
    %v5354 = vunpack.c.h.s8.bf16 %v4598
    %v5355 = vunpack.c.h.s8.bf16 %v4599
    %v5356 = vunpack.c.h.s8.bf16 %v4600
    %v5357 = vunpack.c.h.s8.bf16 %v4601
    %v5358 = vunpack.c.h.s8.bf16 %v4602
    %v5359 = vunpack.c.h.s8.bf16 %v4603
    %v5360 = vunpack.c.h.s8.bf16 %v4604
    %v5361 = vunpack.c.h.s8.bf16 %v4605
    %v5362 = vunpack.c.h.s8.bf16 %v4606
    %v5363 = vunpack.c.h.s8.bf16 %v4607
    %v5364 = vunpack.c.h.s8.bf16 %v4608
    %v5365 = vunpack.c.l.s8.bf16 %v4609
    %v5366 = vunpack.c.l.s8.bf16 %v4610
    %v5367 = vunpack.c.l.s8.bf16 %v4611
    %v5368 = vunpack.c.l.s8.bf16 %v4612
    %v5369 = vunpack.c.l.s8.bf16 %v4613
    %v5370 = vunpack.c.l.s8.bf16 %v4614
    %v5371 = vunpack.c.l.s8.bf16 %v4615
    %v5372 = vunpack.c.l.s8.bf16 %v4616
    %v5373 = vunpack.c.l.s8.bf16 %v4617
    %v5374 = vunpack.c.l.s8.bf16 %v4618
    %v5375 = vunpack.c.l.s8.bf16 %v4619
    %v5376 = vunpack.c.l.s8.bf16 %v4620
    %v5377 = vunpack.c.l.s8.bf16 %v4621
    %v5378 = vunpack.c.l.s8.bf16 %v4622
    %v5379 = vunpack.c.h.s8.bf16 %v4609
    %v5380 = vunpack.c.h.s8.bf16 %v4610
    %v5381 = vunpack.c.h.s8.bf16 %v4611
    %v5382 = vunpack.c.h.s8.bf16 %v4612
    %v5383 = vunpack.c.h.s8.bf16 %v4613
    %v5384 = vunpack.c.h.s8.bf16 %v4614
    %v5385 = vunpack.c.h.s8.bf16 %v4615
    %v5386 = vunpack.c.h.s8.bf16 %v4616
    %v5387 = vunpack.c.h.s8.bf16 %v4617
    %v5388 = vunpack.c.h.s8.bf16 %v4618
    %v5389 = vunpack.c.h.s8.bf16 %v4619
    %v5390 = vunpack.c.h.s8.bf16 %v4620
    %v5391 = vunpack.c.h.s8.bf16 %v4621
    %v5392 = vunpack.c.h.s8.bf16 %v4622
    %v5393 = vunpack.c.l.s8.bf16 %v4623
    %v5394 = vunpack.c.l.s8.bf16 %v4624
    %v5395 = vunpack.c.l.s8.bf16 %v4625
    %v5396 = vunpack.c.l.s8.bf16 %v4626
    %v5397 = vunpack.c.l.s8.bf16 %v4627
    %v5398 = vunpack.c.l.s8.bf16 %v4628
    %v5399 = vunpack.c.l.s8.bf16 %v4629
    %v5400 = vunpack.c.l.s8.bf16 %v4630
    %v5401 = vunpack.c.l.s8.bf16 %v4631
    %v5402 = vunpack.c.l.s8.bf16 %v4632
    %v5403 = vunpack.c.l.s8.bf16 %v4633
    %v5404 = vunpack.c.l.s8.bf16 %v4634
    %v5405 = vunpack.c.l.s8.bf16 %v4635
    %v5406 = vunpack.c.l.s8.bf16 %v4636
    %v5407 = vunpack.c.h.s8.bf16 %v4623
    %v5408 = vunpack.c.h.s8.bf16 %v4624
    %v5409 = vunpack.c.h.s8.bf16 %v4625
    %v5410 = vunpack.c.h.s8.bf16 %v4626
    %v5411 = vunpack.c.h.s8.bf16 %v4627
    %v5412 = vunpack.c.h.s8.bf16 %v4628
    %v5413 = vunpack.c.h.s8.bf16 %v4629
    %v5414 = vunpack.c.h.s8.bf16 %v4630
    %v5415 = vunpack.c.h.s8.bf16 %v4631
    %v5416 = vunpack.c.h.s8.bf16 %v4632
    %v5417 = vunpack.c.h.s8.bf16 %v4633
    %v5418 = vunpack.c.h.s8.bf16 %v4634
    %v5419 = vunpack.c.h.s8.bf16 %v4635
    %v5420 = vunpack.c.h.s8.bf16 %v4636
    %5421 = vmatprep.subr.bf16.mxu0 %v4736
    %5422 = vmatpush1.bf16.msra.mxu0 %v4735
    %5423 = vmatprep.subr.bf16.mxu0 %v4722
    %5424 = vmatpush1.bf16.msra.mxu0 %v4721
    %5425 = vmatprep.subr.bf16.mxu0 %v4708
    %5426 = vmatpush1.bf16.msra.mxu0 %v4707
    %5427 = vmatprep.subr.bf16.mxu0 %v4694
    %5428 = vmatpush1.bf16.msra.mxu0 %v4693
    %5429 = vmatprep.subr.bf16.mxu0 %v4680
    %5430 = vmatpush1.bf16.msra.mxu0 %v4679
    %5431 = vmatprep.subr.bf16.mxu0 %v4666
    %5432 = vmatpush1.bf16.msra.mxu0 %v4665
    %5433 = vmatprep.subr.bf16.mxu0 %v4652
    %5434 = vmatpush1.bf16.msra.mxu0 %v4651
    %5435 = vmatprep.subr.bf16.mxu0 %v4638
    %5436 = vmatpush1.bf16.msra.mxu0 %v4637
    %5437 = vmatprep.subr.bf16.mxu0 %v4848
    %5438 = vmatpush2.bf16.msra.mxu0 %v4847
    %5439 = vmatprep.subr.bf16.mxu0 %v4834
    %5440 = vmatpush2.bf16.msra.mxu0 %v4833
    %5441 = vmatprep.subr.bf16.mxu0 %v4820
    %5442 = vmatpush2.bf16.msra.mxu0 %v4819
    %5443 = vmatprep.subr.bf16.mxu0 %v4806
    %5444 = vmatpush2.bf16.msra.mxu0 %v4805
    %5445 = vmatprep.subr.bf16.mxu0 %v4792
    %5446 = vmatpush2.bf16.msra.mxu0 %v4791
    %5447 = vmatprep.subr.bf16.mxu0 %v4778
    %5448 = vmatpush2.bf16.msra.mxu0 %v4777
    %5449 = vmatprep.subr.bf16.mxu0 %v4764
    %5450 = vmatpush2.bf16.msra.mxu0 %v4763
    %5451 = vmatprep.subr.bf16.mxu0 %v4750
    %5452 = vmatpush2.bf16.msra.mxu0 %v4749
    %5453 = vmatprep.mubr.bf16.mxu0 %v4239
    %5454 = vmatmul.mubr.bf16.gmra.mxu0 %v4238
    %v5455 = vpop.f32.mrf.mxu0
    %v5456 = vadd.f32 0.0, %v5455
    %v5457 = vpop.f32.mrf.mxu0
    %v5458 = vadd.f32 0.0, %v5457
    %v5459 = vpop.f32.mrf.mxu0
    %v5460 = vpop.f32.mrf.mxu0
    %5461 = vdwg.mxu0
    %5462 = vmatprep.subr.bf16.mxu0 %v4960
    %5463 = vmatpush1.bf16.msra.mxu0 %v4959
    %5464 = vmatprep.subr.bf16.mxu0 %v4946
    %5465 = vmatpush1.bf16.msra.mxu0 %v4945
    %5466 = vmatprep.subr.bf16.mxu0 %v4932
    %5467 = vmatpush1.bf16.msra.mxu0 %v4931
    %5468 = vmatprep.subr.bf16.mxu0 %v4918
    %5469 = vmatpush1.bf16.msra.mxu0 %v4917
    %5470 = vmatprep.subr.bf16.mxu0 %v4904
    %5471 = vmatpush1.bf16.msra.mxu0 %v4903
    %5472 = vmatprep.subr.bf16.mxu0 %v4890
    %5473 = vmatpush1.bf16.msra.mxu0 %v4889
    %5474 = vmatprep.subr.bf16.mxu0 %v4876
    %5475 = vmatpush1.bf16.msra.mxu0 %v4875
    %5476 = vmatprep.subr.bf16.mxu0 %v4862
    %5477 = vmatpush1.bf16.msra.mxu0 %v4861
    %5478 = vmatprep.subr.bf16.mxu0 %v5072
    %5479 = vmatpush2.bf16.msra.mxu0 %v5071
    %5480 = vmatprep.subr.bf16.mxu0 %v5058
    %5481 = vmatpush2.bf16.msra.mxu0 %v5057
    %5482 = vmatprep.subr.bf16.mxu0 %v5044
    %5483 = vmatpush2.bf16.msra.mxu0 %v5043
    %5484 = vmatprep.subr.bf16.mxu0 %v5030
    %5485 = vmatpush2.bf16.msra.mxu0 %v5029
    %5486 = vmatprep.subr.bf16.mxu0 %v5016
    %5487 = vmatpush2.bf16.msra.mxu0 %v5015
    %5488 = vmatprep.subr.bf16.mxu0 %v5002
    %5489 = vmatpush2.bf16.msra.mxu0 %v5001
    %5490 = vmatprep.subr.bf16.mxu0 %v4988
    %5491 = vmatpush2.bf16.msra.mxu0 %v4987
    %5492 = vmatprep.subr.bf16.mxu0 %v4974
    %5493 = vmatpush2.bf16.msra.mxu0 %v4973
    %5494 = vmatprep.mubr.bf16.mxu0 %v4241
    %5495 = vmatmul.mubr.bf16.gmra.mxu0 %v4240
    %v5496 = vpop.f32.mrf.mxu0
    %v5497 = vadd.f32 %v5456, %v5496
    %v5498 = vpop.f32.mrf.mxu0
    %v5499 = vadd.f32 %v5458, %v5498
    %v5500 = vpop.f32.mrf.mxu0
    %v5501 = vpop.f32.mrf.mxu0
    %5502 = vdwg.mxu0
    %5503 = vmatprep.subr.bf16.mxu0 %v5184
    %5504 = vmatpush1.bf16.msra.mxu0 %v5183
    %5505 = vmatprep.subr.bf16.mxu0 %v5170
    %5506 = vmatpush1.bf16.msra.mxu0 %v5169
    %5507 = vmatprep.subr.bf16.mxu0 %v5156
    %5508 = vmatpush1.bf16.msra.mxu0 %v5155
    %5509 = vmatprep.subr.bf16.mxu0 %v5142
    %5510 = vmatpush1.bf16.msra.mxu0 %v5141
    %5511 = vmatprep.subr.bf16.mxu0 %v5128
    %5512 = vmatpush1.bf16.msra.mxu0 %v5127
    %5513 = vmatprep.subr.bf16.mxu0 %v5114
    %5514 = vmatpush1.bf16.msra.mxu0 %v5113
    %5515 = vmatprep.subr.bf16.mxu0 %v5100
    %5516 = vmatpush1.bf16.msra.mxu0 %v5099
    %5517 = vmatprep.subr.bf16.mxu0 %v5086
    %5518 = vmatpush1.bf16.msra.mxu0 %v5085
    %5519 = vmatprep.subr.bf16.mxu0 %v5296
    %5520 = vmatpush2.bf16.msra.mxu0 %v5295
    %5521 = vmatprep.subr.bf16.mxu0 %v5282
    %5522 = vmatpush2.bf16.msra.mxu0 %v5281
    %5523 = vmatprep.subr.bf16.mxu0 %v5268
    %5524 = vmatpush2.bf16.msra.mxu0 %v5267
    %5525 = vmatprep.subr.bf16.mxu0 %v5254
    %5526 = vmatpush2.bf16.msra.mxu0 %v5253
    %5527 = vmatprep.subr.bf16.mxu0 %v5240
    %5528 = vmatpush2.bf16.msra.mxu0 %v5239
    %5529 = vmatprep.subr.bf16.mxu0 %v5226
    %5530 = vmatpush2.bf16.msra.mxu0 %v5225
    %5531 = vmatprep.subr.bf16.mxu0 %v5212
    %5532 = vmatpush2.bf16.msra.mxu0 %v5211
    %5533 = vmatprep.subr.bf16.mxu0 %v5198
    %5534 = vmatpush2.bf16.msra.mxu0 %v5197
    %5535 = vmatprep.mubr.bf16.mxu0 %v4243
    %5536 = vmatmul.mubr.bf16.gmra.mxu0 %v4242
    %v5537 = vpop.f32.mrf.mxu0
    %v5538 = vadd.f32 %v5497, %v5537
    %v5539 = vpop.f32.mrf.mxu0
    %v5540 = vadd.f32 %v5499, %v5539
    %v5541 = vpop.f32.mrf.mxu0
    %v5542 = vpop.f32.mrf.mxu0
    %5543 = vdwg.mxu0
    %5544 = vmatprep.subr.bf16.mxu0 %v5408
    %5545 = vmatpush1.bf16.msra.mxu0 %v5407
    %5546 = vmatprep.subr.bf16.mxu0 %v5394
    %5547 = vmatpush1.bf16.msra.mxu0 %v5393
    %5548 = vmatprep.subr.bf16.mxu0 %v5380
    %5549 = vmatpush1.bf16.msra.mxu0 %v5379
    %5550 = vmatprep.subr.bf16.mxu0 %v5366
    %5551 = vmatpush1.bf16.msra.mxu0 %v5365
    %5552 = vmatprep.subr.bf16.mxu0 %v5352
    %5553 = vmatpush1.bf16.msra.mxu0 %v5351
    %5554 = vmatprep.subr.bf16.mxu0 %v5338
    %5555 = vmatpush1.bf16.msra.mxu0 %v5337
    %5556 = vmatprep.subr.bf16.mxu0 %v5324
    %5557 = vmatpush1.bf16.msra.mxu0 %v5323
    %5558 = vmatprep.subr.bf16.mxu0 %v5310
    %5559 = vmatpush1.bf16.msra.mxu0 %v5309
    %5560 = vmatprep.subr.bf16.mxu0 0
    %5561 = vmatpush2.bf16.msra.mxu0 0
    %5562 = vmatprep.subr.bf16.mxu0 0
    %5563 = vmatpush2.bf16.msra.mxu0 0
    %5564 = vmatprep.subr.bf16.mxu0 0
    %5565 = vmatpush2.bf16.msra.mxu0 0
    %5566 = vmatprep.subr.bf16.mxu0 0
    %5567 = vmatpush2.bf16.msra.mxu0 0
    %5568 = vmatprep.subr.bf16.mxu0 0
    %5569 = vmatpush2.bf16.msra.mxu0 0
    %5570 = vmatprep.subr.bf16.mxu0 0
    %5571 = vmatpush2.bf16.msra.mxu0 0
    %5572 = vmatprep.subr.bf16.mxu0 0
    %5573 = vmatpush2.bf16.msra.mxu0 0
    %5574 = vmatprep.subr.bf16.mxu0 0
    %5575 = vmatpush2.bf16.msra.mxu0 0
    %5576 = vmatprep.mubr.bf16.mxu0 0
    %5577 = vmatmul.mubr.bf16.gmra.mxu0 %v4244
    %v5578 = vpop.f32.mrf.mxu0
    %v5579 = vadd.f32 %v5538, %v5578
    %v5580 = vpop.f32.mrf.mxu0
    %v5581 = vadd.f32 %v5540, %v5580
    %v5582 = vpop.f32.mrf.mxu0
    %v5583 = vpop.f32.mrf.mxu0
    %5584 = vdwg.mxu0
    %5585 = vmatprep.subr.bf16.mxu0 %v4738
    %5586 = vmatpush1.bf16.msra.mxu0 %v4737
    %5587 = vmatprep.subr.bf16.mxu0 %v4724
    %5588 = vmatpush1.bf16.msra.mxu0 %v4723
    %5589 = vmatprep.subr.bf16.mxu0 %v4710
    %5590 = vmatpush1.bf16.msra.mxu0 %v4709
    %5591 = vmatprep.subr.bf16.mxu0 %v4696
    %5592 = vmatpush1.bf16.msra.mxu0 %v4695
    %5593 = vmatprep.subr.bf16.mxu0 %v4682
    %5594 = vmatpush1.bf16.msra.mxu0 %v4681
    %5595 = vmatprep.subr.bf16.mxu0 %v4668
    %5596 = vmatpush1.bf16.msra.mxu0 %v4667
    %5597 = vmatprep.subr.bf16.mxu0 %v4654
    %5598 = vmatpush1.bf16.msra.mxu0 %v4653
    %5599 = vmatprep.subr.bf16.mxu0 %v4640
    %5600 = vmatpush1.bf16.msra.mxu0 %v4639
    %5601 = vmatprep.subr.bf16.mxu0 %v4850
    %5602 = vmatpush2.bf16.msra.mxu0 %v4849
    %5603 = vmatprep.subr.bf16.mxu0 %v4836
    %5604 = vmatpush2.bf16.msra.mxu0 %v4835
    %5605 = vmatprep.subr.bf16.mxu0 %v4822
    %5606 = vmatpush2.bf16.msra.mxu0 %v4821
    %5607 = vmatprep.subr.bf16.mxu0 %v4808
    %5608 = vmatpush2.bf16.msra.mxu0 %v4807
    %5609 = vmatprep.subr.bf16.mxu0 %v4794
    %5610 = vmatpush2.bf16.msra.mxu0 %v4793
    %5611 = vmatprep.subr.bf16.mxu0 %v4780
    %5612 = vmatpush2.bf16.msra.mxu0 %v4779
    %5613 = vmatprep.subr.bf16.mxu0 %v4766
    %5614 = vmatpush2.bf16.msra.mxu0 %v4765
    %5615 = vmatprep.subr.bf16.mxu0 %v4752
    %5616 = vmatpush2.bf16.msra.mxu0 %v4751
    %5617 = vmatprep.mubr.bf16.mxu0 %v4239
    %5618 = vmatmul.mubr.bf16.gmra.mxu0 %v4238
    %v5619 = vpop.f32.mrf.mxu0
    %v5620 = vadd.f32 0.0, %v5619
    %v5621 = vpop.f32.mrf.mxu0
    %v5622 = vadd.f32 0.0, %v5621
    %v5623 = vpop.f32.mrf.mxu0
    %v5624 = vpop.f32.mrf.mxu0
    %5625 = vdwg.mxu0
    %5626 = vmatprep.subr.bf16.mxu0 %v4962
    %5627 = vmatpush1.bf16.msra.mxu0 %v4961
    %5628 = vmatprep.subr.bf16.mxu0 %v4948
    %5629 = vmatpush1.bf16.msra.mxu0 %v4947
    %5630 = vmatprep.subr.bf16.mxu0 %v4934
    %5631 = vmatpush1.bf16.msra.mxu0 %v4933
    %5632 = vmatprep.subr.bf16.mxu0 %v4920
    %5633 = vmatpush1.bf16.msra.mxu0 %v4919
    %5634 = vmatprep.subr.bf16.mxu0 %v4906
    %5635 = vmatpush1.bf16.msra.mxu0 %v4905
    %5636 = vmatprep.subr.bf16.mxu0 %v4892
    %5637 = vmatpush1.bf16.msra.mxu0 %v4891
    %5638 = vmatprep.subr.bf16.mxu0 %v4878
    %5639 = vmatpush1.bf16.msra.mxu0 %v4877
    %5640 = vmatprep.subr.bf16.mxu0 %v4864
    %5641 = vmatpush1.bf16.msra.mxu0 %v4863
    %5642 = vmatprep.subr.bf16.mxu0 %v5074
    %5643 = vmatpush2.bf16.msra.mxu0 %v5073
    %5644 = vmatprep.subr.bf16.mxu0 %v5060
    %5645 = vmatpush2.bf16.msra.mxu0 %v5059
    %5646 = vmatprep.subr.bf16.mxu0 %v5046
    %5647 = vmatpush2.bf16.msra.mxu0 %v5045
    %5648 = vmatprep.subr.bf16.mxu0 %v5032
    %5649 = vmatpush2.bf16.msra.mxu0 %v5031
    %5650 = vmatprep.subr.bf16.mxu0 %v5018
    %5651 = vmatpush2.bf16.msra.mxu0 %v5017
    %5652 = vmatprep.subr.bf16.mxu0 %v5004
    %5653 = vmatpush2.bf16.msra.mxu0 %v5003
    %5654 = vmatprep.subr.bf16.mxu0 %v4990
    %5655 = vmatpush2.bf16.msra.mxu0 %v4989
    %5656 = vmatprep.subr.bf16.mxu0 %v4976
    %5657 = vmatpush2.bf16.msra.mxu0 %v4975
    %5658 = vmatprep.mubr.bf16.mxu0 %v4241
    %5659 = vmatmul.mubr.bf16.gmra.mxu0 %v4240
    %v5660 = vpop.f32.mrf.mxu0
    %v5661 = vadd.f32 %v5620, %v5660
    %v5662 = vpop.f32.mrf.mxu0
    %v5663 = vadd.f32 %v5622, %v5662
    %v5664 = vpop.f32.mrf.mxu0
    %v5665 = vpop.f32.mrf.mxu0
    %5666 = vdwg.mxu0
    %5667 = vmatprep.subr.bf16.mxu0 %v5186
    %5668 = vmatpush1.bf16.msra.mxu0 %v5185
    %5669 = vmatprep.subr.bf16.mxu0 %v5172
    %5670 = vmatpush1.bf16.msra.mxu0 %v5171
    %5671 = vmatprep.subr.bf16.mxu0 %v5158
    %5672 = vmatpush1.bf16.msra.mxu0 %v5157
    %5673 = vmatprep.subr.bf16.mxu0 %v5144
    %5674 = vmatpush1.bf16.msra.mxu0 %v5143
    %5675 = vmatprep.subr.bf16.mxu0 %v5130
    %5676 = vmatpush1.bf16.msra.mxu0 %v5129
    %5677 = vmatprep.subr.bf16.mxu0 %v5116
    %5678 = vmatpush1.bf16.msra.mxu0 %v5115
    %5679 = vmatprep.subr.bf16.mxu0 %v5102
    %5680 = vmatpush1.bf16.msra.mxu0 %v5101
    %5681 = vmatprep.subr.bf16.mxu0 %v5088
    %5682 = vmatpush1.bf16.msra.mxu0 %v5087
    %5683 = vmatprep.subr.bf16.mxu0 %v5298
    %5684 = vmatpush2.bf16.msra.mxu0 %v5297
    %5685 = vmatprep.subr.bf16.mxu0 %v5284
    %5686 = vmatpush2.bf16.msra.mxu0 %v5283
    %5687 = vmatprep.subr.bf16.mxu0 %v5270
    %5688 = vmatpush2.bf16.msra.mxu0 %v5269
    %5689 = vmatprep.subr.bf16.mxu0 %v5256
    %5690 = vmatpush2.bf16.msra.mxu0 %v5255
    %5691 = vmatprep.subr.bf16.mxu0 %v5242
    %5692 = vmatpush2.bf16.msra.mxu0 %v5241
    %5693 = vmatprep.subr.bf16.mxu0 %v5228
    %5694 = vmatpush2.bf16.msra.mxu0 %v5227
    %5695 = vmatprep.subr.bf16.mxu0 %v5214
    %5696 = vmatpush2.bf16.msra.mxu0 %v5213
    %5697 = vmatprep.subr.bf16.mxu0 %v5200
    %5698 = vmatpush2.bf16.msra.mxu0 %v5199
    %5699 = vmatprep.mubr.bf16.mxu0 %v4243
    %5700 = vmatmul.mubr.bf16.gmra.mxu0 %v4242
    %v5701 = vpop.f32.mrf.mxu0
    %v5702 = vadd.f32 %v5661, %v5701
    %v5703 = vpop.f32.mrf.mxu0
    %v5704 = vadd.f32 %v5663, %v5703
    %v5705 = vpop.f32.mrf.mxu0
    %v5706 = vpop.f32.mrf.mxu0
    %5707 = vdwg.mxu0
    %5708 = vmatprep.subr.bf16.mxu0 %v5410
    %5709 = vmatpush1.bf16.msra.mxu0 %v5409
    %5710 = vmatprep.subr.bf16.mxu0 %v5396
    %5711 = vmatpush1.bf16.msra.mxu0 %v5395
    %5712 = vmatprep.subr.bf16.mxu0 %v5382
    %5713 = vmatpush1.bf16.msra.mxu0 %v5381
    %5714 = vmatprep.subr.bf16.mxu0 %v5368
    %5715 = vmatpush1.bf16.msra.mxu0 %v5367
    %5716 = vmatprep.subr.bf16.mxu0 %v5354
    %5717 = vmatpush1.bf16.msra.mxu0 %v5353
    %5718 = vmatprep.subr.bf16.mxu0 %v5340
    %5719 = vmatpush1.bf16.msra.mxu0 %v5339
    %5720 = vmatprep.subr.bf16.mxu0 %v5326
    %5721 = vmatpush1.bf16.msra.mxu0 %v5325
    %5722 = vmatprep.subr.bf16.mxu0 %v5312
    %5723 = vmatpush1.bf16.msra.mxu0 %v5311
    %5724 = vmatprep.subr.bf16.mxu0 0
    %5725 = vmatpush2.bf16.msra.mxu0 0
    %5726 = vmatprep.subr.bf16.mxu0 0
    %5727 = vmatpush2.bf16.msra.mxu0 0
    %5728 = vmatprep.subr.bf16.mxu0 0
    %5729 = vmatpush2.bf16.msra.mxu0 0
    %5730 = vmatprep.subr.bf16.mxu0 0
    %5731 = vmatpush2.bf16.msra.mxu0 0
    %5732 = vmatprep.subr.bf16.mxu0 0
    %5733 = vmatpush2.bf16.msra.mxu0 0
    %5734 = vmatprep.subr.bf16.mxu0 0
    %5735 = vmatpush2.bf16.msra.mxu0 0
    %5736 = vmatprep.subr.bf16.mxu0 0
    %5737 = vmatpush2.bf16.msra.mxu0 0
    %5738 = vmatprep.subr.bf16.mxu0 0
    %5739 = vmatpush2.bf16.msra.mxu0 0
    %5740 = vmatprep.mubr.bf16.mxu0 0
    %5741 = vmatmul.mubr.bf16.gmra.mxu0 %v4244
    %v5742 = vpop.f32.mrf.mxu0
    %v5743 = vadd.f32 %v5702, %v5742
    %v5744 = vpop.f32.mrf.mxu0
    %v5745 = vadd.f32 %v5704, %v5744
    %v5746 = vpop.f32.mrf.mxu0
    %v5747 = vpop.f32.mrf.mxu0
    %5748 = vdwg.mxu0
    %5749 = vmatprep.subr.bf16.mxu0 %v4740
    %5750 = vmatpush1.bf16.msra.mxu0 %v4739
    %5751 = vmatprep.subr.bf16.mxu0 %v4726
    %5752 = vmatpush1.bf16.msra.mxu0 %v4725
    %5753 = vmatprep.subr.bf16.mxu0 %v4712
    %5754 = vmatpush1.bf16.msra.mxu0 %v4711
    %5755 = vmatprep.subr.bf16.mxu0 %v4698
    %5756 = vmatpush1.bf16.msra.mxu0 %v4697
    %5757 = vmatprep.subr.bf16.mxu0 %v4684
    %5758 = vmatpush1.bf16.msra.mxu0 %v4683
    %5759 = vmatprep.subr.bf16.mxu0 %v4670
    %5760 = vmatpush1.bf16.msra.mxu0 %v4669
    %5761 = vmatprep.subr.bf16.mxu0 %v4656
    %5762 = vmatpush1.bf16.msra.mxu0 %v4655
    %5763 = vmatprep.subr.bf16.mxu0 %v4642
    %5764 = vmatpush1.bf16.msra.mxu0 %v4641
    %5765 = vmatprep.subr.bf16.mxu0 %v4852
    %5766 = vmatpush2.bf16.msra.mxu0 %v4851
    %5767 = vmatprep.subr.bf16.mxu0 %v4838
    %5768 = vmatpush2.bf16.msra.mxu0 %v4837
    %5769 = vmatprep.subr.bf16.mxu0 %v4824
    %5770 = vmatpush2.bf16.msra.mxu0 %v4823
    %5771 = vmatprep.subr.bf16.mxu0 %v4810
    %5772 = vmatpush2.bf16.msra.mxu0 %v4809
    %5773 = vmatprep.subr.bf16.mxu0 %v4796
    %5774 = vmatpush2.bf16.msra.mxu0 %v4795
    %5775 = vmatprep.subr.bf16.mxu0 %v4782
    %5776 = vmatpush2.bf16.msra.mxu0 %v4781
    %5777 = vmatprep.subr.bf16.mxu0 %v4768
    %5778 = vmatpush2.bf16.msra.mxu0 %v4767
    %5779 = vmatprep.subr.bf16.mxu0 %v4754
    %5780 = vmatpush2.bf16.msra.mxu0 %v4753
    %5781 = vmatprep.mubr.bf16.mxu0 %v4239
    %5782 = vmatmul.mubr.bf16.gmra.mxu0 %v4238
    %v5783 = vpop.f32.mrf.mxu0
    %v5784 = vadd.f32 0.0, %v5783
    %v5785 = vpop.f32.mrf.mxu0
    %v5786 = vadd.f32 0.0, %v5785
    %v5787 = vpop.f32.mrf.mxu0
    %v5788 = vpop.f32.mrf.mxu0
    %5789 = vdwg.mxu0
    %5790 = vmatprep.subr.bf16.mxu0 %v4964
    %5791 = vmatpush1.bf16.msra.mxu0 %v4963
    %5792 = vmatprep.subr.bf16.mxu0 %v4950
    %5793 = vmatpush1.bf16.msra.mxu0 %v4949
    %5794 = vmatprep.subr.bf16.mxu0 %v4936
    %5795 = vmatpush1.bf16.msra.mxu0 %v4935
    %5796 = vmatprep.subr.bf16.mxu0 %v4922
    %5797 = vmatpush1.bf16.msra.mxu0 %v4921
    %5798 = vmatprep.subr.bf16.mxu0 %v4908
    %5799 = vmatpush1.bf16.msra.mxu0 %v4907
    %5800 = vmatprep.subr.bf16.mxu0 %v4894
    %5801 = vmatpush1.bf16.msra.mxu0 %v4893
    %5802 = vmatprep.subr.bf16.mxu0 %v4880
    %5803 = vmatpush1.bf16.msra.mxu0 %v4879
    %5804 = vmatprep.subr.bf16.mxu0 %v4866
    %5805 = vmatpush1.bf16.msra.mxu0 %v4865
    %5806 = vmatprep.subr.bf16.mxu0 %v5076
    %5807 = vmatpush2.bf16.msra.mxu0 %v5075
    %5808 = vmatprep.subr.bf16.mxu0 %v5062
    %5809 = vmatpush2.bf16.msra.mxu0 %v5061
    %5810 = vmatprep.subr.bf16.mxu0 %v5048
    %5811 = vmatpush2.bf16.msra.mxu0 %v5047
    %5812 = vmatprep.subr.bf16.mxu0 %v5034
    %5813 = vmatpush2.bf16.msra.mxu0 %v5033
    %5814 = vmatprep.subr.bf16.mxu0 %v5020
    %5815 = vmatpush2.bf16.msra.mxu0 %v5019
    %5816 = vmatprep.subr.bf16.mxu0 %v5006
    %5817 = vmatpush2.bf16.msra.mxu0 %v5005
    %5818 = vmatprep.subr.bf16.mxu0 %v4992
    %5819 = vmatpush2.bf16.msra.mxu0 %v4991
    %5820 = vmatprep.subr.bf16.mxu0 %v4978
    %5821 = vmatpush2.bf16.msra.mxu0 %v4977
    %5822 = vmatprep.mubr.bf16.mxu0 %v4241
    %5823 = vmatmul.mubr.bf16.gmra.mxu0 %v4240
    %v5824 = vpop.f32.mrf.mxu0
    %v5825 = vadd.f32 %v5784, %v5824
    %v5826 = vpop.f32.mrf.mxu0
    %v5827 = vadd.f32 %v5786, %v5826
    %v5828 = vpop.f32.mrf.mxu0
    %v5829 = vpop.f32.mrf.mxu0
    %5830 = vdwg.mxu0
    %5831 = vmatprep.subr.bf16.mxu0 %v5188
    %5832 = vmatpush1.bf16.msra.mxu0 %v5187
    %5833 = vmatprep.subr.bf16.mxu0 %v5174
    %5834 = vmatpush1.bf16.msra.mxu0 %v5173
    %5835 = vmatprep.subr.bf16.mxu0 %v5160
    %5836 = vmatpush1.bf16.msra.mxu0 %v5159
    %5837 = vmatprep.subr.bf16.mxu0 %v5146
    %5838 = vmatpush1.bf16.msra.mxu0 %v5145
    %5839 = vmatprep.subr.bf16.mxu0 %v5132
    %5840 = vmatpush1.bf16.msra.mxu0 %v5131
    %5841 = vmatprep.subr.bf16.mxu0 %v5118
    %5842 = vmatpush1.bf16.msra.mxu0 %v5117
    %5843 = vmatprep.subr.bf16.mxu0 %v5104
    %5844 = vmatpush1.bf16.msra.mxu0 %v5103
    %5845 = vmatprep.subr.bf16.mxu0 %v5090
    %5846 = vmatpush1.bf16.msra.mxu0 %v5089
    %5847 = vmatprep.subr.bf16.mxu0 %v5300
    %5848 = vmatpush2.bf16.msra.mxu0 %v5299
    %5849 = vmatprep.subr.bf16.mxu0 %v5286
    %5850 = vmatpush2.bf16.msra.mxu0 %v5285
    %5851 = vmatprep.subr.bf16.mxu0 %v5272
    %5852 = vmatpush2.bf16.msra.mxu0 %v5271
    %5853 = vmatprep.subr.bf16.mxu0 %v5258
    %5854 = vmatpush2.bf16.msra.mxu0 %v5257
    %5855 = vmatprep.subr.bf16.mxu0 %v5244
    %5856 = vmatpush2.bf16.msra.mxu0 %v5243
    %5857 = vmatprep.subr.bf16.mxu0 %v5230
    %5858 = vmatpush2.bf16.msra.mxu0 %v5229
    %5859 = vmatprep.subr.bf16.mxu0 %v5216
    %5860 = vmatpush2.bf16.msra.mxu0 %v5215
    %5861 = vmatprep.subr.bf16.mxu0 %v5202
    %5862 = vmatpush2.bf16.msra.mxu0 %v5201
    %5863 = vmatprep.mubr.bf16.mxu0 %v4243
    %5864 = vmatmul.mubr.bf16.gmra.mxu0 %v4242
    %v5865 = vpop.f32.mrf.mxu0
    %v5866 = vadd.f32 %v5825, %v5865
    %v5867 = vpop.f32.mrf.mxu0
    %v5868 = vadd.f32 %v5827, %v5867
    %v5869 = vpop.f32.mrf.mxu0
    %v5870 = vpop.f32.mrf.mxu0
    %5871 = vdwg.mxu0
    %5872 = vmatprep.subr.bf16.mxu0 %v5412
    %5873 = vmatpush1.bf16.msra.mxu0 %v5411
    %5874 = vmatprep.subr.bf16.mxu0 %v5398
    %5875 = vmatpush1.bf16.msra.mxu0 %v5397
    %5876 = vmatprep.subr.bf16.mxu0 %v5384
    %5877 = vmatpush1.bf16.msra.mxu0 %v5383
    %5878 = vmatprep.subr.bf16.mxu0 %v5370
    %5879 = vmatpush1.bf16.msra.mxu0 %v5369
    %5880 = vmatprep.subr.bf16.mxu0 %v5356
    %5881 = vmatpush1.bf16.msra.mxu0 %v5355
    %5882 = vmatprep.subr.bf16.mxu0 %v5342
    %5883 = vmatpush1.bf16.msra.mxu0 %v5341
    %5884 = vmatprep.subr.bf16.mxu0 %v5328
    %5885 = vmatpush1.bf16.msra.mxu0 %v5327
    %5886 = vmatprep.subr.bf16.mxu0 %v5314
    %5887 = vmatpush1.bf16.msra.mxu0 %v5313
    %5888 = vmatprep.subr.bf16.mxu0 0
    %5889 = vmatpush2.bf16.msra.mxu0 0
    %5890 = vmatprep.subr.bf16.mxu0 0
    %5891 = vmatpush2.bf16.msra.mxu0 0
    %5892 = vmatprep.subr.bf16.mxu0 0
    %5893 = vmatpush2.bf16.msra.mxu0 0
    %5894 = vmatprep.subr.bf16.mxu0 0
    %5895 = vmatpush2.bf16.msra.mxu0 0
    %5896 = vmatprep.subr.bf16.mxu0 0
    %5897 = vmatpush2.bf16.msra.mxu0 0
    %5898 = vmatprep.subr.bf16.mxu0 0
    %5899 = vmatpush2.bf16.msra.mxu0 0
    %5900 = vmatprep.subr.bf16.mxu0 0
    %5901 = vmatpush2.bf16.msra.mxu0 0
    %5902 = vmatprep.subr.bf16.mxu0 0
    %5903 = vmatpush2.bf16.msra.mxu0 0
    %5904 = vmatprep.mubr.bf16.mxu0 0
    %5905 = vmatmul.mubr.bf16.gmra.mxu0 %v4244
    %v5906 = vpop.f32.mrf.mxu0
    %v5907 = vadd.f32 %v5866, %v5906
    %v5908 = vpop.f32.mrf.mxu0
    %v5909 = vadd.f32 %v5868, %v5908
    %v5910 = vpop.f32.mrf.mxu0
    %v5911 = vpop.f32.mrf.mxu0
    %5912 = vdwg.mxu0
    %5913 = vmatprep.subr.bf16.mxu0 %v4742
    %5914 = vmatpush1.bf16.msra.mxu0 %v4741
    %5915 = vmatprep.subr.bf16.mxu0 %v4728
    %5916 = vmatpush1.bf16.msra.mxu0 %v4727
    %5917 = vmatprep.subr.bf16.mxu0 %v4714
    %5918 = vmatpush1.bf16.msra.mxu0 %v4713
    %5919 = vmatprep.subr.bf16.mxu0 %v4700
    %5920 = vmatpush1.bf16.msra.mxu0 %v4699
    %5921 = vmatprep.subr.bf16.mxu0 %v4686
    %5922 = vmatpush1.bf16.msra.mxu0 %v4685
    %5923 = vmatprep.subr.bf16.mxu0 %v4672
    %5924 = vmatpush1.bf16.msra.mxu0 %v4671
    %5925 = vmatprep.subr.bf16.mxu0 %v4658
    %5926 = vmatpush1.bf16.msra.mxu0 %v4657
    %5927 = vmatprep.subr.bf16.mxu0 %v4644
    %5928 = vmatpush1.bf16.msra.mxu0 %v4643
    %5929 = vmatprep.subr.bf16.mxu0 %v4854
    %5930 = vmatpush2.bf16.msra.mxu0 %v4853
    %5931 = vmatprep.subr.bf16.mxu0 %v4840
    %5932 = vmatpush2.bf16.msra.mxu0 %v4839
    %5933 = vmatprep.subr.bf16.mxu0 %v4826
    %5934 = vmatpush2.bf16.msra.mxu0 %v4825
    %5935 = vmatprep.subr.bf16.mxu0 %v4812
    %5936 = vmatpush2.bf16.msra.mxu0 %v4811
    %5937 = vmatprep.subr.bf16.mxu0 %v4798
    %5938 = vmatpush2.bf16.msra.mxu0 %v4797
    %5939 = vmatprep.subr.bf16.mxu0 %v4784
    %5940 = vmatpush2.bf16.msra.mxu0 %v4783
    %5941 = vmatprep.subr.bf16.mxu0 %v4770
    %5942 = vmatpush2.bf16.msra.mxu0 %v4769
    %5943 = vmatprep.subr.bf16.mxu0 %v4756
    %5944 = vmatpush2.bf16.msra.mxu0 %v4755
    %5945 = vmatprep.mubr.bf16.mxu0 %v4239
    %5946 = vmatmul.mubr.bf16.gmra.mxu0 %v4238
    %v5947 = vpop.f32.mrf.mxu0
    %v5948 = vadd.f32 0.0, %v5947
    %v5949 = vpop.f32.mrf.mxu0
    %v5950 = vadd.f32 0.0, %v5949
    %v5951 = vpop.f32.mrf.mxu0
    %v5952 = vpop.f32.mrf.mxu0
    %5953 = vdwg.mxu0
    %5954 = vmatprep.subr.bf16.mxu0 %v4966
    %5955 = vmatpush1.bf16.msra.mxu0 %v4965
    %5956 = vmatprep.subr.bf16.mxu0 %v4952
    %5957 = vmatpush1.bf16.msra.mxu0 %v4951
    %5958 = vmatprep.subr.bf16.mxu0 %v4938
    %5959 = vmatpush1.bf16.msra.mxu0 %v4937
    %5960 = vmatprep.subr.bf16.mxu0 %v4924
    %5961 = vmatpush1.bf16.msra.mxu0 %v4923
    %5962 = vmatprep.subr.bf16.mxu0 %v4910
    %5963 = vmatpush1.bf16.msra.mxu0 %v4909
    %5964 = vmatprep.subr.bf16.mxu0 %v4896
    %5965 = vmatpush1.bf16.msra.mxu0 %v4895
    %5966 = vmatprep.subr.bf16.mxu0 %v4882
    %5967 = vmatpush1.bf16.msra.mxu0 %v4881
    %5968 = vmatprep.subr.bf16.mxu0 %v4868
    %5969 = vmatpush1.bf16.msra.mxu0 %v4867
    %5970 = vmatprep.subr.bf16.mxu0 %v5078
    %5971 = vmatpush2.bf16.msra.mxu0 %v5077
    %5972 = vmatprep.subr.bf16.mxu0 %v5064
    %5973 = vmatpush2.bf16.msra.mxu0 %v5063
    %5974 = vmatprep.subr.bf16.mxu0 %v5050
    %5975 = vmatpush2.bf16.msra.mxu0 %v5049
    %5976 = vmatprep.subr.bf16.mxu0 %v5036
    %5977 = vmatpush2.bf16.msra.mxu0 %v5035
    %5978 = vmatprep.subr.bf16.mxu0 %v5022
    %5979 = vmatpush2.bf16.msra.mxu0 %v5021
    %5980 = vmatprep.subr.bf16.mxu0 %v5008
    %5981 = vmatpush2.bf16.msra.mxu0 %v5007
    %5982 = vmatprep.subr.bf16.mxu0 %v4994
    %5983 = vmatpush2.bf16.msra.mxu0 %v4993
    %5984 = vmatprep.subr.bf16.mxu0 %v4980
    %5985 = vmatpush2.bf16.msra.mxu0 %v4979
    %5986 = vmatprep.mubr.bf16.mxu0 %v4241
    %5987 = vmatmul.mubr.bf16.gmra.mxu0 %v4240
    %v5988 = vpop.f32.mrf.mxu0
    %v5989 = vadd.f32 %v5948, %v5988
    %v5990 = vpop.f32.mrf.mxu0
    %v5991 = vadd.f32 %v5950, %v5990
    %v5992 = vpop.f32.mrf.mxu0
    %v5993 = vpop.f32.mrf.mxu0
    %5994 = vdwg.mxu0
    %5995 = vmatprep.subr.bf16.mxu0 %v5190
    %5996 = vmatpush1.bf16.msra.mxu0 %v5189
    %5997 = vmatprep.subr.bf16.mxu0 %v5176
    %5998 = vmatpush1.bf16.msra.mxu0 %v5175
    %5999 = vmatprep.subr.bf16.mxu0 %v5162
    %6000 = vmatpush1.bf16.msra.mxu0 %v5161
    %6001 = vmatprep.subr.bf16.mxu0 %v5148
    %6002 = vmatpush1.bf16.msra.mxu0 %v5147
    %6003 = vmatprep.subr.bf16.mxu0 %v5134
    %6004 = vmatpush1.bf16.msra.mxu0 %v5133
    %6005 = vmatprep.subr.bf16.mxu0 %v5120
    %6006 = vmatpush1.bf16.msra.mxu0 %v5119
    %6007 = vmatprep.subr.bf16.mxu0 %v5106
    %6008 = vmatpush1.bf16.msra.mxu0 %v5105
    %6009 = vmatprep.subr.bf16.mxu0 %v5092
    %6010 = vmatpush1.bf16.msra.mxu0 %v5091
    %6011 = vmatprep.subr.bf16.mxu0 %v5302
    %6012 = vmatpush2.bf16.msra.mxu0 %v5301
    %6013 = vmatprep.subr.bf16.mxu0 %v5288
    %6014 = vmatpush2.bf16.msra.mxu0 %v5287
    %6015 = vmatprep.subr.bf16.mxu0 %v5274
    %6016 = vmatpush2.bf16.msra.mxu0 %v5273
    %6017 = vmatprep.subr.bf16.mxu0 %v5260
    %6018 = vmatpush2.bf16.msra.mxu0 %v5259
    %6019 = vmatprep.subr.bf16.mxu0 %v5246
    %6020 = vmatpush2.bf16.msra.mxu0 %v5245
    %6021 = vmatprep.subr.bf16.mxu0 %v5232
    %6022 = vmatpush2.bf16.msra.mxu0 %v5231
    %6023 = vmatprep.subr.bf16.mxu0 %v5218
    %6024 = vmatpush2.bf16.msra.mxu0 %v5217
    %6025 = vmatprep.subr.bf16.mxu0 %v5204
    %6026 = vmatpush2.bf16.msra.mxu0 %v5203
    %6027 = vmatprep.mubr.bf16.mxu0 %v4243
    %6028 = vmatmul.mubr.bf16.gmra.mxu0 %v4242
    %v6029 = vpop.f32.mrf.mxu0
    %v6030 = vadd.f32 %v5989, %v6029
    %v6031 = vpop.f32.mrf.mxu0
    %v6032 = vadd.f32 %v5991, %v6031
    %v6033 = vpop.f32.mrf.mxu0
    %v6034 = vpop.f32.mrf.mxu0
    %6035 = vdwg.mxu0
    %6036 = vmatprep.subr.bf16.mxu0 %v5414
    %6037 = vmatpush1.bf16.msra.mxu0 %v5413
    %6038 = vmatprep.subr.bf16.mxu0 %v5400
    %6039 = vmatpush1.bf16.msra.mxu0 %v5399
    %6040 = vmatprep.subr.bf16.mxu0 %v5386
    %6041 = vmatpush1.bf16.msra.mxu0 %v5385
    %6042 = vmatprep.subr.bf16.mxu0 %v5372
    %6043 = vmatpush1.bf16.msra.mxu0 %v5371
    %6044 = vmatprep.subr.bf16.mxu0 %v5358
    %6045 = vmatpush1.bf16.msra.mxu0 %v5357
    %6046 = vmatprep.subr.bf16.mxu0 %v5344
    %6047 = vmatpush1.bf16.msra.mxu0 %v5343
    %6048 = vmatprep.subr.bf16.mxu0 %v5330
    %6049 = vmatpush1.bf16.msra.mxu0 %v5329
    %6050 = vmatprep.subr.bf16.mxu0 %v5316
    %6051 = vmatpush1.bf16.msra.mxu0 %v5315
    %6052 = vmatprep.subr.bf16.mxu0 0
    %6053 = vmatpush2.bf16.msra.mxu0 0
    %6054 = vmatprep.subr.bf16.mxu0 0
    %6055 = vmatpush2.bf16.msra.mxu0 0
    %6056 = vmatprep.subr.bf16.mxu0 0
    %6057 = vmatpush2.bf16.msra.mxu0 0
    %6058 = vmatprep.subr.bf16.mxu0 0
    %6059 = vmatpush2.bf16.msra.mxu0 0
    %6060 = vmatprep.subr.bf16.mxu0 0
    %6061 = vmatpush2.bf16.msra.mxu0 0
    %6062 = vmatprep.subr.bf16.mxu0 0
    %6063 = vmatpush2.bf16.msra.mxu0 0
    %6064 = vmatprep.subr.bf16.mxu0 0
    %6065 = vmatpush2.bf16.msra.mxu0 0
    %6066 = vmatprep.subr.bf16.mxu0 0
    %6067 = vmatpush2.bf16.msra.mxu0 0
    %6068 = vmatprep.mubr.bf16.mxu0 0
    %6069 = vmatmul.mubr.bf16.gmra.mxu0 %v4244
    %v6070 = vpop.f32.mrf.mxu0
    %v6071 = vadd.f32 %v6030, %v6070
    %v6072 = vpop.f32.mrf.mxu0
    %v6073 = vadd.f32 %v6032, %v6072
    %v6074 = vpop.f32.mrf.mxu0
    %v6075 = vpop.f32.mrf.mxu0
    %6076 = vdwg.mxu0
    %6077 = vmatprep.subr.bf16.mxu0 %v4744
    %6078 = vmatpush1.bf16.msra.mxu0 %v4743
    %6079 = vmatprep.subr.bf16.mxu0 %v4730
    %6080 = vmatpush1.bf16.msra.mxu0 %v4729
    %6081 = vmatprep.subr.bf16.mxu0 %v4716
    %6082 = vmatpush1.bf16.msra.mxu0 %v4715
    %6083 = vmatprep.subr.bf16.mxu0 %v4702
    %6084 = vmatpush1.bf16.msra.mxu0 %v4701
    %6085 = vmatprep.subr.bf16.mxu0 %v4688
    %6086 = vmatpush1.bf16.msra.mxu0 %v4687
    %6087 = vmatprep.subr.bf16.mxu0 %v4674
    %6088 = vmatpush1.bf16.msra.mxu0 %v4673
    %6089 = vmatprep.subr.bf16.mxu0 %v4660
    %6090 = vmatpush1.bf16.msra.mxu0 %v4659
    %6091 = vmatprep.subr.bf16.mxu0 %v4646
    %6092 = vmatpush1.bf16.msra.mxu0 %v4645
    %6093 = vmatprep.subr.bf16.mxu0 %v4856
    %6094 = vmatpush2.bf16.msra.mxu0 %v4855
    %6095 = vmatprep.subr.bf16.mxu0 %v4842
    %6096 = vmatpush2.bf16.msra.mxu0 %v4841
    %6097 = vmatprep.subr.bf16.mxu0 %v4828
    %6098 = vmatpush2.bf16.msra.mxu0 %v4827
    %6099 = vmatprep.subr.bf16.mxu0 %v4814
    %6100 = vmatpush2.bf16.msra.mxu0 %v4813
    %6101 = vmatprep.subr.bf16.mxu0 %v4800
    %6102 = vmatpush2.bf16.msra.mxu0 %v4799
    %6103 = vmatprep.subr.bf16.mxu0 %v4786
    %6104 = vmatpush2.bf16.msra.mxu0 %v4785
    %6105 = vmatprep.subr.bf16.mxu0 %v4772
    %6106 = vmatpush2.bf16.msra.mxu0 %v4771
    %6107 = vmatprep.subr.bf16.mxu0 %v4758
    %6108 = vmatpush2.bf16.msra.mxu0 %v4757
    %6109 = vmatprep.mubr.bf16.mxu0 %v4239
    %6110 = vmatmul.mubr.bf16.gmra.mxu0 %v4238
    %v6111 = vpop.f32.mrf.mxu0
    %v6112 = vadd.f32 0.0, %v6111
    %v6113 = vpop.f32.mrf.mxu0
    %v6114 = vadd.f32 0.0, %v6113
    %v6115 = vpop.f32.mrf.mxu0
    %v6116 = vpop.f32.mrf.mxu0
    %6117 = vdwg.mxu0
    %6118 = vmatprep.subr.bf16.mxu0 %v4968
    %6119 = vmatpush1.bf16.msra.mxu0 %v4967
    %6120 = vmatprep.subr.bf16.mxu0 %v4954
    %6121 = vmatpush1.bf16.msra.mxu0 %v4953
    %6122 = vmatprep.subr.bf16.mxu0 %v4940
    %6123 = vmatpush1.bf16.msra.mxu0 %v4939
    %6124 = vmatprep.subr.bf16.mxu0 %v4926
    %6125 = vmatpush1.bf16.msra.mxu0 %v4925
    %6126 = vmatprep.subr.bf16.mxu0 %v4912
    %6127 = vmatpush1.bf16.msra.mxu0 %v4911
    %6128 = vmatprep.subr.bf16.mxu0 %v4898
    %6129 = vmatpush1.bf16.msra.mxu0 %v4897
    %6130 = vmatprep.subr.bf16.mxu0 %v4884
    %6131 = vmatpush1.bf16.msra.mxu0 %v4883
    %6132 = vmatprep.subr.bf16.mxu0 %v4870
    %6133 = vmatpush1.bf16.msra.mxu0 %v4869
    %6134 = vmatprep.subr.bf16.mxu0 %v5080
    %6135 = vmatpush2.bf16.msra.mxu0 %v5079
    %6136 = vmatprep.subr.bf16.mxu0 %v5066
    %6137 = vmatpush2.bf16.msra.mxu0 %v5065
    %6138 = vmatprep.subr.bf16.mxu0 %v5052
    %6139 = vmatpush2.bf16.msra.mxu0 %v5051
    %6140 = vmatprep.subr.bf16.mxu0 %v5038
    %6141 = vmatpush2.bf16.msra.mxu0 %v5037
    %6142 = vmatprep.subr.bf16.mxu0 %v5024
    %6143 = vmatpush2.bf16.msra.mxu0 %v5023
    %6144 = vmatprep.subr.bf16.mxu0 %v5010
    %6145 = vmatpush2.bf16.msra.mxu0 %v5009
    %6146 = vmatprep.subr.bf16.mxu0 %v4996
    %6147 = vmatpush2.bf16.msra.mxu0 %v4995
    %6148 = vmatprep.subr.bf16.mxu0 %v4982
    %6149 = vmatpush2.bf16.msra.mxu0 %v4981
    %6150 = vmatprep.mubr.bf16.mxu0 %v4241
    %6151 = vmatmul.mubr.bf16.gmra.mxu0 %v4240
    %v6152 = vpop.f32.mrf.mxu0
    %v6153 = vadd.f32 %v6112, %v6152
    %v6154 = vpop.f32.mrf.mxu0
    %v6155 = vadd.f32 %v6114, %v6154
    %v6156 = vpop.f32.mrf.mxu0
    %v6157 = vpop.f32.mrf.mxu0
    %6158 = vdwg.mxu0
    %6159 = vmatprep.subr.bf16.mxu0 %v5192
    %6160 = vmatpush1.bf16.msra.mxu0 %v5191
    %6161 = vmatprep.subr.bf16.mxu0 %v5178
    %6162 = vmatpush1.bf16.msra.mxu0 %v5177
    %6163 = vmatprep.subr.bf16.mxu0 %v5164
    %6164 = vmatpush1.bf16.msra.mxu0 %v5163
    %6165 = vmatprep.subr.bf16.mxu0 %v5150
    %6166 = vmatpush1.bf16.msra.mxu0 %v5149
    %6167 = vmatprep.subr.bf16.mxu0 %v5136
    %6168 = vmatpush1.bf16.msra.mxu0 %v5135
    %6169 = vmatprep.subr.bf16.mxu0 %v5122
    %6170 = vmatpush1.bf16.msra.mxu0 %v5121
    %6171 = vmatprep.subr.bf16.mxu0 %v5108
    %6172 = vmatpush1.bf16.msra.mxu0 %v5107
    %6173 = vmatprep.subr.bf16.mxu0 %v5094
    %6174 = vmatpush1.bf16.msra.mxu0 %v5093
    %6175 = vmatprep.subr.bf16.mxu0 %v5304
    %6176 = vmatpush2.bf16.msra.mxu0 %v5303
    %6177 = vmatprep.subr.bf16.mxu0 %v5290
    %6178 = vmatpush2.bf16.msra.mxu0 %v5289
    %6179 = vmatprep.subr.bf16.mxu0 %v5276
    %6180 = vmatpush2.bf16.msra.mxu0 %v5275
    %6181 = vmatprep.subr.bf16.mxu0 %v5262
    %6182 = vmatpush2.bf16.msra.mxu0 %v5261
    %6183 = vmatprep.subr.bf16.mxu0 %v5248
    %6184 = vmatpush2.bf16.msra.mxu0 %v5247
    %6185 = vmatprep.subr.bf16.mxu0 %v5234
    %6186 = vmatpush2.bf16.msra.mxu0 %v5233
    %6187 = vmatprep.subr.bf16.mxu0 %v5220
    %6188 = vmatpush2.bf16.msra.mxu0 %v5219
    %6189 = vmatprep.subr.bf16.mxu0 %v5206
    %6190 = vmatpush2.bf16.msra.mxu0 %v5205
    %6191 = vmatprep.mubr.bf16.mxu0 %v4243
    %6192 = vmatmul.mubr.bf16.gmra.mxu0 %v4242
    %v6193 = vpop.f32.mrf.mxu0
    %v6194 = vadd.f32 %v6153, %v6193
    %v6195 = vpop.f32.mrf.mxu0
    %v6196 = vadd.f32 %v6155, %v6195
    %v6197 = vpop.f32.mrf.mxu0
    %v6198 = vpop.f32.mrf.mxu0
    %6199 = vdwg.mxu0
    %6200 = vmatprep.subr.bf16.mxu0 %v5416
    %6201 = vmatpush1.bf16.msra.mxu0 %v5415
    %6202 = vmatprep.subr.bf16.mxu0 %v5402
    %6203 = vmatpush1.bf16.msra.mxu0 %v5401
    %6204 = vmatprep.subr.bf16.mxu0 %v5388
    %6205 = vmatpush1.bf16.msra.mxu0 %v5387
    %6206 = vmatprep.subr.bf16.mxu0 %v5374
    %6207 = vmatpush1.bf16.msra.mxu0 %v5373
    %6208 = vmatprep.subr.bf16.mxu0 %v5360
    %6209 = vmatpush1.bf16.msra.mxu0 %v5359
    %6210 = vmatprep.subr.bf16.mxu0 %v5346
    %6211 = vmatpush1.bf16.msra.mxu0 %v5345
    %6212 = vmatprep.subr.bf16.mxu0 %v5332
    %6213 = vmatpush1.bf16.msra.mxu0 %v5331
    %6214 = vmatprep.subr.bf16.mxu0 %v5318
    %6215 = vmatpush1.bf16.msra.mxu0 %v5317
    %6216 = vmatprep.subr.bf16.mxu0 0
    %6217 = vmatpush2.bf16.msra.mxu0 0
    %6218 = vmatprep.subr.bf16.mxu0 0
    %6219 = vmatpush2.bf16.msra.mxu0 0
    %6220 = vmatprep.subr.bf16.mxu0 0
    %6221 = vmatpush2.bf16.msra.mxu0 0
    %6222 = vmatprep.subr.bf16.mxu0 0
    %6223 = vmatpush2.bf16.msra.mxu0 0
    %6224 = vmatprep.subr.bf16.mxu0 0
    %6225 = vmatpush2.bf16.msra.mxu0 0
    %6226 = vmatprep.subr.bf16.mxu0 0
    %6227 = vmatpush2.bf16.msra.mxu0 0
    %6228 = vmatprep.subr.bf16.mxu0 0
    %6229 = vmatpush2.bf16.msra.mxu0 0
    %6230 = vmatprep.subr.bf16.mxu0 0
    %6231 = vmatpush2.bf16.msra.mxu0 0
    %6232 = vmatprep.mubr.bf16.mxu0 0
    %6233 = vmatmul.mubr.bf16.gmra.mxu0 %v4244
    %v6234 = vpop.f32.mrf.mxu0
    %v6235 = vadd.f32 %v6194, %v6234
    %v6236 = vpop.f32.mrf.mxu0
    %v6237 = vadd.f32 %v6196, %v6236
    %v6238 = vpop.f32.mrf.mxu0
    %v6239 = vpop.f32.mrf.mxu0
    %6240 = vdwg.mxu0
    %6241 = vmatprep.subr.bf16.mxu0 %v4746
    %6242 = vmatpush1.bf16.msra.mxu0 %v4745
    %6243 = vmatprep.subr.bf16.mxu0 %v4732
    %6244 = vmatpush1.bf16.msra.mxu0 %v4731
    %6245 = vmatprep.subr.bf16.mxu0 %v4718
    %6246 = vmatpush1.bf16.msra.mxu0 %v4717
    %6247 = vmatprep.subr.bf16.mxu0 %v4704
    %6248 = vmatpush1.bf16.msra.mxu0 %v4703
    %6249 = vmatprep.subr.bf16.mxu0 %v4690
    %6250 = vmatpush1.bf16.msra.mxu0 %v4689
    %6251 = vmatprep.subr.bf16.mxu0 %v4676
    %6252 = vmatpush1.bf16.msra.mxu0 %v4675
    %6253 = vmatprep.subr.bf16.mxu0 %v4662
    %6254 = vmatpush1.bf16.msra.mxu0 %v4661
    %6255 = vmatprep.subr.bf16.mxu0 %v4648
    %6256 = vmatpush1.bf16.msra.mxu0 %v4647
    %6257 = vmatprep.subr.bf16.mxu0 %v4858
    %6258 = vmatpush2.bf16.msra.mxu0 %v4857
    %6259 = vmatprep.subr.bf16.mxu0 %v4844
    %6260 = vmatpush2.bf16.msra.mxu0 %v4843
    %6261 = vmatprep.subr.bf16.mxu0 %v4830
    %6262 = vmatpush2.bf16.msra.mxu0 %v4829
    %6263 = vmatprep.subr.bf16.mxu0 %v4816
    %6264 = vmatpush2.bf16.msra.mxu0 %v4815
    %6265 = vmatprep.subr.bf16.mxu0 %v4802
    %6266 = vmatpush2.bf16.msra.mxu0 %v4801
    %6267 = vmatprep.subr.bf16.mxu0 %v4788
    %6268 = vmatpush2.bf16.msra.mxu0 %v4787
    %6269 = vmatprep.subr.bf16.mxu0 %v4774
    %6270 = vmatpush2.bf16.msra.mxu0 %v4773
    %6271 = vmatprep.subr.bf16.mxu0 %v4760
    %6272 = vmatpush2.bf16.msra.mxu0 %v4759
    %6273 = vmatprep.mubr.bf16.mxu0 %v4239
    %6274 = vmatmul.mubr.bf16.gmra.mxu0 %v4238
    %v6275 = vpop.f32.mrf.mxu0
    %v6276 = vadd.f32 0.0, %v6275
    %v6277 = vpop.f32.mrf.mxu0
    %v6278 = vadd.f32 0.0, %v6277
    %v6279 = vpop.f32.mrf.mxu0
    %v6280 = vpop.f32.mrf.mxu0
    %6281 = vdwg.mxu0
    %6282 = vmatprep.subr.bf16.mxu0 %v4970
    %6283 = vmatpush1.bf16.msra.mxu0 %v4969
    %6284 = vmatprep.subr.bf16.mxu0 %v4956
    %6285 = vmatpush1.bf16.msra.mxu0 %v4955
    %6286 = vmatprep.subr.bf16.mxu0 %v4942
    %6287 = vmatpush1.bf16.msra.mxu0 %v4941
    %6288 = vmatprep.subr.bf16.mxu0 %v4928
    %6289 = vmatpush1.bf16.msra.mxu0 %v4927
    %6290 = vmatprep.subr.bf16.mxu0 %v4914
    %6291 = vmatpush1.bf16.msra.mxu0 %v4913
    %6292 = vmatprep.subr.bf16.mxu0 %v4900
    %6293 = vmatpush1.bf16.msra.mxu0 %v4899
    %6294 = vmatprep.subr.bf16.mxu0 %v4886
    %6295 = vmatpush1.bf16.msra.mxu0 %v4885
    %6296 = vmatprep.subr.bf16.mxu0 %v4872
    %6297 = vmatpush1.bf16.msra.mxu0 %v4871
    %6298 = vmatprep.subr.bf16.mxu0 %v5082
    %6299 = vmatpush2.bf16.msra.mxu0 %v5081
    %6300 = vmatprep.subr.bf16.mxu0 %v5068
    %6301 = vmatpush2.bf16.msra.mxu0 %v5067
    %6302 = vmatprep.subr.bf16.mxu0 %v5054
    %6303 = vmatpush2.bf16.msra.mxu0 %v5053
    %6304 = vmatprep.subr.bf16.mxu0 %v5040
    %6305 = vmatpush2.bf16.msra.mxu0 %v5039
    %6306 = vmatprep.subr.bf16.mxu0 %v5026
    %6307 = vmatpush2.bf16.msra.mxu0 %v5025
    %6308 = vmatprep.subr.bf16.mxu0 %v5012
    %6309 = vmatpush2.bf16.msra.mxu0 %v5011
    %6310 = vmatprep.subr.bf16.mxu0 %v4998
    %6311 = vmatpush2.bf16.msra.mxu0 %v4997
    %6312 = vmatprep.subr.bf16.mxu0 %v4984
    %6313 = vmatpush2.bf16.msra.mxu0 %v4983
    %6314 = vmatprep.mubr.bf16.mxu0 %v4241
    %6315 = vmatmul.mubr.bf16.gmra.mxu0 %v4240
    %v6316 = vpop.f32.mrf.mxu0
    %v6317 = vadd.f32 %v6276, %v6316
    %v6318 = vpop.f32.mrf.mxu0
    %v6319 = vadd.f32 %v6278, %v6318
    %v6320 = vpop.f32.mrf.mxu0
    %v6321 = vpop.f32.mrf.mxu0
    %6322 = vdwg.mxu0
    %6323 = vmatprep.subr.bf16.mxu0 %v5194
    %6324 = vmatpush1.bf16.msra.mxu0 %v5193
    %6325 = vmatprep.subr.bf16.mxu0 %v5180
    %6326 = vmatpush1.bf16.msra.mxu0 %v5179
    %6327 = vmatprep.subr.bf16.mxu0 %v5166
    %6328 = vmatpush1.bf16.msra.mxu0 %v5165
    %6329 = vmatprep.subr.bf16.mxu0 %v5152
    %6330 = vmatpush1.bf16.msra.mxu0 %v5151
    %6331 = vmatprep.subr.bf16.mxu0 %v5138
    %6332 = vmatpush1.bf16.msra.mxu0 %v5137
    %6333 = vmatprep.subr.bf16.mxu0 %v5124
    %6334 = vmatpush1.bf16.msra.mxu0 %v5123
    %6335 = vmatprep.subr.bf16.mxu0 %v5110
    %6336 = vmatpush1.bf16.msra.mxu0 %v5109
    %6337 = vmatprep.subr.bf16.mxu0 %v5096
    %6338 = vmatpush1.bf16.msra.mxu0 %v5095
    %6339 = vmatprep.subr.bf16.mxu0 %v5306
    %6340 = vmatpush2.bf16.msra.mxu0 %v5305
    %6341 = vmatprep.subr.bf16.mxu0 %v5292
    %6342 = vmatpush2.bf16.msra.mxu0 %v5291
    %6343 = vmatprep.subr.bf16.mxu0 %v5278
    %6344 = vmatpush2.bf16.msra.mxu0 %v5277
    %6345 = vmatprep.subr.bf16.mxu0 %v5264
    %6346 = vmatpush2.bf16.msra.mxu0 %v5263
    %6347 = vmatprep.subr.bf16.mxu0 %v5250
    %6348 = vmatpush2.bf16.msra.mxu0 %v5249
    %6349 = vmatprep.subr.bf16.mxu0 %v5236
    %6350 = vmatpush2.bf16.msra.mxu0 %v5235
    %6351 = vmatprep.subr.bf16.mxu0 %v5222
    %6352 = vmatpush2.bf16.msra.mxu0 %v5221
    %6353 = vmatprep.subr.bf16.mxu0 %v5208
    %6354 = vmatpush2.bf16.msra.mxu0 %v5207
    %6355 = vmatprep.mubr.bf16.mxu0 %v4243
    %6356 = vmatmul.mubr.bf16.gmra.mxu0 %v4242
    %v6357 = vpop.f32.mrf.mxu0
    %v6358 = vadd.f32 %v6317, %v6357
    %v6359 = vpop.f32.mrf.mxu0
    %v6360 = vadd.f32 %v6319, %v6359
    %v6361 = vpop.f32.mrf.mxu0
    %v6362 = vpop.f32.mrf.mxu0
    %6363 = vdwg.mxu0
    %6364 = vmatprep.subr.bf16.mxu0 %v5418
    %6365 = vmatpush1.bf16.msra.mxu0 %v5417
    %6366 = vmatprep.subr.bf16.mxu0 %v5404
    %6367 = vmatpush1.bf16.msra.mxu0 %v5403
    %6368 = vmatprep.subr.bf16.mxu0 %v5390
    %6369 = vmatpush1.bf16.msra.mxu0 %v5389
    %6370 = vmatprep.subr.bf16.mxu0 %v5376
    %6371 = vmatpush1.bf16.msra.mxu0 %v5375
    %6372 = vmatprep.subr.bf16.mxu0 %v5362
    %6373 = vmatpush1.bf16.msra.mxu0 %v5361
    %6374 = vmatprep.subr.bf16.mxu0 %v5348
    %6375 = vmatpush1.bf16.msra.mxu0 %v5347
    %6376 = vmatprep.subr.bf16.mxu0 %v5334
    %6377 = vmatpush1.bf16.msra.mxu0 %v5333
    %6378 = vmatprep.subr.bf16.mxu0 %v5320
    %6379 = vmatpush1.bf16.msra.mxu0 %v5319
    %6380 = vmatprep.subr.bf16.mxu0 0
    %6381 = vmatpush2.bf16.msra.mxu0 0
    %6382 = vmatprep.subr.bf16.mxu0 0
    %6383 = vmatpush2.bf16.msra.mxu0 0
    %6384 = vmatprep.subr.bf16.mxu0 0
    %6385 = vmatpush2.bf16.msra.mxu0 0
    %6386 = vmatprep.subr.bf16.mxu0 0
    %6387 = vmatpush2.bf16.msra.mxu0 0
    %6388 = vmatprep.subr.bf16.mxu0 0
    %6389 = vmatpush2.bf16.msra.mxu0 0
    %6390 = vmatprep.subr.bf16.mxu0 0
    %6391 = vmatpush2.bf16.msra.mxu0 0
    %6392 = vmatprep.subr.bf16.mxu0 0
    %6393 = vmatpush2.bf16.msra.mxu0 0
    %6394 = vmatprep.subr.bf16.mxu0 0
    %6395 = vmatpush2.bf16.msra.mxu0 0
    %6396 = vmatprep.mubr.bf16.mxu0 0
    %6397 = vmatmul.mubr.bf16.gmra.mxu0 %v4244
    %v6398 = vpop.f32.mrf.mxu0
    %v6399 = vadd.f32 %v6358, %v6398
    %v6400 = vpop.f32.mrf.mxu0
    %v6401 = vadd.f32 %v6360, %v6400
    %v6402 = vpop.f32.mrf.mxu0
    %v6403 = vpop.f32.mrf.mxu0
    %6404 = vdwg.mxu0
    %6405 = vmatprep.subr.bf16.mxu0 %v4748
    %6406 = vmatpush1.bf16.msra.mxu0 %v4747
    %6407 = vmatprep.subr.bf16.mxu0 %v4734
    %6408 = vmatpush1.bf16.msra.mxu0 %v4733
    %6409 = vmatprep.subr.bf16.mxu0 %v4720
    %6410 = vmatpush1.bf16.msra.mxu0 %v4719
    %6411 = vmatprep.subr.bf16.mxu0 %v4706
    %6412 = vmatpush1.bf16.msra.mxu0 %v4705
    %6413 = vmatprep.subr.bf16.mxu0 %v4692
    %6414 = vmatpush1.bf16.msra.mxu0 %v4691
    %6415 = vmatprep.subr.bf16.mxu0 %v4678
    %6416 = vmatpush1.bf16.msra.mxu0 %v4677
    %6417 = vmatprep.subr.bf16.mxu0 %v4664
    %6418 = vmatpush1.bf16.msra.mxu0 %v4663
    %6419 = vmatprep.subr.bf16.mxu0 %v4650
    %6420 = vmatpush1.bf16.msra.mxu0 %v4649
    %6421 = vmatprep.subr.bf16.mxu0 %v4860
    %6422 = vmatpush2.bf16.msra.mxu0 %v4859
    %6423 = vmatprep.subr.bf16.mxu0 %v4846
    %6424 = vmatpush2.bf16.msra.mxu0 %v4845
    %6425 = vmatprep.subr.bf16.mxu0 %v4832
    %6426 = vmatpush2.bf16.msra.mxu0 %v4831
    %6427 = vmatprep.subr.bf16.mxu0 %v4818
    %6428 = vmatpush2.bf16.msra.mxu0 %v4817
    %6429 = vmatprep.subr.bf16.mxu0 %v4804
    %6430 = vmatpush2.bf16.msra.mxu0 %v4803
    %6431 = vmatprep.subr.bf16.mxu0 %v4790
    %6432 = vmatpush2.bf16.msra.mxu0 %v4789
    %6433 = vmatprep.subr.bf16.mxu0 %v4776
    %6434 = vmatpush2.bf16.msra.mxu0 %v4775
    %6435 = vmatprep.subr.bf16.mxu0 %v4762
    %6436 = vmatpush2.bf16.msra.mxu0 %v4761
    %6437 = vmatprep.mubr.bf16.mxu0 %v4239
    %6438 = vmatmul.mubr.bf16.gmra.mxu0 %v4238
    %v6439 = vpop.f32.mrf.mxu0
    %v6440 = vadd.f32 0.0, %v6439
    %v6441 = vpop.f32.mrf.mxu0
    %v6442 = vadd.f32 0.0, %v6441
    %v6443 = vpop.f32.mrf.mxu0
    %v6444 = vpop.f32.mrf.mxu0
    %6445 = vdwg.mxu0
    %6446 = vmatprep.subr.bf16.mxu0 %v4972
    %6447 = vmatpush1.bf16.msra.mxu0 %v4971
    %6448 = vmatprep.subr.bf16.mxu0 %v4958
    %6449 = vmatpush1.bf16.msra.mxu0 %v4957
    %6450 = vmatprep.subr.bf16.mxu0 %v4944
    %6451 = vmatpush1.bf16.msra.mxu0 %v4943
    %6452 = vmatprep.subr.bf16.mxu0 %v4930
    %6453 = vmatpush1.bf16.msra.mxu0 %v4929
    %6454 = vmatprep.subr.bf16.mxu0 %v4916
    %6455 = vmatpush1.bf16.msra.mxu0 %v4915
    %6456 = vmatprep.subr.bf16.mxu0 %v4902
    %6457 = vmatpush1.bf16.msra.mxu0 %v4901
    %6458 = vmatprep.subr.bf16.mxu0 %v4888
    %6459 = vmatpush1.bf16.msra.mxu0 %v4887
    %6460 = vmatprep.subr.bf16.mxu0 %v4874
    %6461 = vmatpush1.bf16.msra.mxu0 %v4873
    %6462 = vmatprep.subr.bf16.mxu0 %v5084
    %6463 = vmatpush2.bf16.msra.mxu0 %v5083
    %6464 = vmatprep.subr.bf16.mxu0 %v5070
    %6465 = vmatpush2.bf16.msra.mxu0 %v5069
    %6466 = vmatprep.subr.bf16.mxu0 %v5056
    %6467 = vmatpush2.bf16.msra.mxu0 %v5055
    %6468 = vmatprep.subr.bf16.mxu0 %v5042
    %6469 = vmatpush2.bf16.msra.mxu0 %v5041
    %6470 = vmatprep.subr.bf16.mxu0 %v5028
    %6471 = vmatpush2.bf16.msra.mxu0 %v5027
    %6472 = vmatprep.subr.bf16.mxu0 %v5014
    %6473 = vmatpush2.bf16.msra.mxu0 %v5013
    %6474 = vmatprep.subr.bf16.mxu0 %v5000
    %6475 = vmatpush2.bf16.msra.mxu0 %v4999
    %6476 = vmatprep.subr.bf16.mxu0 %v4986
    %6477 = vmatpush2.bf16.msra.mxu0 %v4985
    %6478 = vmatprep.mubr.bf16.mxu0 %v4241
    %6479 = vmatmul.mubr.bf16.gmra.mxu0 %v4240
    %v6480 = vpop.f32.mrf.mxu0
    %v6481 = vadd.f32 %v6440, %v6480
    %v6482 = vpop.f32.mrf.mxu0
    %v6483 = vadd.f32 %v6442, %v6482
    %v6484 = vpop.f32.mrf.mxu0
    %v6485 = vpop.f32.mrf.mxu0
    %6486 = vdwg.mxu0
    %6487 = vmatprep.subr.bf16.mxu0 %v5196
    %6488 = vmatpush1.bf16.msra.mxu0 %v5195
    %6489 = vmatprep.subr.bf16.mxu0 %v5182
    %6490 = vmatpush1.bf16.msra.mxu0 %v5181
    %6491 = vmatprep.subr.bf16.mxu0 %v5168
    %6492 = vmatpush1.bf16.msra.mxu0 %v5167
    %6493 = vmatprep.subr.bf16.mxu0 %v5154
    %6494 = vmatpush1.bf16.msra.mxu0 %v5153
    %6495 = vmatprep.subr.bf16.mxu0 %v5140
    %6496 = vmatpush1.bf16.msra.mxu0 %v5139
    %6497 = vmatprep.subr.bf16.mxu0 %v5126
    %6498 = vmatpush1.bf16.msra.mxu0 %v5125
    %6499 = vmatprep.subr.bf16.mxu0 %v5112
    %6500 = vmatpush1.bf16.msra.mxu0 %v5111
    %6501 = vmatprep.subr.bf16.mxu0 %v5098
    %6502 = vmatpush1.bf16.msra.mxu0 %v5097
    %6503 = vmatprep.subr.bf16.mxu0 %v5308
    %6504 = vmatpush2.bf16.msra.mxu0 %v5307
    %6505 = vmatprep.subr.bf16.mxu0 %v5294
    %6506 = vmatpush2.bf16.msra.mxu0 %v5293
    %6507 = vmatprep.subr.bf16.mxu0 %v5280
    %6508 = vmatpush2.bf16.msra.mxu0 %v5279
    %6509 = vmatprep.subr.bf16.mxu0 %v5266
    %6510 = vmatpush2.bf16.msra.mxu0 %v5265
    %6511 = vmatprep.subr.bf16.mxu0 %v5252
    %6512 = vmatpush2.bf16.msra.mxu0 %v5251
    %6513 = vmatprep.subr.bf16.mxu0 %v5238
    %6514 = vmatpush2.bf16.msra.mxu0 %v5237
    %6515 = vmatprep.subr.bf16.mxu0 %v5224
    %6516 = vmatpush2.bf16.msra.mxu0 %v5223
    %6517 = vmatprep.subr.bf16.mxu0 %v5210
    %6518 = vmatpush2.bf16.msra.mxu0 %v5209
    %6519 = vmatprep.mubr.bf16.mxu0 %v4243
    %6520 = vmatmul.mubr.bf16.gmra.mxu0 %v4242
    %v6521 = vpop.f32.mrf.mxu0
    %v6522 = vadd.f32 %v6481, %v6521
    %v6523 = vpop.f32.mrf.mxu0
    %v6524 = vadd.f32 %v6483, %v6523
    %v6525 = vpop.f32.mrf.mxu0
    %v6526 = vpop.f32.mrf.mxu0
    %6527 = vdwg.mxu0
    %6528 = vmatprep.subr.bf16.mxu0 %v5420
    %6529 = vmatpush1.bf16.msra.mxu0 %v5419
    %6530 = vmatprep.subr.bf16.mxu0 %v5406
    %6531 = vmatpush1.bf16.msra.mxu0 %v5405
    %6532 = vmatprep.subr.bf16.mxu0 %v5392
    %6533 = vmatpush1.bf16.msra.mxu0 %v5391
    %6534 = vmatprep.subr.bf16.mxu0 %v5378
    %6535 = vmatpush1.bf16.msra.mxu0 %v5377
    %6536 = vmatprep.subr.bf16.mxu0 %v5364
    %6537 = vmatpush1.bf16.msra.mxu0 %v5363
    %6538 = vmatprep.subr.bf16.mxu0 %v5350
    %6539 = vmatpush1.bf16.msra.mxu0 %v5349
    %6540 = vmatprep.subr.bf16.mxu0 %v5336
    %6541 = vmatpush1.bf16.msra.mxu0 %v5335
    %6542 = vmatprep.subr.bf16.mxu0 %v5322
    %6543 = vmatpush1.bf16.msra.mxu0 %v5321
    %6544 = vmatprep.subr.bf16.mxu0 0
    %6545 = vmatpush2.bf16.msra.mxu0 0
    %6546 = vmatprep.subr.bf16.mxu0 0
    %6547 = vmatpush2.bf16.msra.mxu0 0
    %6548 = vmatprep.subr.bf16.mxu0 0
    %6549 = vmatpush2.bf16.msra.mxu0 0
    %6550 = vmatprep.subr.bf16.mxu0 0
    %6551 = vmatpush2.bf16.msra.mxu0 0
    %6552 = vmatprep.subr.bf16.mxu0 0
    %6553 = vmatpush2.bf16.msra.mxu0 0
    %6554 = vmatprep.subr.bf16.mxu0 0
    %6555 = vmatpush2.bf16.msra.mxu0 0
    %6556 = vmatprep.subr.bf16.mxu0 0
    %6557 = vmatpush2.bf16.msra.mxu0 0
    %6558 = vmatprep.subr.bf16.mxu0 0
    %6559 = vmatpush2.bf16.msra.mxu0 0
    %6560 = vmatprep.mubr.bf16.mxu0 0
    %6561 = vmatmul.mubr.bf16.gmra.mxu0 %v4244
    %v6562 = vpop.f32.mrf.mxu0
    %v6563 = vadd.f32 %v6522, %v6562
    %v6564 = vpop.f32.mrf.mxu0
    %v6565 = vadd.f32 %v6524, %v6564
    %v6566 = vpop.f32.mrf.mxu0
    %v6567 = vpop.f32.mrf.mxu0
    %6568 = vdwg.mxu0
    %v6569 = vld [vmem:[#allocation18] sm:$0xff]
    %v6570 = vld [vmem:[#allocation18 + $0x8] sm:$0x3f]
    %v6573 = vlaneseq
    %v6574 = vshrl.u32 %v6573, 7
    %v6575 = vsub.s32 0, %v6574
    %v6576 = vrot.slane %v6569, %v6575
    %v6577 = vlaneseq
    %v6578 = vshrl.u32 %v6577, 7
    %v6579 = vsub.s32 1, %v6578
    %v6580 = vrot.slane %v6569, %v6579
    %v6581 = vlaneseq
    %v6582 = vshrl.u32 %v6581, 7
    %v6583 = vsub.s32 2, %v6582
    %v6584 = vrot.slane %v6569, %v6583
    %v6585 = vlaneseq
    %v6586 = vshrl.u32 %v6585, 7
    %v6587 = vsub.s32 3, %v6586
    %v6588 = vrot.slane %v6569, %v6587
    %v6589 = vlaneseq
    %v6590 = vshrl.u32 %v6589, 7
    %v6591 = vsub.s32 4, %v6590
    %v6592 = vrot.slane %v6569, %v6591
    %v6593 = vlaneseq
    %v6594 = vshrl.u32 %v6593, 7
    %v6595 = vsub.s32 5, %v6594
    %v6596 = vrot.slane %v6569, %v6595
    %v6597 = vlaneseq
    %v6598 = vshrl.u32 %v6597, 7
    %v6599 = vsub.s32 6, %v6598
    %v6600 = vrot.slane %v6569, %v6599
    %v6601 = vlaneseq
    %v6602 = vshrl.u32 %v6601, 7
    %v6603 = vsub.s32 7, %v6602
    %v6604 = vrot.slane %v6569, %v6603
    %v6605 = vlaneseq
    %v6606 = vshrl.u32 %v6605, 7
    %v6607 = vsub.s32 0, %v6606
    %v6608 = vrot.slane %v6570, %v6607
    %v6609 = vlaneseq
    %v6610 = vshrl.u32 %v6609, 7
    %v6611 = vsub.s32 1, %v6610
    %v6612 = vrot.slane %v6570, %v6611
    %v6613 = vlaneseq
    %v6614 = vshrl.u32 %v6613, 7
    %v6615 = vsub.s32 2, %v6614
    %v6616 = vrot.slane %v6570, %v6615
    %v6617 = vlaneseq
    %v6618 = vshrl.u32 %v6617, 7
    %v6619 = vsub.s32 3, %v6618
    %v6620 = vrot.slane %v6570, %v6619
    %v6621 = vlaneseq
    %v6622 = vshrl.u32 %v6621, 7
    %v6623 = vsub.s32 4, %v6622
    %v6624 = vrot.slane %v6570, %v6623
    %v6625 = vlaneseq
    %v6626 = vshrl.u32 %v6625, 7
    %v6627 = vsub.s32 5, %v6626
    %v6628 = vrot.slane %v6570, %v6627
    %v6643 = vmul.f32 %v5579, %v6576
    %v6644 = vmul.f32 %v5581, %v6580
    %v6645 = vmul.f32 %v5743, %v6584
    %v6646 = vmul.f32 %v5745, %v6588
    %v6647 = vmul.f32 %v5907, %v6592
    %v6648 = vmul.f32 %v5909, %v6596
    %v6649 = vmul.f32 %v6071, %v6600
    %v6650 = vmul.f32 %v6073, %v6604
    %v6651 = vmul.f32 %v6235, %v6608
    %v6652 = vmul.f32 %v6237, %v6612
    %v6653 = vmul.f32 %v6399, %v6616
    %v6654 = vmul.f32 %v6401, %v6620
    %v6655 = vmul.f32 %v6563, %v6624
    %v6656 = vmul.f32 %v6565, %v6628
    %v6657 = vld [vmem:[#allocation19] sm:$0xff]
    %v6658 = vld [vmem:[#allocation19 + $0x8] sm:$0x3f]
    %v6661 = vlaneseq
    %v6662 = vshrl.u32 %v6661, 7
    %v6663 = vsub.s32 0, %v6662
    %v6664 = vrot.slane %v6657, %v6663
    %v6665 = vlaneseq
    %v6666 = vshrl.u32 %v6665, 7
    %v6667 = vsub.s32 1, %v6666
    %v6668 = vrot.slane %v6657, %v6667
    %v6669 = vlaneseq
    %v6670 = vshrl.u32 %v6669, 7
    %v6671 = vsub.s32 2, %v6670
    %v6672 = vrot.slane %v6657, %v6671
    %v6673 = vlaneseq
    %v6674 = vshrl.u32 %v6673, 7
    %v6675 = vsub.s32 3, %v6674
    %v6676 = vrot.slane %v6657, %v6675
    %v6677 = vlaneseq
    %v6678 = vshrl.u32 %v6677, 7
    %v6679 = vsub.s32 4, %v6678
    %v6680 = vrot.slane %v6657, %v6679
    %v6681 = vlaneseq
    %v6682 = vshrl.u32 %v6681, 7
    %v6683 = vsub.s32 5, %v6682
    %v6684 = vrot.slane %v6657, %v6683
    %v6685 = vlaneseq
    %v6686 = vshrl.u32 %v6685, 7
    %v6687 = vsub.s32 6, %v6686
    %v6688 = vrot.slane %v6657, %v6687
    %v6689 = vlaneseq
    %v6690 = vshrl.u32 %v6689, 7
    %v6691 = vsub.s32 7, %v6690
    %v6692 = vrot.slane %v6657, %v6691
    %v6693 = vlaneseq
    %v6694 = vshrl.u32 %v6693, 7
    %v6695 = vsub.s32 0, %v6694
    %v6696 = vrot.slane %v6658, %v6695
    %v6697 = vlaneseq
    %v6698 = vshrl.u32 %v6697, 7
    %v6699 = vsub.s32 1, %v6698
    %v6700 = vrot.slane %v6658, %v6699
    %v6701 = vlaneseq
    %v6702 = vshrl.u32 %v6701, 7
    %v6703 = vsub.s32 2, %v6702
    %v6704 = vrot.slane %v6658, %v6703
    %v6705 = vlaneseq
    %v6706 = vshrl.u32 %v6705, 7
    %v6707 = vsub.s32 3, %v6706
    %v6708 = vrot.slane %v6658, %v6707
    %v6709 = vlaneseq
    %v6710 = vshrl.u32 %v6709, 7
    %v6711 = vsub.s32 4, %v6710
    %v6712 = vrot.slane %v6658, %v6711
    %v6713 = vlaneseq
    %v6714 = vshrl.u32 %v6713, 7
    %v6715 = vsub.s32 5, %v6714
    %v6716 = vrot.slane %v6658, %v6715
    %v6731 = vadd.f32 %v6643, %v6664
    %v6732 = vadd.f32 %v6644, %v6668
    %v6733 = vadd.f32 %v6645, %v6672
    %v6734 = vadd.f32 %v6646, %v6676
    %v6735 = vadd.f32 %v6647, %v6680
    %v6736 = vadd.f32 %v6648, %v6684
    %v6737 = vadd.f32 %v6649, %v6688
    %v6738 = vadd.f32 %v6650, %v6692
    %v6739 = vadd.f32 %v6651, %v6696
    %v6740 = vadd.f32 %v6652, %v6700
    %v6741 = vadd.f32 %v6653, %v6704
    %v6742 = vadd.f32 %v6654, %v6708
    %v6743 = vadd.f32 %v6655, %v6712
    %v6744 = vadd.f32 %v6656, %v6716
    %6745 = vst [vmem:[%s13] sm:$0xff] %v6731
    %6746 = vst [vmem:[%s13 + $0x8] sm:$0xff] %v6732
    %6747 = vst [vmem:[%s13 + $0x10] sm:$0xff] %v6733
    %6748 = vst [vmem:[%s13 + $0x18] sm:$0xff] %v6734
    %6749 = vst [vmem:[%s13 + $0x20] sm:$0xff] %v6735
    %6750 = vst [vmem:[%s13 + $0x28] sm:$0xff] %v6736
    %6751 = vst [vmem:[%s13 + $0x30] sm:$0xff] %v6737
    %6752 = vst [vmem:[%s13 + $0x38] sm:$0xff] %v6738
    %6753 = vst [vmem:[%s13 + $0x40] sm:$0xff] %v6739
    %6754 = vst [vmem:[%s13 + $0x48] sm:$0xff] %v6740
    %6755 = vst [vmem:[%s13 + $0x50] sm:$0xff] %v6741
    %6756 = vst [vmem:[%s13 + $0x58] sm:$0xff] %v6742
    %6757 = vst [vmem:[%s13 + $0x60] sm:$0xff] %v6743
    %6758 = vst [vmem:[%s13 + $0x68] sm:$0xff] %v6744
    // Predicated region
    $region102: #{sae_forward.1} parent=1 // pred_check
      _
    $region103: #{sae_forward.1} parent=1 // pred_check_branch
      %6760 = sbr.rel (0) target = $region105
    $region104: #{sae_forward.1} parent=1 // pred_region
      _
    $region105: #{sae_forward.1} parent=1 // pred_fallthru
      _
    // Predicated region
    $region106: #{sae_forward.1} parent=1 // pred_check
      _
    $region107: #{sae_forward.1} parent=1 // pred_check_branch
      %6762 = sbr.rel (0) target = $region109
    $region108: #{sae_forward.1} parent=1 // pred_region
      _
    $region109: #{sae_forward.1} parent=1 // pred_fallthru
      _
    %6763 = vsyncpa [#allocation3], 1
    %6764 = vsyncpa [#allocation5], 1
    %6765 = vsyncpa [#allocation8], 1
    %6766 = vsyncpa [#allocation11], 1
    %6767 = vsyncpa [#allocation14], 1
    %6768 = vsyncpa [#allocation17], 1
    %6769 = vsyncpa [#allocation20], 1

</llo_original>
